<compile_context>
chip_gen: v6e
topology: v6e:2x2x1
jax: 0.10.0
libtpu: 0.0.40
codegen_flags: <defaults>
</compile_context>

<pallas_src>
import functools

import numpy as np

import jax
import jax.numpy as jnp
from jax.experimental import pallas as pl
from jax.experimental.pallas import tpu as pltpu


CP = 128  # persistent channel padding = one full lane width

_VMEM = pl.BlockSpec(memory_space=pltpu.MemorySpace.VMEM)

# static tap-packing layout for the 5 convs: real input channels per conv
_CONV_CIN = (3, 16, 16, 16, 32)


def _ngroups(cin):
    return -(-9 // (CP // cin))       # ceil(9 / taps_per_group)


_GRP_OFF = tuple(int(v) for v in np.cumsum([0] + [_ngroups(c) for c in _CONV_CIN[:-1]]))
_NUM_GRPS = int(sum(_ngroups(c) for c in _CONV_CIN))   # = 1+2+2+2+3 = 10


def _rup(x, m):
    return ((x + m - 1) // m) * m


# ----------------------------- in-kernel helpers -----------------------------

def _bn_relu(x, gamma, beta, eps):
    """Training-mode BatchNorm over rows (M = N*H*W) + ReLU, one-pass statistics."""
    m = x.shape[0]
    inv_m = 1.0 / m
    s1 = jnp.sum(x, axis=0, keepdims=True)
    s2 = jnp.sum(x * x, axis=0, keepdims=True)
    mean = s1 * inv_m
    var = jnp.maximum(s2 * inv_m - mean * mean, 0.0)
    scale = jax.lax.rsqrt(var + eps) * gamma          # fold (1,CP) rows before broadcast
    return jnp.maximum((x - mean) * scale + beta, 0.0)


def _conv3x3(x, cwp_ref, mask_ref, grp_off, cin, h, w, sel=None):
    """3x3, stride-1, zero-pad-1 conv on a row-flattened NHWC activation,
    with the 9 taps packed along the MXU contraction dimension.

    x: (M, CP) f32, M = n*h*w (row-major over n, h, w).
    cwp_ref[grp_off + g]: (CP, CP) bf16 packed weight for tap group g
        (row j*cin + c = input channel c of the j-th tap in the group).
    mask_ref[t]: (M, CP) bf16 validity mask for tap t, already restricted to the
        tap's cin-wide lane slot (zero everywhere else).
    sel: optional (M_out, M) bf16 row-selection matrix (stride-2 subsample),
        applied to each packed group BEFORE the weight matmul so the weight
        matmuls only run on the rows that are kept.
    """
    m = x.shape[0]
    tpg = CP // cin                    # taps per 128-wide group
    ngrp = -(-9 // tpg)

    # factored sublane rolls: the two misaligned +-1 (kw) rolls once, then the
    # per-kh +-w rolls (sublane-aligned when w % 8 == 0) compose on top.
    col = [pltpu.roll(x, shift=1, axis=0), x, pltpu.roll(x, shift=m - 1, axis=0)]

    grp = [None] * ngrp
    for kh in range(3):
        s_r = ((1 - kh) * w) % m       # row shift so shifted[r] = x[r + (kh-1)*w + (kw-1)]
        for kw in range(3):
            t = kh * 3 + kw
            shifted = col[kw] if s_r == 0 else pltpu.roll(col[kw], shift=s_r, axis=0)
            g, j = t // tpg, t % tpg
            placed = shifted if j == 0 else pltpu.roll(shifted, shift=j * cin, axis=1)
            masked = placed * mask_ref[t]          # precomputed slot-placed 0/1 mask
            grp[g] = masked if grp[g] is None else grp[g] + masked

    acc = None
    for g in range(ngrp):
        lhs = grp[g].astype(jnp.bfloat16)
        if sel is not None:
            lhs = jnp.dot(sel, lhs, preferred_element_type=jnp.float32).astype(jnp.bfloat16)
        part = jnp.dot(lhs, cwp_ref[grp_off + g], preferred_element_type=jnp.float32)
        acc = part if acc is None else acc + part
    return acc


# ----------------------------- the fused kernel ------------------------------

def _resnet_fwd_kernel(x_ref, cwp_ref, wt_ref, wlin_ref, bnp_ref,
                       s0_ref, s2_ref, p2_ref, pm_ref,
                       m0_ref, m1_ref, m2_ref, out_ref, *, h, w, eps):
    h1, w1 = h // 2, w // 2
    h2, w2 = h1 // 2, w1 // 2

    def g(r):  # one packed (1, CP) BN/bias/standardize row
        return bnp_ref[r:r + 1, :]

    # standardize(x, means, stds): padded channels stay exactly 0
    # (means row zero-filled, 1/std row one-filled).
    x = (x_ref[...] - g(11)) * g(12)                              # (n*h*w, CP)

    # head: Conv2d(3,16,k3,s2,p1).  Stride-2 selection is folded into the conv
    # (rows selected before the weight matmul).
    y0 = _conv3x3(x, cwp_ref, m0_ref, _GRP_OFF[0], 3, h, w, sel=s0_ref[...])

    # group 1: BasicBlock(16, 16), regular path (skip = block input).
    t = _bn_relu(y0, g(0), g(1), eps)
    t = _conv3x3(t, cwp_ref, m1_ref, _GRP_OFF[1], 16, h1, w1)
    t = _bn_relu(t, g(2), g(3), eps)
    x1 = _conv3x3(t, cwp_ref, m1_ref, _GRP_OFF[2], 16, h1, w1) + y0

    # group 2: BasicBlock(16, 32), transition path (skip = post-BN/ReLU input).
    a = _bn_relu(x1, g(4), g(5), eps)
    t = _conv3x3(a, cwp_ref, m1_ref, _GRP_OFF[3], 16, h1, w1, sel=s2_ref[...])  # stride-2
    t = _bn_relu(t, g(6), g(7), eps)
    t = _conv3x3(t, cwp_ref, m2_ref, _GRP_OFF[4], 32, h2, w2)
    pooled = jnp.dot(p2_ref[...], a.astype(jnp.bfloat16),
                     preferred_element_type=jnp.float32)           # AvgPool2d(2) skip
    trans = jnp.dot(pooled.astype(jnp.bfloat16), wt_ref[...],
                    preferred_element_type=jnp.float32)            # 1x1 transition conv
    x2 = t + trans

    # tail: final BN+ReLU -> global mean pool (MXU) -> linear (+bias), fused.
    f = _bn_relu(x2, g(8), g(9), eps)
    feat = jnp.dot(pm_ref[...], f.astype(jnp.bfloat16),
                   preferred_element_type=jnp.float32)              # (m_out, CP)
    out_ref[...] = jnp.dot(feat.astype(jnp.bfloat16), wlin_ref[...],
                           preferred_element_type=jnp.float32) + g(10)


# ----------------------------- forward wrapper --------------------------------

def resnet_v2_forward(x_nchw, prep, num_classes=10):
    n, cin, h, w = x_nchw.shape
    assert prep["s0"].shape[1] == n * h * w, "prepared constants don't match input shape"
    # entry-layout glue: NCHW -> row-flattened NHWC, channel-padded once to CP.
    x = jnp.transpose(x_nchw, (0, 2, 3, 1)).astype(jnp.float32).reshape(n * h * w, cin)
    x = jnp.pad(x, ((0, 0), (0, CP - cin)))
    m_out = prep["pm"].shape[0]
    out = pl.pallas_call(
        functools.partial(_resnet_fwd_kernel, h=h, w=w, eps=1e-5),
        out_shape=jax.ShapeDtypeStruct((m_out, CP), jnp.float32),
        in_specs=[_VMEM] * 12,
        out_specs=_VMEM,
    )(x, prep["cwp"], prep["wt"], prep["wlin"], prep["bnp"],
      prep["s0"], prep["s2"], prep["p2"], prep["pm"],
      prep["m0"], prep["m1"], prep["m2"])
    # the only exit-side slice of the whole forward
    return out[:n, :num_classes]


# ----------------------------- parameter init / packing ----------------------

def _kaiming_conv(key, kh, kw, cin, cout, gain):
    fan_in = cin * kh * kw
    std = gain / float(np.sqrt(fan_in))
    return jax.random.normal(key, (kh, kw, cin, cout), jnp.float32) * std


def init_params(key, num_classes=10, num_blocks=(1, 1), width_factor=1):
    assert tuple(num_blocks) == (1, 1) and width_factor == 1, \
        "this script's fused kernel is specialized to num_blocks=(1,1), width_factor=1"
    nc = [16] + [2 ** (4 + i) * width_factor for i in range(len(num_blocks))]  # [16,16,32]
    keys = jax.random.split(key, 8)
    relu_gain = float(np.sqrt(2.0))
    params = {
        "head_w": _kaiming_conv(keys[0], 3, 3, 3, nc[0], relu_gain),
        "b1": {  # BasicBlock(16, 16), regular
            "bn1_g": jnp.ones((nc[0],)), "bn1_b": jnp.zeros((nc[0],)),
            "w1": _kaiming_conv(keys[1], 3, 3, nc[0], nc[1], relu_gain),
            "bn2_g": jnp.ones((nc[1],)), "bn2_b": jnp.zeros((nc[1],)),
            "w2": _kaiming_conv(keys[2], 3, 3, nc[1], nc[1], relu_gain),
        },
        "b2": {  # BasicBlock(16, 32), transition (downscale 2)
            "bn1_g": jnp.ones((nc[1],)), "bn1_b": jnp.zeros((nc[1],)),
            "w1": _kaiming_conv(keys[3], 3, 3, nc[1], nc[2], relu_gain),
            "bn2_g": jnp.ones((nc[2],)), "bn2_b": jnp.zeros((nc[2],)),
            "w2": _kaiming_conv(keys[4], 3, 3, nc[2], nc[2], relu_gain),
            "wt": _kaiming_conv(keys[5], 1, 1, nc[1], nc[2], relu_gain),
        },
        "bn_g": jnp.ones((nc[-1],)), "bn_b": jnp.zeros((nc[-1],)),
        # Linear: kaiming 'linear' (gain 1, fan_in), bias 0.  Stored as (in, out).
        "lin_w": jax.random.normal(keys[6], (nc[-1], num_classes), jnp.float32)
        / float(np.sqrt(nc[-1])),
        "lin_b": jnp.zeros((num_classes,), jnp.float32),
    }
    return params


def _pack_conv_groups(w4):
    """(3,3,cin,cout) -> list of (CP,CP) f32 group matrices with the 9 taps packed
    into cin-wide contraction slots (row j*cin + c = channel c of the j-th tap)."""
    _, _, cin, cout = w4.shape
    w_np = np.asarray(w4, np.float32)
    tpg = CP // cin
    ngrp = -(-9 // tpg)
    mats = []
    for gidx in range(ngrp):
        m = np.zeros((CP, CP), np.float32)
        for j in range(tpg):
            t = gidx * tpg + j
            if t >= 9:
                break
            m[j * cin:(j + 1) * cin, :cout] = w_np[t // 3, t % 3]
        mats.append(m)
    return mats


def _tap_masks(n, h, w, cin):
    """(9, n*h*w, CP) bf16 validity masks, already placed in each tap's lane slot."""
    m = n * h * w
    tpg = CP // cin
    out = np.zeros((9, m, CP), np.float32)
    row = np.arange(m)
    hh = (row // w) % h
    ww = row % w
    for t in range(9):
        kh, kw = t // 3, t % 3
        valid = ((hh + kh - 1 >= 0) & (hh + kh - 1 < h) &
                 (ww + kw - 1 >= 0) & (ww + kw - 1 < w)).astype(np.float32)
        j = t % tpg
        out[t, :, j * cin:(j + 1) * cin] = valid[:, None]
    return jnp.asarray(out, jnp.bfloat16)


def _subsample_matrix(n, h, w):
    """0/1 row-mixing matrix selecting (2i, 2j) rows: stride-2 subsample via MXU."""
    ho, wo = h // 2, w // 2
    s = np.zeros((n * ho * wo, n * h * w), np.float32)
    for b in range(n):
        for i in range(ho):
            for j in range(wo):
                s[b * ho * wo + i * wo + j, b * h * w + (2 * i) * w + 2 * j] = 1.0
    return jnp.asarray(s, jnp.bfloat16)


def _avgpool2_matrix(n, h, w):
    """Row-mixing matrix implementing AvgPool2d(2) on row-flattened NHWC (bf16, exact)."""
    ho, wo = h // 2, w // 2
    p = np.zeros((n * ho * wo, n * h * w), np.float32)
    for b in range(n):
        for i in range(ho):
            for j in range(wo):
                for di in range(2):
                    for dj in range(2):
                        p[b * ho * wo + i * wo + j,
                          b * h * w + (2 * i + di) * w + (2 * j + dj)] = 0.25
    return jnp.asarray(p, jnp.bfloat16)


def _meanpool_matrix(n, hw):
    """Row-mixing matrix for the global spatial mean; rows padded up to 8 (bf16)."""
    q = np.zeros((_rup(n, 8), n * hw), np.float32)
    for b in range(n):
        q[b, b * hw:(b + 1) * hw] = 1.0 / hw
    return jnp.asarray(q, jnp.bfloat16)


def _pad_row(vec, fill=0.0):
    v = jnp.full((CP,), fill, jnp.float32)
    return v.at[: vec.shape[0]].set(jnp.asarray(vec, jnp.float32))


def prepare_params(params, input_shape, means=(0.0, 0.0, 0.0), stds=(1.0, 1.0, 1.0)):
    """One-time packing (outside the hot path): tap-packed bf16 conv weights,
    lane-padded bf16 1x1/linear weights, packed f32 BN rows, bf16 row-mixing
    matrices, and the precomputed per-tap validity masks."""
    n, _, h, w = input_shape
    assert h % 4 == 0 and w % 4 == 0
    h1, w1 = h // 2, w // 2
    h2, w2 = h1 // 2, w1 // 2
    p = params

    conv_ws = [p["head_w"], p["b1"]["w1"], p["b1"]["w2"], p["b2"]["w1"], p["b2"]["w2"]]
    groups = []
    for w4 in conv_ws:
        groups.extend(_pack_conv_groups(w4))
    assert len(groups) == _NUM_GRPS
    cwp = jnp.asarray(np.stack(groups), jnp.bfloat16)              # (10, CP, CP)

    ci_t, co_t = p["b2"]["wt"].shape[2], p["b2"]["wt"].shape[3]
    wt = (jnp.zeros((CP, CP), jnp.float32)
          .at[:ci_t, :co_t].set(p["b2"]["wt"][0, 0])).astype(jnp.bfloat16)
    cin_l, ncls = p["lin_w"].shape
    wlin = (jnp.zeros((CP, CP), jnp.float32)
            .at[:cin_l, :ncls].set(p["lin_w"])).astype(jnp.bfloat16)

    # NOTE: beta/bias/mean rows MUST be zero-padded (and 1/std one-padded) so padded
    # channels stay exactly 0 through standardize/BN/ReLU and the residual adds.
    rows = [
        _pad_row(p["b1"]["bn1_g"], 1.0), _pad_row(p["b1"]["bn1_b"]),
        _pad_row(p["b1"]["bn2_g"], 1.0), _pad_row(p["b1"]["bn2_b"]),
        _pad_row(p["b2"]["bn1_g"], 1.0), _pad_row(p["b2"]["bn1_b"]),
        _pad_row(p["b2"]["bn2_g"], 1.0), _pad_row(p["b2"]["bn2_b"]),
        _pad_row(p["bn_g"], 1.0), _pad_row(p["bn_b"]),
        _pad_row(p["lin_b"]),
        _pad_row(jnp.asarray(means, jnp.float32)),
        _pad_row(1.0 / jnp.asarray(stds, jnp.float32), 1.0),
        jnp.zeros((CP,), jnp.float32), jnp.zeros((CP,), jnp.float32),
        jnp.zeros((CP,), jnp.float32),
    ]
    bnp = jnp.stack(rows)  # (16, CP) f32

    return {
        "cwp": cwp, "wt": wt, "wlin": wlin, "bnp": bnp,
        "s0": _subsample_matrix(n, h, w),       # (n*h1*w1, n*h*w)  head stride-2
        "s2": _subsample_matrix(n, h1, w1),     # (n*h2*w2, n*h1*w1) block2 stride-2
        "p2": _avgpool2_matrix(n, h1, w1),      # AvgPool2d(2) on the transition skip
        "pm": _meanpool_matrix(n, h2 * w2),     # global spatial mean
        "m0": _tap_masks(n, h, w, 3),           # head-conv tap masks   (9, n*h*w,  CP)
        "m1": _tap_masks(n, h1, w1, 16),        # block convs 1-3 masks (9, n*h1*w1, CP)
        "m2": _tap_masks(n, h2, w2, 32),        # block-2 conv2 masks   (9, n*h2*w2, CP)
    }


# ----------------------------- pure-JAX reference (sanity check) --------------

def _ref_conv(x, w4, stride, pad):
    return jax.lax.conv_general_dilated(
        x.astype(jnp.bfloat16), w4.astype(jnp.bfloat16),
        window_strides=(stride, stride), padding=[(pad, pad), (pad, pad)],
        dimension_numbers=("NHWC", "HWIO", "NHWC"),
        preferred_element_type=jnp.float32)


def _ref_bn_relu(x, g, b, eps=1e-5):
    mean = jnp.mean(x, axis=(0, 1, 2), keepdims=True)
    var = jnp.mean((x - mean) ** 2, axis=(0, 1, 2), keepdims=True)
    return jnp.maximum((x - mean) * jax.lax.rsqrt(var + eps) * g + b, 0.0)


def reference_forward(x_nchw, params, means=(0.0, 0.0, 0.0), stds=(1.0, 1.0, 1.0)):
    x = jnp.transpose(x_nchw, (0, 2, 3, 1)).astype(jnp.float32)
    x = (x - jnp.asarray(means, jnp.float32)) / jnp.asarray(stds, jnp.float32)
    x = _ref_conv(x, params["head_w"], 2, 1)
    b1 = params["b1"]
    skip = x
    t = _ref_bn_relu(x, b1["bn1_g"], b1["bn1_b"])
    t = _ref_conv(t, b1["w1"], 1, 1)
    t = _ref_bn_relu(t, b1["bn2_g"], b1["bn2_b"])
    x = _ref_conv(t, b1["w2"], 1, 1) + skip
    b2 = params["b2"]
    a = _ref_bn_relu(x, b2["bn1_g"], b2["bn1_b"])
    t = _ref_conv(a, b2["w1"], 2, 1)
    t = _ref_bn_relu(t, b2["bn2_g"], b2["bn2_b"])
    t = _ref_conv(t, b2["w2"], 1, 1)
    n, h, w, c = a.shape
    pool = a.reshape(n, h // 2, 2, w // 2, 2, c).mean(axis=(2, 4))
    x = t + _ref_conv(pool, b2["wt"], 1, 0)
    x = _ref_bn_relu(x, params["bn_g"], params["bn_b"])
    feat = jnp.mean(x, axis=(1, 2))
    # Dropout(p=0.0) is the identity.
    return (jnp.dot(feat.astype(jnp.bfloat16), params["lin_w"].astype(jnp.bfloat16),
                    preferred_element_type=jnp.float32) + params["lin_b"])


# ----------------------------- main -------------------------------------------

if __name__ == "__main__":
    key = jax.random.PRNGKey(0)
    k_x, k_p = jax.random.split(key)
    x = jax.random.normal(k_x, (2, 3, 16, 16), jnp.float32)  # NCHW, like PyTorch
    params = init_params(k_p, num_classes=10, num_blocks=(1, 1), width_factor=1)
    prep = prepare_params(params, x.shape)  # one-time weight packing / padding

    fwd = jax.jit(resnet_v2_forward, static_argnames=("num_classes",))
    out = fwd(x, prep, num_classes=10)
    jax.block_until_ready(out)

    assert out.shape == (2, 10), out.shape
    assert bool(jnp.all(jnp.isfinite(out)))

    # sanity check against a pure-JAX (XLA) reference of the same math
    ref = jax.jit(reference_forward)(x, params)
    diff = float(jnp.max(jnp.abs(out - ref)))
    assert diff < 1e-1, f"mismatch vs pure-JAX reference: max|diff|={diff}"

    print("KERNEL_OK")
</pallas_src>

<mosaic_0001>
module attributes {stable_mosaic.version = 11 : i64} {
  func.func @_resnet_fwd_kernel(%arg0: memref<512x128xf32, #tpu.memory_space<vmem>>, %arg1: memref<10x128x128xbf16, #tpu.memory_space<vmem>>, %arg2: memref<128x128xbf16, #tpu.memory_space<vmem>>, %arg3: memref<128x128xbf16, #tpu.memory_space<vmem>>, %arg4: memref<16x128xf32, #tpu.memory_space<vmem>>, %arg5: memref<128x512xbf16, #tpu.memory_space<vmem>>, %arg6: memref<32x128xbf16, #tpu.memory_space<vmem>>, %arg7: memref<32x128xbf16, #tpu.memory_space<vmem>>, %arg8: memref<8x32xbf16, #tpu.memory_space<vmem>>, %arg9: memref<9x512x128xbf16, #tpu.memory_space<vmem>>, %arg10: memref<9x128x128xbf16, #tpu.memory_space<vmem>>, %arg11: memref<9x32x128xbf16, #tpu.memory_space<vmem>>, %arg12: memref<8x128xf32, #tpu.memory_space<vmem>>) attributes {dimension_semantics = [], scalar_prefetch = 0 : i64, scratch_operands = 0 : i64, tpu.core_type = #tpu.core_type<tc>} {
    %c0 = arith.constant 0 : index
    %c0_0 = arith.constant 0 : index
    %0 = vector.load %arg0[%c0, %c0_0] : memref<512x128xf32, #tpu.memory_space<vmem>>, vector<512x128xf32>
    %c11 = arith.constant 11 : index
    %c0_1 = arith.constant 0 : index
    %1 = vector.load %arg4[%c11, %c0_1] : memref<16x128xf32, #tpu.memory_space<vmem>>, vector<1x128xf32>
    %2 = vector.broadcast %1 : vector<1x128xf32> to vector<512x128xf32>
    %3 = arith.subf %0, %2 : vector<512x128xf32>
    %c12 = arith.constant 12 : index
    %c0_2 = arith.constant 0 : index
    %4 = vector.load %arg4[%c12, %c0_2] : memref<16x128xf32, #tpu.memory_space<vmem>>, vector<1x128xf32>
    %5 = vector.broadcast %4 : vector<1x128xf32> to vector<512x128xf32>
    %6 = arith.mulf %3, %5 : vector<512x128xf32>
    %c0_3 = arith.constant 0 : index
    %c0_4 = arith.constant 0 : index
    %7 = vector.load %arg5[%c0_3, %c0_4] : memref<128x512xbf16, #tpu.memory_space<vmem>>, vector<128x512xbf16>
    %c1_i32 = arith.constant 1 : i32
    %8 = tpu.dynamic_rotate %6 by %c1_i32 dim 0 : vector<512x128xf32>, i32 -> vector<512x128xf32>
    %c511_i32 = arith.constant 511 : i32
    %9 = tpu.dynamic_rotate %6 by %c511_i32 dim 0 : vector<512x128xf32>, i32 -> vector<512x128xf32>
    %c16_i32 = arith.constant 16 : i32
    %10 = tpu.dynamic_rotate %8 by %c16_i32 dim 0 : vector<512x128xf32>, i32 -> vector<512x128xf32>
    %c0_5 = arith.constant 0 : index
    %c0_6 = arith.constant 0 : index
    %c0_7 = arith.constant 0 : index
    %11 = vector.load %arg9[%c0_5, %c0_6, %c0_7] : memref<9x512x128xbf16, #tpu.memory_space<vmem>>, vector<1x512x128xbf16>
    %12 = vector.shape_cast %11 : vector<1x512x128xbf16> to vector<512x128xbf16>
    %13 = arith.extf %12 : vector<512x128xbf16> to vector<512x128xf32>
    %14 = arith.mulf %10, %13 : vector<512x128xf32>
    %c16_i32_8 = arith.constant 16 : i32
    %15 = tpu.dynamic_rotate %6 by %c16_i32_8 dim 0 : vector<512x128xf32>, i32 -> vector<512x128xf32>
    %c3_i32 = arith.constant 3 : i32
    %16 = tpu.dynamic_rotate %15 by %c3_i32 dim 1 : vector<512x128xf32>, i32 -> vector<512x128xf32>
    %c1 = arith.constant 1 : index
    %c0_9 = arith.constant 0 : index
    %c0_10 = arith.constant 0 : index
    %17 = vector.load %arg9[%c1, %c0_9, %c0_10] : memref<9x512x128xbf16, #tpu.memory_space<vmem>>, vector<1x512x128xbf16>
    %18 = vector.shape_cast %17 : vector<1x512x128xbf16> to vector<512x128xbf16>
    %19 = arith.extf %18 : vector<512x128xbf16> to vector<512x128xf32>
    %20 = arith.mulf %16, %19 : vector<512x128xf32>
    %21 = arith.addf %14, %20 : vector<512x128xf32>
    %c16_i32_11 = arith.constant 16 : i32
    %22 = tpu.dynamic_rotate %9 by %c16_i32_11 dim 0 : vector<512x128xf32>, i32 -> vector<512x128xf32>
    %c6_i32 = arith.constant 6 : i32
    %23 = tpu.dynamic_rotate %22 by %c6_i32 dim 1 : vector<512x128xf32>, i32 -> vector<512x128xf32>
    %c2 = arith.constant 2 : index
    %c0_12 = arith.constant 0 : index
    %c0_13 = arith.constant 0 : index
    %24 = vector.load %arg9[%c2, %c0_12, %c0_13] : memref<9x512x128xbf16, #tpu.memory_space<vmem>>, vector<1x512x128xbf16>
    %25 = vector.shape_cast %24 : vector<1x512x128xbf16> to vector<512x128xbf16>
    %26 = arith.extf %25 : vector<512x128xbf16> to vector<512x128xf32>
    %27 = arith.mulf %23, %26 : vector<512x128xf32>
    %28 = arith.addf %21, %27 : vector<512x128xf32>
    %c9_i32 = arith.constant 9 : i32
    %29 = tpu.dynamic_rotate %8 by %c9_i32 dim 1 : vector<512x128xf32>, i32 -> vector<512x128xf32>
    %c3 = arith.constant 3 : index
    %c0_14 = arith.constant 0 : index
    %c0_15 = arith.constant 0 : index
    %30 = vector.load %arg9[%c3, %c0_14, %c0_15] : memref<9x512x128xbf16, #tpu.memory_space<vmem>>, vector<1x512x128xbf16>
    %31 = vector.shape_cast %30 : vector<1x512x128xbf16> to vector<512x128xbf16>
    %32 = arith.extf %31 : vector<512x128xbf16> to vector<512x128xf32>
    %33 = arith.mulf %29, %32 : vector<512x128xf32>
    %34 = arith.addf %28, %33 : vector<512x128xf32>
    %c12_i32 = arith.constant 12 : i32
    %35 = tpu.dynamic_rotate %6 by %c12_i32 dim 1 : vector<512x128xf32>, i32 -> vector<512x128xf32>
    %c4 = arith.constant 4 : index
    %c0_16 = arith.constant 0 : index
    %c0_17 = arith.constant 0 : index
    %36 = vector.load %arg9[%c4, %c0_16, %c0_17] : memref<9x512x128xbf16, #tpu.memory_space<vmem>>, vector<1x512x128xbf16>
    %37 = vector.shape_cast %36 : vector<1x512x128xbf16> to vector<512x128xbf16>
    %38 = arith.extf %37 : vector<512x128xbf16> to vector<512x128xf32>
    %39 = arith.mulf %35, %38 : vector<512x128xf32>
    %40 = arith.addf %34, %39 : vector<512x128xf32>
    %c15_i32 = arith.constant 15 : i32
    %41 = tpu.dynamic_rotate %9 by %c15_i32 dim 1 : vector<512x128xf32>, i32 -> vector<512x128xf32>
    %c5 = arith.constant 5 : index
    %c0_18 = arith.constant 0 : index
    %c0_19 = arith.constant 0 : index
    %42 = vector.load %arg9[%c5, %c0_18, %c0_19] : memref<9x512x128xbf16, #tpu.memory_space<vmem>>, vector<1x512x128xbf16>
    %43 = vector.shape_cast %42 : vector<1x512x128xbf16> to vector<512x128xbf16>
    %44 = arith.extf %43 : vector<512x128xbf16> to vector<512x128xf32>
    %45 = arith.mulf %41, %44 : vector<512x128xf32>
    %46 = arith.addf %40, %45 : vector<512x128xf32>
    %c496_i32 = arith.constant 496 : i32
    %47 = tpu.dynamic_rotate %8 by %c496_i32 dim 0 : vector<512x128xf32>, i32 -> vector<512x128xf32>
    %c18_i32 = arith.constant 18 : i32
    %48 = tpu.dynamic_rotate %47 by %c18_i32 dim 1 : vector<512x128xf32>, i32 -> vector<512x128xf32>
    %c6 = arith.constant 6 : index
    %c0_20 = arith.constant 0 : index
    %c0_21 = arith.constant 0 : index
    %49 = vector.load %arg9[%c6, %c0_20, %c0_21] : memref<9x512x128xbf16, #tpu.memory_space<vmem>>, vector<1x512x128xbf16>
    %50 = vector.shape_cast %49 : vector<1x512x128xbf16> to vector<512x128xbf16>
    %51 = arith.extf %50 : vector<512x128xbf16> to vector<512x128xf32>
    %52 = arith.mulf %48, %51 : vector<512x128xf32>
    %53 = arith.addf %46, %52 : vector<512x128xf32>
    %c496_i32_22 = arith.constant 496 : i32
    %54 = tpu.dynamic_rotate %6 by %c496_i32_22 dim 0 : vector<512x128xf32>, i32 -> vector<512x128xf32>
    %c21_i32 = arith.constant 21 : i32
    %55 = tpu.dynamic_rotate %54 by %c21_i32 dim 1 : vector<512x128xf32>, i32 -> vector<512x128xf32>
    %c7 = arith.constant 7 : index
    %c0_23 = arith.constant 0 : index
    %c0_24 = arith.constant 0 : index
    %56 = vector.load %arg9[%c7, %c0_23, %c0_24] : memref<9x512x128xbf16, #tpu.memory_space<vmem>>, vector<1x512x128xbf16>
    %57 = vector.shape_cast %56 : vector<1x512x128xbf16> to vector<512x128xbf16>
    %58 = arith.extf %57 : vector<512x128xbf16> to vector<512x128xf32>
    %59 = arith.mulf %55, %58 : vector<512x128xf32>
    %60 = arith.addf %53, %59 : vector<512x128xf32>
    %c496_i32_25 = arith.constant 496 : i32
    %61 = tpu.dynamic_rotate %9 by %c496_i32_25 dim 0 : vector<512x128xf32>, i32 -> vector<512x128xf32>
    %c24_i32 = arith.constant 24 : i32
    %62 = tpu.dynamic_rotate %61 by %c24_i32 dim 1 : vector<512x128xf32>, i32 -> vector<512x128xf32>
    %c8 = arith.constant 8 : index
    %c0_26 = arith.constant 0 : index
    %c0_27 = arith.constant 0 : index
    %63 = vector.load %arg9[%c8, %c0_26, %c0_27] : memref<9x512x128xbf16, #tpu.memory_space<vmem>>, vector<1x512x128xbf16>
    %64 = vector.shape_cast %63 : vector<1x512x128xbf16> to vector<512x128xbf16>
    %65 = arith.extf %64 : vector<512x128xbf16> to vector<512x128xf32>
    %66 = arith.mulf %62, %65 : vector<512x128xf32>
    %67 = arith.addf %60, %66 : vector<512x128xf32>
    %68 = arith.truncf %67 : vector<512x128xf32> to vector<512x128xbf16>
    %cst = arith.constant dense<0.000000e+00> : vector<128x128xf32>
    %69 = tpu.matmul %7, %68, %cst {dimension_numbers = #tpu.dot_dimension_numbers<[1], [0], [0], [1], [0, 0, 1, 1], [], []>} : vector<128x512xbf16>, vector<512x128xbf16>, vector<128x128xf32> -> vector<128x128xf32>
    %70 = arith.truncf %69 : vector<128x128xf32> to vector<128x128xbf16>
    %c0_28 = arith.constant 0 : index
    %c0_29 = arith.constant 0 : index
    %c0_30 = arith.constant 0 : index
    %71 = vector.load %arg1[%c0_28, %c0_29, %c0_30] : memref<10x128x128xbf16, #tpu.memory_space<vmem>>, vector<1x128x128xbf16>
    %72 = vector.shape_cast %71 : vector<1x128x128xbf16> to vector<128x128xbf16>
    %cst_31 = arith.constant dense<0.000000e+00> : vector<128x128xf32>
    %73 = tpu.matmul %70, %72, %cst_31 {dimension_numbers = #tpu.dot_dimension_numbers<[1], [0], [0], [1], [0, 0, 1, 1], [], []>} : vector<128x128xbf16>, vector<128x128xbf16>, vector<128x128xf32> -> vector<128x128xf32>
    %c0_32 = arith.constant 0 : index
    %c0_33 = arith.constant 0 : index
    %74 = vector.load %arg4[%c0_32, %c0_33] : memref<16x128xf32, #tpu.memory_space<vmem>>, vector<1x128xf32>
    %c1_34 = arith.constant 1 : index
    %c0_35 = arith.constant 0 : index
    %75 = vector.load %arg4[%c1_34, %c0_35] : memref<16x128xf32, #tpu.memory_space<vmem>>, vector<1x128xf32>
    %cst_36 = arith.constant dense<0.000000e+00> : vector<128xf32>
    %76 = vector.multi_reduction <add>, %73, %cst_36 [0] : vector<128x128xf32> to vector<128xf32>
    %77 = vector.shape_cast %76 : vector<128xf32> to vector<1x128xf32>
    %78 = arith.mulf %73, %73 : vector<128x128xf32>
    %cst_37 = arith.constant dense<0.000000e+00> : vector<128xf32>
    %79 = vector.multi_reduction <add>, %78, %cst_37 [0] : vector<128x128xf32> to vector<128xf32>
    %80 = vector.shape_cast %79 : vector<128xf32> to vector<1x128xf32>
    %cst_38 = arith.constant 7.812500e-03 : f32
    %81 = vector.broadcast %cst_38 : f32 to vector<1x128xf32>
    %82 = arith.mulf %77, %81 : vector<1x128xf32>
    %cst_39 = arith.constant 7.812500e-03 : f32
    %83 = vector.broadcast %cst_39 : f32 to vector<1x128xf32>
    %84 = arith.mulf %80, %83 : vector<1x128xf32>
    %85 = arith.mulf %82, %82 : vector<1x128xf32>
    %86 = arith.subf %84, %85 : vector<1x128xf32>
    %cst_40 = arith.constant 0.000000e+00 : f32
    %87 = vector.broadcast %cst_40 : f32 to vector<1x128xf32>
    %88 = arith.maximumf %86, %87 : vector<1x128xf32>
    %cst_41 = arith.constant 9.99999974E-6 : f32
    %89 = vector.broadcast %cst_41 : f32 to vector<1x128xf32>
    %90 = arith.addf %88, %89 : vector<1x128xf32>
    %91 = math.rsqrt %90 : vector<1x128xf32>
    %92 = arith.mulf %91, %74 : vector<1x128xf32>
    %93 = vector.broadcast %82 : vector<1x128xf32> to vector<128x128xf32>
    %94 = arith.subf %73, %93 : vector<128x128xf32>
    %95 = vector.broadcast %92 : vector<1x128xf32> to vector<128x128xf32>
    %96 = arith.mulf %94, %95 : vector<128x128xf32>
    %97 = vector.broadcast %75 : vector<1x128xf32> to vector<128x128xf32>
    %98 = arith.addf %96, %97 : vector<128x128xf32>
    %cst_42 = arith.constant 0.000000e+00 : f32
    %99 = vector.broadcast %cst_42 : f32 to vector<128x128xf32>
    %100 = arith.maximumf %98, %99 : vector<128x128xf32>
    %c1_i32_43 = arith.constant 1 : i32
    %101 = tpu.dynamic_rotate %100 by %c1_i32_43 dim 0 : vector<128x128xf32>, i32 -> vector<128x128xf32>
    %c127_i32 = arith.constant 127 : i32
    %102 = tpu.dynamic_rotate %100 by %c127_i32 dim 0 : vector<128x128xf32>, i32 -> vector<128x128xf32>
    %c8_i32 = arith.constant 8 : i32
    %103 = tpu.dynamic_rotate %101 by %c8_i32 dim 0 : vector<128x128xf32>, i32 -> vector<128x128xf32>
    %c0_44 = arith.constant 0 : index
    %c0_45 = arith.constant 0 : index
    %c0_46 = arith.constant 0 : index
    %104 = vector.load %arg10[%c0_44, %c0_45, %c0_46] : memref<9x128x128xbf16, #tpu.memory_space<vmem>>, vector<1x128x128xbf16>
    %105 = vector.shape_cast %104 : vector<1x128x128xbf16> to vector<128x128xbf16>
    %106 = arith.extf %105 : vector<128x128xbf16> to vector<128x128xf32>
    %107 = arith.mulf %103, %106 : vector<128x128xf32>
    %c8_i32_47 = arith.constant 8 : i32
    %108 = tpu.dynamic_rotate %100 by %c8_i32_47 dim 0 : vector<128x128xf32>, i32 -> vector<128x128xf32>
    %c16_i32_48 = arith.constant 16 : i32
    %109 = tpu.dynamic_rotate %108 by %c16_i32_48 dim 1 : vector<128x128xf32>, i32 -> vector<128x128xf32>
    %c1_49 = arith.constant 1 : index
    %c0_50 = arith.constant 0 : index
    %c0_51 = arith.constant 0 : index
    %110 = vector.load %arg10[%c1_49, %c0_50, %c0_51] : memref<9x128x128xbf16, #tpu.memory_space<vmem>>, vector<1x128x128xbf16>
    %111 = vector.shape_cast %110 : vector<1x128x128xbf16> to vector<128x128xbf16>
    %112 = arith.extf %111 : vector<128x128xbf16> to vector<128x128xf32>
    %113 = arith.mulf %109, %112 : vector<128x128xf32>
    %114 = arith.addf %107, %113 : vector<128x128xf32>
    %c8_i32_52 = arith.constant 8 : i32
    %115 = tpu.dynamic_rotate %102 by %c8_i32_52 dim 0 : vector<128x128xf32>, i32 -> vector<128x128xf32>
    %c32_i32 = arith.constant 32 : i32
    %116 = tpu.dynamic_rotate %115 by %c32_i32 dim 1 : vector<128x128xf32>, i32 -> vector<128x128xf32>
    %c2_53 = arith.constant 2 : index
    %c0_54 = arith.constant 0 : index
    %c0_55 = arith.constant 0 : index
    %117 = vector.load %arg10[%c2_53, %c0_54, %c0_55] : memref<9x128x128xbf16, #tpu.memory_space<vmem>>, vector<1x128x128xbf16>
    %118 = vector.shape_cast %117 : vector<1x128x128xbf16> to vector<128x128xbf16>
    %119 = arith.extf %118 : vector<128x128xbf16> to vector<128x128xf32>
    %120 = arith.mulf %116, %119 : vector<128x128xf32>
    %121 = arith.addf %114, %120 : vector<128x128xf32>
    %c48_i32 = arith.constant 48 : i32
    %122 = tpu.dynamic_rotate %101 by %c48_i32 dim 1 : vector<128x128xf32>, i32 -> vector<128x128xf32>
    %c3_56 = arith.constant 3 : index
    %c0_57 = arith.constant 0 : index
    %c0_58 = arith.constant 0 : index
    %123 = vector.load %arg10[%c3_56, %c0_57, %c0_58] : memref<9x128x128xbf16, #tpu.memory_space<vmem>>, vector<1x128x128xbf16>
    %124 = vector.shape_cast %123 : vector<1x128x128xbf16> to vector<128x128xbf16>
    %125 = arith.extf %124 : vector<128x128xbf16> to vector<128x128xf32>
    %126 = arith.mulf %122, %125 : vector<128x128xf32>
    %127 = arith.addf %121, %126 : vector<128x128xf32>
    %c64_i32 = arith.constant 64 : i32
    %128 = tpu.dynamic_rotate %100 by %c64_i32 dim 1 : vector<128x128xf32>, i32 -> vector<128x128xf32>
    %c4_59 = arith.constant 4 : index
    %c0_60 = arith.constant 0 : index
    %c0_61 = arith.constant 0 : index
    %129 = vector.load %arg10[%c4_59, %c0_60, %c0_61] : memref<9x128x128xbf16, #tpu.memory_space<vmem>>, vector<1x128x128xbf16>
    %130 = vector.shape_cast %129 : vector<1x128x128xbf16> to vector<128x128xbf16>
    %131 = arith.extf %130 : vector<128x128xbf16> to vector<128x128xf32>
    %132 = arith.mulf %128, %131 : vector<128x128xf32>
    %133 = arith.addf %127, %132 : vector<128x128xf32>
    %c80_i32 = arith.constant 80 : i32
    %134 = tpu.dynamic_rotate %102 by %c80_i32 dim 1 : vector<128x128xf32>, i32 -> vector<128x128xf32>
    %c5_62 = arith.constant 5 : index
    %c0_63 = arith.constant 0 : index
    %c0_64 = arith.constant 0 : index
    %135 = vector.load %arg10[%c5_62, %c0_63, %c0_64] : memref<9x128x128xbf16, #tpu.memory_space<vmem>>, vector<1x128x128xbf16>
    %136 = vector.shape_cast %135 : vector<1x128x128xbf16> to vector<128x128xbf16>
    %137 = arith.extf %136 : vector<128x128xbf16> to vector<128x128xf32>
    %138 = arith.mulf %134, %137 : vector<128x128xf32>
    %139 = arith.addf %133, %138 : vector<128x128xf32>
    %c120_i32 = arith.constant 120 : i32
    %140 = tpu.dynamic_rotate %101 by %c120_i32 dim 0 : vector<128x128xf32>, i32 -> vector<128x128xf32>
    %c96_i32 = arith.constant 96 : i32
    %141 = tpu.dynamic_rotate %140 by %c96_i32 dim 1 : vector<128x128xf32>, i32 -> vector<128x128xf32>
    %c6_65 = arith.constant 6 : index
    %c0_66 = arith.constant 0 : index
    %c0_67 = arith.constant 0 : index
    %142 = vector.load %arg10[%c6_65, %c0_66, %c0_67] : memref<9x128x128xbf16, #tpu.memory_space<vmem>>, vector<1x128x128xbf16>
    %143 = vector.shape_cast %142 : vector<1x128x128xbf16> to vector<128x128xbf16>
    %144 = arith.extf %143 : vector<128x128xbf16> to vector<128x128xf32>
    %145 = arith.mulf %141, %144 : vector<128x128xf32>
    %146 = arith.addf %139, %145 : vector<128x128xf32>
    %c120_i32_68 = arith.constant 120 : i32
    %147 = tpu.dynamic_rotate %100 by %c120_i32_68 dim 0 : vector<128x128xf32>, i32 -> vector<128x128xf32>
    %c112_i32 = arith.constant 112 : i32
    %148 = tpu.dynamic_rotate %147 by %c112_i32 dim 1 : vector<128x128xf32>, i32 -> vector<128x128xf32>
    %c7_69 = arith.constant 7 : index
    %c0_70 = arith.constant 0 : index
    %c0_71 = arith.constant 0 : index
    %149 = vector.load %arg10[%c7_69, %c0_70, %c0_71] : memref<9x128x128xbf16, #tpu.memory_space<vmem>>, vector<1x128x128xbf16>
    %150 = vector.shape_cast %149 : vector<1x128x128xbf16> to vector<128x128xbf16>
    %151 = arith.extf %150 : vector<128x128xbf16> to vector<128x128xf32>
    %152 = arith.mulf %148, %151 : vector<128x128xf32>
    %153 = arith.addf %146, %152 : vector<128x128xf32>
    %c120_i32_72 = arith.constant 120 : i32
    %154 = tpu.dynamic_rotate %102 by %c120_i32_72 dim 0 : vector<128x128xf32>, i32 -> vector<128x128xf32>
    %c8_73 = arith.constant 8 : index
    %c0_74 = arith.constant 0 : index
    %c0_75 = arith.constant 0 : index
    %155 = vector.load %arg10[%c8_73, %c0_74, %c0_75] : memref<9x128x128xbf16, #tpu.memory_space<vmem>>, vector<1x128x128xbf16>
    %156 = vector.shape_cast %155 : vector<1x128x128xbf16> to vector<128x128xbf16>
    %157 = arith.extf %156 : vector<128x128xbf16> to vector<128x128xf32>
    %158 = arith.mulf %154, %157 : vector<128x128xf32>
    %159 = arith.truncf %153 : vector<128x128xf32> to vector<128x128xbf16>
    %c1_76 = arith.constant 1 : index
    %c0_77 = arith.constant 0 : index
    %c0_78 = arith.constant 0 : index
    %160 = vector.load %arg1[%c1_76, %c0_77, %c0_78] : memref<10x128x128xbf16, #tpu.memory_space<vmem>>, vector<1x128x128xbf16>
    %161 = vector.shape_cast %160 : vector<1x128x128xbf16> to vector<128x128xbf16>
    %cst_79 = arith.constant dense<0.000000e+00> : vector<128x128xf32>
    %162 = tpu.matmul %159, %161, %cst_79 {dimension_numbers = #tpu.dot_dimension_numbers<[1], [0], [0], [1], [0, 0, 1, 1], [], []>} : vector<128x128xbf16>, vector<128x128xbf16>, vector<128x128xf32> -> vector<128x128xf32>
    %163 = arith.truncf %158 : vector<128x128xf32> to vector<128x128xbf16>
    %c2_80 = arith.constant 2 : index
    %c0_81 = arith.constant 0 : index
    %c0_82 = arith.constant 0 : index
    %164 = vector.load %arg1[%c2_80, %c0_81, %c0_82] : memref<10x128x128xbf16, #tpu.memory_space<vmem>>, vector<1x128x128xbf16>
    %165 = vector.shape_cast %164 : vector<1x128x128xbf16> to vector<128x128xbf16>
    %cst_83 = arith.constant dense<0.000000e+00> : vector<128x128xf32>
    %166 = tpu.matmul %163, %165, %cst_83 {dimension_numbers = #tpu.dot_dimension_numbers<[1], [0], [0], [1], [0, 0, 1, 1], [], []>} : vector<128x128xbf16>, vector<128x128xbf16>, vector<128x128xf32> -> vector<128x128xf32>
    %167 = arith.addf %162, %166 : vector<128x128xf32>
    %c2_84 = arith.constant 2 : index
    %c0_85 = arith.constant 0 : index
    %168 = vector.load %arg4[%c2_84, %c0_85] : memref<16x128xf32, #tpu.memory_space<vmem>>, vector<1x128xf32>
    %c3_86 = arith.constant 3 : index
    %c0_87 = arith.constant 0 : index
    %169 = vector.load %arg4[%c3_86, %c0_87] : memref<16x128xf32, #tpu.memory_space<vmem>>, vector<1x128xf32>
    %cst_88 = arith.constant dense<0.000000e+00> : vector<128xf32>
    %170 = vector.multi_reduction <add>, %167, %cst_88 [0] : vector<128x128xf32> to vector<128xf32>
    %171 = vector.shape_cast %170 : vector<128xf32> to vector<1x128xf32>
    %172 = arith.mulf %167, %167 : vector<128x128xf32>
    %cst_89 = arith.constant dense<0.000000e+00> : vector<128xf32>
    %173 = vector.multi_reduction <add>, %172, %cst_89 [0] : vector<128x128xf32> to vector<128xf32>
    %174 = vector.shape_cast %173 : vector<128xf32> to vector<1x128xf32>
    %cst_90 = arith.constant 7.812500e-03 : f32
    %175 = vector.broadcast %cst_90 : f32 to vector<1x128xf32>
    %176 = arith.mulf %171, %175 : vector<1x128xf32>
    %cst_91 = arith.constant 7.812500e-03 : f32
    %177 = vector.broadcast %cst_91 : f32 to vector<1x128xf32>
    %178 = arith.mulf %174, %177 : vector<1x128xf32>
    %179 = arith.mulf %176, %176 : vector<1x128xf32>
    %180 = arith.subf %178, %179 : vector<1x128xf32>
    %cst_92 = arith.constant 0.000000e+00 : f32
    %181 = vector.broadcast %cst_92 : f32 to vector<1x128xf32>
    %182 = arith.maximumf %180, %181 : vector<1x128xf32>
    %cst_93 = arith.constant 9.99999974E-6 : f32
    %183 = vector.broadcast %cst_93 : f32 to vector<1x128xf32>
    %184 = arith.addf %182, %183 : vector<1x128xf32>
    %185 = math.rsqrt %184 : vector<1x128xf32>
    %186 = arith.mulf %185, %168 : vector<1x128xf32>
    %187 = vector.broadcast %176 : vector<1x128xf32> to vector<128x128xf32>
    %188 = arith.subf %167, %187 : vector<128x128xf32>
    %189 = vector.broadcast %186 : vector<1x128xf32> to vector<128x128xf32>
    %190 = arith.mulf %188, %189 : vector<128x128xf32>
    %191 = vector.broadcast %169 : vector<1x128xf32> to vector<128x128xf32>
    %192 = arith.addf %190, %191 : vector<128x128xf32>
    %cst_94 = arith.constant 0.000000e+00 : f32
    %193 = vector.broadcast %cst_94 : f32 to vector<128x128xf32>
    %194 = arith.maximumf %192, %193 : vector<128x128xf32>
    %c1_i32_95 = arith.constant 1 : i32
    %195 = tpu.dynamic_rotate %194 by %c1_i32_95 dim 0 : vector<128x128xf32>, i32 -> vector<128x128xf32>
    %c127_i32_96 = arith.constant 127 : i32
    %196 = tpu.dynamic_rotate %194 by %c127_i32_96 dim 0 : vector<128x128xf32>, i32 -> vector<128x128xf32>
    %c8_i32_97 = arith.constant 8 : i32
    %197 = tpu.dynamic_rotate %195 by %c8_i32_97 dim 0 : vector<128x128xf32>, i32 -> vector<128x128xf32>
    %c0_98 = arith.constant 0 : index
    %c0_99 = arith.constant 0 : index
    %c0_100 = arith.constant 0 : index
    %198 = vector.load %arg10[%c0_98, %c0_99, %c0_100] : memref<9x128x128xbf16, #tpu.memory_space<vmem>>, vector<1x128x128xbf16>
    %199 = vector.shape_cast %198 : vector<1x128x128xbf16> to vector<128x128xbf16>
    %200 = arith.extf %199 : vector<128x128xbf16> to vector<128x128xf32>
    %201 = arith.mulf %197, %200 : vector<128x128xf32>
    %c8_i32_101 = arith.constant 8 : i32
    %202 = tpu.dynamic_rotate %194 by %c8_i32_101 dim 0 : vector<128x128xf32>, i32 -> vector<128x128xf32>
    %c16_i32_102 = arith.constant 16 : i32
    %203 = tpu.dynamic_rotate %202 by %c16_i32_102 dim 1 : vector<128x128xf32>, i32 -> vector<128x128xf32>
    %c1_103 = arith.constant 1 : index
    %c0_104 = arith.constant 0 : index
    %c0_105 = arith.constant 0 : index
    %204 = vector.load %arg10[%c1_103, %c0_104, %c0_105] : memref<9x128x128xbf16, #tpu.memory_space<vmem>>, vector<1x128x128xbf16>
    %205 = vector.shape_cast %204 : vector<1x128x128xbf16> to vector<128x128xbf16>
    %206 = arith.extf %205 : vector<128x128xbf16> to vector<128x128xf32>
    %207 = arith.mulf %203, %206 : vector<128x128xf32>
    %208 = arith.addf %201, %207 : vector<128x128xf32>
    %c8_i32_106 = arith.constant 8 : i32
    %209 = tpu.dynamic_rotate %196 by %c8_i32_106 dim 0 : vector<128x128xf32>, i32 -> vector<128x128xf32>
    %c32_i32_107 = arith.constant 32 : i32
    %210 = tpu.dynamic_rotate %209 by %c32_i32_107 dim 1 : vector<128x128xf32>, i32 -> vector<128x128xf32>
    %c2_108 = arith.constant 2 : index
    %c0_109 = arith.constant 0 : index
    %c0_110 = arith.constant 0 : index
    %211 = vector.load %arg10[%c2_108, %c0_109, %c0_110] : memref<9x128x128xbf16, #tpu.memory_space<vmem>>, vector<1x128x128xbf16>
    %212 = vector.shape_cast %211 : vector<1x128x128xbf16> to vector<128x128xbf16>
    %213 = arith.extf %212 : vector<128x128xbf16> to vector<128x128xf32>
    %214 = arith.mulf %210, %213 : vector<128x128xf32>
    %215 = arith.addf %208, %214 : vector<128x128xf32>
    %c48_i32_111 = arith.constant 48 : i32
    %216 = tpu.dynamic_rotate %195 by %c48_i32_111 dim 1 : vector<128x128xf32>, i32 -> vector<128x128xf32>
    %c3_112 = arith.constant 3 : index
    %c0_113 = arith.constant 0 : index
    %c0_114 = arith.constant 0 : index
    %217 = vector.load %arg10[%c3_112, %c0_113, %c0_114] : memref<9x128x128xbf16, #tpu.memory_space<vmem>>, vector<1x128x128xbf16>
    %218 = vector.shape_cast %217 : vector<1x128x128xbf16> to vector<128x128xbf16>
    %219 = arith.extf %218 : vector<128x128xbf16> to vector<128x128xf32>
    %220 = arith.mulf %216, %219 : vector<128x128xf32>
    %221 = arith.addf %215, %220 : vector<128x128xf32>
    %c64_i32_115 = arith.constant 64 : i32
    %222 = tpu.dynamic_rotate %194 by %c64_i32_115 dim 1 : vector<128x128xf32>, i32 -> vector<128x128xf32>
    %c4_116 = arith.constant 4 : index
    %c0_117 = arith.constant 0 : index
    %c0_118 = arith.constant 0 : index
    %223 = vector.load %arg10[%c4_116, %c0_117, %c0_118] : memref<9x128x128xbf16, #tpu.memory_space<vmem>>, vector<1x128x128xbf16>
    %224 = vector.shape_cast %223 : vector<1x128x128xbf16> to vector<128x128xbf16>
    %225 = arith.extf %224 : vector<128x128xbf16> to vector<128x128xf32>
    %226 = arith.mulf %222, %225 : vector<128x128xf32>
    %227 = arith.addf %221, %226 : vector<128x128xf32>
    %c80_i32_119 = arith.constant 80 : i32
    %228 = tpu.dynamic_rotate %196 by %c80_i32_119 dim 1 : vector<128x128xf32>, i32 -> vector<128x128xf32>
    %c5_120 = arith.constant 5 : index
    %c0_121 = arith.constant 0 : index
    %c0_122 = arith.constant 0 : index
    %229 = vector.load %arg10[%c5_120, %c0_121, %c0_122] : memref<9x128x128xbf16, #tpu.memory_space<vmem>>, vector<1x128x128xbf16>
    %230 = vector.shape_cast %229 : vector<1x128x128xbf16> to vector<128x128xbf16>
    %231 = arith.extf %230 : vector<128x128xbf16> to vector<128x128xf32>
    %232 = arith.mulf %228, %231 : vector<128x128xf32>
    %233 = arith.addf %227, %232 : vector<128x128xf32>
    %c120_i32_123 = arith.constant 120 : i32
    %234 = tpu.dynamic_rotate %195 by %c120_i32_123 dim 0 : vector<128x128xf32>, i32 -> vector<128x128xf32>
    %c96_i32_124 = arith.constant 96 : i32
    %235 = tpu.dynamic_rotate %234 by %c96_i32_124 dim 1 : vector<128x128xf32>, i32 -> vector<128x128xf32>
    %c6_125 = arith.constant 6 : index
    %c0_126 = arith.constant 0 : index
    %c0_127 = arith.constant 0 : index
    %236 = vector.load %arg10[%c6_125, %c0_126, %c0_127] : memref<9x128x128xbf16, #tpu.memory_space<vmem>>, vector<1x128x128xbf16>
    %237 = vector.shape_cast %236 : vector<1x128x128xbf16> to vector<128x128xbf16>
    %238 = arith.extf %237 : vector<128x128xbf16> to vector<128x128xf32>
    %239 = arith.mulf %235, %238 : vector<128x128xf32>
    %240 = arith.addf %233, %239 : vector<128x128xf32>
    %c120_i32_128 = arith.constant 120 : i32
    %241 = tpu.dynamic_rotate %194 by %c120_i32_128 dim 0 : vector<128x128xf32>, i32 -> vector<128x128xf32>
    %c112_i32_129 = arith.constant 112 : i32
    %242 = tpu.dynamic_rotate %241 by %c112_i32_129 dim 1 : vector<128x128xf32>, i32 -> vector<128x128xf32>
    %c7_130 = arith.constant 7 : index
    %c0_131 = arith.constant 0 : index
    %c0_132 = arith.constant 0 : index
    %243 = vector.load %arg10[%c7_130, %c0_131, %c0_132] : memref<9x128x128xbf16, #tpu.memory_space<vmem>>, vector<1x128x128xbf16>
    %244 = vector.shape_cast %243 : vector<1x128x128xbf16> to vector<128x128xbf16>
    %245 = arith.extf %244 : vector<128x128xbf16> to vector<128x128xf32>
    %246 = arith.mulf %242, %245 : vector<128x128xf32>
    %247 = arith.addf %240, %246 : vector<128x128xf32>
    %c120_i32_133 = arith.constant 120 : i32
    %248 = tpu.dynamic_rotate %196 by %c120_i32_133 dim 0 : vector<128x128xf32>, i32 -> vector<128x128xf32>
    %c8_134 = arith.constant 8 : index
    %c0_135 = arith.constant 0 : index
    %c0_136 = arith.constant 0 : index
    %249 = vector.load %arg10[%c8_134, %c0_135, %c0_136] : memref<9x128x128xbf16, #tpu.memory_space<vmem>>, vector<1x128x128xbf16>
    %250 = vector.shape_cast %249 : vector<1x128x128xbf16> to vector<128x128xbf16>
    %251 = arith.extf %250 : vector<128x128xbf16> to vector<128x128xf32>
    %252 = arith.mulf %248, %251 : vector<128x128xf32>
    %253 = arith.truncf %247 : vector<128x128xf32> to vector<128x128xbf16>
    %c3_137 = arith.constant 3 : index
    %c0_138 = arith.constant 0 : index
    %c0_139 = arith.constant 0 : index
    %254 = vector.load %arg1[%c3_137, %c0_138, %c0_139] : memref<10x128x128xbf16, #tpu.memory_space<vmem>>, vector<1x128x128xbf16>
    %255 = vector.shape_cast %254 : vector<1x128x128xbf16> to vector<128x128xbf16>
    %cst_140 = arith.constant dense<0.000000e+00> : vector<128x128xf32>
    %256 = tpu.matmul %253, %255, %cst_140 {dimension_numbers = #tpu.dot_dimension_numbers<[1], [0], [0], [1], [0, 0, 1, 1], [], []>} : vector<128x128xbf16>, vector<128x128xbf16>, vector<128x128xf32> -> vector<128x128xf32>
    %257 = arith.truncf %252 : vector<128x128xf32> to vector<128x128xbf16>
    %c4_141 = arith.constant 4 : index
    %c0_142 = arith.constant 0 : index
    %c0_143 = arith.constant 0 : index
    %258 = vector.load %arg1[%c4_141, %c0_142, %c0_143] : memref<10x128x128xbf16, #tpu.memory_space<vmem>>, vector<1x128x128xbf16>
    %259 = vector.shape_cast %258 : vector<1x128x128xbf16> to vector<128x128xbf16>
    %cst_144 = arith.constant dense<0.000000e+00> : vector<128x128xf32>
    %260 = tpu.matmul %257, %259, %cst_144 {dimension_numbers = #tpu.dot_dimension_numbers<[1], [0], [0], [1], [0, 0, 1, 1], [], []>} : vector<128x128xbf16>, vector<128x128xbf16>, vector<128x128xf32> -> vector<128x128xf32>
    %261 = arith.addf %256, %260 : vector<128x128xf32>
    %262 = arith.addf %261, %73 : vector<128x128xf32>
    %c4_145 = arith.constant 4 : index
    %c0_146 = arith.constant 0 : index
    %263 = vector.load %arg4[%c4_145, %c0_146] : memref<16x128xf32, #tpu.memory_space<vmem>>, vector<1x128xf32>
    %c5_147 = arith.constant 5 : index
    %c0_148 = arith.constant 0 : index
    %264 = vector.load %arg4[%c5_147, %c0_148] : memref<16x128xf32, #tpu.memory_space<vmem>>, vector<1x128xf32>
    %cst_149 = arith.constant dense<0.000000e+00> : vector<128xf32>
    %265 = vector.multi_reduction <add>, %262, %cst_149 [0] : vector<128x128xf32> to vector<128xf32>
    %266 = vector.shape_cast %265 : vector<128xf32> to vector<1x128xf32>
    %267 = arith.mulf %262, %262 : vector<128x128xf32>
    %cst_150 = arith.constant dense<0.000000e+00> : vector<128xf32>
    %268 = vector.multi_reduction <add>, %267, %cst_150 [0] : vector<128x128xf32> to vector<128xf32>
    %269 = vector.shape_cast %268 : vector<128xf32> to vector<1x128xf32>
    %cst_151 = arith.constant 7.812500e-03 : f32
    %270 = vector.broadcast %cst_151 : f32 to vector<1x128xf32>
    %271 = arith.mulf %266, %270 : vector<1x128xf32>
    %cst_152 = arith.constant 7.812500e-03 : f32
    %272 = vector.broadcast %cst_152 : f32 to vector<1x128xf32>
    %273 = arith.mulf %269, %272 : vector<1x128xf32>
    %274 = arith.mulf %271, %271 : vector<1x128xf32>
    %275 = arith.subf %273, %274 : vector<1x128xf32>
    %cst_153 = arith.constant 0.000000e+00 : f32
    %276 = vector.broadcast %cst_153 : f32 to vector<1x128xf32>
    %277 = arith.maximumf %275, %276 : vector<1x128xf32>
    %cst_154 = arith.constant 9.99999974E-6 : f32
    %278 = vector.broadcast %cst_154 : f32 to vector<1x128xf32>
    %279 = arith.addf %277, %278 : vector<1x128xf32>
    %280 = math.rsqrt %279 : vector<1x128xf32>
    %281 = arith.mulf %280, %263 : vector<1x128xf32>
    %282 = vector.broadcast %271 : vector<1x128xf32> to vector<128x128xf32>
    %283 = arith.subf %262, %282 : vector<128x128xf32>
    %284 = vector.broadcast %281 : vector<1x128xf32> to vector<128x128xf32>
    %285 = arith.mulf %283, %284 : vector<128x128xf32>
    %286 = vector.broadcast %264 : vector<1x128xf32> to vector<128x128xf32>
    %287 = arith.addf %285, %286 : vector<128x128xf32>
    %cst_155 = arith.constant 0.000000e+00 : f32
    %288 = vector.broadcast %cst_155 : f32 to vector<128x128xf32>
    %289 = arith.maximumf %287, %288 : vector<128x128xf32>
    %c0_156 = arith.constant 0 : index
    %c0_157 = arith.constant 0 : index
    %290 = vector.load %arg6[%c0_156, %c0_157] : memref<32x128xbf16, #tpu.memory_space<vmem>>, vector<32x128xbf16>
    %c1_i32_158 = arith.constant 1 : i32
    %291 = tpu.dynamic_rotate %289 by %c1_i32_158 dim 0 : vector<128x128xf32>, i32 -> vector<128x128xf32>
    %c127_i32_159 = arith.constant 127 : i32
    %292 = tpu.dynamic_rotate %289 by %c127_i32_159 dim 0 : vector<128x128xf32>, i32 -> vector<128x128xf32>
    %c8_i32_160 = arith.constant 8 : i32
    %293 = tpu.dynamic_rotate %291 by %c8_i32_160 dim 0 : vector<128x128xf32>, i32 -> vector<128x128xf32>
    %c0_161 = arith.constant 0 : index
    %c0_162 = arith.constant 0 : index
    %c0_163 = arith.constant 0 : index
    %294 = vector.load %arg10[%c0_161, %c0_162, %c0_163] : memref<9x128x128xbf16, #tpu.memory_space<vmem>>, vector<1x128x128xbf16>
    %295 = vector.shape_cast %294 : vector<1x128x128xbf16> to vector<128x128xbf16>
    %296 = arith.extf %295 : vector<128x128xbf16> to vector<128x128xf32>
    %297 = arith.mulf %293, %296 : vector<128x128xf32>
    %c8_i32_164 = arith.constant 8 : i32
    %298 = tpu.dynamic_rotate %289 by %c8_i32_164 dim 0 : vector<128x128xf32>, i32 -> vector<128x128xf32>
    %c16_i32_165 = arith.constant 16 : i32
    %299 = tpu.dynamic_rotate %298 by %c16_i32_165 dim 1 : vector<128x128xf32>, i32 -> vector<128x128xf32>
    %c1_166 = arith.constant 1 : index
    %c0_167 = arith.constant 0 : index
    %c0_168 = arith.constant 0 : index
    %300 = vector.load %arg10[%c1_166, %c0_167, %c0_168] : memref<9x128x128xbf16, #tpu.memory_space<vmem>>, vector<1x128x128xbf16>
    %301 = vector.shape_cast %300 : vector<1x128x128xbf16> to vector<128x128xbf16>
    %302 = arith.extf %301 : vector<128x128xbf16> to vector<128x128xf32>
    %303 = arith.mulf %299, %302 : vector<128x128xf32>
    %304 = arith.addf %297, %303 : vector<128x128xf32>
    %c8_i32_169 = arith.constant 8 : i32
    %305 = tpu.dynamic_rotate %292 by %c8_i32_169 dim 0 : vector<128x128xf32>, i32 -> vector<128x128xf32>
    %c32_i32_170 = arith.constant 32 : i32
    %306 = tpu.dynamic_rotate %305 by %c32_i32_170 dim 1 : vector<128x128xf32>, i32 -> vector<128x128xf32>
    %c2_171 = arith.constant 2 : index
    %c0_172 = arith.constant 0 : index
    %c0_173 = arith.constant 0 : index
    %307 = vector.load %arg10[%c2_171, %c0_172, %c0_173] : memref<9x128x128xbf16, #tpu.memory_space<vmem>>, vector<1x128x128xbf16>
    %308 = vector.shape_cast %307 : vector<1x128x128xbf16> to vector<128x128xbf16>
    %309 = arith.extf %308 : vector<128x128xbf16> to vector<128x128xf32>
    %310 = arith.mulf %306, %309 : vector<128x128xf32>
    %311 = arith.addf %304, %310 : vector<128x128xf32>
    %c48_i32_174 = arith.constant 48 : i32
    %312 = tpu.dynamic_rotate %291 by %c48_i32_174 dim 1 : vector<128x128xf32>, i32 -> vector<128x128xf32>
    %c3_175 = arith.constant 3 : index
    %c0_176 = arith.constant 0 : index
    %c0_177 = arith.constant 0 : index
    %313 = vector.load %arg10[%c3_175, %c0_176, %c0_177] : memref<9x128x128xbf16, #tpu.memory_space<vmem>>, vector<1x128x128xbf16>
    %314 = vector.shape_cast %313 : vector<1x128x128xbf16> to vector<128x128xbf16>
    %315 = arith.extf %314 : vector<128x128xbf16> to vector<128x128xf32>
    %316 = arith.mulf %312, %315 : vector<128x128xf32>
    %317 = arith.addf %311, %316 : vector<128x128xf32>
    %c64_i32_178 = arith.constant 64 : i32
    %318 = tpu.dynamic_rotate %289 by %c64_i32_178 dim 1 : vector<128x128xf32>, i32 -> vector<128x128xf32>
    %c4_179 = arith.constant 4 : index
    %c0_180 = arith.constant 0 : index
    %c0_181 = arith.constant 0 : index
    %319 = vector.load %arg10[%c4_179, %c0_180, %c0_181] : memref<9x128x128xbf16, #tpu.memory_space<vmem>>, vector<1x128x128xbf16>
    %320 = vector.shape_cast %319 : vector<1x128x128xbf16> to vector<128x128xbf16>
    %321 = arith.extf %320 : vector<128x128xbf16> to vector<128x128xf32>
    %322 = arith.mulf %318, %321 : vector<128x128xf32>
    %323 = arith.addf %317, %322 : vector<128x128xf32>
    %c80_i32_182 = arith.constant 80 : i32
    %324 = tpu.dynamic_rotate %292 by %c80_i32_182 dim 1 : vector<128x128xf32>, i32 -> vector<128x128xf32>
    %c5_183 = arith.constant 5 : index
    %c0_184 = arith.constant 0 : index
    %c0_185 = arith.constant 0 : index
    %325 = vector.load %arg10[%c5_183, %c0_184, %c0_185] : memref<9x128x128xbf16, #tpu.memory_space<vmem>>, vector<1x128x128xbf16>
    %326 = vector.shape_cast %325 : vector<1x128x128xbf16> to vector<128x128xbf16>
    %327 = arith.extf %326 : vector<128x128xbf16> to vector<128x128xf32>
    %328 = arith.mulf %324, %327 : vector<128x128xf32>
    %329 = arith.addf %323, %328 : vector<128x128xf32>
    %c120_i32_186 = arith.constant 120 : i32
    %330 = tpu.dynamic_rotate %291 by %c120_i32_186 dim 0 : vector<128x128xf32>, i32 -> vector<128x128xf32>
    %c96_i32_187 = arith.constant 96 : i32
    %331 = tpu.dynamic_rotate %330 by %c96_i32_187 dim 1 : vector<128x128xf32>, i32 -> vector<128x128xf32>
    %c6_188 = arith.constant 6 : index
    %c0_189 = arith.constant 0 : index
    %c0_190 = arith.constant 0 : index
    %332 = vector.load %arg10[%c6_188, %c0_189, %c0_190] : memref<9x128x128xbf16, #tpu.memory_space<vmem>>, vector<1x128x128xbf16>
    %333 = vector.shape_cast %332 : vector<1x128x128xbf16> to vector<128x128xbf16>
    %334 = arith.extf %333 : vector<128x128xbf16> to vector<128x128xf32>
    %335 = arith.mulf %331, %334 : vector<128x128xf32>
    %336 = arith.addf %329, %335 : vector<128x128xf32>
    %c120_i32_191 = arith.constant 120 : i32
    %337 = tpu.dynamic_rotate %289 by %c120_i32_191 dim 0 : vector<128x128xf32>, i32 -> vector<128x128xf32>
    %c112_i32_192 = arith.constant 112 : i32
    %338 = tpu.dynamic_rotate %337 by %c112_i32_192 dim 1 : vector<128x128xf32>, i32 -> vector<128x128xf32>
    %c7_193 = arith.constant 7 : index
    %c0_194 = arith.constant 0 : index
    %c0_195 = arith.constant 0 : index
    %339 = vector.load %arg10[%c7_193, %c0_194, %c0_195] : memref<9x128x128xbf16, #tpu.memory_space<vmem>>, vector<1x128x128xbf16>
    %340 = vector.shape_cast %339 : vector<1x128x128xbf16> to vector<128x128xbf16>
    %341 = arith.extf %340 : vector<128x128xbf16> to vector<128x128xf32>
    %342 = arith.mulf %338, %341 : vector<128x128xf32>
    %343 = arith.addf %336, %342 : vector<128x128xf32>
    %c120_i32_196 = arith.constant 120 : i32
    %344 = tpu.dynamic_rotate %292 by %c120_i32_196 dim 0 : vector<128x128xf32>, i32 -> vector<128x128xf32>
    %c8_197 = arith.constant 8 : index
    %c0_198 = arith.constant 0 : index
    %c0_199 = arith.constant 0 : index
    %345 = vector.load %arg10[%c8_197, %c0_198, %c0_199] : memref<9x128x128xbf16, #tpu.memory_space<vmem>>, vector<1x128x128xbf16>
    %346 = vector.shape_cast %345 : vector<1x128x128xbf16> to vector<128x128xbf16>
    %347 = arith.extf %346 : vector<128x128xbf16> to vector<128x128xf32>
    %348 = arith.mulf %344, %347 : vector<128x128xf32>
    %349 = arith.truncf %343 : vector<128x128xf32> to vector<128x128xbf16>
    %cst_200 = arith.constant dense<0.000000e+00> : vector<32x128xf32>
    %350 = tpu.matmul %290, %349, %cst_200 {dimension_numbers = #tpu.dot_dimension_numbers<[1], [0], [0], [1], [0, 0, 1, 1], [], []>} : vector<32x128xbf16>, vector<128x128xbf16>, vector<32x128xf32> -> vector<32x128xf32>
    %351 = arith.truncf %350 : vector<32x128xf32> to vector<32x128xbf16>
    %c5_201 = arith.constant 5 : index
    %c0_202 = arith.constant 0 : index
    %c0_203 = arith.constant 0 : index
    %352 = vector.load %arg1[%c5_201, %c0_202, %c0_203] : memref<10x128x128xbf16, #tpu.memory_space<vmem>>, vector<1x128x128xbf16>
    %353 = vector.shape_cast %352 : vector<1x128x128xbf16> to vector<128x128xbf16>
    %cst_204 = arith.constant dense<0.000000e+00> : vector<32x128xf32>
    %354 = tpu.matmul %351, %353, %cst_204 {dimension_numbers = #tpu.dot_dimension_numbers<[1], [0], [0], [1], [0, 0, 1, 1], [], []>} : vector<32x128xbf16>, vector<128x128xbf16>, vector<32x128xf32> -> vector<32x128xf32>
    %355 = arith.truncf %348 : vector<128x128xf32> to vector<128x128xbf16>
    %cst_205 = arith.constant dense<0.000000e+00> : vector<32x128xf32>
    %356 = tpu.matmul %290, %355, %cst_205 {dimension_numbers = #tpu.dot_dimension_numbers<[1], [0], [0], [1], [0, 0, 1, 1], [], []>} : vector<32x128xbf16>, vector<128x128xbf16>, vector<32x128xf32> -> vector<32x128xf32>
    %357 = arith.truncf %356 : vector<32x128xf32> to vector<32x128xbf16>
    %c6_206 = arith.constant 6 : index
    %c0_207 = arith.constant 0 : index
    %c0_208 = arith.constant 0 : index
    %358 = vector.load %arg1[%c6_206, %c0_207, %c0_208] : memref<10x128x128xbf16, #tpu.memory_space<vmem>>, vector<1x128x128xbf16>
    %359 = vector.shape_cast %358 : vector<1x128x128xbf16> to vector<128x128xbf16>
    %cst_209 = arith.constant dense<0.000000e+00> : vector<32x128xf32>
    %360 = tpu.matmul %357, %359, %cst_209 {dimension_numbers = #tpu.dot_dimension_numbers<[1], [0], [0], [1], [0, 0, 1, 1], [], []>} : vector<32x128xbf16>, vector<128x128xbf16>, vector<32x128xf32> -> vector<32x128xf32>
    %361 = arith.addf %354, %360 : vector<32x128xf32>
    %c6_210 = arith.constant 6 : index
    %c0_211 = arith.constant 0 : index
    %362 = vector.load %arg4[%c6_210, %c0_211] : memref<16x128xf32, #tpu.memory_space<vmem>>, vector<1x128xf32>
    %c7_212 = arith.constant 7 : index
    %c0_213 = arith.constant 0 : index
    %363 = vector.load %arg4[%c7_212, %c0_213] : memref<16x128xf32, #tpu.memory_space<vmem>>, vector<1x128xf32>
    %cst_214 = arith.constant dense<0.000000e+00> : vector<128xf32>
    %364 = vector.multi_reduction <add>, %361, %cst_214 [0] : vector<32x128xf32> to vector<128xf32>
    %365 = vector.shape_cast %364 : vector<128xf32> to vector<1x128xf32>
    %366 = arith.mulf %361, %361 : vector<32x128xf32>
    %cst_215 = arith.constant dense<0.000000e+00> : vector<128xf32>
    %367 = vector.multi_reduction <add>, %366, %cst_215 [0] : vector<32x128xf32> to vector<128xf32>
    %368 = vector.shape_cast %367 : vector<128xf32> to vector<1x128xf32>
    %cst_216 = arith.constant 3.125000e-02 : f32
    %369 = vector.broadcast %cst_216 : f32 to vector<1x128xf32>
    %370 = arith.mulf %365, %369 : vector<1x128xf32>
    %cst_217 = arith.constant 3.125000e-02 : f32
    %371 = vector.broadcast %cst_217 : f32 to vector<1x128xf32>
    %372 = arith.mulf %368, %371 : vector<1x128xf32>
    %373 = arith.mulf %370, %370 : vector<1x128xf32>
    %374 = arith.subf %372, %373 : vector<1x128xf32>
    %cst_218 = arith.constant 0.000000e+00 : f32
    %375 = vector.broadcast %cst_218 : f32 to vector<1x128xf32>
    %376 = arith.maximumf %374, %375 : vector<1x128xf32>
    %cst_219 = arith.constant 9.99999974E-6 : f32
    %377 = vector.broadcast %cst_219 : f32 to vector<1x128xf32>
    %378 = arith.addf %376, %377 : vector<1x128xf32>
    %379 = math.rsqrt %378 : vector<1x128xf32>
    %380 = arith.mulf %379, %362 : vector<1x128xf32>
    %381 = vector.broadcast %370 : vector<1x128xf32> to vector<32x128xf32>
    %382 = arith.subf %361, %381 : vector<32x128xf32>
    %383 = vector.broadcast %380 : vector<1x128xf32> to vector<32x128xf32>
    %384 = arith.mulf %382, %383 : vector<32x128xf32>
    %385 = vector.broadcast %363 : vector<1x128xf32> to vector<32x128xf32>
    %386 = arith.addf %384, %385 : vector<32x128xf32>
    %cst_220 = arith.constant 0.000000e+00 : f32
    %387 = vector.broadcast %cst_220 : f32 to vector<32x128xf32>
    %388 = arith.maximumf %386, %387 : vector<32x128xf32>
    %c1_i32_221 = arith.constant 1 : i32
    %389 = tpu.dynamic_rotate %388 by %c1_i32_221 dim 0 : vector<32x128xf32>, i32 -> vector<32x128xf32>
    %c31_i32 = arith.constant 31 : i32
    %390 = tpu.dynamic_rotate %388 by %c31_i32 dim 0 : vector<32x128xf32>, i32 -> vector<32x128xf32>
    %c4_i32 = arith.constant 4 : i32
    %391 = tpu.dynamic_rotate %389 by %c4_i32 dim 0 : vector<32x128xf32>, i32 -> vector<32x128xf32>
    %c0_222 = arith.constant 0 : index
    %c0_223 = arith.constant 0 : index
    %c0_224 = arith.constant 0 : index
    %392 = vector.load %arg11[%c0_222, %c0_223, %c0_224] : memref<9x32x128xbf16, #tpu.memory_space<vmem>>, vector<1x32x128xbf16>
    %393 = vector.shape_cast %392 : vector<1x32x128xbf16> to vector<32x128xbf16>
    %394 = arith.extf %393 : vector<32x128xbf16> to vector<32x128xf32>
    %395 = arith.mulf %391, %394 : vector<32x128xf32>
    %c4_i32_225 = arith.constant 4 : i32
    %396 = tpu.dynamic_rotate %388 by %c4_i32_225 dim 0 : vector<32x128xf32>, i32 -> vector<32x128xf32>
    %c32_i32_226 = arith.constant 32 : i32
    %397 = tpu.dynamic_rotate %396 by %c32_i32_226 dim 1 : vector<32x128xf32>, i32 -> vector<32x128xf32>
    %c1_227 = arith.constant 1 : index
    %c0_228 = arith.constant 0 : index
    %c0_229 = arith.constant 0 : index
    %398 = vector.load %arg11[%c1_227, %c0_228, %c0_229] : memref<9x32x128xbf16, #tpu.memory_space<vmem>>, vector<1x32x128xbf16>
    %399 = vector.shape_cast %398 : vector<1x32x128xbf16> to vector<32x128xbf16>
    %400 = arith.extf %399 : vector<32x128xbf16> to vector<32x128xf32>
    %401 = arith.mulf %397, %400 : vector<32x128xf32>
    %402 = arith.addf %395, %401 : vector<32x128xf32>
    %c4_i32_230 = arith.constant 4 : i32
    %403 = tpu.dynamic_rotate %390 by %c4_i32_230 dim 0 : vector<32x128xf32>, i32 -> vector<32x128xf32>
    %c64_i32_231 = arith.constant 64 : i32
    %404 = tpu.dynamic_rotate %403 by %c64_i32_231 dim 1 : vector<32x128xf32>, i32 -> vector<32x128xf32>
    %c2_232 = arith.constant 2 : index
    %c0_233 = arith.constant 0 : index
    %c0_234 = arith.constant 0 : index
    %405 = vector.load %arg11[%c2_232, %c0_233, %c0_234] : memref<9x32x128xbf16, #tpu.memory_space<vmem>>, vector<1x32x128xbf16>
    %406 = vector.shape_cast %405 : vector<1x32x128xbf16> to vector<32x128xbf16>
    %407 = arith.extf %406 : vector<32x128xbf16> to vector<32x128xf32>
    %408 = arith.mulf %404, %407 : vector<32x128xf32>
    %409 = arith.addf %402, %408 : vector<32x128xf32>
    %c96_i32_235 = arith.constant 96 : i32
    %410 = tpu.dynamic_rotate %389 by %c96_i32_235 dim 1 : vector<32x128xf32>, i32 -> vector<32x128xf32>
    %c3_236 = arith.constant 3 : index
    %c0_237 = arith.constant 0 : index
    %c0_238 = arith.constant 0 : index
    %411 = vector.load %arg11[%c3_236, %c0_237, %c0_238] : memref<9x32x128xbf16, #tpu.memory_space<vmem>>, vector<1x32x128xbf16>
    %412 = vector.shape_cast %411 : vector<1x32x128xbf16> to vector<32x128xbf16>
    %413 = arith.extf %412 : vector<32x128xbf16> to vector<32x128xf32>
    %414 = arith.mulf %410, %413 : vector<32x128xf32>
    %415 = arith.addf %409, %414 : vector<32x128xf32>
    %c4_239 = arith.constant 4 : index
    %c0_240 = arith.constant 0 : index
    %c0_241 = arith.constant 0 : index
    %416 = vector.load %arg11[%c4_239, %c0_240, %c0_241] : memref<9x32x128xbf16, #tpu.memory_space<vmem>>, vector<1x32x128xbf16>
    %417 = vector.shape_cast %416 : vector<1x32x128xbf16> to vector<32x128xbf16>
    %418 = arith.extf %417 : vector<32x128xbf16> to vector<32x128xf32>
    %419 = arith.mulf %388, %418 : vector<32x128xf32>
    %c32_i32_242 = arith.constant 32 : i32
    %420 = tpu.dynamic_rotate %390 by %c32_i32_242 dim 1 : vector<32x128xf32>, i32 -> vector<32x128xf32>
    %c5_243 = arith.constant 5 : index
    %c0_244 = arith.constant 0 : index
    %c0_245 = arith.constant 0 : index
    %421 = vector.load %arg11[%c5_243, %c0_244, %c0_245] : memref<9x32x128xbf16, #tpu.memory_space<vmem>>, vector<1x32x128xbf16>
    %422 = vector.shape_cast %421 : vector<1x32x128xbf16> to vector<32x128xbf16>
    %423 = arith.extf %422 : vector<32x128xbf16> to vector<32x128xf32>
    %424 = arith.mulf %420, %423 : vector<32x128xf32>
    %425 = arith.addf %419, %424 : vector<32x128xf32>
    %c28_i32 = arith.constant 28 : i32
    %426 = tpu.dynamic_rotate %389 by %c28_i32 dim 0 : vector<32x128xf32>, i32 -> vector<32x128xf32>
    %c64_i32_246 = arith.constant 64 : i32
    %427 = tpu.dynamic_rotate %426 by %c64_i32_246 dim 1 : vector<32x128xf32>, i32 -> vector<32x128xf32>
    %c6_247 = arith.constant 6 : index
    %c0_248 = arith.constant 0 : index
    %c0_249 = arith.constant 0 : index
    %428 = vector.load %arg11[%c6_247, %c0_248, %c0_249] : memref<9x32x128xbf16, #tpu.memory_space<vmem>>, vector<1x32x128xbf16>
    %429 = vector.shape_cast %428 : vector<1x32x128xbf16> to vector<32x128xbf16>
    %430 = arith.extf %429 : vector<32x128xbf16> to vector<32x128xf32>
    %431 = arith.mulf %427, %430 : vector<32x128xf32>
    %432 = arith.addf %425, %431 : vector<32x128xf32>
    %c28_i32_250 = arith.constant 28 : i32
    %433 = tpu.dynamic_rotate %388 by %c28_i32_250 dim 0 : vector<32x128xf32>, i32 -> vector<32x128xf32>
    %c96_i32_251 = arith.constant 96 : i32
    %434 = tpu.dynamic_rotate %433 by %c96_i32_251 dim 1 : vector<32x128xf32>, i32 -> vector<32x128xf32>
    %c7_252 = arith.constant 7 : index
    %c0_253 = arith.constant 0 : index
    %c0_254 = arith.constant 0 : index
    %435 = vector.load %arg11[%c7_252, %c0_253, %c0_254] : memref<9x32x128xbf16, #tpu.memory_space<vmem>>, vector<1x32x128xbf16>
    %436 = vector.shape_cast %435 : vector<1x32x128xbf16> to vector<32x128xbf16>
    %437 = arith.extf %436 : vector<32x128xbf16> to vector<32x128xf32>
    %438 = arith.mulf %434, %437 : vector<32x128xf32>
    %439 = arith.addf %432, %438 : vector<32x128xf32>
    %c28_i32_255 = arith.constant 28 : i32
    %440 = tpu.dynamic_rotate %390 by %c28_i32_255 dim 0 : vector<32x128xf32>, i32 -> vector<32x128xf32>
    %c8_256 = arith.constant 8 : index
    %c0_257 = arith.constant 0 : index
    %c0_258 = arith.constant 0 : index
    %441 = vector.load %arg11[%c8_256, %c0_257, %c0_258] : memref<9x32x128xbf16, #tpu.memory_space<vmem>>, vector<1x32x128xbf16>
    %442 = vector.shape_cast %441 : vector<1x32x128xbf16> to vector<32x128xbf16>
    %443 = arith.extf %442 : vector<32x128xbf16> to vector<32x128xf32>
    %444 = arith.mulf %440, %443 : vector<32x128xf32>
    %445 = arith.truncf %415 : vector<32x128xf32> to vector<32x128xbf16>
    %c7_259 = arith.constant 7 : index
    %c0_260 = arith.constant 0 : index
    %c0_261 = arith.constant 0 : index
    %446 = vector.load %arg1[%c7_259, %c0_260, %c0_261] : memref<10x128x128xbf16, #tpu.memory_space<vmem>>, vector<1x128x128xbf16>
    %447 = vector.shape_cast %446 : vector<1x128x128xbf16> to vector<128x128xbf16>
    %cst_262 = arith.constant dense<0.000000e+00> : vector<32x128xf32>
    %448 = tpu.matmul %445, %447, %cst_262 {dimension_numbers = #tpu.dot_dimension_numbers<[1], [0], [0], [1], [0, 0, 1, 1], [], []>} : vector<32x128xbf16>, vector<128x128xbf16>, vector<32x128xf32> -> vector<32x128xf32>
    %449 = arith.truncf %439 : vector<32x128xf32> to vector<32x128xbf16>
    %c8_263 = arith.constant 8 : index
    %c0_264 = arith.constant 0 : index
    %c0_265 = arith.constant 0 : index
    %450 = vector.load %arg1[%c8_263, %c0_264, %c0_265] : memref<10x128x128xbf16, #tpu.memory_space<vmem>>, vector<1x128x128xbf16>
    %451 = vector.shape_cast %450 : vector<1x128x128xbf16> to vector<128x128xbf16>
    %cst_266 = arith.constant dense<0.000000e+00> : vector<32x128xf32>
    %452 = tpu.matmul %449, %451, %cst_266 {dimension_numbers = #tpu.dot_dimension_numbers<[1], [0], [0], [1], [0, 0, 1, 1], [], []>} : vector<32x128xbf16>, vector<128x128xbf16>, vector<32x128xf32> -> vector<32x128xf32>
    %453 = arith.addf %448, %452 : vector<32x128xf32>
    %454 = arith.truncf %444 : vector<32x128xf32> to vector<32x128xbf16>
    %c9 = arith.constant 9 : index
    %c0_267 = arith.constant 0 : index
    %c0_268 = arith.constant 0 : index
    %455 = vector.load %arg1[%c9, %c0_267, %c0_268] : memref<10x128x128xbf16, #tpu.memory_space<vmem>>, vector<1x128x128xbf16>
    %456 = vector.shape_cast %455 : vector<1x128x128xbf16> to vector<128x128xbf16>
    %cst_269 = arith.constant dense<0.000000e+00> : vector<32x128xf32>
    %457 = tpu.matmul %454, %456, %cst_269 {dimension_numbers = #tpu.dot_dimension_numbers<[1], [0], [0], [1], [0, 0, 1, 1], [], []>} : vector<32x128xbf16>, vector<128x128xbf16>, vector<32x128xf32> -> vector<32x128xf32>
    %458 = arith.addf %453, %457 : vector<32x128xf32>
    %c0_270 = arith.constant 0 : index
    %c0_271 = arith.constant 0 : index
    %459 = vector.load %arg7[%c0_270, %c0_271] : memref<32x128xbf16, #tpu.memory_space<vmem>>, vector<32x128xbf16>
    %460 = arith.truncf %289 : vector<128x128xf32> to vector<128x128xbf16>
    %cst_272 = arith.constant dense<0.000000e+00> : vector<32x128xf32>
    %461 = tpu.matmul %459, %460, %cst_272 {dimension_numbers = #tpu.dot_dimension_numbers<[1], [0], [0], [1], [0, 0, 1, 1], [], []>} : vector<32x128xbf16>, vector<128x128xbf16>, vector<32x128xf32> -> vector<32x128xf32>
    %462 = arith.truncf %461 : vector<32x128xf32> to vector<32x128xbf16>
    %c0_273 = arith.constant 0 : index
    %c0_274 = arith.constant 0 : index
    %463 = vector.load %arg2[%c0_273, %c0_274] : memref<128x128xbf16, #tpu.memory_space<vmem>>, vector<128x128xbf16>
    %cst_275 = arith.constant dense<0.000000e+00> : vector<32x128xf32>
    %464 = tpu.matmul %462, %463, %cst_275 {dimension_numbers = #tpu.dot_dimension_numbers<[1], [0], [0], [1], [0, 0, 1, 1], [], []>} : vector<32x128xbf16>, vector<128x128xbf16>, vector<32x128xf32> -> vector<32x128xf32>
    %465 = arith.addf %458, %464 : vector<32x128xf32>
    %c8_276 = arith.constant 8 : index
    %c0_277 = arith.constant 0 : index
    %466 = vector.load %arg4[%c8_276, %c0_277] : memref<16x128xf32, #tpu.memory_space<vmem>>, vector<1x128xf32>
    %c9_278 = arith.constant 9 : index
    %c0_279 = arith.constant 0 : index
    %467 = vector.load %arg4[%c9_278, %c0_279] : memref<16x128xf32, #tpu.memory_space<vmem>>, vector<1x128xf32>
    %cst_280 = arith.constant dense<0.000000e+00> : vector<128xf32>
    %468 = vector.multi_reduction <add>, %465, %cst_280 [0] : vector<32x128xf32> to vector<128xf32>
    %469 = vector.shape_cast %468 : vector<128xf32> to vector<1x128xf32>
    %470 = arith.mulf %465, %465 : vector<32x128xf32>
    %cst_281 = arith.constant dense<0.000000e+00> : vector<128xf32>
    %471 = vector.multi_reduction <add>, %470, %cst_281 [0] : vector<32x128xf32> to vector<128xf32>
    %472 = vector.shape_cast %471 : vector<128xf32> to vector<1x128xf32>
    %cst_282 = arith.constant 3.125000e-02 : f32
    %473 = vector.broadcast %cst_282 : f32 to vector<1x128xf32>
    %474 = arith.mulf %469, %473 : vector<1x128xf32>
    %cst_283 = arith.constant 3.125000e-02 : f32
    %475 = vector.broadcast %cst_283 : f32 to vector<1x128xf32>
    %476 = arith.mulf %472, %475 : vector<1x128xf32>
    %477 = arith.mulf %474, %474 : vector<1x128xf32>
    %478 = arith.subf %476, %477 : vector<1x128xf32>
    %cst_284 = arith.constant 0.000000e+00 : f32
    %479 = vector.broadcast %cst_284 : f32 to vector<1x128xf32>
    %480 = arith.maximumf %478, %479 : vector<1x128xf32>
    %cst_285 = arith.constant 9.99999974E-6 : f32
    %481 = vector.broadcast %cst_285 : f32 to vector<1x128xf32>
    %482 = arith.addf %480, %481 : vector<1x128xf32>
    %483 = math.rsqrt %482 : vector<1x128xf32>
    %484 = arith.mulf %483, %466 : vector<1x128xf32>
    %485 = vector.broadcast %474 : vector<1x128xf32> to vector<32x128xf32>
    %486 = arith.subf %465, %485 : vector<32x128xf32>
    %487 = vector.broadcast %484 : vector<1x128xf32> to vector<32x128xf32>
    %488 = arith.mulf %486, %487 : vector<32x128xf32>
    %489 = vector.broadcast %467 : vector<1x128xf32> to vector<32x128xf32>
    %490 = arith.addf %488, %489 : vector<32x128xf32>
    %cst_286 = arith.constant 0.000000e+00 : f32
    %491 = vector.broadcast %cst_286 : f32 to vector<32x128xf32>
    %492 = arith.maximumf %490, %491 : vector<32x128xf32>
    %c0_287 = arith.constant 0 : index
    %c0_288 = arith.constant 0 : index
    %493 = vector.load %arg8[%c0_287, %c0_288] : memref<8x32xbf16, #tpu.memory_space<vmem>>, vector<8x32xbf16>
    %494 = arith.truncf %492 : vector<32x128xf32> to vector<32x128xbf16>
    %cst_289 = arith.constant dense<0.000000e+00> : vector<8x128xf32>
    %495 = tpu.matmul %493, %494, %cst_289 {dimension_numbers = #tpu.dot_dimension_numbers<[1], [0], [0], [1], [0, 0, 1, 1], [], []>} : vector<8x32xbf16>, vector<32x128xbf16>, vector<8x128xf32> -> vector<8x128xf32>
    %496 = arith.truncf %495 : vector<8x128xf32> to vector<8x128xbf16>
    %c0_290 = arith.constant 0 : index
    %c0_291 = arith.constant 0 : index
    %497 = vector.load %arg3[%c0_290, %c0_291] : memref<128x128xbf16, #tpu.memory_space<vmem>>, vector<128x128xbf16>
    %cst_292 = arith.constant dense<0.000000e+00> : vector<8x128xf32>
    %498 = tpu.matmul %496, %497, %cst_292 {dimension_numbers = #tpu.dot_dimension_numbers<[1], [0], [0], [1], [0, 0, 1, 1], [], []>} : vector<8x128xbf16>, vector<128x128xbf16>, vector<8x128xf32> -> vector<8x128xf32>
    %c10 = arith.constant 10 : index
    %c0_293 = arith.constant 0 : index
    %499 = vector.load %arg4[%c10, %c0_293] : memref<16x128xf32, #tpu.memory_space<vmem>>, vector<1x128xf32>
    %500 = vector.broadcast %499 : vector<1x128xf32> to vector<8x128xf32>
    %501 = arith.addf %498, %500 : vector<8x128xf32>
    %c0_294 = arith.constant 0 : index
    %c0_295 = arith.constant 0 : index
    %502 = vector.load %arg12[%c0_294, %c0_295] : memref<8x128xf32, #tpu.memory_space<vmem>>, vector<8x128xf32>
    tpu.vector_store %arg12[%c0_294, %c0_295], %501 {strides = array<i32>} : memref<8x128xf32, #tpu.memory_space<vmem>>, vector<8x128xf32>,
    return
  }
}

</mosaic_0001>

<llo_original>
// kernel: resnet_v2_forward.1
$region0: #{resnet_v2_forward.1}
  #allocation0 [shape = 'u32[]', space=smem, size = 0x4, offset = 0x4, fixed_abs, tag = 'smem constant byte address 0x4 - core index']
  #allocation1 [shape = 'u32[144,128]{1,0:T(1,128)}', space=vmem, size = 0x12000, scoped, tag = 'internal scratch']
  %s0 = inlined_call_operand.vmem [shape: f32[512,128], index: 0, kind: input, shape index: {}]
  %s1 = inlined_call_operand.hbm [shape: bf16[10,128,128], index: 1, kind: input, shape index: {}]
  %s2 = inlined_call_operand.hbm [shape: bf16[128,128], index: 2, kind: input, shape index: {}]
  %s3 = inlined_call_operand.hbm [shape: bf16[128,128], index: 3, kind: input, shape index: {}]
  %s4 = inlined_call_operand.hbm [shape: f32[16,128], index: 4, kind: input, shape index: {}]
  %s5 = inlined_call_operand.hbm [shape: bf16[128,512], index: 5, kind: input, shape index: {}]
  %s6 = inlined_call_operand.hbm [shape: bf16[32,128], index: 6, kind: input, shape index: {}]
  %s7 = inlined_call_operand.hbm [shape: bf16[32,128], index: 7, kind: input, shape index: {}]
  %s8 = inlined_call_operand.hbm [shape: bf16[8,32], index: 8, kind: input, shape index: {}]
  %s9 = inlined_call_operand.hbm [shape: bf16[9,512,128], index: 9, kind: input, shape index: {}]
  %s10 = inlined_call_operand.hbm [shape: bf16[9,128,128], index: 10, kind: input, shape index: {}]
  %s11 = inlined_call_operand.hbm [shape: bf16[9,32,128], index: 11, kind: input, shape index: {}]
  %s12 = inlined_call_operand.vmem [shape: f32[8,128], index: 12, kind: output, shape index: {}]
  %s13 = sld [smem:[#allocation0]]
  $region102: #{resnet_v2_forward.1} parent=0
    _
  %s15 = ssub.s32 1, %s13
  %s16 = scalar_select 0, %s15, %s13
  $region1: #{resnet_v2_forward.1} parent=0
    #allocation2 [shape = 'u8[327680]{0}', space=vmem, size = 0x50000, scoped, tag = 'input window, operand 1, single buffered']
    #allocation3 [shape = 's32[1]{0}', space=sflag, size = 0x4, scoped, tag = 'scoped memory for resnet_v2_forward.1']
    #allocation4 [shape = 'u8[32768]{0}', space=vmem, size = 0x8000, scoped, tag = 'input window, operand 2, single buffered']
    #allocation5 [shape = 's32[1]{0}', space=sflag, size = 0x4, scoped, tag = 'scoped memory for resnet_v2_forward.1']
    #allocation6 [shape = 'u8[32768]{0}', space=vmem, size = 0x8000, scoped, tag = 'input window, operand 3, single buffered']
    #allocation7 [shape = 'u8[8192]{0}', space=vmem, size = 0x2000, scoped, tag = 'input window, operand 4, single buffered']
    #allocation8 [shape = 's32[1]{0}', space=sflag, size = 0x4, scoped, tag = 'scoped memory for resnet_v2_forward.1']
    #allocation9 [shape = 'u8[131072]{0}', space=vmem, size = 0x20000, scoped, tag = 'input window, operand 5, single buffered']
    #allocation10 [shape = 'u8[8192]{0}', space=vmem, size = 0x2000, scoped, tag = 'input window, operand 6, single buffered']
    #allocation11 [shape = 's32[1]{0}', space=sflag, size = 0x4, scoped, tag = 'scoped memory for resnet_v2_forward.1']
    #allocation12 [shape = 'u8[8192]{0}', space=vmem, size = 0x2000, scoped, tag = 'input window, operand 7, single buffered']
    #allocation13 [shape = 'u8[2048]{0}', space=vmem, size = 0x800, scoped, tag = 'input window, operand 8, single buffered']
    #allocation14 [shape = 's32[1]{0}', space=sflag, size = 0x4, scoped, tag = 'scoped memory for resnet_v2_forward.1']
    #allocation15 [shape = 'u8[1179648]{0}', space=vmem, size = 0x120000, scoped, tag = 'input window, operand 9, single buffered']
    #allocation16 [shape = 'u8[294912]{0}', space=vmem, size = 0x48000, scoped, tag = 'input window, operand 10, single buffered']
    #allocation17 [shape = 's32[1]{0}', space=sflag, size = 0x4, scoped, tag = 'scoped memory for resnet_v2_forward.1']
    #allocation18 [shape = 'u8[73728]{0}', space=vmem, size = 0x12000, scoped, tag = 'input window, operand 11, single buffered']
    %17 = vsyncpa [#allocation3], 0
    %18 = vsyncpa [#allocation5], 0
    %19 = vsyncpa [#allocation8], 0
    %20 = vsyncpa [#allocation11], 0
    %21 = vsyncpa [#allocation14], 0
    %22 = vsyncpa [#allocation17], 0
    // Predicated region
    $region2: #{resnet_v2_forward.1} parent=1 // pred_check
      _
    $region3: #{resnet_v2_forward.1} parent=1 // pred_check_branch
      %24 = sbr.rel (0) target = $region5
    $region4: #{resnet_v2_forward.1} parent=1 // pred_region
      _
    $region5: #{resnet_v2_forward.1} parent=1 // pred_fallthru
      _
    // Predicated region
    $region6: #{resnet_v2_forward.1} parent=1 // pred_check
      _
    $region7: #{resnet_v2_forward.1} parent=1 // pred_check_branch
      %26 = sbr.rel (0) target = $region9
    $region8: #{resnet_v2_forward.1} parent=1 // pred_region
      %s28 = ssub.s32 10240, 10240
      %29 = vsyncadd [#allocation3], %s28
      %s30 = sshll.u32 [#allocation2], 4
      %s31 = int_to_ptr.vmem [resolvable:$true] %s30
      %36 = dma.hbm_to_vmem [thread:$0]  %s1, 10240, %s31, [#allocation3], 64, 64, 4
    $region9: #{resnet_v2_forward.1} parent=1 // pred_fallthru
      _
    // Predicated region
    $region10: #{resnet_v2_forward.1} parent=1 // pred_check
      _
    $region11: #{resnet_v2_forward.1} parent=1 // pred_check_branch
      %38 = sbr.rel (0) target = $region13
    $region12: #{resnet_v2_forward.1} parent=1 // pred_region
      %s40 = ssub.s32 1024, 1024
      %41 = vsyncadd [#allocation5], %s40
      %s42 = sshll.u32 [#allocation4], 4
      %s43 = int_to_ptr.vmem [resolvable:$true] %s42
      %48 = dma.hbm_to_vmem [thread:$0]  %s2, 1024, %s43, [#allocation5], 64, 64, 4
    $region13: #{resnet_v2_forward.1} parent=1 // pred_fallthru
      _
    // Predicated region
    $region14: #{resnet_v2_forward.1} parent=1 // pred_check
      _
    $region15: #{resnet_v2_forward.1} parent=1 // pred_check_branch
      %50 = sbr.rel (0) target = $region17
    $region16: #{resnet_v2_forward.1} parent=1 // pred_region
      %s52 = ssub.s32 1024, 1024
      %53 = vsyncadd [#allocation5], %s52
      %s54 = sshll.u32 [#allocation6], 4
      %s55 = int_to_ptr.vmem [resolvable:$true] %s54
      %60 = dma.hbm_to_vmem [thread:$0]  %s3, 1024, %s55, [#allocation5], 64, 64, 4
    $region17: #{resnet_v2_forward.1} parent=1 // pred_fallthru
      _
    // Predicated region
    $region18: #{resnet_v2_forward.1} parent=1 // pred_check
      _
    $region19: #{resnet_v2_forward.1} parent=1 // pred_check_branch
      %62 = sbr.rel (0) target = $region21
    $region20: #{resnet_v2_forward.1} parent=1 // pred_region
      %s64 = ssub.s32 256, 256
      %65 = vsyncadd [#allocation8], %s64
      %s66 = sshll.u32 [#allocation7], 4
      %s67 = int_to_ptr.vmem [resolvable:$true] %s66
      %72 = dma.hbm_to_vmem [thread:$0]  %s4, 256, %s67, [#allocation8], 128, 128, 8
    $region21: #{resnet_v2_forward.1} parent=1 // pred_fallthru
      _
    // Predicated region
    $region22: #{resnet_v2_forward.1} parent=1 // pred_check
      _
    $region23: #{resnet_v2_forward.1} parent=1 // pred_check_branch
      %74 = sbr.rel (0) target = $region25
    $region24: #{resnet_v2_forward.1} parent=1 // pred_region
      %s76 = ssub.s32 4096, 4096
      %77 = vsyncadd [#allocation8], %s76
      %s78 = sshll.u32 [#allocation9], 4
      %s79 = int_to_ptr.vmem [resolvable:$true] %s78
      %84 = dma.hbm_to_vmem [thread:$0]  %s5, 4096, %s79, [#allocation8], 256, 256, 16
    $region25: #{resnet_v2_forward.1} parent=1 // pred_fallthru
      _
    // Predicated region
    $region26: #{resnet_v2_forward.1} parent=1 // pred_check
      _
    $region27: #{resnet_v2_forward.1} parent=1 // pred_check_branch
      %86 = sbr.rel (0) target = $region29
    $region28: #{resnet_v2_forward.1} parent=1 // pred_region
      %s88 = ssub.s32 256, 256
      %89 = vsyncadd [#allocation11], %s88
      %s90 = sshll.u32 [#allocation10], 4
      %s91 = int_to_ptr.vmem [resolvable:$true] %s90
      %96 = dma.hbm_to_vmem [thread:$0]  %s6, 256, %s91, [#allocation11], 64, 64, 4
    $region29: #{resnet_v2_forward.1} parent=1 // pred_fallthru
      _
    // Predicated region
    $region30: #{resnet_v2_forward.1} parent=1 // pred_check
      _
    $region31: #{resnet_v2_forward.1} parent=1 // pred_check_branch
      %98 = sbr.rel (0) target = $region33
    $region32: #{resnet_v2_forward.1} parent=1 // pred_region
      %s100 = ssub.s32 256, 256
      %101 = vsyncadd [#allocation11], %s100
      %s102 = sshll.u32 [#allocation12], 4
      %s103 = int_to_ptr.vmem [resolvable:$true] %s102
      %108 = dma.hbm_to_vmem [thread:$0]  %s7, 256, %s103, [#allocation11], 64, 64, 4
    $region33: #{resnet_v2_forward.1} parent=1 // pred_fallthru
      _
    // Predicated region
    $region34: #{resnet_v2_forward.1} parent=1 // pred_check
      _
    $region35: #{resnet_v2_forward.1} parent=1 // pred_check_branch
      %110 = sbr.rel (0) target = $region37
    $region36: #{resnet_v2_forward.1} parent=1 // pred_region
      %s112 = ssub.s32 64, 64
      %113 = vsyncadd [#allocation14], %s112
      %s115 = sshll.u32 [#allocation13], 4
      %s116 = int_to_ptr.vmem [resolvable:$true] %s115
      %118 = dma.hbm_to_vmem [thread:$0]  %s8, 64, %s116, [#allocation14]
    $region37: #{resnet_v2_forward.1} parent=1 // pred_fallthru
      _
    // Predicated region
    $region38: #{resnet_v2_forward.1} parent=1 // pred_check
      _
    $region39: #{resnet_v2_forward.1} parent=1 // pred_check_branch
      %120 = sbr.rel (0) target = $region41
    $region40: #{resnet_v2_forward.1} parent=1 // pred_region
      %s122 = ssub.s32 36864, 36864
      %123 = vsyncadd [#allocation14], %s122
      %s124 = sshll.u32 [#allocation15], 4
      %s125 = int_to_ptr.vmem [resolvable:$true] %s124
      %130 = dma.hbm_to_vmem [thread:$0]  %s9, 36864, %s125, [#allocation14], 64, 64, 4
    $region41: #{resnet_v2_forward.1} parent=1 // pred_fallthru
      _
    // Predicated region
    $region42: #{resnet_v2_forward.1} parent=1 // pred_check
      _
    $region43: #{resnet_v2_forward.1} parent=1 // pred_check_branch
      %132 = sbr.rel (0) target = $region45
    $region44: #{resnet_v2_forward.1} parent=1 // pred_region
      %s134 = ssub.s32 9216, 9216
      %135 = vsyncadd [#allocation17], %s134
      %s136 = sshll.u32 [#allocation16], 4
      %s137 = int_to_ptr.vmem [resolvable:$true] %s136
      %142 = dma.hbm_to_vmem [thread:$0]  %s10, 9216, %s137, [#allocation17], 64, 64, 4
    $region45: #{resnet_v2_forward.1} parent=1 // pred_fallthru
      _
    // Predicated region
    $region46: #{resnet_v2_forward.1} parent=1 // pred_check
      _
    $region47: #{resnet_v2_forward.1} parent=1 // pred_check_branch
      %144 = sbr.rel (0) target = $region49
    $region48: #{resnet_v2_forward.1} parent=1 // pred_region
      %s146 = ssub.s32 2304, 2304
      %147 = vsyncadd [#allocation17], %s146
      %s148 = sshll.u32 [#allocation18], 4
      %s149 = int_to_ptr.vmem [resolvable:$true] %s148
      %154 = dma.hbm_to_vmem [thread:$0]  %s11, 2304, %s149, [#allocation17], 64, 64, 4
    $region49: #{resnet_v2_forward.1} parent=1 // pred_fallthru
      _
    // Predicated region
    $region50: #{resnet_v2_forward.1} parent=1 // pred_check
      _
    $region51: #{resnet_v2_forward.1} parent=1 // pred_check_branch
      %156 = sbr.rel (0) target = $region53
    $region52: #{resnet_v2_forward.1} parent=1 // pred_region
      %157 = dma.done [#allocation3], 10240
    $region53: #{resnet_v2_forward.1} parent=1 // pred_fallthru
      _
    // Predicated region
    $region54: #{resnet_v2_forward.1} parent=1 // pred_check
      _
    $region55: #{resnet_v2_forward.1} parent=1 // pred_check_branch
      %159 = sbr.rel (0) target = $region57
    $region56: #{resnet_v2_forward.1} parent=1 // pred_region
      %160 = dma.done [#allocation5], 1024
    $region57: #{resnet_v2_forward.1} parent=1 // pred_fallthru
      _
    // Predicated region
    $region58: #{resnet_v2_forward.1} parent=1 // pred_check
      _
    $region59: #{resnet_v2_forward.1} parent=1 // pred_check_branch
      %162 = sbr.rel (0) target = $region61
    $region60: #{resnet_v2_forward.1} parent=1 // pred_region
      %163 = dma.done [#allocation5], 1024
    $region61: #{resnet_v2_forward.1} parent=1 // pred_fallthru
      _
    // Predicated region
    $region62: #{resnet_v2_forward.1} parent=1 // pred_check
      _
    $region63: #{resnet_v2_forward.1} parent=1 // pred_check_branch
      %165 = sbr.rel (0) target = $region65
    $region64: #{resnet_v2_forward.1} parent=1 // pred_region
      %166 = dma.done [#allocation8], 256
    $region65: #{resnet_v2_forward.1} parent=1 // pred_fallthru
      _
    // Predicated region
    $region66: #{resnet_v2_forward.1} parent=1 // pred_check
      _
    $region67: #{resnet_v2_forward.1} parent=1 // pred_check_branch
      %168 = sbr.rel (0) target = $region69
    $region68: #{resnet_v2_forward.1} parent=1 // pred_region
      %169 = dma.done [#allocation8], 4096
    $region69: #{resnet_v2_forward.1} parent=1 // pred_fallthru
      _
    // Predicated region
    $region70: #{resnet_v2_forward.1} parent=1 // pred_check
      _
    $region71: #{resnet_v2_forward.1} parent=1 // pred_check_branch
      %171 = sbr.rel (0) target = $region73
    $region72: #{resnet_v2_forward.1} parent=1 // pred_region
      %172 = dma.done [#allocation11], 256
    $region73: #{resnet_v2_forward.1} parent=1 // pred_fallthru
      _
    // Predicated region
    $region74: #{resnet_v2_forward.1} parent=1 // pred_check
      _
    $region75: #{resnet_v2_forward.1} parent=1 // pred_check_branch
      %174 = sbr.rel (0) target = $region77
    $region76: #{resnet_v2_forward.1} parent=1 // pred_region
      %175 = dma.done [#allocation11], 256
    $region77: #{resnet_v2_forward.1} parent=1 // pred_fallthru
      _
    // Predicated region
    $region78: #{resnet_v2_forward.1} parent=1 // pred_check
      _
    $region79: #{resnet_v2_forward.1} parent=1 // pred_check_branch
      %177 = sbr.rel (0) target = $region81
    $region80: #{resnet_v2_forward.1} parent=1 // pred_region
      %178 = dma.done [#allocation14], 64
    $region81: #{resnet_v2_forward.1} parent=1 // pred_fallthru
      _
    // Predicated region
    $region82: #{resnet_v2_forward.1} parent=1 // pred_check
      _
    $region83: #{resnet_v2_forward.1} parent=1 // pred_check_branch
      %180 = sbr.rel (0) target = $region85
    $region84: #{resnet_v2_forward.1} parent=1 // pred_region
      %181 = dma.done [#allocation14], 36864
    $region85: #{resnet_v2_forward.1} parent=1 // pred_fallthru
      _
    // Predicated region
    $region86: #{resnet_v2_forward.1} parent=1 // pred_check
      _
    $region87: #{resnet_v2_forward.1} parent=1 // pred_check_branch
      %183 = sbr.rel (0) target = $region89
    $region88: #{resnet_v2_forward.1} parent=1 // pred_region
      %184 = dma.done [#allocation17], 9216
    $region89: #{resnet_v2_forward.1} parent=1 // pred_fallthru
      _
    // Predicated region
    $region90: #{resnet_v2_forward.1} parent=1 // pred_check
      _
    $region91: #{resnet_v2_forward.1} parent=1 // pred_check_branch
      %186 = sbr.rel (0) target = $region93
    $region92: #{resnet_v2_forward.1} parent=1 // pred_region
      %187 = dma.done [#allocation17], 2304
    $region93: #{resnet_v2_forward.1} parent=1 // pred_fallthru
      _
    %v189 = vld [vmem:[%s0] sm:$0xff]
    %v190 = vld [vmem:[%s0 + $0x8] sm:$0xff]
    %v191 = vld [vmem:[%s0 + $0x10] sm:$0xff]
    %v192 = vld [vmem:[%s0 + $0x18] sm:$0xff]
    %v193 = vld [vmem:[%s0 + $0x20] sm:$0xff]
    %v194 = vld [vmem:[%s0 + $0x28] sm:$0xff]
    %v195 = vld [vmem:[%s0 + $0x30] sm:$0xff]
    %v196 = vld [vmem:[%s0 + $0x38] sm:$0xff]
    %v197 = vld [vmem:[%s0 + $0x40] sm:$0xff]
    %v198 = vld [vmem:[%s0 + $0x48] sm:$0xff]
    %v199 = vld [vmem:[%s0 + $0x50] sm:$0xff]
    %v200 = vld [vmem:[%s0 + $0x58] sm:$0xff]
    %v201 = vld [vmem:[%s0 + $0x60] sm:$0xff]
    %v202 = vld [vmem:[%s0 + $0x68] sm:$0xff]
    %v203 = vld [vmem:[%s0 + $0x70] sm:$0xff]
    %v204 = vld [vmem:[%s0 + $0x78] sm:$0xff]
    %v205 = vld [vmem:[%s0 + $0x80] sm:$0xff]
    %v206 = vld [vmem:[%s0 + $0x88] sm:$0xff]
    %v207 = vld [vmem:[%s0 + $0x90] sm:$0xff]
    %v208 = vld [vmem:[%s0 + $0x98] sm:$0xff]
    %v209 = vld [vmem:[%s0 + $0xa0] sm:$0xff]
    %v210 = vld [vmem:[%s0 + $0xa8] sm:$0xff]
    %v211 = vld [vmem:[%s0 + $0xb0] sm:$0xff]
    %v212 = vld [vmem:[%s0 + $0xb8] sm:$0xff]
    %v213 = vld [vmem:[%s0 + $0xc0] sm:$0xff]
    %v214 = vld [vmem:[%s0 + $0xc8] sm:$0xff]
    %v215 = vld [vmem:[%s0 + $0xd0] sm:$0xff]
    %v216 = vld [vmem:[%s0 + $0xd8] sm:$0xff]
    %v217 = vld [vmem:[%s0 + $0xe0] sm:$0xff]
    %v218 = vld [vmem:[%s0 + $0xe8] sm:$0xff]
    %v219 = vld [vmem:[%s0 + $0xf0] sm:$0xff]
    %v220 = vld [vmem:[%s0 + $0xf8] sm:$0xff]
    %v221 = vld [vmem:[%s0 + $0x100] sm:$0xff]
    %v222 = vld [vmem:[%s0 + $0x108] sm:$0xff]
    %v223 = vld [vmem:[%s0 + $0x110] sm:$0xff]
    %v224 = vld [vmem:[%s0 + $0x118] sm:$0xff]
    %v225 = vld [vmem:[%s0 + $0x120] sm:$0xff]
    %v226 = vld [vmem:[%s0 + $0x128] sm:$0xff]
    %v227 = vld [vmem:[%s0 + $0x130] sm:$0xff]
    %v228 = vld [vmem:[%s0 + $0x138] sm:$0xff]
    %v229 = vld [vmem:[%s0 + $0x140] sm:$0xff]
    %v230 = vld [vmem:[%s0 + $0x148] sm:$0xff]
    %v231 = vld [vmem:[%s0 + $0x150] sm:$0xff]
    %v232 = vld [vmem:[%s0 + $0x158] sm:$0xff]
    %v233 = vld [vmem:[%s0 + $0x160] sm:$0xff]
    %v234 = vld [vmem:[%s0 + $0x168] sm:$0xff]
    %v235 = vld [vmem:[%s0 + $0x170] sm:$0xff]
    %v236 = vld [vmem:[%s0 + $0x178] sm:$0xff]
    %v237 = vld [vmem:[%s0 + $0x180] sm:$0xff]
    %v238 = vld [vmem:[%s0 + $0x188] sm:$0xff]
    %v239 = vld [vmem:[%s0 + $0x190] sm:$0xff]
    %v240 = vld [vmem:[%s0 + $0x198] sm:$0xff]
    %v241 = vld [vmem:[%s0 + $0x1a0] sm:$0xff]
    %v242 = vld [vmem:[%s0 + $0x1a8] sm:$0xff]
    %v243 = vld [vmem:[%s0 + $0x1b0] sm:$0xff]
    %v244 = vld [vmem:[%s0 + $0x1b8] sm:$0xff]
    %v245 = vld [vmem:[%s0 + $0x1c0] sm:$0xff]
    %v246 = vld [vmem:[%s0 + $0x1c8] sm:$0xff]
    %v247 = vld [vmem:[%s0 + $0x1d0] sm:$0xff]
    %v248 = vld [vmem:[%s0 + $0x1d8] sm:$0xff]
    %v249 = vld [vmem:[%s0 + $0x1e0] sm:$0xff]
    %v250 = vld [vmem:[%s0 + $0x1e8] sm:$0xff]
    %v251 = vld [vmem:[%s0 + $0x1f0] sm:$0xff]
    %v252 = vld [vmem:[%s0 + $0x1f8] sm:$0xff]
    %v253 = vld [vmem:[#allocation7 + $0xb] sm:$0x1]
    %v254 = vlaneseq
    %v255 = vshrl.u32 %v254, 7
    %v256 = vsub.s32 0, %v255
    %v257 = vrot.slane %v253, %v256
    %v258 = vsub.f32 %v189, %v257
    %v259 = vsub.f32 %v190, %v257
    %v260 = vsub.f32 %v191, %v257
    %v261 = vsub.f32 %v192, %v257
    %v262 = vsub.f32 %v193, %v257
    %v263 = vsub.f32 %v194, %v257
    %v264 = vsub.f32 %v195, %v257
    %v265 = vsub.f32 %v196, %v257
    %v266 = vsub.f32 %v197, %v257
    %v267 = vsub.f32 %v198, %v257
    %v268 = vsub.f32 %v199, %v257
    %v269 = vsub.f32 %v200, %v257
    %v270 = vsub.f32 %v201, %v257
    %v271 = vsub.f32 %v202, %v257
    %v272 = vsub.f32 %v203, %v257
    %v273 = vsub.f32 %v204, %v257
    %v274 = vsub.f32 %v205, %v257
    %v275 = vsub.f32 %v206, %v257
    %v276 = vsub.f32 %v207, %v257
    %v277 = vsub.f32 %v208, %v257
    %v278 = vsub.f32 %v209, %v257
    %v279 = vsub.f32 %v210, %v257
    %v280 = vsub.f32 %v211, %v257
    %v281 = vsub.f32 %v212, %v257
    %v282 = vsub.f32 %v213, %v257
    %v283 = vsub.f32 %v214, %v257
    %v284 = vsub.f32 %v215, %v257
    %v285 = vsub.f32 %v216, %v257
    %v286 = vsub.f32 %v217, %v257
    %v287 = vsub.f32 %v218, %v257
    %v288 = vsub.f32 %v219, %v257
    %v289 = vsub.f32 %v220, %v257
    %v290 = vsub.f32 %v221, %v257
    %v291 = vsub.f32 %v222, %v257
    %v292 = vsub.f32 %v223, %v257
    %v293 = vsub.f32 %v224, %v257
    %v294 = vsub.f32 %v225, %v257
    %v295 = vsub.f32 %v226, %v257
    %v296 = vsub.f32 %v227, %v257
    %v297 = vsub.f32 %v228, %v257
    %v298 = vsub.f32 %v229, %v257
    %v299 = vsub.f32 %v230, %v257
    %v300 = vsub.f32 %v231, %v257
    %v301 = vsub.f32 %v232, %v257
    %v302 = vsub.f32 %v233, %v257
    %v303 = vsub.f32 %v234, %v257
    %v304 = vsub.f32 %v235, %v257
    %v305 = vsub.f32 %v236, %v257
    %v306 = vsub.f32 %v237, %v257
    %v307 = vsub.f32 %v238, %v257
    %v308 = vsub.f32 %v239, %v257
    %v309 = vsub.f32 %v240, %v257
    %v310 = vsub.f32 %v241, %v257
    %v311 = vsub.f32 %v242, %v257
    %v312 = vsub.f32 %v243, %v257
    %v313 = vsub.f32 %v244, %v257
    %v314 = vsub.f32 %v245, %v257
    %v315 = vsub.f32 %v246, %v257
    %v316 = vsub.f32 %v247, %v257
    %v317 = vsub.f32 %v248, %v257
    %v318 = vsub.f32 %v249, %v257
    %v319 = vsub.f32 %v250, %v257
    %v320 = vsub.f32 %v251, %v257
    %v321 = vsub.f32 %v252, %v257
    %v322 = vld [vmem:[#allocation7 + $0xc] sm:$0x1]
    %v323 = vlaneseq
    %v324 = vshrl.u32 %v323, 7
    %v325 = vsub.s32 0, %v324
    %v326 = vrot.slane %v322, %v325
    %v327 = vmul.f32 %v258, %v326
    %v328 = vmul.f32 %v259, %v326
    %v329 = vmul.f32 %v260, %v326
    %v330 = vmul.f32 %v261, %v326
    %v331 = vmul.f32 %v262, %v326
    %v332 = vmul.f32 %v263, %v326
    %v333 = vmul.f32 %v264, %v326
    %v334 = vmul.f32 %v265, %v326
    %v335 = vmul.f32 %v266, %v326
    %v336 = vmul.f32 %v267, %v326
    %v337 = vmul.f32 %v268, %v326
    %v338 = vmul.f32 %v269, %v326
    %v339 = vmul.f32 %v270, %v326
    %v340 = vmul.f32 %v271, %v326
    %v341 = vmul.f32 %v272, %v326
    %v342 = vmul.f32 %v273, %v326
    %v343 = vmul.f32 %v274, %v326
    %v344 = vmul.f32 %v275, %v326
    %v345 = vmul.f32 %v276, %v326
    %v346 = vmul.f32 %v277, %v326
    %v347 = vmul.f32 %v278, %v326
    %v348 = vmul.f32 %v279, %v326
    %v349 = vmul.f32 %v280, %v326
    %v350 = vmul.f32 %v281, %v326
    %v351 = vmul.f32 %v282, %v326
    %v352 = vmul.f32 %v283, %v326
    %v353 = vmul.f32 %v284, %v326
    %v354 = vmul.f32 %v285, %v326
    %v355 = vmul.f32 %v286, %v326
    %v356 = vmul.f32 %v287, %v326
    %v357 = vmul.f32 %v288, %v326
    %v358 = vmul.f32 %v289, %v326
    %v359 = vmul.f32 %v290, %v326
    %v360 = vmul.f32 %v291, %v326
    %v361 = vmul.f32 %v292, %v326
    %v362 = vmul.f32 %v293, %v326
    %v363 = vmul.f32 %v294, %v326
    %v364 = vmul.f32 %v295, %v326
    %v365 = vmul.f32 %v296, %v326
    %v366 = vmul.f32 %v297, %v326
    %v367 = vmul.f32 %v298, %v326
    %v368 = vmul.f32 %v299, %v326
    %v369 = vmul.f32 %v300, %v326
    %v370 = vmul.f32 %v301, %v326
    %v371 = vmul.f32 %v302, %v326
    %v372 = vmul.f32 %v303, %v326
    %v373 = vmul.f32 %v304, %v326
    %v374 = vmul.f32 %v305, %v326
    %v375 = vmul.f32 %v306, %v326
    %v376 = vmul.f32 %v307, %v326
    %v377 = vmul.f32 %v308, %v326
    %v378 = vmul.f32 %v309, %v326
    %v379 = vmul.f32 %v310, %v326
    %v380 = vmul.f32 %v311, %v326
    %v381 = vmul.f32 %v312, %v326
    %v382 = vmul.f32 %v313, %v326
    %v383 = vmul.f32 %v314, %v326
    %v384 = vmul.f32 %v315, %v326
    %v385 = vmul.f32 %v316, %v326
    %v386 = vmul.f32 %v317, %v326
    %v387 = vmul.f32 %v318, %v326
    %v388 = vmul.f32 %v319, %v326
    %v389 = vmul.f32 %v320, %v326
    %v390 = vmul.f32 %v321, %v326
    %v391 = vld [vmem:[#allocation9] sm:$0xff]
    %v392 = vld [vmem:[#allocation9 + $0x8] sm:$0xff]
    %v393 = vld [vmem:[#allocation9 + $0x10] sm:$0xff]
    %v394 = vld [vmem:[#allocation9 + $0x18] sm:$0xff]
    %v395 = vld [vmem:[#allocation9 + $0x20] sm:$0xff]
    %v396 = vld [vmem:[#allocation9 + $0x28] sm:$0xff]
    %v397 = vld [vmem:[#allocation9 + $0x30] sm:$0xff]
    %v398 = vld [vmem:[#allocation9 + $0x38] sm:$0xff]
    %v399 = vld [vmem:[#allocation9 + $0x40] sm:$0xff]
    %v400 = vld [vmem:[#allocation9 + $0x48] sm:$0xff]
    %v401 = vld [vmem:[#allocation9 + $0x50] sm:$0xff]
    %v402 = vld [vmem:[#allocation9 + $0x58] sm:$0xff]
    %v403 = vld [vmem:[#allocation9 + $0x60] sm:$0xff]
    %v404 = vld [vmem:[#allocation9 + $0x68] sm:$0xff]
    %v405 = vld [vmem:[#allocation9 + $0x70] sm:$0xff]
    %v406 = vld [vmem:[#allocation9 + $0x78] sm:$0xff]
    %v407 = vld [vmem:[#allocation9 + $0x80] sm:$0xff]
    %v408 = vld [vmem:[#allocation9 + $0x88] sm:$0xff]
    %v409 = vld [vmem:[#allocation9 + $0x90] sm:$0xff]
    %v410 = vld [vmem:[#allocation9 + $0x98] sm:$0xff]
    %v411 = vld [vmem:[#allocation9 + $0xa0] sm:$0xff]
    %v412 = vld [vmem:[#allocation9 + $0xa8] sm:$0xff]
    %v413 = vld [vmem:[#allocation9 + $0xb0] sm:$0xff]
    %v414 = vld [vmem:[#allocation9 + $0xb8] sm:$0xff]
    %v415 = vld [vmem:[#allocation9 + $0xc0] sm:$0xff]
    %v416 = vld [vmem:[#allocation9 + $0xc8] sm:$0xff]
    %v417 = vld [vmem:[#allocation9 + $0xd0] sm:$0xff]
    %v418 = vld [vmem:[#allocation9 + $0xd8] sm:$0xff]
    %v419 = vld [vmem:[#allocation9 + $0xe0] sm:$0xff]
    %v420 = vld [vmem:[#allocation9 + $0xe8] sm:$0xff]
    %v421 = vld [vmem:[#allocation9 + $0xf0] sm:$0xff]
    %v422 = vld [vmem:[#allocation9 + $0xf8] sm:$0xff]
    %v423 = vrot.slane %v327, 7
    %v424 = vrot.slane %v328, 7
    %v425 = vrot.slane %v329, 7
    %v426 = vrot.slane %v330, 7
    %v427 = vrot.slane %v331, 7
    %v428 = vrot.slane %v332, 7
    %v429 = vrot.slane %v333, 7
    %v430 = vrot.slane %v334, 7
    %v431 = vrot.slane %v335, 7
    %v432 = vrot.slane %v336, 7
    %v433 = vrot.slane %v337, 7
    %v434 = vrot.slane %v338, 7
    %v435 = vrot.slane %v339, 7
    %v436 = vrot.slane %v340, 7
    %v437 = vrot.slane %v341, 7
    %v438 = vrot.slane %v342, 7
    %v439 = vrot.slane %v343, 7
    %v440 = vrot.slane %v344, 7
    %v441 = vrot.slane %v345, 7
    %v442 = vrot.slane %v346, 7
    %v443 = vrot.slane %v347, 7
    %v444 = vrot.slane %v348, 7
    %v445 = vrot.slane %v349, 7
    %v446 = vrot.slane %v350, 7
    %v447 = vrot.slane %v351, 7
    %v448 = vrot.slane %v352, 7
    %v449 = vrot.slane %v353, 7
    %v450 = vrot.slane %v354, 7
    %v451 = vrot.slane %v355, 7
    %v452 = vrot.slane %v356, 7
    %v453 = vrot.slane %v357, 7
    %v454 = vrot.slane %v358, 7
    %v455 = vrot.slane %v359, 7
    %v456 = vrot.slane %v360, 7
    %v457 = vrot.slane %v361, 7
    %v458 = vrot.slane %v362, 7
    %v459 = vrot.slane %v363, 7
    %v460 = vrot.slane %v364, 7
    %v461 = vrot.slane %v365, 7
    %v462 = vrot.slane %v366, 7
    %v463 = vrot.slane %v367, 7
    %v464 = vrot.slane %v368, 7
    %v465 = vrot.slane %v369, 7
    %v466 = vrot.slane %v370, 7
    %v467 = vrot.slane %v371, 7
    %v468 = vrot.slane %v372, 7
    %v469 = vrot.slane %v373, 7
    %v470 = vrot.slane %v374, 7
    %v471 = vrot.slane %v375, 7
    %v472 = vrot.slane %v376, 7
    %v473 = vrot.slane %v377, 7
    %v474 = vrot.slane %v378, 7
    %v475 = vrot.slane %v379, 7
    %v476 = vrot.slane %v380, 7
    %v477 = vrot.slane %v381, 7
    %v478 = vrot.slane %v382, 7
    %v479 = vrot.slane %v383, 7
    %v480 = vrot.slane %v384, 7
    %v481 = vrot.slane %v385, 7
    %v482 = vrot.slane %v386, 7
    %v483 = vrot.slane %v387, 7
    %v484 = vrot.slane %v388, 7
    %v485 = vrot.slane %v389, 7
    %v486 = vrot.slane %v390, 7
    %v487 = vlaneseq
    %v488 = vshrl.u32 %v487, 7
    %vm489 = vcmp.lt.s32.totalorder %v488, 1
    %v490 = vsel %vm489, %v485, %v486
    %v491 = vsel %vm489, %v484, %v485
    %v492 = vsel %vm489, %v483, %v484
    %v493 = vsel %vm489, %v482, %v483
    %v494 = vsel %vm489, %v481, %v482
    %v495 = vsel %vm489, %v480, %v481
    %v496 = vsel %vm489, %v479, %v480
    %v497 = vsel %vm489, %v478, %v479
    %v498 = vsel %vm489, %v477, %v478
    %v499 = vsel %vm489, %v476, %v477
    %v500 = vsel %vm489, %v475, %v476
    %v501 = vsel %vm489, %v474, %v475
    %v502 = vsel %vm489, %v473, %v474
    %v503 = vsel %vm489, %v472, %v473
    %v504 = vsel %vm489, %v471, %v472
    %v505 = vsel %vm489, %v470, %v471
    %v506 = vsel %vm489, %v469, %v470
    %v507 = vsel %vm489, %v468, %v469
    %v508 = vsel %vm489, %v467, %v468
    %v509 = vsel %vm489, %v466, %v467
    %v510 = vsel %vm489, %v465, %v466
    %v511 = vsel %vm489, %v464, %v465
    %v512 = vsel %vm489, %v463, %v464
    %v513 = vsel %vm489, %v462, %v463
    %v514 = vsel %vm489, %v461, %v462
    %v515 = vsel %vm489, %v460, %v461
    %v516 = vsel %vm489, %v459, %v460
    %v517 = vsel %vm489, %v458, %v459
    %v518 = vsel %vm489, %v457, %v458
    %v519 = vsel %vm489, %v456, %v457
    %v520 = vsel %vm489, %v455, %v456
    %v521 = vsel %vm489, %v454, %v455
    %v522 = vsel %vm489, %v453, %v454
    %v523 = vsel %vm489, %v452, %v453
    %v524 = vsel %vm489, %v451, %v452
    %v525 = vsel %vm489, %v450, %v451
    %v526 = vsel %vm489, %v449, %v450
    %v527 = vsel %vm489, %v448, %v449
    %v528 = vsel %vm489, %v447, %v448
    %v529 = vsel %vm489, %v446, %v447
    %v530 = vsel %vm489, %v445, %v446
    %v531 = vsel %vm489, %v444, %v445
    %v532 = vsel %vm489, %v443, %v444
    %v533 = vsel %vm489, %v442, %v443
    %v534 = vsel %vm489, %v441, %v442
    %v535 = vsel %vm489, %v440, %v441
    %v536 = vsel %vm489, %v439, %v440
    %v537 = vsel %vm489, %v438, %v439
    %v538 = vsel %vm489, %v437, %v438
    %v539 = vsel %vm489, %v436, %v437
    %v540 = vsel %vm489, %v435, %v436
    %v541 = vsel %vm489, %v434, %v435
    %v542 = vsel %vm489, %v433, %v434
    %v543 = vsel %vm489, %v432, %v433
    %v544 = vsel %vm489, %v431, %v432
    %v545 = vsel %vm489, %v430, %v431
    %v546 = vsel %vm489, %v429, %v430
    %v547 = vsel %vm489, %v428, %v429
    %v548 = vsel %vm489, %v427, %v428
    %v549 = vsel %vm489, %v426, %v427
    %v550 = vsel %vm489, %v425, %v426
    %v551 = vsel %vm489, %v424, %v425
    %v552 = vsel %vm489, %v423, %v424
    %v553 = vsel %vm489, %v486, %v423
    %v554 = vrot.slane %v327, 1
    %v555 = vrot.slane %v328, 1
    %v556 = vrot.slane %v329, 1
    %v557 = vrot.slane %v330, 1
    %v558 = vrot.slane %v331, 1
    %v559 = vrot.slane %v332, 1
    %v560 = vrot.slane %v333, 1
    %v561 = vrot.slane %v334, 1
    %v562 = vrot.slane %v335, 1
    %v563 = vrot.slane %v336, 1
    %v564 = vrot.slane %v337, 1
    %v565 = vrot.slane %v338, 1
    %v566 = vrot.slane %v339, 1
    %v567 = vrot.slane %v340, 1
    %v568 = vrot.slane %v341, 1
    %v569 = vrot.slane %v342, 1
    %v570 = vrot.slane %v343, 1
    %v571 = vrot.slane %v344, 1
    %v572 = vrot.slane %v345, 1
    %v573 = vrot.slane %v346, 1
    %v574 = vrot.slane %v347, 1
    %v575 = vrot.slane %v348, 1
    %v576 = vrot.slane %v349, 1
    %v577 = vrot.slane %v350, 1
    %v578 = vrot.slane %v351, 1
    %v579 = vrot.slane %v352, 1
    %v580 = vrot.slane %v353, 1
    %v581 = vrot.slane %v354, 1
    %v582 = vrot.slane %v355, 1
    %v583 = vrot.slane %v356, 1
    %v584 = vrot.slane %v357, 1
    %v585 = vrot.slane %v358, 1
    %v586 = vrot.slane %v359, 1
    %v587 = vrot.slane %v360, 1
    %v588 = vrot.slane %v361, 1
    %v589 = vrot.slane %v362, 1
    %v590 = vrot.slane %v363, 1
    %v591 = vrot.slane %v364, 1
    %v592 = vrot.slane %v365, 1
    %v593 = vrot.slane %v366, 1
    %v594 = vrot.slane %v367, 1
    %v595 = vrot.slane %v368, 1
    %v596 = vrot.slane %v369, 1
    %v597 = vrot.slane %v370, 1
    %v598 = vrot.slane %v371, 1
    %v599 = vrot.slane %v372, 1
    %v600 = vrot.slane %v373, 1
    %v601 = vrot.slane %v374, 1
    %v602 = vrot.slane %v375, 1
    %v603 = vrot.slane %v376, 1
    %v604 = vrot.slane %v377, 1
    %v605 = vrot.slane %v378, 1
    %v606 = vrot.slane %v379, 1
    %v607 = vrot.slane %v380, 1
    %v608 = vrot.slane %v381, 1
    %v609 = vrot.slane %v382, 1
    %v610 = vrot.slane %v383, 1
    %v611 = vrot.slane %v384, 1
    %v612 = vrot.slane %v385, 1
    %v613 = vrot.slane %v386, 1
    %v614 = vrot.slane %v387, 1
    %v615 = vrot.slane %v388, 1
    %v616 = vrot.slane %v389, 1
    %v617 = vrot.slane %v390, 1
    %vm618 = vcmp.lt.s32.totalorder %v488, 7
    %v619 = vsel %vm618, %v616, %v617
    %v620 = vsel %vm618, %v615, %v616
    %v621 = vsel %vm618, %v614, %v615
    %v622 = vsel %vm618, %v613, %v614
    %v623 = vsel %vm618, %v612, %v613
    %v624 = vsel %vm618, %v611, %v612
    %v625 = vsel %vm618, %v610, %v611
    %v626 = vsel %vm618, %v609, %v610
    %v627 = vsel %vm618, %v608, %v609
    %v628 = vsel %vm618, %v607, %v608
    %v629 = vsel %vm618, %v606, %v607
    %v630 = vsel %vm618, %v605, %v606
    %v631 = vsel %vm618, %v604, %v605
    %v632 = vsel %vm618, %v603, %v604
    %v633 = vsel %vm618, %v602, %v603
    %v634 = vsel %vm618, %v601, %v602
    %v635 = vsel %vm618, %v600, %v601
    %v636 = vsel %vm618, %v599, %v600
    %v637 = vsel %vm618, %v598, %v599
    %v638 = vsel %vm618, %v597, %v598
    %v639 = vsel %vm618, %v596, %v597
    %v640 = vsel %vm618, %v595, %v596
    %v641 = vsel %vm618, %v594, %v595
    %v642 = vsel %vm618, %v593, %v594
    %v643 = vsel %vm618, %v592, %v593
    %v644 = vsel %vm618, %v591, %v592
    %v645 = vsel %vm618, %v590, %v591
    %v646 = vsel %vm618, %v589, %v590
    %v647 = vsel %vm618, %v588, %v589
    %v648 = vsel %vm618, %v587, %v588
    %v649 = vsel %vm618, %v586, %v587
    %v650 = vsel %vm618, %v585, %v586
    %v651 = vsel %vm618, %v584, %v585
    %v652 = vsel %vm618, %v583, %v584
    %v653 = vsel %vm618, %v582, %v583
    %v654 = vsel %vm618, %v581, %v582
    %v655 = vsel %vm618, %v580, %v581
    %v656 = vsel %vm618, %v579, %v580
    %v657 = vsel %vm618, %v578, %v579
    %v658 = vsel %vm618, %v577, %v578
    %v659 = vsel %vm618, %v576, %v577
    %v660 = vsel %vm618, %v575, %v576
    %v661 = vsel %vm618, %v574, %v575
    %v662 = vsel %vm618, %v573, %v574
    %v663 = vsel %vm618, %v572, %v573
    %v664 = vsel %vm618, %v571, %v572
    %v665 = vsel %vm618, %v570, %v571
    %v666 = vsel %vm618, %v569, %v570
    %v667 = vsel %vm618, %v568, %v569
    %v668 = vsel %vm618, %v567, %v568
    %v669 = vsel %vm618, %v566, %v567
    %v670 = vsel %vm618, %v565, %v566
    %v671 = vsel %vm618, %v564, %v565
    %v672 = vsel %vm618, %v563, %v564
    %v673 = vsel %vm618, %v562, %v563
    %v674 = vsel %vm618, %v561, %v562
    %v675 = vsel %vm618, %v560, %v561
    %v676 = vsel %vm618, %v559, %v560
    %v677 = vsel %vm618, %v558, %v559
    %v678 = vsel %vm618, %v557, %v558
    %v679 = vsel %vm618, %v556, %v557
    %v680 = vsel %vm618, %v555, %v556
    %v681 = vsel %vm618, %v554, %v555
    %v682 = vsel %vm618, %v617, %v554
    %v683 = vld [vmem:[#allocation15] sm:$0xf]
    %v684 = vld [vmem:[#allocation15 + $0x4] sm:$0xf]
    %v685 = vld [vmem:[#allocation15 + $0x8] sm:$0xf]
    %v686 = vld [vmem:[#allocation15 + $0xc] sm:$0xf]
    %v687 = vld [vmem:[#allocation15 + $0x10] sm:$0xf]
    %v688 = vld [vmem:[#allocation15 + $0x14] sm:$0xf]
    %v689 = vld [vmem:[#allocation15 + $0x18] sm:$0xf]
    %v690 = vld [vmem:[#allocation15 + $0x1c] sm:$0xf]
    %v691 = vld [vmem:[#allocation15 + $0x20] sm:$0xf]
    %v692 = vld [vmem:[#allocation15 + $0x24] sm:$0xf]
    %v693 = vld [vmem:[#allocation15 + $0x28] sm:$0xf]
    %v694 = vld [vmem:[#allocation15 + $0x2c] sm:$0xf]
    %v695 = vld [vmem:[#allocation15 + $0x30] sm:$0xf]
    %v696 = vld [vmem:[#allocation15 + $0x34] sm:$0xf]
    %v697 = vld [vmem:[#allocation15 + $0x38] sm:$0xf]
    %v698 = vld [vmem:[#allocation15 + $0x3c] sm:$0xf]
    %v699 = vld [vmem:[#allocation15 + $0x40] sm:$0xf]
    %v700 = vld [vmem:[#allocation15 + $0x44] sm:$0xf]
    %v701 = vld [vmem:[#allocation15 + $0x48] sm:$0xf]
    %v702 = vld [vmem:[#allocation15 + $0x4c] sm:$0xf]
    %v703 = vld [vmem:[#allocation15 + $0x50] sm:$0xf]
    %v704 = vld [vmem:[#allocation15 + $0x54] sm:$0xf]
    %v705 = vld [vmem:[#allocation15 + $0x58] sm:$0xf]
    %v706 = vld [vmem:[#allocation15 + $0x5c] sm:$0xf]
    %v707 = vld [vmem:[#allocation15 + $0x60] sm:$0xf]
    %v708 = vld [vmem:[#allocation15 + $0x64] sm:$0xf]
    %v709 = vld [vmem:[#allocation15 + $0x68] sm:$0xf]
    %v710 = vld [vmem:[#allocation15 + $0x6c] sm:$0xf]
    %v711 = vld [vmem:[#allocation15 + $0x70] sm:$0xf]
    %v712 = vld [vmem:[#allocation15 + $0x74] sm:$0xf]
    %v713 = vld [vmem:[#allocation15 + $0x78] sm:$0xf]
    %v714 = vld [vmem:[#allocation15 + $0x7c] sm:$0xf]
    %v715 = vld [vmem:[#allocation15 + $0x80] sm:$0xf]
    %v716 = vld [vmem:[#allocation15 + $0x84] sm:$0xf]
    %v717 = vld [vmem:[#allocation15 + $0x88] sm:$0xf]
    %v718 = vld [vmem:[#allocation15 + $0x8c] sm:$0xf]
    %v719 = vld [vmem:[#allocation15 + $0x90] sm:$0xf]
    %v720 = vld [vmem:[#allocation15 + $0x94] sm:$0xf]
    %v721 = vld [vmem:[#allocation15 + $0x98] sm:$0xf]
    %v722 = vld [vmem:[#allocation15 + $0x9c] sm:$0xf]
    %v723 = vld [vmem:[#allocation15 + $0xa0] sm:$0xf]
    %v724 = vld [vmem:[#allocation15 + $0xa4] sm:$0xf]
    %v725 = vld [vmem:[#allocation15 + $0xa8] sm:$0xf]
    %v726 = vld [vmem:[#allocation15 + $0xac] sm:$0xf]
    %v727 = vld [vmem:[#allocation15 + $0xb0] sm:$0xf]
    %v728 = vld [vmem:[#allocation15 + $0xb4] sm:$0xf]
    %v729 = vld [vmem:[#allocation15 + $0xb8] sm:$0xf]
    %v730 = vld [vmem:[#allocation15 + $0xbc] sm:$0xf]
    %v731 = vld [vmem:[#allocation15 + $0xc0] sm:$0xf]
    %v732 = vld [vmem:[#allocation15 + $0xc4] sm:$0xf]
    %v733 = vld [vmem:[#allocation15 + $0xc8] sm:$0xf]
    %v734 = vld [vmem:[#allocation15 + $0xcc] sm:$0xf]
    %v735 = vld [vmem:[#allocation15 + $0xd0] sm:$0xf]
    %v736 = vld [vmem:[#allocation15 + $0xd4] sm:$0xf]
    %v737 = vld [vmem:[#allocation15 + $0xd8] sm:$0xf]
    %v738 = vld [vmem:[#allocation15 + $0xdc] sm:$0xf]
    %v739 = vld [vmem:[#allocation15 + $0xe0] sm:$0xf]
    %v740 = vld [vmem:[#allocation15 + $0xe4] sm:$0xf]
    %v741 = vld [vmem:[#allocation15 + $0xe8] sm:$0xf]
    %v742 = vld [vmem:[#allocation15 + $0xec] sm:$0xf]
    %v743 = vld [vmem:[#allocation15 + $0xf0] sm:$0xf]
    %v744 = vld [vmem:[#allocation15 + $0xf4] sm:$0xf]
    %v745 = vld [vmem:[#allocation15 + $0xf8] sm:$0xf]
    %v746 = vld [vmem:[#allocation15 + $0xfc] sm:$0xf]
    %v747 = vunpack.c.l.bf16 %v683
    %v748 = vunpack.c.l.bf16 %v684
    %v749 = vunpack.c.l.bf16 %v685
    %v750 = vunpack.c.l.bf16 %v686
    %v751 = vunpack.c.l.bf16 %v687
    %v752 = vunpack.c.l.bf16 %v688
    %v753 = vunpack.c.l.bf16 %v689
    %v754 = vunpack.c.l.bf16 %v690
    %v755 = vunpack.c.l.bf16 %v691
    %v756 = vunpack.c.l.bf16 %v692
    %v757 = vunpack.c.l.bf16 %v693
    %v758 = vunpack.c.l.bf16 %v694
    %v759 = vunpack.c.l.bf16 %v695
    %v760 = vunpack.c.l.bf16 %v696
    %v761 = vunpack.c.l.bf16 %v697
    %v762 = vunpack.c.l.bf16 %v698
    %v763 = vunpack.c.l.bf16 %v699
    %v764 = vunpack.c.l.bf16 %v700
    %v765 = vunpack.c.l.bf16 %v701
    %v766 = vunpack.c.l.bf16 %v702
    %v767 = vunpack.c.l.bf16 %v703
    %v768 = vunpack.c.l.bf16 %v704
    %v769 = vunpack.c.l.bf16 %v705
    %v770 = vunpack.c.l.bf16 %v706
    %v771 = vunpack.c.l.bf16 %v707
    %v772 = vunpack.c.l.bf16 %v708
    %v773 = vunpack.c.l.bf16 %v709
    %v774 = vunpack.c.l.bf16 %v710
    %v775 = vunpack.c.l.bf16 %v711
    %v776 = vunpack.c.l.bf16 %v712
    %v777 = vunpack.c.l.bf16 %v713
    %v778 = vunpack.c.l.bf16 %v714
    %v779 = vunpack.c.l.bf16 %v715
    %v780 = vunpack.c.l.bf16 %v716
    %v781 = vunpack.c.l.bf16 %v717
    %v782 = vunpack.c.l.bf16 %v718
    %v783 = vunpack.c.l.bf16 %v719
    %v784 = vunpack.c.l.bf16 %v720
    %v785 = vunpack.c.l.bf16 %v721
    %v786 = vunpack.c.l.bf16 %v722
    %v787 = vunpack.c.l.bf16 %v723
    %v788 = vunpack.c.l.bf16 %v724
    %v789 = vunpack.c.l.bf16 %v725
    %v790 = vunpack.c.l.bf16 %v726
    %v791 = vunpack.c.l.bf16 %v727
    %v792 = vunpack.c.l.bf16 %v728
    %v793 = vunpack.c.l.bf16 %v729
    %v794 = vunpack.c.l.bf16 %v730
    %v795 = vunpack.c.l.bf16 %v731
    %v796 = vunpack.c.l.bf16 %v732
    %v797 = vunpack.c.l.bf16 %v733
    %v798 = vunpack.c.l.bf16 %v734
    %v799 = vunpack.c.l.bf16 %v735
    %v800 = vunpack.c.l.bf16 %v736
    %v801 = vunpack.c.l.bf16 %v737
    %v802 = vunpack.c.l.bf16 %v738
    %v803 = vunpack.c.l.bf16 %v739
    %v804 = vunpack.c.l.bf16 %v740
    %v805 = vunpack.c.l.bf16 %v741
    %v806 = vunpack.c.l.bf16 %v742
    %v807 = vunpack.c.l.bf16 %v743
    %v808 = vunpack.c.l.bf16 %v744
    %v809 = vunpack.c.l.bf16 %v745
    %v810 = vunpack.c.l.bf16 %v746
    %v811 = vmul.f32 %v491, %v747
    %v812 = vmul.f32 %v490, %v748
    %v813 = vmul.f32 %v553, %v749
    %v814 = vmul.f32 %v552, %v750
    %v815 = vmul.f32 %v551, %v751
    %v816 = vmul.f32 %v550, %v752
    %v817 = vmul.f32 %v549, %v753
    %v818 = vmul.f32 %v548, %v754
    %v819 = vmul.f32 %v547, %v755
    %v820 = vmul.f32 %v546, %v756
    %v821 = vmul.f32 %v545, %v757
    %v822 = vmul.f32 %v544, %v758
    %v823 = vmul.f32 %v543, %v759
    %v824 = vmul.f32 %v542, %v760
    %v825 = vmul.f32 %v541, %v761
    %v826 = vmul.f32 %v540, %v762
    %v827 = vmul.f32 %v539, %v763
    %v828 = vmul.f32 %v538, %v764
    %v829 = vmul.f32 %v537, %v765
    %v830 = vmul.f32 %v536, %v766
    %v831 = vmul.f32 %v535, %v767
    %v832 = vmul.f32 %v534, %v768
    %v833 = vmul.f32 %v533, %v769
    %v834 = vmul.f32 %v532, %v770
    %v835 = vmul.f32 %v531, %v771
    %v836 = vmul.f32 %v530, %v772
    %v837 = vmul.f32 %v529, %v773
    %v838 = vmul.f32 %v528, %v774
    %v839 = vmul.f32 %v527, %v775
    %v840 = vmul.f32 %v526, %v776
    %v841 = vmul.f32 %v525, %v777
    %v842 = vmul.f32 %v524, %v778
    %v843 = vmul.f32 %v523, %v779
    %v844 = vmul.f32 %v522, %v780
    %v845 = vmul.f32 %v521, %v781
    %v846 = vmul.f32 %v520, %v782
    %v847 = vmul.f32 %v519, %v783
    %v848 = vmul.f32 %v518, %v784
    %v849 = vmul.f32 %v517, %v785
    %v850 = vmul.f32 %v516, %v786
    %v851 = vmul.f32 %v515, %v787
    %v852 = vmul.f32 %v514, %v788
    %v853 = vmul.f32 %v513, %v789
    %v854 = vmul.f32 %v512, %v790
    %v855 = vmul.f32 %v511, %v791
    %v856 = vmul.f32 %v510, %v792
    %v857 = vmul.f32 %v509, %v793
    %v858 = vmul.f32 %v508, %v794
    %v859 = vmul.f32 %v507, %v795
    %v860 = vmul.f32 %v506, %v796
    %v861 = vmul.f32 %v505, %v797
    %v862 = vmul.f32 %v504, %v798
    %v863 = vmul.f32 %v503, %v799
    %v864 = vmul.f32 %v502, %v800
    %v865 = vmul.f32 %v501, %v801
    %v866 = vmul.f32 %v500, %v802
    %v867 = vmul.f32 %v499, %v803
    %v868 = vmul.f32 %v498, %v804
    %v869 = vmul.f32 %v497, %v805
    %v870 = vmul.f32 %v496, %v806
    %v871 = vmul.f32 %v495, %v807
    %v872 = vmul.f32 %v494, %v808
    %v873 = vmul.f32 %v493, %v809
    %v874 = vmul.f32 %v492, %v810
    %875 = vrot.lane.b32.xlu0 %v389, 3
    %v876 = vpop.permute.xlu0 %875
    %877 = vrot.lane.b32.xlu0 %v390, 3
    %v878 = vpop.permute.xlu0 %877
    %879 = vrot.lane.b32.xlu0 %v327, 3
    %v880 = vpop.permute.xlu0 %879
    %881 = vrot.lane.b32.xlu0 %v328, 3
    %v882 = vpop.permute.xlu0 %881
    %883 = vrot.lane.b32.xlu0 %v329, 3
    %v884 = vpop.permute.xlu0 %883
    %885 = vrot.lane.b32.xlu0 %v330, 3
    %v886 = vpop.permute.xlu0 %885
    %887 = vrot.lane.b32.xlu0 %v331, 3
    %v888 = vpop.permute.xlu0 %887
    %889 = vrot.lane.b32.xlu0 %v332, 3
    %v890 = vpop.permute.xlu0 %889
    %891 = vrot.lane.b32.xlu0 %v333, 3
    %v892 = vpop.permute.xlu0 %891
    %893 = vrot.lane.b32.xlu0 %v334, 3
    %v894 = vpop.permute.xlu0 %893
    %895 = vrot.lane.b32.xlu0 %v335, 3
    %v896 = vpop.permute.xlu0 %895
    %897 = vrot.lane.b32.xlu0 %v336, 3
    %v898 = vpop.permute.xlu0 %897
    %899 = vrot.lane.b32.xlu0 %v337, 3
    %v900 = vpop.permute.xlu0 %899
    %901 = vrot.lane.b32.xlu0 %v338, 3
    %v902 = vpop.permute.xlu0 %901
    %903 = vrot.lane.b32.xlu0 %v339, 3
    %v904 = vpop.permute.xlu0 %903
    %905 = vrot.lane.b32.xlu0 %v340, 3
    %v906 = vpop.permute.xlu0 %905
    %907 = vrot.lane.b32.xlu0 %v341, 3
    %v908 = vpop.permute.xlu0 %907
    %909 = vrot.lane.b32.xlu0 %v342, 3
    %v910 = vpop.permute.xlu0 %909
    %911 = vrot.lane.b32.xlu0 %v343, 3
    %v912 = vpop.permute.xlu0 %911
    %913 = vrot.lane.b32.xlu0 %v344, 3
    %v914 = vpop.permute.xlu0 %913
    %915 = vrot.lane.b32.xlu0 %v345, 3
    %v916 = vpop.permute.xlu0 %915
    %917 = vrot.lane.b32.xlu0 %v346, 3
    %v918 = vpop.permute.xlu0 %917
    %919 = vrot.lane.b32.xlu0 %v347, 3
    %v920 = vpop.permute.xlu0 %919
    %921 = vrot.lane.b32.xlu0 %v348, 3
    %v922 = vpop.permute.xlu0 %921
    %923 = vrot.lane.b32.xlu0 %v349, 3
    %v924 = vpop.permute.xlu0 %923
    %925 = vrot.lane.b32.xlu0 %v350, 3
    %v926 = vpop.permute.xlu0 %925
    %927 = vrot.lane.b32.xlu0 %v351, 3
    %v928 = vpop.permute.xlu0 %927
    %929 = vrot.lane.b32.xlu0 %v352, 3
    %v930 = vpop.permute.xlu0 %929
    %931 = vrot.lane.b32.xlu0 %v353, 3
    %v932 = vpop.permute.xlu0 %931
    %933 = vrot.lane.b32.xlu0 %v354, 3
    %v934 = vpop.permute.xlu0 %933
    %935 = vrot.lane.b32.xlu0 %v355, 3
    %v936 = vpop.permute.xlu0 %935
    %937 = vrot.lane.b32.xlu0 %v356, 3
    %v938 = vpop.permute.xlu0 %937
    %939 = vrot.lane.b32.xlu0 %v357, 3
    %v940 = vpop.permute.xlu0 %939
    %941 = vrot.lane.b32.xlu0 %v358, 3
    %v942 = vpop.permute.xlu0 %941
    %943 = vrot.lane.b32.xlu0 %v359, 3
    %v944 = vpop.permute.xlu0 %943
    %945 = vrot.lane.b32.xlu0 %v360, 3
    %v946 = vpop.permute.xlu0 %945
    %947 = vrot.lane.b32.xlu0 %v361, 3
    %v948 = vpop.permute.xlu0 %947
    %949 = vrot.lane.b32.xlu0 %v362, 3
    %v950 = vpop.permute.xlu0 %949
    %951 = vrot.lane.b32.xlu0 %v363, 3
    %v952 = vpop.permute.xlu0 %951
    %953 = vrot.lane.b32.xlu0 %v364, 3
    %v954 = vpop.permute.xlu0 %953
    %955 = vrot.lane.b32.xlu0 %v365, 3
    %v956 = vpop.permute.xlu0 %955
    %957 = vrot.lane.b32.xlu0 %v366, 3
    %v958 = vpop.permute.xlu0 %957
    %959 = vrot.lane.b32.xlu0 %v367, 3
    %v960 = vpop.permute.xlu0 %959
    %961 = vrot.lane.b32.xlu0 %v368, 3
    %v962 = vpop.permute.xlu0 %961
    %963 = vrot.lane.b32.xlu0 %v369, 3
    %v964 = vpop.permute.xlu0 %963
    %965 = vrot.lane.b32.xlu0 %v370, 3
    %v966 = vpop.permute.xlu0 %965
    %967 = vrot.lane.b32.xlu0 %v371, 3
    %v968 = vpop.permute.xlu0 %967
    %969 = vrot.lane.b32.xlu0 %v372, 3
    %v970 = vpop.permute.xlu0 %969
    %971 = vrot.lane.b32.xlu0 %v373, 3
    %v972 = vpop.permute.xlu0 %971
    %973 = vrot.lane.b32.xlu0 %v374, 3
    %v974 = vpop.permute.xlu0 %973
    %975 = vrot.lane.b32.xlu0 %v375, 3
    %v976 = vpop.permute.xlu0 %975
    %977 = vrot.lane.b32.xlu0 %v376, 3
    %v978 = vpop.permute.xlu0 %977
    %979 = vrot.lane.b32.xlu0 %v377, 3
    %v980 = vpop.permute.xlu0 %979
    %981 = vrot.lane.b32.xlu0 %v378, 3
    %v982 = vpop.permute.xlu0 %981
    %983 = vrot.lane.b32.xlu0 %v379, 3
    %v984 = vpop.permute.xlu0 %983
    %985 = vrot.lane.b32.xlu0 %v380, 3
    %v986 = vpop.permute.xlu0 %985
    %987 = vrot.lane.b32.xlu0 %v381, 3
    %v988 = vpop.permute.xlu0 %987
    %989 = vrot.lane.b32.xlu0 %v382, 3
    %v990 = vpop.permute.xlu0 %989
    %991 = vrot.lane.b32.xlu0 %v383, 3
    %v992 = vpop.permute.xlu0 %991
    %993 = vrot.lane.b32.xlu0 %v384, 3
    %v994 = vpop.permute.xlu0 %993
    %995 = vrot.lane.b32.xlu0 %v385, 3
    %v996 = vpop.permute.xlu0 %995
    %997 = vrot.lane.b32.xlu0 %v386, 3
    %v998 = vpop.permute.xlu0 %997
    %999 = vrot.lane.b32.xlu0 %v387, 3
    %v1000 = vpop.permute.xlu0 %999
    %1001 = vrot.lane.b32.xlu0 %v388, 3
    %v1002 = vpop.permute.xlu0 %1001
    %s1003 = scalar_lea.vmem [#allocation15], 256
    %v1004 = vld [vmem:[%s1003] sm:$0xf]
    %v1005 = vld [vmem:[%s1003 + $0x4] sm:$0xf]
    %v1006 = vld [vmem:[%s1003 + $0x8] sm:$0xf]
    %v1007 = vld [vmem:[%s1003 + $0xc] sm:$0xf]
    %v1008 = vld [vmem:[%s1003 + $0x10] sm:$0xf]
    %v1009 = vld [vmem:[%s1003 + $0x14] sm:$0xf]
    %v1010 = vld [vmem:[%s1003 + $0x18] sm:$0xf]
    %v1011 = vld [vmem:[%s1003 + $0x1c] sm:$0xf]
    %v1012 = vld [vmem:[%s1003 + $0x20] sm:$0xf]
    %v1013 = vld [vmem:[%s1003 + $0x24] sm:$0xf]
    %v1014 = vld [vmem:[%s1003 + $0x28] sm:$0xf]
    %v1015 = vld [vmem:[%s1003 + $0x2c] sm:$0xf]
    %v1016 = vld [vmem:[%s1003 + $0x30] sm:$0xf]
    %v1017 = vld [vmem:[%s1003 + $0x34] sm:$0xf]
    %v1018 = vld [vmem:[%s1003 + $0x38] sm:$0xf]
    %v1019 = vld [vmem:[%s1003 + $0x3c] sm:$0xf]
    %v1020 = vld [vmem:[%s1003 + $0x40] sm:$0xf]
    %v1021 = vld [vmem:[%s1003 + $0x44] sm:$0xf]
    %v1022 = vld [vmem:[%s1003 + $0x48] sm:$0xf]
    %v1023 = vld [vmem:[%s1003 + $0x4c] sm:$0xf]
    %v1024 = vld [vmem:[%s1003 + $0x50] sm:$0xf]
    %v1025 = vld [vmem:[%s1003 + $0x54] sm:$0xf]
    %v1026 = vld [vmem:[%s1003 + $0x58] sm:$0xf]
    %v1027 = vld [vmem:[%s1003 + $0x5c] sm:$0xf]
    %v1028 = vld [vmem:[%s1003 + $0x60] sm:$0xf]
    %v1029 = vld [vmem:[%s1003 + $0x64] sm:$0xf]
    %v1030 = vld [vmem:[%s1003 + $0x68] sm:$0xf]
    %v1031 = vld [vmem:[%s1003 + $0x6c] sm:$0xf]
    %v1032 = vld [vmem:[%s1003 + $0x70] sm:$0xf]
    %v1033 = vld [vmem:[%s1003 + $0x74] sm:$0xf]
    %v1034 = vld [vmem:[%s1003 + $0x78] sm:$0xf]
    %v1035 = vld [vmem:[%s1003 + $0x7c] sm:$0xf]
    %v1036 = vld [vmem:[%s1003 + $0x80] sm:$0xf]
    %v1037 = vld [vmem:[%s1003 + $0x84] sm:$0xf]
    %v1038 = vld [vmem:[%s1003 + $0x88] sm:$0xf]
    %v1039 = vld [vmem:[%s1003 + $0x8c] sm:$0xf]
    %v1040 = vld [vmem:[%s1003 + $0x90] sm:$0xf]
    %v1041 = vld [vmem:[%s1003 + $0x94] sm:$0xf]
    %v1042 = vld [vmem:[%s1003 + $0x98] sm:$0xf]
    %v1043 = vld [vmem:[%s1003 + $0x9c] sm:$0xf]
    %v1044 = vld [vmem:[%s1003 + $0xa0] sm:$0xf]
    %v1045 = vld [vmem:[%s1003 + $0xa4] sm:$0xf]
    %v1046 = vld [vmem:[%s1003 + $0xa8] sm:$0xf]
    %v1047 = vld [vmem:[%s1003 + $0xac] sm:$0xf]
    %v1048 = vld [vmem:[%s1003 + $0xb0] sm:$0xf]
    %v1049 = vld [vmem:[%s1003 + $0xb4] sm:$0xf]
    %v1050 = vld [vmem:[%s1003 + $0xb8] sm:$0xf]
    %v1051 = vld [vmem:[%s1003 + $0xbc] sm:$0xf]
    %v1052 = vld [vmem:[%s1003 + $0xc0] sm:$0xf]
    %v1053 = vld [vmem:[%s1003 + $0xc4] sm:$0xf]
    %v1054 = vld [vmem:[%s1003 + $0xc8] sm:$0xf]
    %v1055 = vld [vmem:[%s1003 + $0xcc] sm:$0xf]
    %v1056 = vld [vmem:[%s1003 + $0xd0] sm:$0xf]
    %v1057 = vld [vmem:[%s1003 + $0xd4] sm:$0xf]
    %v1058 = vld [vmem:[%s1003 + $0xd8] sm:$0xf]
    %v1059 = vld [vmem:[%s1003 + $0xdc] sm:$0xf]
    %v1060 = vld [vmem:[%s1003 + $0xe0] sm:$0xf]
    %v1061 = vld [vmem:[%s1003 + $0xe4] sm:$0xf]
    %v1062 = vld [vmem:[%s1003 + $0xe8] sm:$0xf]
    %v1063 = vld [vmem:[%s1003 + $0xec] sm:$0xf]
    %v1064 = vld [vmem:[%s1003 + $0xf0] sm:$0xf]
    %v1065 = vld [vmem:[%s1003 + $0xf4] sm:$0xf]
    %v1066 = vld [vmem:[%s1003 + $0xf8] sm:$0xf]
    %v1067 = vld [vmem:[%s1003 + $0xfc] sm:$0xf]
    %v1068 = vunpack.c.l.bf16 %v1004
    %v1069 = vunpack.c.l.bf16 %v1005
    %v1070 = vunpack.c.l.bf16 %v1006
    %v1071 = vunpack.c.l.bf16 %v1007
    %v1072 = vunpack.c.l.bf16 %v1008
    %v1073 = vunpack.c.l.bf16 %v1009
    %v1074 = vunpack.c.l.bf16 %v1010
    %v1075 = vunpack.c.l.bf16 %v1011
    %v1076 = vunpack.c.l.bf16 %v1012
    %v1077 = vunpack.c.l.bf16 %v1013
    %v1078 = vunpack.c.l.bf16 %v1014
    %v1079 = vunpack.c.l.bf16 %v1015
    %v1080 = vunpack.c.l.bf16 %v1016
    %v1081 = vunpack.c.l.bf16 %v1017
    %v1082 = vunpack.c.l.bf16 %v1018
    %v1083 = vunpack.c.l.bf16 %v1019
    %v1084 = vunpack.c.l.bf16 %v1020
    %v1085 = vunpack.c.l.bf16 %v1021
    %v1086 = vunpack.c.l.bf16 %v1022
    %v1087 = vunpack.c.l.bf16 %v1023
    %v1088 = vunpack.c.l.bf16 %v1024
    %v1089 = vunpack.c.l.bf16 %v1025
    %v1090 = vunpack.c.l.bf16 %v1026
    %v1091 = vunpack.c.l.bf16 %v1027
    %v1092 = vunpack.c.l.bf16 %v1028
    %v1093 = vunpack.c.l.bf16 %v1029
    %v1094 = vunpack.c.l.bf16 %v1030
    %v1095 = vunpack.c.l.bf16 %v1031
    %v1096 = vunpack.c.l.bf16 %v1032
    %v1097 = vunpack.c.l.bf16 %v1033
    %v1098 = vunpack.c.l.bf16 %v1034
    %v1099 = vunpack.c.l.bf16 %v1035
    %v1100 = vunpack.c.l.bf16 %v1036
    %v1101 = vunpack.c.l.bf16 %v1037
    %v1102 = vunpack.c.l.bf16 %v1038
    %v1103 = vunpack.c.l.bf16 %v1039
    %v1104 = vunpack.c.l.bf16 %v1040
    %v1105 = vunpack.c.l.bf16 %v1041
    %v1106 = vunpack.c.l.bf16 %v1042
    %v1107 = vunpack.c.l.bf16 %v1043
    %v1108 = vunpack.c.l.bf16 %v1044
    %v1109 = vunpack.c.l.bf16 %v1045
    %v1110 = vunpack.c.l.bf16 %v1046
    %v1111 = vunpack.c.l.bf16 %v1047
    %v1112 = vunpack.c.l.bf16 %v1048
    %v1113 = vunpack.c.l.bf16 %v1049
    %v1114 = vunpack.c.l.bf16 %v1050
    %v1115 = vunpack.c.l.bf16 %v1051
    %v1116 = vunpack.c.l.bf16 %v1052
    %v1117 = vunpack.c.l.bf16 %v1053
    %v1118 = vunpack.c.l.bf16 %v1054
    %v1119 = vunpack.c.l.bf16 %v1055
    %v1120 = vunpack.c.l.bf16 %v1056
    %v1121 = vunpack.c.l.bf16 %v1057
    %v1122 = vunpack.c.l.bf16 %v1058
    %v1123 = vunpack.c.l.bf16 %v1059
    %v1124 = vunpack.c.l.bf16 %v1060
    %v1125 = vunpack.c.l.bf16 %v1061
    %v1126 = vunpack.c.l.bf16 %v1062
    %v1127 = vunpack.c.l.bf16 %v1063
    %v1128 = vunpack.c.l.bf16 %v1064
    %v1129 = vunpack.c.l.bf16 %v1065
    %v1130 = vunpack.c.l.bf16 %v1066
    %v1131 = vunpack.c.l.bf16 %v1067
    %v1132 = vmul.f32 %v876, %v1068
    %v1133 = vmul.f32 %v878, %v1069
    %v1134 = vmul.f32 %v880, %v1070
    %v1135 = vmul.f32 %v882, %v1071
    %v1136 = vmul.f32 %v884, %v1072
    %v1137 = vmul.f32 %v886, %v1073
    %v1138 = vmul.f32 %v888, %v1074
    %v1139 = vmul.f32 %v890, %v1075
    %v1140 = vmul.f32 %v892, %v1076
    %v1141 = vmul.f32 %v894, %v1077
    %v1142 = vmul.f32 %v896, %v1078
    %v1143 = vmul.f32 %v898, %v1079
    %v1144 = vmul.f32 %v900, %v1080
    %v1145 = vmul.f32 %v902, %v1081
    %v1146 = vmul.f32 %v904, %v1082
    %v1147 = vmul.f32 %v906, %v1083
    %v1148 = vmul.f32 %v908, %v1084
    %v1149 = vmul.f32 %v910, %v1085
    %v1150 = vmul.f32 %v912, %v1086
    %v1151 = vmul.f32 %v914, %v1087
    %v1152 = vmul.f32 %v916, %v1088
    %v1153 = vmul.f32 %v918, %v1089
    %v1154 = vmul.f32 %v920, %v1090
    %v1155 = vmul.f32 %v922, %v1091
    %v1156 = vmul.f32 %v924, %v1092
    %v1157 = vmul.f32 %v926, %v1093
    %v1158 = vmul.f32 %v928, %v1094
    %v1159 = vmul.f32 %v930, %v1095
    %v1160 = vmul.f32 %v932, %v1096
    %v1161 = vmul.f32 %v934, %v1097
    %v1162 = vmul.f32 %v936, %v1098
    %v1163 = vmul.f32 %v938, %v1099
    %v1164 = vmul.f32 %v940, %v1100
    %v1165 = vmul.f32 %v942, %v1101
    %v1166 = vmul.f32 %v944, %v1102
    %v1167 = vmul.f32 %v946, %v1103
    %v1168 = vmul.f32 %v948, %v1104
    %v1169 = vmul.f32 %v950, %v1105
    %v1170 = vmul.f32 %v952, %v1106
    %v1171 = vmul.f32 %v954, %v1107
    %v1172 = vmul.f32 %v956, %v1108
    %v1173 = vmul.f32 %v958, %v1109
    %v1174 = vmul.f32 %v960, %v1110
    %v1175 = vmul.f32 %v962, %v1111
    %v1176 = vmul.f32 %v964, %v1112
    %v1177 = vmul.f32 %v966, %v1113
    %v1178 = vmul.f32 %v968, %v1114
    %v1179 = vmul.f32 %v970, %v1115
    %v1180 = vmul.f32 %v972, %v1116
    %v1181 = vmul.f32 %v974, %v1117
    %v1182 = vmul.f32 %v976, %v1118
    %v1183 = vmul.f32 %v978, %v1119
    %v1184 = vmul.f32 %v980, %v1120
    %v1185 = vmul.f32 %v982, %v1121
    %v1186 = vmul.f32 %v984, %v1122
    %v1187 = vmul.f32 %v986, %v1123
    %v1188 = vmul.f32 %v988, %v1124
    %v1189 = vmul.f32 %v990, %v1125
    %v1190 = vmul.f32 %v992, %v1126
    %v1191 = vmul.f32 %v994, %v1127
    %v1192 = vmul.f32 %v996, %v1128
    %v1193 = vmul.f32 %v998, %v1129
    %v1194 = vmul.f32 %v1000, %v1130
    %v1195 = vmul.f32 %v1002, %v1131
    %v1196 = vadd.f32 %v811, %v1132
    %v1197 = vadd.f32 %v812, %v1133
    %v1198 = vadd.f32 %v813, %v1134
    %v1199 = vadd.f32 %v814, %v1135
    %v1200 = vadd.f32 %v815, %v1136
    %v1201 = vadd.f32 %v816, %v1137
    %v1202 = vadd.f32 %v817, %v1138
    %v1203 = vadd.f32 %v818, %v1139
    %v1204 = vadd.f32 %v819, %v1140
    %v1205 = vadd.f32 %v820, %v1141
    %v1206 = vadd.f32 %v821, %v1142
    %v1207 = vadd.f32 %v822, %v1143
    %v1208 = vadd.f32 %v823, %v1144
    %v1209 = vadd.f32 %v824, %v1145
    %v1210 = vadd.f32 %v825, %v1146
    %v1211 = vadd.f32 %v826, %v1147
    %v1212 = vadd.f32 %v827, %v1148
    %v1213 = vadd.f32 %v828, %v1149
    %v1214 = vadd.f32 %v829, %v1150
    %v1215 = vadd.f32 %v830, %v1151
    %v1216 = vadd.f32 %v831, %v1152
    %v1217 = vadd.f32 %v832, %v1153
    %v1218 = vadd.f32 %v833, %v1154
    %v1219 = vadd.f32 %v834, %v1155
    %v1220 = vadd.f32 %v835, %v1156
    %v1221 = vadd.f32 %v836, %v1157
    %v1222 = vadd.f32 %v837, %v1158
    %v1223 = vadd.f32 %v838, %v1159
    %v1224 = vadd.f32 %v839, %v1160
    %v1225 = vadd.f32 %v840, %v1161
    %v1226 = vadd.f32 %v841, %v1162
    %v1227 = vadd.f32 %v842, %v1163
    %v1228 = vadd.f32 %v843, %v1164
    %v1229 = vadd.f32 %v844, %v1165
    %v1230 = vadd.f32 %v845, %v1166
    %v1231 = vadd.f32 %v846, %v1167
    %v1232 = vadd.f32 %v847, %v1168
    %v1233 = vadd.f32 %v848, %v1169
    %v1234 = vadd.f32 %v849, %v1170
    %v1235 = vadd.f32 %v850, %v1171
    %v1236 = vadd.f32 %v851, %v1172
    %v1237 = vadd.f32 %v852, %v1173
    %v1238 = vadd.f32 %v853, %v1174
    %v1239 = vadd.f32 %v854, %v1175
    %v1240 = vadd.f32 %v855, %v1176
    %v1241 = vadd.f32 %v856, %v1177
    %v1242 = vadd.f32 %v857, %v1178
    %v1243 = vadd.f32 %v858, %v1179
    %v1244 = vadd.f32 %v859, %v1180
    %v1245 = vadd.f32 %v860, %v1181
    %v1246 = vadd.f32 %v861, %v1182
    %v1247 = vadd.f32 %v862, %v1183
    %v1248 = vadd.f32 %v863, %v1184
    %v1249 = vadd.f32 %v864, %v1185
    %v1250 = vadd.f32 %v865, %v1186
    %v1251 = vadd.f32 %v866, %v1187
    %v1252 = vadd.f32 %v867, %v1188
    %v1253 = vadd.f32 %v868, %v1189
    %v1254 = vadd.f32 %v869, %v1190
    %v1255 = vadd.f32 %v870, %v1191
    %v1256 = vadd.f32 %v871, %v1192
    %v1257 = vadd.f32 %v872, %v1193
    %v1258 = vadd.f32 %v873, %v1194
    %v1259 = vadd.f32 %v874, %v1195
    %1260 = vrot.lane.b32.xlu0 %v619, 6
    %v1261 = vpop.permute.xlu0 %1260
    %1262 = vrot.lane.b32.xlu0 %v682, 6
    %v1263 = vpop.permute.xlu0 %1262
    %1264 = vrot.lane.b32.xlu0 %v681, 6
    %v1265 = vpop.permute.xlu0 %1264
    %1266 = vrot.lane.b32.xlu0 %v680, 6
    %v1267 = vpop.permute.xlu0 %1266
    %1268 = vrot.lane.b32.xlu0 %v679, 6
    %v1269 = vpop.permute.xlu0 %1268
    %1270 = vrot.lane.b32.xlu0 %v678, 6
    %v1271 = vpop.permute.xlu0 %1270
    %1272 = vrot.lane.b32.xlu0 %v677, 6
    %v1273 = vpop.permute.xlu0 %1272
    %1274 = vrot.lane.b32.xlu0 %v676, 6
    %v1275 = vpop.permute.xlu0 %1274
    %1276 = vrot.lane.b32.xlu0 %v675, 6
    %v1277 = vpop.permute.xlu0 %1276
    %1278 = vrot.lane.b32.xlu0 %v674, 6
    %v1279 = vpop.permute.xlu0 %1278
    %1280 = vrot.lane.b32.xlu0 %v673, 6
    %v1281 = vpop.permute.xlu0 %1280
    %1282 = vrot.lane.b32.xlu0 %v672, 6
    %v1283 = vpop.permute.xlu0 %1282
    %1284 = vrot.lane.b32.xlu0 %v671, 6
    %v1285 = vpop.permute.xlu0 %1284
    %1286 = vrot.lane.b32.xlu0 %v670, 6
    %v1287 = vpop.permute.xlu0 %1286
    %1288 = vrot.lane.b32.xlu0 %v669, 6
    %v1289 = vpop.permute.xlu0 %1288
    %1290 = vrot.lane.b32.xlu0 %v668, 6
    %v1291 = vpop.permute.xlu0 %1290
    %1292 = vrot.lane.b32.xlu0 %v667, 6
    %v1293 = vpop.permute.xlu0 %1292
    %1294 = vrot.lane.b32.xlu0 %v666, 6
    %v1295 = vpop.permute.xlu0 %1294
    %1296 = vrot.lane.b32.xlu0 %v665, 6
    %v1297 = vpop.permute.xlu0 %1296
    %1298 = vrot.lane.b32.xlu0 %v664, 6
    %v1299 = vpop.permute.xlu0 %1298
    %1300 = vrot.lane.b32.xlu0 %v663, 6
    %v1301 = vpop.permute.xlu0 %1300
    %1302 = vrot.lane.b32.xlu0 %v662, 6
    %v1303 = vpop.permute.xlu0 %1302
    %1304 = vrot.lane.b32.xlu0 %v661, 6
    %v1305 = vpop.permute.xlu0 %1304
    %1306 = vrot.lane.b32.xlu0 %v660, 6
    %v1307 = vpop.permute.xlu0 %1306
    %1308 = vrot.lane.b32.xlu0 %v659, 6
    %v1309 = vpop.permute.xlu0 %1308
    %1310 = vrot.lane.b32.xlu0 %v658, 6
    %v1311 = vpop.permute.xlu0 %1310
    %1312 = vrot.lane.b32.xlu0 %v657, 6
    %v1313 = vpop.permute.xlu0 %1312
    %1314 = vrot.lane.b32.xlu0 %v656, 6
    %v1315 = vpop.permute.xlu0 %1314
    %1316 = vrot.lane.b32.xlu0 %v655, 6
    %v1317 = vpop.permute.xlu0 %1316
    %1318 = vrot.lane.b32.xlu0 %v654, 6
    %v1319 = vpop.permute.xlu0 %1318
    %1320 = vrot.lane.b32.xlu0 %v653, 6
    %v1321 = vpop.permute.xlu0 %1320
    %1322 = vrot.lane.b32.xlu0 %v652, 6
    %v1323 = vpop.permute.xlu0 %1322
    %1324 = vrot.lane.b32.xlu0 %v651, 6
    %v1325 = vpop.permute.xlu0 %1324
    %1326 = vrot.lane.b32.xlu0 %v650, 6
    %v1327 = vpop.permute.xlu0 %1326
    %1328 = vrot.lane.b32.xlu0 %v649, 6
    %v1329 = vpop.permute.xlu0 %1328
    %1330 = vrot.lane.b32.xlu0 %v648, 6
    %v1331 = vpop.permute.xlu0 %1330
    %1332 = vrot.lane.b32.xlu0 %v647, 6
    %v1333 = vpop.permute.xlu0 %1332
    %1334 = vrot.lane.b32.xlu0 %v646, 6
    %v1335 = vpop.permute.xlu0 %1334
    %1336 = vrot.lane.b32.xlu0 %v645, 6
    %v1337 = vpop.permute.xlu0 %1336
    %1338 = vrot.lane.b32.xlu0 %v644, 6
    %v1339 = vpop.permute.xlu0 %1338
    %1340 = vrot.lane.b32.xlu0 %v643, 6
    %v1341 = vpop.permute.xlu0 %1340
    %1342 = vrot.lane.b32.xlu0 %v642, 6
    %v1343 = vpop.permute.xlu0 %1342
    %1344 = vrot.lane.b32.xlu0 %v641, 6
    %v1345 = vpop.permute.xlu0 %1344
    %1346 = vrot.lane.b32.xlu0 %v640, 6
    %v1347 = vpop.permute.xlu0 %1346
    %1348 = vrot.lane.b32.xlu0 %v639, 6
    %v1349 = vpop.permute.xlu0 %1348
    %1350 = vrot.lane.b32.xlu0 %v638, 6
    %v1351 = vpop.permute.xlu0 %1350
    %1352 = vrot.lane.b32.xlu0 %v637, 6
    %v1353 = vpop.permute.xlu0 %1352
    %1354 = vrot.lane.b32.xlu0 %v636, 6
    %v1355 = vpop.permute.xlu0 %1354
    %1356 = vrot.lane.b32.xlu0 %v635, 6
    %v1357 = vpop.permute.xlu0 %1356
    %1358 = vrot.lane.b32.xlu0 %v634, 6
    %v1359 = vpop.permute.xlu0 %1358
    %1360 = vrot.lane.b32.xlu0 %v633, 6
    %v1361 = vpop.permute.xlu0 %1360
    %1362 = vrot.lane.b32.xlu0 %v632, 6
    %v1363 = vpop.permute.xlu0 %1362
    %1364 = vrot.lane.b32.xlu0 %v631, 6
    %v1365 = vpop.permute.xlu0 %1364
    %1366 = vrot.lane.b32.xlu0 %v630, 6
    %v1367 = vpop.permute.xlu0 %1366
    %1368 = vrot.lane.b32.xlu0 %v629, 6
    %v1369 = vpop.permute.xlu0 %1368
    %1370 = vrot.lane.b32.xlu0 %v628, 6
    %v1371 = vpop.permute.xlu0 %1370
    %1372 = vrot.lane.b32.xlu0 %v627, 6
    %v1373 = vpop.permute.xlu0 %1372
    %1374 = vrot.lane.b32.xlu0 %v626, 6
    %v1375 = vpop.permute.xlu0 %1374
    %1376 = vrot.lane.b32.xlu0 %v625, 6
    %v1377 = vpop.permute.xlu0 %1376
    %1378 = vrot.lane.b32.xlu0 %v624, 6
    %v1379 = vpop.permute.xlu0 %1378
    %1380 = vrot.lane.b32.xlu0 %v623, 6
    %v1381 = vpop.permute.xlu0 %1380
    %1382 = vrot.lane.b32.xlu0 %v622, 6
    %v1383 = vpop.permute.xlu0 %1382
    %1384 = vrot.lane.b32.xlu0 %v621, 6
    %v1385 = vpop.permute.xlu0 %1384
    %1386 = vrot.lane.b32.xlu0 %v620, 6
    %v1387 = vpop.permute.xlu0 %1386
    %s1388 = scalar_lea.vmem [#allocation15], 512
    %v1389 = vld [vmem:[%s1388] sm:$0xf]
    %v1390 = vld [vmem:[%s1388 + $0x4] sm:$0xf]
    %v1391 = vld [vmem:[%s1388 + $0x8] sm:$0xf]
    %v1392 = vld [vmem:[%s1388 + $0xc] sm:$0xf]
    %v1393 = vld [vmem:[%s1388 + $0x10] sm:$0xf]
    %v1394 = vld [vmem:[%s1388 + $0x14] sm:$0xf]
    %v1395 = vld [vmem:[%s1388 + $0x18] sm:$0xf]
    %v1396 = vld [vmem:[%s1388 + $0x1c] sm:$0xf]
    %v1397 = vld [vmem:[%s1388 + $0x20] sm:$0xf]
    %v1398 = vld [vmem:[%s1388 + $0x24] sm:$0xf]
    %v1399 = vld [vmem:[%s1388 + $0x28] sm:$0xf]
    %v1400 = vld [vmem:[%s1388 + $0x2c] sm:$0xf]
    %v1401 = vld [vmem:[%s1388 + $0x30] sm:$0xf]
    %v1402 = vld [vmem:[%s1388 + $0x34] sm:$0xf]
    %v1403 = vld [vmem:[%s1388 + $0x38] sm:$0xf]
    %v1404 = vld [vmem:[%s1388 + $0x3c] sm:$0xf]
    %v1405 = vld [vmem:[%s1388 + $0x40] sm:$0xf]
    %v1406 = vld [vmem:[%s1388 + $0x44] sm:$0xf]
    %v1407 = vld [vmem:[%s1388 + $0x48] sm:$0xf]
    %v1408 = vld [vmem:[%s1388 + $0x4c] sm:$0xf]
    %v1409 = vld [vmem:[%s1388 + $0x50] sm:$0xf]
    %v1410 = vld [vmem:[%s1388 + $0x54] sm:$0xf]
    %v1411 = vld [vmem:[%s1388 + $0x58] sm:$0xf]
    %v1412 = vld [vmem:[%s1388 + $0x5c] sm:$0xf]
    %v1413 = vld [vmem:[%s1388 + $0x60] sm:$0xf]
    %v1414 = vld [vmem:[%s1388 + $0x64] sm:$0xf]
    %v1415 = vld [vmem:[%s1388 + $0x68] sm:$0xf]
    %v1416 = vld [vmem:[%s1388 + $0x6c] sm:$0xf]
    %v1417 = vld [vmem:[%s1388 + $0x70] sm:$0xf]
    %v1418 = vld [vmem:[%s1388 + $0x74] sm:$0xf]
    %v1419 = vld [vmem:[%s1388 + $0x78] sm:$0xf]
    %v1420 = vld [vmem:[%s1388 + $0x7c] sm:$0xf]
    %v1421 = vld [vmem:[%s1388 + $0x80] sm:$0xf]
    %v1422 = vld [vmem:[%s1388 + $0x84] sm:$0xf]
    %v1423 = vld [vmem:[%s1388 + $0x88] sm:$0xf]
    %v1424 = vld [vmem:[%s1388 + $0x8c] sm:$0xf]
    %v1425 = vld [vmem:[%s1388 + $0x90] sm:$0xf]
    %v1426 = vld [vmem:[%s1388 + $0x94] sm:$0xf]
    %v1427 = vld [vmem:[%s1388 + $0x98] sm:$0xf]
    %v1428 = vld [vmem:[%s1388 + $0x9c] sm:$0xf]
    %v1429 = vld [vmem:[%s1388 + $0xa0] sm:$0xf]
    %v1430 = vld [vmem:[%s1388 + $0xa4] sm:$0xf]
    %v1431 = vld [vmem:[%s1388 + $0xa8] sm:$0xf]
    %v1432 = vld [vmem:[%s1388 + $0xac] sm:$0xf]
    %v1433 = vld [vmem:[%s1388 + $0xb0] sm:$0xf]
    %v1434 = vld [vmem:[%s1388 + $0xb4] sm:$0xf]
    %v1435 = vld [vmem:[%s1388 + $0xb8] sm:$0xf]
    %v1436 = vld [vmem:[%s1388 + $0xbc] sm:$0xf]
    %v1437 = vld [vmem:[%s1388 + $0xc0] sm:$0xf]
    %v1438 = vld [vmem:[%s1388 + $0xc4] sm:$0xf]
    %v1439 = vld [vmem:[%s1388 + $0xc8] sm:$0xf]
    %v1440 = vld [vmem:[%s1388 + $0xcc] sm:$0xf]
    %v1441 = vld [vmem:[%s1388 + $0xd0] sm:$0xf]
    %v1442 = vld [vmem:[%s1388 + $0xd4] sm:$0xf]
    %v1443 = vld [vmem:[%s1388 + $0xd8] sm:$0xf]
    %v1444 = vld [vmem:[%s1388 + $0xdc] sm:$0xf]
    %v1445 = vld [vmem:[%s1388 + $0xe0] sm:$0xf]
    %v1446 = vld [vmem:[%s1388 + $0xe4] sm:$0xf]
    %v1447 = vld [vmem:[%s1388 + $0xe8] sm:$0xf]
    %v1448 = vld [vmem:[%s1388 + $0xec] sm:$0xf]
    %v1449 = vld [vmem:[%s1388 + $0xf0] sm:$0xf]
    %v1450 = vld [vmem:[%s1388 + $0xf4] sm:$0xf]
    %v1451 = vld [vmem:[%s1388 + $0xf8] sm:$0xf]
    %v1452 = vld [vmem:[%s1388 + $0xfc] sm:$0xf]
    %v1453 = vunpack.c.l.bf16 %v1389
    %v1454 = vunpack.c.l.bf16 %v1390
    %v1455 = vunpack.c.l.bf16 %v1391
    %v1456 = vunpack.c.l.bf16 %v1392
    %v1457 = vunpack.c.l.bf16 %v1393
    %v1458 = vunpack.c.l.bf16 %v1394
    %v1459 = vunpack.c.l.bf16 %v1395
    %v1460 = vunpack.c.l.bf16 %v1396
    %v1461 = vunpack.c.l.bf16 %v1397
    %v1462 = vunpack.c.l.bf16 %v1398
    %v1463 = vunpack.c.l.bf16 %v1399
    %v1464 = vunpack.c.l.bf16 %v1400
    %v1465 = vunpack.c.l.bf16 %v1401
    %v1466 = vunpack.c.l.bf16 %v1402
    %v1467 = vunpack.c.l.bf16 %v1403
    %v1468 = vunpack.c.l.bf16 %v1404
    %v1469 = vunpack.c.l.bf16 %v1405
    %v1470 = vunpack.c.l.bf16 %v1406
    %v1471 = vunpack.c.l.bf16 %v1407
    %v1472 = vunpack.c.l.bf16 %v1408
    %v1473 = vunpack.c.l.bf16 %v1409
    %v1474 = vunpack.c.l.bf16 %v1410
    %v1475 = vunpack.c.l.bf16 %v1411
    %v1476 = vunpack.c.l.bf16 %v1412
    %v1477 = vunpack.c.l.bf16 %v1413
    %v1478 = vunpack.c.l.bf16 %v1414
    %v1479 = vunpack.c.l.bf16 %v1415
    %v1480 = vunpack.c.l.bf16 %v1416
    %v1481 = vunpack.c.l.bf16 %v1417
    %v1482 = vunpack.c.l.bf16 %v1418
    %v1483 = vunpack.c.l.bf16 %v1419
    %v1484 = vunpack.c.l.bf16 %v1420
    %v1485 = vunpack.c.l.bf16 %v1421
    %v1486 = vunpack.c.l.bf16 %v1422
    %v1487 = vunpack.c.l.bf16 %v1423
    %v1488 = vunpack.c.l.bf16 %v1424
    %v1489 = vunpack.c.l.bf16 %v1425
    %v1490 = vunpack.c.l.bf16 %v1426
    %v1491 = vunpack.c.l.bf16 %v1427
    %v1492 = vunpack.c.l.bf16 %v1428
    %v1493 = vunpack.c.l.bf16 %v1429
    %v1494 = vunpack.c.l.bf16 %v1430
    %v1495 = vunpack.c.l.bf16 %v1431
    %v1496 = vunpack.c.l.bf16 %v1432
    %v1497 = vunpack.c.l.bf16 %v1433
    %v1498 = vunpack.c.l.bf16 %v1434
    %v1499 = vunpack.c.l.bf16 %v1435
    %v1500 = vunpack.c.l.bf16 %v1436
    %v1501 = vunpack.c.l.bf16 %v1437
    %v1502 = vunpack.c.l.bf16 %v1438
    %v1503 = vunpack.c.l.bf16 %v1439
    %v1504 = vunpack.c.l.bf16 %v1440
    %v1505 = vunpack.c.l.bf16 %v1441
    %v1506 = vunpack.c.l.bf16 %v1442
    %v1507 = vunpack.c.l.bf16 %v1443
    %v1508 = vunpack.c.l.bf16 %v1444
    %v1509 = vunpack.c.l.bf16 %v1445
    %v1510 = vunpack.c.l.bf16 %v1446
    %v1511 = vunpack.c.l.bf16 %v1447
    %v1512 = vunpack.c.l.bf16 %v1448
    %v1513 = vunpack.c.l.bf16 %v1449
    %v1514 = vunpack.c.l.bf16 %v1450
    %v1515 = vunpack.c.l.bf16 %v1451
    %v1516 = vunpack.c.l.bf16 %v1452
    %v1517 = vmul.f32 %v1261, %v1453
    %v1518 = vmul.f32 %v1263, %v1454
    %v1519 = vmul.f32 %v1265, %v1455
    %v1520 = vmul.f32 %v1267, %v1456
    %v1521 = vmul.f32 %v1269, %v1457
    %v1522 = vmul.f32 %v1271, %v1458
    %v1523 = vmul.f32 %v1273, %v1459
    %v1524 = vmul.f32 %v1275, %v1460
    %v1525 = vmul.f32 %v1277, %v1461
    %v1526 = vmul.f32 %v1279, %v1462
    %v1527 = vmul.f32 %v1281, %v1463
    %v1528 = vmul.f32 %v1283, %v1464
    %v1529 = vmul.f32 %v1285, %v1465
    %v1530 = vmul.f32 %v1287, %v1466
    %v1531 = vmul.f32 %v1289, %v1467
    %v1532 = vmul.f32 %v1291, %v1468
    %v1533 = vmul.f32 %v1293, %v1469
    %v1534 = vmul.f32 %v1295, %v1470
    %v1535 = vmul.f32 %v1297, %v1471
    %v1536 = vmul.f32 %v1299, %v1472
    %v1537 = vmul.f32 %v1301, %v1473
    %v1538 = vmul.f32 %v1303, %v1474
    %v1539 = vmul.f32 %v1305, %v1475
    %v1540 = vmul.f32 %v1307, %v1476
    %v1541 = vmul.f32 %v1309, %v1477
    %v1542 = vmul.f32 %v1311, %v1478
    %v1543 = vmul.f32 %v1313, %v1479
    %v1544 = vmul.f32 %v1315, %v1480
    %v1545 = vmul.f32 %v1317, %v1481
    %v1546 = vmul.f32 %v1319, %v1482
    %v1547 = vmul.f32 %v1321, %v1483
    %v1548 = vmul.f32 %v1323, %v1484
    %v1549 = vmul.f32 %v1325, %v1485
    %v1550 = vmul.f32 %v1327, %v1486
    %v1551 = vmul.f32 %v1329, %v1487
    %v1552 = vmul.f32 %v1331, %v1488
    %v1553 = vmul.f32 %v1333, %v1489
    %v1554 = vmul.f32 %v1335, %v1490
    %v1555 = vmul.f32 %v1337, %v1491
    %v1556 = vmul.f32 %v1339, %v1492
    %v1557 = vmul.f32 %v1341, %v1493
    %v1558 = vmul.f32 %v1343, %v1494
    %v1559 = vmul.f32 %v1345, %v1495
    %v1560 = vmul.f32 %v1347, %v1496
    %v1561 = vmul.f32 %v1349, %v1497
    %v1562 = vmul.f32 %v1351, %v1498
    %v1563 = vmul.f32 %v1353, %v1499
    %v1564 = vmul.f32 %v1355, %v1500
    %v1565 = vmul.f32 %v1357, %v1501
    %v1566 = vmul.f32 %v1359, %v1502
    %v1567 = vmul.f32 %v1361, %v1503
    %v1568 = vmul.f32 %v1363, %v1504
    %v1569 = vmul.f32 %v1365, %v1505
    %v1570 = vmul.f32 %v1367, %v1506
    %v1571 = vmul.f32 %v1369, %v1507
    %v1572 = vmul.f32 %v1371, %v1508
    %v1573 = vmul.f32 %v1373, %v1509
    %v1574 = vmul.f32 %v1375, %v1510
    %v1575 = vmul.f32 %v1377, %v1511
    %v1576 = vmul.f32 %v1379, %v1512
    %v1577 = vmul.f32 %v1381, %v1513
    %v1578 = vmul.f32 %v1383, %v1514
    %v1579 = vmul.f32 %v1385, %v1515
    %v1580 = vmul.f32 %v1387, %v1516
    %v1581 = vadd.f32 %v1196, %v1517
    %v1582 = vadd.f32 %v1197, %v1518
    %v1583 = vadd.f32 %v1198, %v1519
    %v1584 = vadd.f32 %v1199, %v1520
    %v1585 = vadd.f32 %v1200, %v1521
    %v1586 = vadd.f32 %v1201, %v1522
    %v1587 = vadd.f32 %v1202, %v1523
    %v1588 = vadd.f32 %v1203, %v1524
    %v1589 = vadd.f32 %v1204, %v1525
    %v1590 = vadd.f32 %v1205, %v1526
    %v1591 = vadd.f32 %v1206, %v1527
    %v1592 = vadd.f32 %v1207, %v1528
    %v1593 = vadd.f32 %v1208, %v1529
    %v1594 = vadd.f32 %v1209, %v1530
    %v1595 = vadd.f32 %v1210, %v1531
    %v1596 = vadd.f32 %v1211, %v1532
    %v1597 = vadd.f32 %v1212, %v1533
    %v1598 = vadd.f32 %v1213, %v1534
    %v1599 = vadd.f32 %v1214, %v1535
    %v1600 = vadd.f32 %v1215, %v1536
    %v1601 = vadd.f32 %v1216, %v1537
    %v1602 = vadd.f32 %v1217, %v1538
    %v1603 = vadd.f32 %v1218, %v1539
    %v1604 = vadd.f32 %v1219, %v1540
    %v1605 = vadd.f32 %v1220, %v1541
    %v1606 = vadd.f32 %v1221, %v1542
    %v1607 = vadd.f32 %v1222, %v1543
    %v1608 = vadd.f32 %v1223, %v1544
    %v1609 = vadd.f32 %v1224, %v1545
    %v1610 = vadd.f32 %v1225, %v1546
    %v1611 = vadd.f32 %v1226, %v1547
    %v1612 = vadd.f32 %v1227, %v1548
    %v1613 = vadd.f32 %v1228, %v1549
    %v1614 = vadd.f32 %v1229, %v1550
    %v1615 = vadd.f32 %v1230, %v1551
    %v1616 = vadd.f32 %v1231, %v1552
    %v1617 = vadd.f32 %v1232, %v1553
    %v1618 = vadd.f32 %v1233, %v1554
    %v1619 = vadd.f32 %v1234, %v1555
    %v1620 = vadd.f32 %v1235, %v1556
    %v1621 = vadd.f32 %v1236, %v1557
    %v1622 = vadd.f32 %v1237, %v1558
    %v1623 = vadd.f32 %v1238, %v1559
    %v1624 = vadd.f32 %v1239, %v1560
    %v1625 = vadd.f32 %v1240, %v1561
    %v1626 = vadd.f32 %v1241, %v1562
    %v1627 = vadd.f32 %v1242, %v1563
    %v1628 = vadd.f32 %v1243, %v1564
    %v1629 = vadd.f32 %v1244, %v1565
    %v1630 = vadd.f32 %v1245, %v1566
    %v1631 = vadd.f32 %v1246, %v1567
    %v1632 = vadd.f32 %v1247, %v1568
    %v1633 = vadd.f32 %v1248, %v1569
    %v1634 = vadd.f32 %v1249, %v1570
    %v1635 = vadd.f32 %v1250, %v1571
    %v1636 = vadd.f32 %v1251, %v1572
    %v1637 = vadd.f32 %v1252, %v1573
    %v1638 = vadd.f32 %v1253, %v1574
    %v1639 = vadd.f32 %v1254, %v1575
    %v1640 = vadd.f32 %v1255, %v1576
    %v1641 = vadd.f32 %v1256, %v1577
    %v1642 = vadd.f32 %v1257, %v1578
    %v1643 = vadd.f32 %v1258, %v1579
    %v1644 = vadd.f32 %v1259, %v1580
    %1645 = vrot.lane.b32.xlu0 %v553, 9
    %v1646 = vpop.permute.xlu0 %1645
    %1647 = vrot.lane.b32.xlu0 %v552, 9
    %v1648 = vpop.permute.xlu0 %1647
    %1649 = vrot.lane.b32.xlu0 %v551, 9
    %v1650 = vpop.permute.xlu0 %1649
    %1651 = vrot.lane.b32.xlu0 %v550, 9
    %v1652 = vpop.permute.xlu0 %1651
    %1653 = vrot.lane.b32.xlu0 %v549, 9
    %v1654 = vpop.permute.xlu0 %1653
    %1655 = vrot.lane.b32.xlu0 %v548, 9
    %v1656 = vpop.permute.xlu0 %1655
    %1657 = vrot.lane.b32.xlu0 %v547, 9
    %v1658 = vpop.permute.xlu0 %1657
    %1659 = vrot.lane.b32.xlu0 %v546, 9
    %v1660 = vpop.permute.xlu0 %1659
    %1661 = vrot.lane.b32.xlu0 %v545, 9
    %v1662 = vpop.permute.xlu0 %1661
    %1663 = vrot.lane.b32.xlu0 %v544, 9
    %v1664 = vpop.permute.xlu0 %1663
    %1665 = vrot.lane.b32.xlu0 %v543, 9
    %v1666 = vpop.permute.xlu0 %1665
    %1667 = vrot.lane.b32.xlu0 %v542, 9
    %v1668 = vpop.permute.xlu0 %1667
    %1669 = vrot.lane.b32.xlu0 %v541, 9
    %v1670 = vpop.permute.xlu0 %1669
    %1671 = vrot.lane.b32.xlu0 %v540, 9
    %v1672 = vpop.permute.xlu0 %1671
    %1673 = vrot.lane.b32.xlu0 %v539, 9
    %v1674 = vpop.permute.xlu0 %1673
    %1675 = vrot.lane.b32.xlu0 %v538, 9
    %v1676 = vpop.permute.xlu0 %1675
    %1677 = vrot.lane.b32.xlu0 %v537, 9
    %v1678 = vpop.permute.xlu0 %1677
    %1679 = vrot.lane.b32.xlu0 %v536, 9
    %v1680 = vpop.permute.xlu0 %1679
    %1681 = vrot.lane.b32.xlu0 %v535, 9
    %v1682 = vpop.permute.xlu0 %1681
    %1683 = vrot.lane.b32.xlu0 %v534, 9
    %v1684 = vpop.permute.xlu0 %1683
    %1685 = vrot.lane.b32.xlu0 %v533, 9
    %v1686 = vpop.permute.xlu0 %1685
    %1687 = vrot.lane.b32.xlu0 %v532, 9
    %v1688 = vpop.permute.xlu0 %1687
    %1689 = vrot.lane.b32.xlu0 %v531, 9
    %v1690 = vpop.permute.xlu0 %1689
    %1691 = vrot.lane.b32.xlu0 %v530, 9
    %v1692 = vpop.permute.xlu0 %1691
    %1693 = vrot.lane.b32.xlu0 %v529, 9
    %v1694 = vpop.permute.xlu0 %1693
    %1695 = vrot.lane.b32.xlu0 %v528, 9
    %v1696 = vpop.permute.xlu0 %1695
    %1697 = vrot.lane.b32.xlu0 %v527, 9
    %v1698 = vpop.permute.xlu0 %1697
    %1699 = vrot.lane.b32.xlu0 %v526, 9
    %v1700 = vpop.permute.xlu0 %1699
    %1701 = vrot.lane.b32.xlu0 %v525, 9
    %v1702 = vpop.permute.xlu0 %1701
    %1703 = vrot.lane.b32.xlu0 %v524, 9
    %v1704 = vpop.permute.xlu0 %1703
    %1705 = vrot.lane.b32.xlu0 %v523, 9
    %v1706 = vpop.permute.xlu0 %1705
    %1707 = vrot.lane.b32.xlu0 %v522, 9
    %v1708 = vpop.permute.xlu0 %1707
    %1709 = vrot.lane.b32.xlu0 %v521, 9
    %v1710 = vpop.permute.xlu0 %1709
    %1711 = vrot.lane.b32.xlu0 %v520, 9
    %v1712 = vpop.permute.xlu0 %1711
    %1713 = vrot.lane.b32.xlu0 %v519, 9
    %v1714 = vpop.permute.xlu0 %1713
    %1715 = vrot.lane.b32.xlu0 %v518, 9
    %v1716 = vpop.permute.xlu0 %1715
    %1717 = vrot.lane.b32.xlu0 %v517, 9
    %v1718 = vpop.permute.xlu0 %1717
    %1719 = vrot.lane.b32.xlu0 %v516, 9
    %v1720 = vpop.permute.xlu0 %1719
    %1721 = vrot.lane.b32.xlu0 %v515, 9
    %v1722 = vpop.permute.xlu0 %1721
    %1723 = vrot.lane.b32.xlu0 %v514, 9
    %v1724 = vpop.permute.xlu0 %1723
    %1725 = vrot.lane.b32.xlu0 %v513, 9
    %v1726 = vpop.permute.xlu0 %1725
    %1727 = vrot.lane.b32.xlu0 %v512, 9
    %v1728 = vpop.permute.xlu0 %1727
    %1729 = vrot.lane.b32.xlu0 %v511, 9
    %v1730 = vpop.permute.xlu0 %1729
    %1731 = vrot.lane.b32.xlu0 %v510, 9
    %v1732 = vpop.permute.xlu0 %1731
    %1733 = vrot.lane.b32.xlu0 %v509, 9
    %v1734 = vpop.permute.xlu0 %1733
    %1735 = vrot.lane.b32.xlu0 %v508, 9
    %v1736 = vpop.permute.xlu0 %1735
    %1737 = vrot.lane.b32.xlu0 %v507, 9
    %v1738 = vpop.permute.xlu0 %1737
    %1739 = vrot.lane.b32.xlu0 %v506, 9
    %v1740 = vpop.permute.xlu0 %1739
    %1741 = vrot.lane.b32.xlu0 %v505, 9
    %v1742 = vpop.permute.xlu0 %1741
    %1743 = vrot.lane.b32.xlu0 %v504, 9
    %v1744 = vpop.permute.xlu0 %1743
    %1745 = vrot.lane.b32.xlu0 %v503, 9
    %v1746 = vpop.permute.xlu0 %1745
    %1747 = vrot.lane.b32.xlu0 %v502, 9
    %v1748 = vpop.permute.xlu0 %1747
    %1749 = vrot.lane.b32.xlu0 %v501, 9
    %v1750 = vpop.permute.xlu0 %1749
    %1751 = vrot.lane.b32.xlu0 %v500, 9
    %v1752 = vpop.permute.xlu0 %1751
    %1753 = vrot.lane.b32.xlu0 %v499, 9
    %v1754 = vpop.permute.xlu0 %1753
    %1755 = vrot.lane.b32.xlu0 %v498, 9
    %v1756 = vpop.permute.xlu0 %1755
    %1757 = vrot.lane.b32.xlu0 %v497, 9
    %v1758 = vpop.permute.xlu0 %1757
    %1759 = vrot.lane.b32.xlu0 %v496, 9
    %v1760 = vpop.permute.xlu0 %1759
    %1761 = vrot.lane.b32.xlu0 %v495, 9
    %v1762 = vpop.permute.xlu0 %1761
    %1763 = vrot.lane.b32.xlu0 %v494, 9
    %v1764 = vpop.permute.xlu0 %1763
    %1765 = vrot.lane.b32.xlu0 %v493, 9
    %v1766 = vpop.permute.xlu0 %1765
    %1767 = vrot.lane.b32.xlu0 %v492, 9
    %v1768 = vpop.permute.xlu0 %1767
    %1769 = vrot.lane.b32.xlu0 %v491, 9
    %v1770 = vpop.permute.xlu0 %1769
    %1771 = vrot.lane.b32.xlu0 %v490, 9
    %v1772 = vpop.permute.xlu0 %1771
    %s1773 = scalar_lea.vmem [#allocation15], 768
    %v1774 = vld [vmem:[%s1773] sm:$0xf]
    %v1775 = vld [vmem:[%s1773 + $0x4] sm:$0xf]
    %v1776 = vld [vmem:[%s1773 + $0x8] sm:$0xf]
    %v1777 = vld [vmem:[%s1773 + $0xc] sm:$0xf]
    %v1778 = vld [vmem:[%s1773 + $0x10] sm:$0xf]
    %v1779 = vld [vmem:[%s1773 + $0x14] sm:$0xf]
    %v1780 = vld [vmem:[%s1773 + $0x18] sm:$0xf]
    %v1781 = vld [vmem:[%s1773 + $0x1c] sm:$0xf]
    %v1782 = vld [vmem:[%s1773 + $0x20] sm:$0xf]
    %v1783 = vld [vmem:[%s1773 + $0x24] sm:$0xf]
    %v1784 = vld [vmem:[%s1773 + $0x28] sm:$0xf]
    %v1785 = vld [vmem:[%s1773 + $0x2c] sm:$0xf]
    %v1786 = vld [vmem:[%s1773 + $0x30] sm:$0xf]
    %v1787 = vld [vmem:[%s1773 + $0x34] sm:$0xf]
    %v1788 = vld [vmem:[%s1773 + $0x38] sm:$0xf]
    %v1789 = vld [vmem:[%s1773 + $0x3c] sm:$0xf]
    %v1790 = vld [vmem:[%s1773 + $0x40] sm:$0xf]
    %v1791 = vld [vmem:[%s1773 + $0x44] sm:$0xf]
    %v1792 = vld [vmem:[%s1773 + $0x48] sm:$0xf]
    %v1793 = vld [vmem:[%s1773 + $0x4c] sm:$0xf]
    %v1794 = vld [vmem:[%s1773 + $0x50] sm:$0xf]
    %v1795 = vld [vmem:[%s1773 + $0x54] sm:$0xf]
    %v1796 = vld [vmem:[%s1773 + $0x58] sm:$0xf]
    %v1797 = vld [vmem:[%s1773 + $0x5c] sm:$0xf]
    %v1798 = vld [vmem:[%s1773 + $0x60] sm:$0xf]
    %v1799 = vld [vmem:[%s1773 + $0x64] sm:$0xf]
    %v1800 = vld [vmem:[%s1773 + $0x68] sm:$0xf]
    %v1801 = vld [vmem:[%s1773 + $0x6c] sm:$0xf]
    %v1802 = vld [vmem:[%s1773 + $0x70] sm:$0xf]
    %v1803 = vld [vmem:[%s1773 + $0x74] sm:$0xf]
    %v1804 = vld [vmem:[%s1773 + $0x78] sm:$0xf]
    %v1805 = vld [vmem:[%s1773 + $0x7c] sm:$0xf]
    %v1806 = vld [vmem:[%s1773 + $0x80] sm:$0xf]
    %v1807 = vld [vmem:[%s1773 + $0x84] sm:$0xf]
    %v1808 = vld [vmem:[%s1773 + $0x88] sm:$0xf]
    %v1809 = vld [vmem:[%s1773 + $0x8c] sm:$0xf]
    %v1810 = vld [vmem:[%s1773 + $0x90] sm:$0xf]
    %v1811 = vld [vmem:[%s1773 + $0x94] sm:$0xf]
    %v1812 = vld [vmem:[%s1773 + $0x98] sm:$0xf]
    %v1813 = vld [vmem:[%s1773 + $0x9c] sm:$0xf]
    %v1814 = vld [vmem:[%s1773 + $0xa0] sm:$0xf]
    %v1815 = vld [vmem:[%s1773 + $0xa4] sm:$0xf]
    %v1816 = vld [vmem:[%s1773 + $0xa8] sm:$0xf]
    %v1817 = vld [vmem:[%s1773 + $0xac] sm:$0xf]
    %v1818 = vld [vmem:[%s1773 + $0xb0] sm:$0xf]
    %v1819 = vld [vmem:[%s1773 + $0xb4] sm:$0xf]
    %v1820 = vld [vmem:[%s1773 + $0xb8] sm:$0xf]
    %v1821 = vld [vmem:[%s1773 + $0xbc] sm:$0xf]
    %v1822 = vld [vmem:[%s1773 + $0xc0] sm:$0xf]
    %v1823 = vld [vmem:[%s1773 + $0xc4] sm:$0xf]
    %v1824 = vld [vmem:[%s1773 + $0xc8] sm:$0xf]
    %v1825 = vld [vmem:[%s1773 + $0xcc] sm:$0xf]
    %v1826 = vld [vmem:[%s1773 + $0xd0] sm:$0xf]
    %v1827 = vld [vmem:[%s1773 + $0xd4] sm:$0xf]
    %v1828 = vld [vmem:[%s1773 + $0xd8] sm:$0xf]
    %v1829 = vld [vmem:[%s1773 + $0xdc] sm:$0xf]
    %v1830 = vld [vmem:[%s1773 + $0xe0] sm:$0xf]
    %v1831 = vld [vmem:[%s1773 + $0xe4] sm:$0xf]
    %v1832 = vld [vmem:[%s1773 + $0xe8] sm:$0xf]
    %v1833 = vld [vmem:[%s1773 + $0xec] sm:$0xf]
    %v1834 = vld [vmem:[%s1773 + $0xf0] sm:$0xf]
    %v1835 = vld [vmem:[%s1773 + $0xf4] sm:$0xf]
    %v1836 = vld [vmem:[%s1773 + $0xf8] sm:$0xf]
    %v1837 = vld [vmem:[%s1773 + $0xfc] sm:$0xf]
    %v1838 = vunpack.c.l.bf16 %v1774
    %v1839 = vunpack.c.l.bf16 %v1775
    %v1840 = vunpack.c.l.bf16 %v1776
    %v1841 = vunpack.c.l.bf16 %v1777
    %v1842 = vunpack.c.l.bf16 %v1778
    %v1843 = vunpack.c.l.bf16 %v1779
    %v1844 = vunpack.c.l.bf16 %v1780
    %v1845 = vunpack.c.l.bf16 %v1781
    %v1846 = vunpack.c.l.bf16 %v1782
    %v1847 = vunpack.c.l.bf16 %v1783
    %v1848 = vunpack.c.l.bf16 %v1784
    %v1849 = vunpack.c.l.bf16 %v1785
    %v1850 = vunpack.c.l.bf16 %v1786
    %v1851 = vunpack.c.l.bf16 %v1787
    %v1852 = vunpack.c.l.bf16 %v1788
    %v1853 = vunpack.c.l.bf16 %v1789
    %v1854 = vunpack.c.l.bf16 %v1790
    %v1855 = vunpack.c.l.bf16 %v1791
    %v1856 = vunpack.c.l.bf16 %v1792
    %v1857 = vunpack.c.l.bf16 %v1793
    %v1858 = vunpack.c.l.bf16 %v1794
    %v1859 = vunpack.c.l.bf16 %v1795
    %v1860 = vunpack.c.l.bf16 %v1796
    %v1861 = vunpack.c.l.bf16 %v1797
    %v1862 = vunpack.c.l.bf16 %v1798
    %v1863 = vunpack.c.l.bf16 %v1799
    %v1864 = vunpack.c.l.bf16 %v1800
    %v1865 = vunpack.c.l.bf16 %v1801
    %v1866 = vunpack.c.l.bf16 %v1802
    %v1867 = vunpack.c.l.bf16 %v1803
    %v1868 = vunpack.c.l.bf16 %v1804
    %v1869 = vunpack.c.l.bf16 %v1805
    %v1870 = vunpack.c.l.bf16 %v1806
    %v1871 = vunpack.c.l.bf16 %v1807
    %v1872 = vunpack.c.l.bf16 %v1808
    %v1873 = vunpack.c.l.bf16 %v1809
    %v1874 = vunpack.c.l.bf16 %v1810
    %v1875 = vunpack.c.l.bf16 %v1811
    %v1876 = vunpack.c.l.bf16 %v1812
    %v1877 = vunpack.c.l.bf16 %v1813
    %v1878 = vunpack.c.l.bf16 %v1814
    %v1879 = vunpack.c.l.bf16 %v1815
    %v1880 = vunpack.c.l.bf16 %v1816
    %v1881 = vunpack.c.l.bf16 %v1817
    %v1882 = vunpack.c.l.bf16 %v1818
    %v1883 = vunpack.c.l.bf16 %v1819
    %v1884 = vunpack.c.l.bf16 %v1820
    %v1885 = vunpack.c.l.bf16 %v1821
    %v1886 = vunpack.c.l.bf16 %v1822
    %v1887 = vunpack.c.l.bf16 %v1823
    %v1888 = vunpack.c.l.bf16 %v1824
    %v1889 = vunpack.c.l.bf16 %v1825
    %v1890 = vunpack.c.l.bf16 %v1826
    %v1891 = vunpack.c.l.bf16 %v1827
    %v1892 = vunpack.c.l.bf16 %v1828
    %v1893 = vunpack.c.l.bf16 %v1829
    %v1894 = vunpack.c.l.bf16 %v1830
    %v1895 = vunpack.c.l.bf16 %v1831
    %v1896 = vunpack.c.l.bf16 %v1832
    %v1897 = vunpack.c.l.bf16 %v1833
    %v1898 = vunpack.c.l.bf16 %v1834
    %v1899 = vunpack.c.l.bf16 %v1835
    %v1900 = vunpack.c.l.bf16 %v1836
    %v1901 = vunpack.c.l.bf16 %v1837
    %v1902 = vmul.f32 %v1646, %v1838
    %v1903 = vmul.f32 %v1648, %v1839
    %v1904 = vmul.f32 %v1650, %v1840
    %v1905 = vmul.f32 %v1652, %v1841
    %v1906 = vmul.f32 %v1654, %v1842
    %v1907 = vmul.f32 %v1656, %v1843
    %v1908 = vmul.f32 %v1658, %v1844
    %v1909 = vmul.f32 %v1660, %v1845
    %v1910 = vmul.f32 %v1662, %v1846
    %v1911 = vmul.f32 %v1664, %v1847
    %v1912 = vmul.f32 %v1666, %v1848
    %v1913 = vmul.f32 %v1668, %v1849
    %v1914 = vmul.f32 %v1670, %v1850
    %v1915 = vmul.f32 %v1672, %v1851
    %v1916 = vmul.f32 %v1674, %v1852
    %v1917 = vmul.f32 %v1676, %v1853
    %v1918 = vmul.f32 %v1678, %v1854
    %v1919 = vmul.f32 %v1680, %v1855
    %v1920 = vmul.f32 %v1682, %v1856
    %v1921 = vmul.f32 %v1684, %v1857
    %v1922 = vmul.f32 %v1686, %v1858
    %v1923 = vmul.f32 %v1688, %v1859
    %v1924 = vmul.f32 %v1690, %v1860
    %v1925 = vmul.f32 %v1692, %v1861
    %v1926 = vmul.f32 %v1694, %v1862
    %v1927 = vmul.f32 %v1696, %v1863
    %v1928 = vmul.f32 %v1698, %v1864
    %v1929 = vmul.f32 %v1700, %v1865
    %v1930 = vmul.f32 %v1702, %v1866
    %v1931 = vmul.f32 %v1704, %v1867
    %v1932 = vmul.f32 %v1706, %v1868
    %v1933 = vmul.f32 %v1708, %v1869
    %v1934 = vmul.f32 %v1710, %v1870
    %v1935 = vmul.f32 %v1712, %v1871
    %v1936 = vmul.f32 %v1714, %v1872
    %v1937 = vmul.f32 %v1716, %v1873
    %v1938 = vmul.f32 %v1718, %v1874
    %v1939 = vmul.f32 %v1720, %v1875
    %v1940 = vmul.f32 %v1722, %v1876
    %v1941 = vmul.f32 %v1724, %v1877
    %v1942 = vmul.f32 %v1726, %v1878
    %v1943 = vmul.f32 %v1728, %v1879
    %v1944 = vmul.f32 %v1730, %v1880
    %v1945 = vmul.f32 %v1732, %v1881
    %v1946 = vmul.f32 %v1734, %v1882
    %v1947 = vmul.f32 %v1736, %v1883
    %v1948 = vmul.f32 %v1738, %v1884
    %v1949 = vmul.f32 %v1740, %v1885
    %v1950 = vmul.f32 %v1742, %v1886
    %v1951 = vmul.f32 %v1744, %v1887
    %v1952 = vmul.f32 %v1746, %v1888
    %v1953 = vmul.f32 %v1748, %v1889
    %v1954 = vmul.f32 %v1750, %v1890
    %v1955 = vmul.f32 %v1752, %v1891
    %v1956 = vmul.f32 %v1754, %v1892
    %v1957 = vmul.f32 %v1756, %v1893
    %v1958 = vmul.f32 %v1758, %v1894
    %v1959 = vmul.f32 %v1760, %v1895
    %v1960 = vmul.f32 %v1762, %v1896
    %v1961 = vmul.f32 %v1764, %v1897
    %v1962 = vmul.f32 %v1766, %v1898
    %v1963 = vmul.f32 %v1768, %v1899
    %v1964 = vmul.f32 %v1770, %v1900
    %v1965 = vmul.f32 %v1772, %v1901
    %v1966 = vadd.f32 %v1581, %v1902
    %v1967 = vadd.f32 %v1582, %v1903
    %v1968 = vadd.f32 %v1583, %v1904
    %v1969 = vadd.f32 %v1584, %v1905
    %v1970 = vadd.f32 %v1585, %v1906
    %v1971 = vadd.f32 %v1586, %v1907
    %v1972 = vadd.f32 %v1587, %v1908
    %v1973 = vadd.f32 %v1588, %v1909
    %v1974 = vadd.f32 %v1589, %v1910
    %v1975 = vadd.f32 %v1590, %v1911
    %v1976 = vadd.f32 %v1591, %v1912
    %v1977 = vadd.f32 %v1592, %v1913
    %v1978 = vadd.f32 %v1593, %v1914
    %v1979 = vadd.f32 %v1594, %v1915
    %v1980 = vadd.f32 %v1595, %v1916
    %v1981 = vadd.f32 %v1596, %v1917
    %v1982 = vadd.f32 %v1597, %v1918
    %v1983 = vadd.f32 %v1598, %v1919
    %v1984 = vadd.f32 %v1599, %v1920
    %v1985 = vadd.f32 %v1600, %v1921
    %v1986 = vadd.f32 %v1601, %v1922
    %v1987 = vadd.f32 %v1602, %v1923
    %v1988 = vadd.f32 %v1603, %v1924
    %v1989 = vadd.f32 %v1604, %v1925
    %v1990 = vadd.f32 %v1605, %v1926
    %v1991 = vadd.f32 %v1606, %v1927
    %v1992 = vadd.f32 %v1607, %v1928
    %v1993 = vadd.f32 %v1608, %v1929
    %v1994 = vadd.f32 %v1609, %v1930
    %v1995 = vadd.f32 %v1610, %v1931
    %v1996 = vadd.f32 %v1611, %v1932
    %v1997 = vadd.f32 %v1612, %v1933
    %v1998 = vadd.f32 %v1613, %v1934
    %v1999 = vadd.f32 %v1614, %v1935
    %v2000 = vadd.f32 %v1615, %v1936
    %v2001 = vadd.f32 %v1616, %v1937
    %v2002 = vadd.f32 %v1617, %v1938
    %v2003 = vadd.f32 %v1618, %v1939
    %v2004 = vadd.f32 %v1619, %v1940
    %v2005 = vadd.f32 %v1620, %v1941
    %v2006 = vadd.f32 %v1621, %v1942
    %v2007 = vadd.f32 %v1622, %v1943
    %v2008 = vadd.f32 %v1623, %v1944
    %v2009 = vadd.f32 %v1624, %v1945
    %v2010 = vadd.f32 %v1625, %v1946
    %v2011 = vadd.f32 %v1626, %v1947
    %v2012 = vadd.f32 %v1627, %v1948
    %v2013 = vadd.f32 %v1628, %v1949
    %v2014 = vadd.f32 %v1629, %v1950
    %v2015 = vadd.f32 %v1630, %v1951
    %v2016 = vadd.f32 %v1631, %v1952
    %v2017 = vadd.f32 %v1632, %v1953
    %v2018 = vadd.f32 %v1633, %v1954
    %v2019 = vadd.f32 %v1634, %v1955
    %v2020 = vadd.f32 %v1635, %v1956
    %v2021 = vadd.f32 %v1636, %v1957
    %v2022 = vadd.f32 %v1637, %v1958
    %v2023 = vadd.f32 %v1638, %v1959
    %v2024 = vadd.f32 %v1639, %v1960
    %v2025 = vadd.f32 %v1640, %v1961
    %v2026 = vadd.f32 %v1641, %v1962
    %v2027 = vadd.f32 %v1642, %v1963
    %v2028 = vadd.f32 %v1643, %v1964
    %v2029 = vadd.f32 %v1644, %v1965
    %2030 = vrot.lane.b32.xlu0 %v327, 12
    %v2031 = vpop.permute.xlu0 %2030
    %2032 = vrot.lane.b32.xlu0 %v328, 12
    %v2033 = vpop.permute.xlu0 %2032
    %2034 = vrot.lane.b32.xlu0 %v329, 12
    %v2035 = vpop.permute.xlu0 %2034
    %2036 = vrot.lane.b32.xlu0 %v330, 12
    %v2037 = vpop.permute.xlu0 %2036
    %2038 = vrot.lane.b32.xlu0 %v331, 12
    %v2039 = vpop.permute.xlu0 %2038
    %2040 = vrot.lane.b32.xlu0 %v332, 12
    %v2041 = vpop.permute.xlu0 %2040
    %2042 = vrot.lane.b32.xlu0 %v333, 12
    %v2043 = vpop.permute.xlu0 %2042
    %2044 = vrot.lane.b32.xlu0 %v334, 12
    %v2045 = vpop.permute.xlu0 %2044
    %2046 = vrot.lane.b32.xlu0 %v335, 12
    %v2047 = vpop.permute.xlu0 %2046
    %2048 = vrot.lane.b32.xlu0 %v336, 12
    %v2049 = vpop.permute.xlu0 %2048
    %2050 = vrot.lane.b32.xlu0 %v337, 12
    %v2051 = vpop.permute.xlu0 %2050
    %2052 = vrot.lane.b32.xlu0 %v338, 12
    %v2053 = vpop.permute.xlu0 %2052
    %2054 = vrot.lane.b32.xlu0 %v339, 12
    %v2055 = vpop.permute.xlu0 %2054
    %2056 = vrot.lane.b32.xlu0 %v340, 12
    %v2057 = vpop.permute.xlu0 %2056
    %2058 = vrot.lane.b32.xlu0 %v341, 12
    %v2059 = vpop.permute.xlu0 %2058
    %2060 = vrot.lane.b32.xlu0 %v342, 12
    %v2061 = vpop.permute.xlu0 %2060
    %2062 = vrot.lane.b32.xlu0 %v343, 12
    %v2063 = vpop.permute.xlu0 %2062
    %2064 = vrot.lane.b32.xlu0 %v344, 12
    %v2065 = vpop.permute.xlu0 %2064
    %2066 = vrot.lane.b32.xlu0 %v345, 12
    %v2067 = vpop.permute.xlu0 %2066
    %2068 = vrot.lane.b32.xlu0 %v346, 12
    %v2069 = vpop.permute.xlu0 %2068
    %2070 = vrot.lane.b32.xlu0 %v347, 12
    %v2071 = vpop.permute.xlu0 %2070
    %2072 = vrot.lane.b32.xlu0 %v348, 12
    %v2073 = vpop.permute.xlu0 %2072
    %2074 = vrot.lane.b32.xlu0 %v349, 12
    %v2075 = vpop.permute.xlu0 %2074
    %2076 = vrot.lane.b32.xlu0 %v350, 12
    %v2077 = vpop.permute.xlu0 %2076
    %2078 = vrot.lane.b32.xlu0 %v351, 12
    %v2079 = vpop.permute.xlu0 %2078
    %2080 = vrot.lane.b32.xlu0 %v352, 12
    %v2081 = vpop.permute.xlu0 %2080
    %2082 = vrot.lane.b32.xlu0 %v353, 12
    %v2083 = vpop.permute.xlu0 %2082
    %2084 = vrot.lane.b32.xlu0 %v354, 12
    %v2085 = vpop.permute.xlu0 %2084
    %2086 = vrot.lane.b32.xlu0 %v355, 12
    %v2087 = vpop.permute.xlu0 %2086
    %2088 = vrot.lane.b32.xlu0 %v356, 12
    %v2089 = vpop.permute.xlu0 %2088
    %2090 = vrot.lane.b32.xlu0 %v357, 12
    %v2091 = vpop.permute.xlu0 %2090
    %2092 = vrot.lane.b32.xlu0 %v358, 12
    %v2093 = vpop.permute.xlu0 %2092
    %2094 = vrot.lane.b32.xlu0 %v359, 12
    %v2095 = vpop.permute.xlu0 %2094
    %2096 = vrot.lane.b32.xlu0 %v360, 12
    %v2097 = vpop.permute.xlu0 %2096
    %2098 = vrot.lane.b32.xlu0 %v361, 12
    %v2099 = vpop.permute.xlu0 %2098
    %2100 = vrot.lane.b32.xlu0 %v362, 12
    %v2101 = vpop.permute.xlu0 %2100
    %2102 = vrot.lane.b32.xlu0 %v363, 12
    %v2103 = vpop.permute.xlu0 %2102
    %2104 = vrot.lane.b32.xlu0 %v364, 12
    %v2105 = vpop.permute.xlu0 %2104
    %2106 = vrot.lane.b32.xlu0 %v365, 12
    %v2107 = vpop.permute.xlu0 %2106
    %2108 = vrot.lane.b32.xlu0 %v366, 12
    %v2109 = vpop.permute.xlu0 %2108
    %2110 = vrot.lane.b32.xlu0 %v367, 12
    %v2111 = vpop.permute.xlu0 %2110
    %2112 = vrot.lane.b32.xlu0 %v368, 12
    %v2113 = vpop.permute.xlu0 %2112
    %2114 = vrot.lane.b32.xlu0 %v369, 12
    %v2115 = vpop.permute.xlu0 %2114
    %2116 = vrot.lane.b32.xlu0 %v370, 12
    %v2117 = vpop.permute.xlu0 %2116
    %2118 = vrot.lane.b32.xlu0 %v371, 12
    %v2119 = vpop.permute.xlu0 %2118
    %2120 = vrot.lane.b32.xlu0 %v372, 12
    %v2121 = vpop.permute.xlu0 %2120
    %2122 = vrot.lane.b32.xlu0 %v373, 12
    %v2123 = vpop.permute.xlu0 %2122
    %2124 = vrot.lane.b32.xlu0 %v374, 12
    %v2125 = vpop.permute.xlu0 %2124
    %2126 = vrot.lane.b32.xlu0 %v375, 12
    %v2127 = vpop.permute.xlu0 %2126
    %2128 = vrot.lane.b32.xlu0 %v376, 12
    %v2129 = vpop.permute.xlu0 %2128
    %2130 = vrot.lane.b32.xlu0 %v377, 12
    %v2131 = vpop.permute.xlu0 %2130
    %2132 = vrot.lane.b32.xlu0 %v378, 12
    %v2133 = vpop.permute.xlu0 %2132
    %2134 = vrot.lane.b32.xlu0 %v379, 12
    %v2135 = vpop.permute.xlu0 %2134
    %2136 = vrot.lane.b32.xlu0 %v380, 12
    %v2137 = vpop.permute.xlu0 %2136
    %2138 = vrot.lane.b32.xlu0 %v381, 12
    %v2139 = vpop.permute.xlu0 %2138
    %2140 = vrot.lane.b32.xlu0 %v382, 12
    %v2141 = vpop.permute.xlu0 %2140
    %2142 = vrot.lane.b32.xlu0 %v383, 12
    %v2143 = vpop.permute.xlu0 %2142
    %2144 = vrot.lane.b32.xlu0 %v384, 12
    %v2145 = vpop.permute.xlu0 %2144
    %2146 = vrot.lane.b32.xlu0 %v385, 12
    %v2147 = vpop.permute.xlu0 %2146
    %2148 = vrot.lane.b32.xlu0 %v386, 12
    %v2149 = vpop.permute.xlu0 %2148
    %2150 = vrot.lane.b32.xlu0 %v387, 12
    %v2151 = vpop.permute.xlu0 %2150
    %2152 = vrot.lane.b32.xlu0 %v388, 12
    %v2153 = vpop.permute.xlu0 %2152
    %2154 = vrot.lane.b32.xlu0 %v389, 12
    %v2155 = vpop.permute.xlu0 %2154
    %2156 = vrot.lane.b32.xlu0 %v390, 12
    %v2157 = vpop.permute.xlu0 %2156
    %s2158 = scalar_lea.vmem [#allocation15], 1024
    %v2159 = vld [vmem:[%s2158] sm:$0xf]
    %v2160 = vld [vmem:[%s2158 + $0x4] sm:$0xf]
    %v2161 = vld [vmem:[%s2158 + $0x8] sm:$0xf]
    %v2162 = vld [vmem:[%s2158 + $0xc] sm:$0xf]
    %v2163 = vld [vmem:[%s2158 + $0x10] sm:$0xf]
    %v2164 = vld [vmem:[%s2158 + $0x14] sm:$0xf]
    %v2165 = vld [vmem:[%s2158 + $0x18] sm:$0xf]
    %v2166 = vld [vmem:[%s2158 + $0x1c] sm:$0xf]
    %v2167 = vld [vmem:[%s2158 + $0x20] sm:$0xf]
    %v2168 = vld [vmem:[%s2158 + $0x24] sm:$0xf]
    %v2169 = vld [vmem:[%s2158 + $0x28] sm:$0xf]
    %v2170 = vld [vmem:[%s2158 + $0x2c] sm:$0xf]
    %v2171 = vld [vmem:[%s2158 + $0x30] sm:$0xf]
    %v2172 = vld [vmem:[%s2158 + $0x34] sm:$0xf]
    %v2173 = vld [vmem:[%s2158 + $0x38] sm:$0xf]
    %v2174 = vld [vmem:[%s2158 + $0x3c] sm:$0xf]
    %v2175 = vld [vmem:[%s2158 + $0x40] sm:$0xf]
    %v2176 = vld [vmem:[%s2158 + $0x44] sm:$0xf]
    %v2177 = vld [vmem:[%s2158 + $0x48] sm:$0xf]
    %v2178 = vld [vmem:[%s2158 + $0x4c] sm:$0xf]
    %v2179 = vld [vmem:[%s2158 + $0x50] sm:$0xf]
    %v2180 = vld [vmem:[%s2158 + $0x54] sm:$0xf]
    %v2181 = vld [vmem:[%s2158 + $0x58] sm:$0xf]
    %v2182 = vld [vmem:[%s2158 + $0x5c] sm:$0xf]
    %v2183 = vld [vmem:[%s2158 + $0x60] sm:$0xf]
    %v2184 = vld [vmem:[%s2158 + $0x64] sm:$0xf]
    %v2185 = vld [vmem:[%s2158 + $0x68] sm:$0xf]
    %v2186 = vld [vmem:[%s2158 + $0x6c] sm:$0xf]
    %v2187 = vld [vmem:[%s2158 + $0x70] sm:$0xf]
    %v2188 = vld [vmem:[%s2158 + $0x74] sm:$0xf]
    %v2189 = vld [vmem:[%s2158 + $0x78] sm:$0xf]
    %v2190 = vld [vmem:[%s2158 + $0x7c] sm:$0xf]
    %v2191 = vld [vmem:[%s2158 + $0x80] sm:$0xf]
    %v2192 = vld [vmem:[%s2158 + $0x84] sm:$0xf]
    %v2193 = vld [vmem:[%s2158 + $0x88] sm:$0xf]
    %v2194 = vld [vmem:[%s2158 + $0x8c] sm:$0xf]
    %v2195 = vld [vmem:[%s2158 + $0x90] sm:$0xf]
    %v2196 = vld [vmem:[%s2158 + $0x94] sm:$0xf]
    %v2197 = vld [vmem:[%s2158 + $0x98] sm:$0xf]
    %v2198 = vld [vmem:[%s2158 + $0x9c] sm:$0xf]
    %v2199 = vld [vmem:[%s2158 + $0xa0] sm:$0xf]
    %v2200 = vld [vmem:[%s2158 + $0xa4] sm:$0xf]
    %v2201 = vld [vmem:[%s2158 + $0xa8] sm:$0xf]
    %v2202 = vld [vmem:[%s2158 + $0xac] sm:$0xf]
    %v2203 = vld [vmem:[%s2158 + $0xb0] sm:$0xf]
    %v2204 = vld [vmem:[%s2158 + $0xb4] sm:$0xf]
    %v2205 = vld [vmem:[%s2158 + $0xb8] sm:$0xf]
    %v2206 = vld [vmem:[%s2158 + $0xbc] sm:$0xf]
    %v2207 = vld [vmem:[%s2158 + $0xc0] sm:$0xf]
    %v2208 = vld [vmem:[%s2158 + $0xc4] sm:$0xf]
    %v2209 = vld [vmem:[%s2158 + $0xc8] sm:$0xf]
    %v2210 = vld [vmem:[%s2158 + $0xcc] sm:$0xf]
    %v2211 = vld [vmem:[%s2158 + $0xd0] sm:$0xf]
    %v2212 = vld [vmem:[%s2158 + $0xd4] sm:$0xf]
    %v2213 = vld [vmem:[%s2158 + $0xd8] sm:$0xf]
    %v2214 = vld [vmem:[%s2158 + $0xdc] sm:$0xf]
    %v2215 = vld [vmem:[%s2158 + $0xe0] sm:$0xf]
    %v2216 = vld [vmem:[%s2158 + $0xe4] sm:$0xf]
    %v2217 = vld [vmem:[%s2158 + $0xe8] sm:$0xf]
    %v2218 = vld [vmem:[%s2158 + $0xec] sm:$0xf]
    %v2219 = vld [vmem:[%s2158 + $0xf0] sm:$0xf]
    %v2220 = vld [vmem:[%s2158 + $0xf4] sm:$0xf]
    %v2221 = vld [vmem:[%s2158 + $0xf8] sm:$0xf]
    %v2222 = vld [vmem:[%s2158 + $0xfc] sm:$0xf]
    %v2223 = vunpack.c.l.bf16 %v2159
    %v2224 = vunpack.c.l.bf16 %v2160
    %v2225 = vunpack.c.l.bf16 %v2161
    %v2226 = vunpack.c.l.bf16 %v2162
    %v2227 = vunpack.c.l.bf16 %v2163
    %v2228 = vunpack.c.l.bf16 %v2164
    %v2229 = vunpack.c.l.bf16 %v2165
    %v2230 = vunpack.c.l.bf16 %v2166
    %v2231 = vunpack.c.l.bf16 %v2167
    %v2232 = vunpack.c.l.bf16 %v2168
    %v2233 = vunpack.c.l.bf16 %v2169
    %v2234 = vunpack.c.l.bf16 %v2170
    %v2235 = vunpack.c.l.bf16 %v2171
    %v2236 = vunpack.c.l.bf16 %v2172
    %v2237 = vunpack.c.l.bf16 %v2173
    %v2238 = vunpack.c.l.bf16 %v2174
    %v2239 = vunpack.c.l.bf16 %v2175
    %v2240 = vunpack.c.l.bf16 %v2176
    %v2241 = vunpack.c.l.bf16 %v2177
    %v2242 = vunpack.c.l.bf16 %v2178
    %v2243 = vunpack.c.l.bf16 %v2179
    %v2244 = vunpack.c.l.bf16 %v2180
    %v2245 = vunpack.c.l.bf16 %v2181
    %v2246 = vunpack.c.l.bf16 %v2182
    %v2247 = vunpack.c.l.bf16 %v2183
    %v2248 = vunpack.c.l.bf16 %v2184
    %v2249 = vunpack.c.l.bf16 %v2185
    %v2250 = vunpack.c.l.bf16 %v2186
    %v2251 = vunpack.c.l.bf16 %v2187
    %v2252 = vunpack.c.l.bf16 %v2188
    %v2253 = vunpack.c.l.bf16 %v2189
    %v2254 = vunpack.c.l.bf16 %v2190
    %v2255 = vunpack.c.l.bf16 %v2191
    %v2256 = vunpack.c.l.bf16 %v2192
    %v2257 = vunpack.c.l.bf16 %v2193
    %v2258 = vunpack.c.l.bf16 %v2194
    %v2259 = vunpack.c.l.bf16 %v2195
    %v2260 = vunpack.c.l.bf16 %v2196
    %v2261 = vunpack.c.l.bf16 %v2197
    %v2262 = vunpack.c.l.bf16 %v2198
    %v2263 = vunpack.c.l.bf16 %v2199
    %v2264 = vunpack.c.l.bf16 %v2200
    %v2265 = vunpack.c.l.bf16 %v2201
    %v2266 = vunpack.c.l.bf16 %v2202
    %v2267 = vunpack.c.l.bf16 %v2203
    %v2268 = vunpack.c.l.bf16 %v2204
    %v2269 = vunpack.c.l.bf16 %v2205
    %v2270 = vunpack.c.l.bf16 %v2206
    %v2271 = vunpack.c.l.bf16 %v2207
    %v2272 = vunpack.c.l.bf16 %v2208
    %v2273 = vunpack.c.l.bf16 %v2209
    %v2274 = vunpack.c.l.bf16 %v2210
    %v2275 = vunpack.c.l.bf16 %v2211
    %v2276 = vunpack.c.l.bf16 %v2212
    %v2277 = vunpack.c.l.bf16 %v2213
    %v2278 = vunpack.c.l.bf16 %v2214
    %v2279 = vunpack.c.l.bf16 %v2215
    %v2280 = vunpack.c.l.bf16 %v2216
    %v2281 = vunpack.c.l.bf16 %v2217
    %v2282 = vunpack.c.l.bf16 %v2218
    %v2283 = vunpack.c.l.bf16 %v2219
    %v2284 = vunpack.c.l.bf16 %v2220
    %v2285 = vunpack.c.l.bf16 %v2221
    %v2286 = vunpack.c.l.bf16 %v2222
    %v2287 = vmul.f32 %v2031, %v2223
    %v2288 = vmul.f32 %v2033, %v2224
    %v2289 = vmul.f32 %v2035, %v2225
    %v2290 = vmul.f32 %v2037, %v2226
    %v2291 = vmul.f32 %v2039, %v2227
    %v2292 = vmul.f32 %v2041, %v2228
    %v2293 = vmul.f32 %v2043, %v2229
    %v2294 = vmul.f32 %v2045, %v2230
    %v2295 = vmul.f32 %v2047, %v2231
    %v2296 = vmul.f32 %v2049, %v2232
    %v2297 = vmul.f32 %v2051, %v2233
    %v2298 = vmul.f32 %v2053, %v2234
    %v2299 = vmul.f32 %v2055, %v2235
    %v2300 = vmul.f32 %v2057, %v2236
    %v2301 = vmul.f32 %v2059, %v2237
    %v2302 = vmul.f32 %v2061, %v2238
    %v2303 = vmul.f32 %v2063, %v2239
    %v2304 = vmul.f32 %v2065, %v2240
    %v2305 = vmul.f32 %v2067, %v2241
    %v2306 = vmul.f32 %v2069, %v2242
    %v2307 = vmul.f32 %v2071, %v2243
    %v2308 = vmul.f32 %v2073, %v2244
    %v2309 = vmul.f32 %v2075, %v2245
    %v2310 = vmul.f32 %v2077, %v2246
    %v2311 = vmul.f32 %v2079, %v2247
    %v2312 = vmul.f32 %v2081, %v2248
    %v2313 = vmul.f32 %v2083, %v2249
    %v2314 = vmul.f32 %v2085, %v2250
    %v2315 = vmul.f32 %v2087, %v2251
    %v2316 = vmul.f32 %v2089, %v2252
    %v2317 = vmul.f32 %v2091, %v2253
    %v2318 = vmul.f32 %v2093, %v2254
    %v2319 = vmul.f32 %v2095, %v2255
    %v2320 = vmul.f32 %v2097, %v2256
    %v2321 = vmul.f32 %v2099, %v2257
    %v2322 = vmul.f32 %v2101, %v2258
    %v2323 = vmul.f32 %v2103, %v2259
    %v2324 = vmul.f32 %v2105, %v2260
    %v2325 = vmul.f32 %v2107, %v2261
    %v2326 = vmul.f32 %v2109, %v2262
    %v2327 = vmul.f32 %v2111, %v2263
    %v2328 = vmul.f32 %v2113, %v2264
    %v2329 = vmul.f32 %v2115, %v2265
    %v2330 = vmul.f32 %v2117, %v2266
    %v2331 = vmul.f32 %v2119, %v2267
    %v2332 = vmul.f32 %v2121, %v2268
    %v2333 = vmul.f32 %v2123, %v2269
    %v2334 = vmul.f32 %v2125, %v2270
    %v2335 = vmul.f32 %v2127, %v2271
    %v2336 = vmul.f32 %v2129, %v2272
    %v2337 = vmul.f32 %v2131, %v2273
    %v2338 = vmul.f32 %v2133, %v2274
    %v2339 = vmul.f32 %v2135, %v2275
    %v2340 = vmul.f32 %v2137, %v2276
    %v2341 = vmul.f32 %v2139, %v2277
    %v2342 = vmul.f32 %v2141, %v2278
    %v2343 = vmul.f32 %v2143, %v2279
    %v2344 = vmul.f32 %v2145, %v2280
    %v2345 = vmul.f32 %v2147, %v2281
    %v2346 = vmul.f32 %v2149, %v2282
    %v2347 = vmul.f32 %v2151, %v2283
    %v2348 = vmul.f32 %v2153, %v2284
    %v2349 = vmul.f32 %v2155, %v2285
    %v2350 = vmul.f32 %v2157, %v2286
    %v2351 = vadd.f32 %v1966, %v2287
    %v2352 = vadd.f32 %v1967, %v2288
    %v2353 = vadd.f32 %v1968, %v2289
    %v2354 = vadd.f32 %v1969, %v2290
    %v2355 = vadd.f32 %v1970, %v2291
    %v2356 = vadd.f32 %v1971, %v2292
    %v2357 = vadd.f32 %v1972, %v2293
    %v2358 = vadd.f32 %v1973, %v2294
    %v2359 = vadd.f32 %v1974, %v2295
    %v2360 = vadd.f32 %v1975, %v2296
    %v2361 = vadd.f32 %v1976, %v2297
    %v2362 = vadd.f32 %v1977, %v2298
    %v2363 = vadd.f32 %v1978, %v2299
    %v2364 = vadd.f32 %v1979, %v2300
    %v2365 = vadd.f32 %v1980, %v2301
    %v2366 = vadd.f32 %v1981, %v2302
    %v2367 = vadd.f32 %v1982, %v2303
    %v2368 = vadd.f32 %v1983, %v2304
    %v2369 = vadd.f32 %v1984, %v2305
    %v2370 = vadd.f32 %v1985, %v2306
    %v2371 = vadd.f32 %v1986, %v2307
    %v2372 = vadd.f32 %v1987, %v2308
    %v2373 = vadd.f32 %v1988, %v2309
    %v2374 = vadd.f32 %v1989, %v2310
    %v2375 = vadd.f32 %v1990, %v2311
    %v2376 = vadd.f32 %v1991, %v2312
    %v2377 = vadd.f32 %v1992, %v2313
    %v2378 = vadd.f32 %v1993, %v2314
    %v2379 = vadd.f32 %v1994, %v2315
    %v2380 = vadd.f32 %v1995, %v2316
    %v2381 = vadd.f32 %v1996, %v2317
    %v2382 = vadd.f32 %v1997, %v2318
    %v2383 = vadd.f32 %v1998, %v2319
    %v2384 = vadd.f32 %v1999, %v2320
    %v2385 = vadd.f32 %v2000, %v2321
    %v2386 = vadd.f32 %v2001, %v2322
    %v2387 = vadd.f32 %v2002, %v2323
    %v2388 = vadd.f32 %v2003, %v2324
    %v2389 = vadd.f32 %v2004, %v2325
    %v2390 = vadd.f32 %v2005, %v2326
    %v2391 = vadd.f32 %v2006, %v2327
    %v2392 = vadd.f32 %v2007, %v2328
    %v2393 = vadd.f32 %v2008, %v2329
    %v2394 = vadd.f32 %v2009, %v2330
    %v2395 = vadd.f32 %v2010, %v2331
    %v2396 = vadd.f32 %v2011, %v2332
    %v2397 = vadd.f32 %v2012, %v2333
    %v2398 = vadd.f32 %v2013, %v2334
    %v2399 = vadd.f32 %v2014, %v2335
    %v2400 = vadd.f32 %v2015, %v2336
    %v2401 = vadd.f32 %v2016, %v2337
    %v2402 = vadd.f32 %v2017, %v2338
    %v2403 = vadd.f32 %v2018, %v2339
    %v2404 = vadd.f32 %v2019, %v2340
    %v2405 = vadd.f32 %v2020, %v2341
    %v2406 = vadd.f32 %v2021, %v2342
    %v2407 = vadd.f32 %v2022, %v2343
    %v2408 = vadd.f32 %v2023, %v2344
    %v2409 = vadd.f32 %v2024, %v2345
    %v2410 = vadd.f32 %v2025, %v2346
    %v2411 = vadd.f32 %v2026, %v2347
    %v2412 = vadd.f32 %v2027, %v2348
    %v2413 = vadd.f32 %v2028, %v2349
    %v2414 = vadd.f32 %v2029, %v2350
    %2415 = vrot.lane.b32.xlu0 %v681, 15
    %v2416 = vpop.permute.xlu0 %2415
    %2417 = vrot.lane.b32.xlu0 %v680, 15
    %v2418 = vpop.permute.xlu0 %2417
    %2419 = vrot.lane.b32.xlu0 %v679, 15
    %v2420 = vpop.permute.xlu0 %2419
    %2421 = vrot.lane.b32.xlu0 %v678, 15
    %v2422 = vpop.permute.xlu0 %2421
    %2423 = vrot.lane.b32.xlu0 %v677, 15
    %v2424 = vpop.permute.xlu0 %2423
    %2425 = vrot.lane.b32.xlu0 %v676, 15
    %v2426 = vpop.permute.xlu0 %2425
    %2427 = vrot.lane.b32.xlu0 %v675, 15
    %v2428 = vpop.permute.xlu0 %2427
    %2429 = vrot.lane.b32.xlu0 %v674, 15
    %v2430 = vpop.permute.xlu0 %2429
    %2431 = vrot.lane.b32.xlu0 %v673, 15
    %v2432 = vpop.permute.xlu0 %2431
    %2433 = vrot.lane.b32.xlu0 %v672, 15
    %v2434 = vpop.permute.xlu0 %2433
    %2435 = vrot.lane.b32.xlu0 %v671, 15
    %v2436 = vpop.permute.xlu0 %2435
    %2437 = vrot.lane.b32.xlu0 %v670, 15
    %v2438 = vpop.permute.xlu0 %2437
    %2439 = vrot.lane.b32.xlu0 %v669, 15
    %v2440 = vpop.permute.xlu0 %2439
    %2441 = vrot.lane.b32.xlu0 %v668, 15
    %v2442 = vpop.permute.xlu0 %2441
    %2443 = vrot.lane.b32.xlu0 %v667, 15
    %v2444 = vpop.permute.xlu0 %2443
    %2445 = vrot.lane.b32.xlu0 %v666, 15
    %v2446 = vpop.permute.xlu0 %2445
    %2447 = vrot.lane.b32.xlu0 %v665, 15
    %v2448 = vpop.permute.xlu0 %2447
    %2449 = vrot.lane.b32.xlu0 %v664, 15
    %v2450 = vpop.permute.xlu0 %2449
    %2451 = vrot.lane.b32.xlu0 %v663, 15
    %v2452 = vpop.permute.xlu0 %2451
    %2453 = vrot.lane.b32.xlu0 %v662, 15
    %v2454 = vpop.permute.xlu0 %2453
    %2455 = vrot.lane.b32.xlu0 %v661, 15
    %v2456 = vpop.permute.xlu0 %2455
    %2457 = vrot.lane.b32.xlu0 %v660, 15
    %v2458 = vpop.permute.xlu0 %2457
    %2459 = vrot.lane.b32.xlu0 %v659, 15
    %v2460 = vpop.permute.xlu0 %2459
    %2461 = vrot.lane.b32.xlu0 %v658, 15
    %v2462 = vpop.permute.xlu0 %2461
    %2463 = vrot.lane.b32.xlu0 %v657, 15
    %v2464 = vpop.permute.xlu0 %2463
    %2465 = vrot.lane.b32.xlu0 %v656, 15
    %v2466 = vpop.permute.xlu0 %2465
    %2467 = vrot.lane.b32.xlu0 %v655, 15
    %v2468 = vpop.permute.xlu0 %2467
    %2469 = vrot.lane.b32.xlu0 %v654, 15
    %v2470 = vpop.permute.xlu0 %2469
    %2471 = vrot.lane.b32.xlu0 %v653, 15
    %v2472 = vpop.permute.xlu0 %2471
    %2473 = vrot.lane.b32.xlu0 %v652, 15
    %v2474 = vpop.permute.xlu0 %2473
    %2475 = vrot.lane.b32.xlu0 %v651, 15
    %v2476 = vpop.permute.xlu0 %2475
    %2477 = vrot.lane.b32.xlu0 %v650, 15
    %v2478 = vpop.permute.xlu0 %2477
    %2479 = vrot.lane.b32.xlu0 %v649, 15
    %v2480 = vpop.permute.xlu0 %2479
    %2481 = vrot.lane.b32.xlu0 %v648, 15
    %v2482 = vpop.permute.xlu0 %2481
    %2483 = vrot.lane.b32.xlu0 %v647, 15
    %v2484 = vpop.permute.xlu0 %2483
    %2485 = vrot.lane.b32.xlu0 %v646, 15
    %v2486 = vpop.permute.xlu0 %2485
    %2487 = vrot.lane.b32.xlu0 %v645, 15
    %v2488 = vpop.permute.xlu0 %2487
    %2489 = vrot.lane.b32.xlu0 %v644, 15
    %v2490 = vpop.permute.xlu0 %2489
    %2491 = vrot.lane.b32.xlu0 %v643, 15
    %v2492 = vpop.permute.xlu0 %2491
    %2493 = vrot.lane.b32.xlu0 %v642, 15
    %v2494 = vpop.permute.xlu0 %2493
    %2495 = vrot.lane.b32.xlu0 %v641, 15
    %v2496 = vpop.permute.xlu0 %2495
    %2497 = vrot.lane.b32.xlu0 %v640, 15
    %v2498 = vpop.permute.xlu0 %2497
    %2499 = vrot.lane.b32.xlu0 %v639, 15
    %v2500 = vpop.permute.xlu0 %2499
    %2501 = vrot.lane.b32.xlu0 %v638, 15
    %v2502 = vpop.permute.xlu0 %2501
    %2503 = vrot.lane.b32.xlu0 %v637, 15
    %v2504 = vpop.permute.xlu0 %2503
    %2505 = vrot.lane.b32.xlu0 %v636, 15
    %v2506 = vpop.permute.xlu0 %2505
    %2507 = vrot.lane.b32.xlu0 %v635, 15
    %v2508 = vpop.permute.xlu0 %2507
    %2509 = vrot.lane.b32.xlu0 %v634, 15
    %v2510 = vpop.permute.xlu0 %2509
    %2511 = vrot.lane.b32.xlu0 %v633, 15
    %v2512 = vpop.permute.xlu0 %2511
    %2513 = vrot.lane.b32.xlu0 %v632, 15
    %v2514 = vpop.permute.xlu0 %2513
    %2515 = vrot.lane.b32.xlu0 %v631, 15
    %v2516 = vpop.permute.xlu0 %2515
    %2517 = vrot.lane.b32.xlu0 %v630, 15
    %v2518 = vpop.permute.xlu0 %2517
    %2519 = vrot.lane.b32.xlu0 %v629, 15
    %v2520 = vpop.permute.xlu0 %2519
    %2521 = vrot.lane.b32.xlu0 %v628, 15
    %v2522 = vpop.permute.xlu0 %2521
    %2523 = vrot.lane.b32.xlu0 %v627, 15
    %v2524 = vpop.permute.xlu0 %2523
    %2525 = vrot.lane.b32.xlu0 %v626, 15
    %v2526 = vpop.permute.xlu0 %2525
    %2527 = vrot.lane.b32.xlu0 %v625, 15
    %v2528 = vpop.permute.xlu0 %2527
    %2529 = vrot.lane.b32.xlu0 %v624, 15
    %v2530 = vpop.permute.xlu0 %2529
    %2531 = vrot.lane.b32.xlu0 %v623, 15
    %v2532 = vpop.permute.xlu0 %2531
    %2533 = vrot.lane.b32.xlu0 %v622, 15
    %v2534 = vpop.permute.xlu0 %2533
    %2535 = vrot.lane.b32.xlu0 %v621, 15
    %v2536 = vpop.permute.xlu0 %2535
    %2537 = vrot.lane.b32.xlu0 %v620, 15
    %v2538 = vpop.permute.xlu0 %2537
    %2539 = vrot.lane.b32.xlu0 %v619, 15
    %v2540 = vpop.permute.xlu0 %2539
    %2541 = vrot.lane.b32.xlu0 %v682, 15
    %v2542 = vpop.permute.xlu0 %2541
    %s2543 = scalar_lea.vmem [#allocation15], 1280
    %v2544 = vld [vmem:[%s2543] sm:$0xf]
    %v2545 = vld [vmem:[%s2543 + $0x4] sm:$0xf]
    %v2546 = vld [vmem:[%s2543 + $0x8] sm:$0xf]
    %v2547 = vld [vmem:[%s2543 + $0xc] sm:$0xf]
    %v2548 = vld [vmem:[%s2543 + $0x10] sm:$0xf]
    %v2549 = vld [vmem:[%s2543 + $0x14] sm:$0xf]
    %v2550 = vld [vmem:[%s2543 + $0x18] sm:$0xf]
    %v2551 = vld [vmem:[%s2543 + $0x1c] sm:$0xf]
    %v2552 = vld [vmem:[%s2543 + $0x20] sm:$0xf]
    %v2553 = vld [vmem:[%s2543 + $0x24] sm:$0xf]
    %v2554 = vld [vmem:[%s2543 + $0x28] sm:$0xf]
    %v2555 = vld [vmem:[%s2543 + $0x2c] sm:$0xf]
    %v2556 = vld [vmem:[%s2543 + $0x30] sm:$0xf]
    %v2557 = vld [vmem:[%s2543 + $0x34] sm:$0xf]
    %v2558 = vld [vmem:[%s2543 + $0x38] sm:$0xf]
    %v2559 = vld [vmem:[%s2543 + $0x3c] sm:$0xf]
    %v2560 = vld [vmem:[%s2543 + $0x40] sm:$0xf]
    %v2561 = vld [vmem:[%s2543 + $0x44] sm:$0xf]
    %v2562 = vld [vmem:[%s2543 + $0x48] sm:$0xf]
    %v2563 = vld [vmem:[%s2543 + $0x4c] sm:$0xf]
    %v2564 = vld [vmem:[%s2543 + $0x50] sm:$0xf]
    %v2565 = vld [vmem:[%s2543 + $0x54] sm:$0xf]
    %v2566 = vld [vmem:[%s2543 + $0x58] sm:$0xf]
    %v2567 = vld [vmem:[%s2543 + $0x5c] sm:$0xf]
    %v2568 = vld [vmem:[%s2543 + $0x60] sm:$0xf]
    %v2569 = vld [vmem:[%s2543 + $0x64] sm:$0xf]
    %v2570 = vld [vmem:[%s2543 + $0x68] sm:$0xf]
    %v2571 = vld [vmem:[%s2543 + $0x6c] sm:$0xf]
    %v2572 = vld [vmem:[%s2543 + $0x70] sm:$0xf]
    %v2573 = vld [vmem:[%s2543 + $0x74] sm:$0xf]
    %v2574 = vld [vmem:[%s2543 + $0x78] sm:$0xf]
    %v2575 = vld [vmem:[%s2543 + $0x7c] sm:$0xf]
    %v2576 = vld [vmem:[%s2543 + $0x80] sm:$0xf]
    %v2577 = vld [vmem:[%s2543 + $0x84] sm:$0xf]
    %v2578 = vld [vmem:[%s2543 + $0x88] sm:$0xf]
    %v2579 = vld [vmem:[%s2543 + $0x8c] sm:$0xf]
    %v2580 = vld [vmem:[%s2543 + $0x90] sm:$0xf]
    %v2581 = vld [vmem:[%s2543 + $0x94] sm:$0xf]
    %v2582 = vld [vmem:[%s2543 + $0x98] sm:$0xf]
    %v2583 = vld [vmem:[%s2543 + $0x9c] sm:$0xf]
    %v2584 = vld [vmem:[%s2543 + $0xa0] sm:$0xf]
    %v2585 = vld [vmem:[%s2543 + $0xa4] sm:$0xf]
    %v2586 = vld [vmem:[%s2543 + $0xa8] sm:$0xf]
    %v2587 = vld [vmem:[%s2543 + $0xac] sm:$0xf]
    %v2588 = vld [vmem:[%s2543 + $0xb0] sm:$0xf]
    %v2589 = vld [vmem:[%s2543 + $0xb4] sm:$0xf]
    %v2590 = vld [vmem:[%s2543 + $0xb8] sm:$0xf]
    %v2591 = vld [vmem:[%s2543 + $0xbc] sm:$0xf]
    %v2592 = vld [vmem:[%s2543 + $0xc0] sm:$0xf]
    %v2593 = vld [vmem:[%s2543 + $0xc4] sm:$0xf]
    %v2594 = vld [vmem:[%s2543 + $0xc8] sm:$0xf]
    %v2595 = vld [vmem:[%s2543 + $0xcc] sm:$0xf]
    %v2596 = vld [vmem:[%s2543 + $0xd0] sm:$0xf]
    %v2597 = vld [vmem:[%s2543 + $0xd4] sm:$0xf]
    %v2598 = vld [vmem:[%s2543 + $0xd8] sm:$0xf]
    %v2599 = vld [vmem:[%s2543 + $0xdc] sm:$0xf]
    %v2600 = vld [vmem:[%s2543 + $0xe0] sm:$0xf]
    %v2601 = vld [vmem:[%s2543 + $0xe4] sm:$0xf]
    %v2602 = vld [vmem:[%s2543 + $0xe8] sm:$0xf]
    %v2603 = vld [vmem:[%s2543 + $0xec] sm:$0xf]
    %v2604 = vld [vmem:[%s2543 + $0xf0] sm:$0xf]
    %v2605 = vld [vmem:[%s2543 + $0xf4] sm:$0xf]
    %v2606 = vld [vmem:[%s2543 + $0xf8] sm:$0xf]
    %v2607 = vld [vmem:[%s2543 + $0xfc] sm:$0xf]
    %v2608 = vunpack.c.l.bf16 %v2544
    %v2609 = vunpack.c.l.bf16 %v2545
    %v2610 = vunpack.c.l.bf16 %v2546
    %v2611 = vunpack.c.l.bf16 %v2547
    %v2612 = vunpack.c.l.bf16 %v2548
    %v2613 = vunpack.c.l.bf16 %v2549
    %v2614 = vunpack.c.l.bf16 %v2550
    %v2615 = vunpack.c.l.bf16 %v2551
    %v2616 = vunpack.c.l.bf16 %v2552
    %v2617 = vunpack.c.l.bf16 %v2553
    %v2618 = vunpack.c.l.bf16 %v2554
    %v2619 = vunpack.c.l.bf16 %v2555
    %v2620 = vunpack.c.l.bf16 %v2556
    %v2621 = vunpack.c.l.bf16 %v2557
    %v2622 = vunpack.c.l.bf16 %v2558
    %v2623 = vunpack.c.l.bf16 %v2559
    %v2624 = vunpack.c.l.bf16 %v2560
    %v2625 = vunpack.c.l.bf16 %v2561
    %v2626 = vunpack.c.l.bf16 %v2562
    %v2627 = vunpack.c.l.bf16 %v2563
    %v2628 = vunpack.c.l.bf16 %v2564
    %v2629 = vunpack.c.l.bf16 %v2565
    %v2630 = vunpack.c.l.bf16 %v2566
    %v2631 = vunpack.c.l.bf16 %v2567
    %v2632 = vunpack.c.l.bf16 %v2568
    %v2633 = vunpack.c.l.bf16 %v2569
    %v2634 = vunpack.c.l.bf16 %v2570
    %v2635 = vunpack.c.l.bf16 %v2571
    %v2636 = vunpack.c.l.bf16 %v2572
    %v2637 = vunpack.c.l.bf16 %v2573
    %v2638 = vunpack.c.l.bf16 %v2574
    %v2639 = vunpack.c.l.bf16 %v2575
    %v2640 = vunpack.c.l.bf16 %v2576
    %v2641 = vunpack.c.l.bf16 %v2577
    %v2642 = vunpack.c.l.bf16 %v2578
    %v2643 = vunpack.c.l.bf16 %v2579
    %v2644 = vunpack.c.l.bf16 %v2580
    %v2645 = vunpack.c.l.bf16 %v2581
    %v2646 = vunpack.c.l.bf16 %v2582
    %v2647 = vunpack.c.l.bf16 %v2583
    %v2648 = vunpack.c.l.bf16 %v2584
    %v2649 = vunpack.c.l.bf16 %v2585
    %v2650 = vunpack.c.l.bf16 %v2586
    %v2651 = vunpack.c.l.bf16 %v2587
    %v2652 = vunpack.c.l.bf16 %v2588
    %v2653 = vunpack.c.l.bf16 %v2589
    %v2654 = vunpack.c.l.bf16 %v2590
    %v2655 = vunpack.c.l.bf16 %v2591
    %v2656 = vunpack.c.l.bf16 %v2592
    %v2657 = vunpack.c.l.bf16 %v2593
    %v2658 = vunpack.c.l.bf16 %v2594
    %v2659 = vunpack.c.l.bf16 %v2595
    %v2660 = vunpack.c.l.bf16 %v2596
    %v2661 = vunpack.c.l.bf16 %v2597
    %v2662 = vunpack.c.l.bf16 %v2598
    %v2663 = vunpack.c.l.bf16 %v2599
    %v2664 = vunpack.c.l.bf16 %v2600
    %v2665 = vunpack.c.l.bf16 %v2601
    %v2666 = vunpack.c.l.bf16 %v2602
    %v2667 = vunpack.c.l.bf16 %v2603
    %v2668 = vunpack.c.l.bf16 %v2604
    %v2669 = vunpack.c.l.bf16 %v2605
    %v2670 = vunpack.c.l.bf16 %v2606
    %v2671 = vunpack.c.l.bf16 %v2607
    %v2672 = vmul.f32 %v2416, %v2608
    %v2673 = vmul.f32 %v2418, %v2609
    %v2674 = vmul.f32 %v2420, %v2610
    %v2675 = vmul.f32 %v2422, %v2611
    %v2676 = vmul.f32 %v2424, %v2612
    %v2677 = vmul.f32 %v2426, %v2613
    %v2678 = vmul.f32 %v2428, %v2614
    %v2679 = vmul.f32 %v2430, %v2615
    %v2680 = vmul.f32 %v2432, %v2616
    %v2681 = vmul.f32 %v2434, %v2617
    %v2682 = vmul.f32 %v2436, %v2618
    %v2683 = vmul.f32 %v2438, %v2619
    %v2684 = vmul.f32 %v2440, %v2620
    %v2685 = vmul.f32 %v2442, %v2621
    %v2686 = vmul.f32 %v2444, %v2622
    %v2687 = vmul.f32 %v2446, %v2623
    %v2688 = vmul.f32 %v2448, %v2624
    %v2689 = vmul.f32 %v2450, %v2625
    %v2690 = vmul.f32 %v2452, %v2626
    %v2691 = vmul.f32 %v2454, %v2627
    %v2692 = vmul.f32 %v2456, %v2628
    %v2693 = vmul.f32 %v2458, %v2629
    %v2694 = vmul.f32 %v2460, %v2630
    %v2695 = vmul.f32 %v2462, %v2631
    %v2696 = vmul.f32 %v2464, %v2632
    %v2697 = vmul.f32 %v2466, %v2633
    %v2698 = vmul.f32 %v2468, %v2634
    %v2699 = vmul.f32 %v2470, %v2635
    %v2700 = vmul.f32 %v2472, %v2636
    %v2701 = vmul.f32 %v2474, %v2637
    %v2702 = vmul.f32 %v2476, %v2638
    %v2703 = vmul.f32 %v2478, %v2639
    %v2704 = vmul.f32 %v2480, %v2640
    %v2705 = vmul.f32 %v2482, %v2641
    %v2706 = vmul.f32 %v2484, %v2642
    %v2707 = vmul.f32 %v2486, %v2643
    %v2708 = vmul.f32 %v2488, %v2644
    %v2709 = vmul.f32 %v2490, %v2645
    %v2710 = vmul.f32 %v2492, %v2646
    %v2711 = vmul.f32 %v2494, %v2647
    %v2712 = vmul.f32 %v2496, %v2648
    %v2713 = vmul.f32 %v2498, %v2649
    %v2714 = vmul.f32 %v2500, %v2650
    %v2715 = vmul.f32 %v2502, %v2651
    %v2716 = vmul.f32 %v2504, %v2652
    %v2717 = vmul.f32 %v2506, %v2653
    %v2718 = vmul.f32 %v2508, %v2654
    %v2719 = vmul.f32 %v2510, %v2655
    %v2720 = vmul.f32 %v2512, %v2656
    %v2721 = vmul.f32 %v2514, %v2657
    %v2722 = vmul.f32 %v2516, %v2658
    %v2723 = vmul.f32 %v2518, %v2659
    %v2724 = vmul.f32 %v2520, %v2660
    %v2725 = vmul.f32 %v2522, %v2661
    %v2726 = vmul.f32 %v2524, %v2662
    %v2727 = vmul.f32 %v2526, %v2663
    %v2728 = vmul.f32 %v2528, %v2664
    %v2729 = vmul.f32 %v2530, %v2665
    %v2730 = vmul.f32 %v2532, %v2666
    %v2731 = vmul.f32 %v2534, %v2667
    %v2732 = vmul.f32 %v2536, %v2668
    %v2733 = vmul.f32 %v2538, %v2669
    %v2734 = vmul.f32 %v2540, %v2670
    %v2735 = vmul.f32 %v2542, %v2671
    %v2736 = vadd.f32 %v2351, %v2672
    %v2737 = vadd.f32 %v2352, %v2673
    %v2738 = vadd.f32 %v2353, %v2674
    %v2739 = vadd.f32 %v2354, %v2675
    %v2740 = vadd.f32 %v2355, %v2676
    %v2741 = vadd.f32 %v2356, %v2677
    %v2742 = vadd.f32 %v2357, %v2678
    %v2743 = vadd.f32 %v2358, %v2679
    %v2744 = vadd.f32 %v2359, %v2680
    %v2745 = vadd.f32 %v2360, %v2681
    %v2746 = vadd.f32 %v2361, %v2682
    %v2747 = vadd.f32 %v2362, %v2683
    %v2748 = vadd.f32 %v2363, %v2684
    %v2749 = vadd.f32 %v2364, %v2685
    %v2750 = vadd.f32 %v2365, %v2686
    %v2751 = vadd.f32 %v2366, %v2687
    %v2752 = vadd.f32 %v2367, %v2688
    %v2753 = vadd.f32 %v2368, %v2689
    %v2754 = vadd.f32 %v2369, %v2690
    %v2755 = vadd.f32 %v2370, %v2691
    %v2756 = vadd.f32 %v2371, %v2692
    %v2757 = vadd.f32 %v2372, %v2693
    %v2758 = vadd.f32 %v2373, %v2694
    %v2759 = vadd.f32 %v2374, %v2695
    %v2760 = vadd.f32 %v2375, %v2696
    %v2761 = vadd.f32 %v2376, %v2697
    %v2762 = vadd.f32 %v2377, %v2698
    %v2763 = vadd.f32 %v2378, %v2699
    %v2764 = vadd.f32 %v2379, %v2700
    %v2765 = vadd.f32 %v2380, %v2701
    %v2766 = vadd.f32 %v2381, %v2702
    %v2767 = vadd.f32 %v2382, %v2703
    %v2768 = vadd.f32 %v2383, %v2704
    %v2769 = vadd.f32 %v2384, %v2705
    %v2770 = vadd.f32 %v2385, %v2706
    %v2771 = vadd.f32 %v2386, %v2707
    %v2772 = vadd.f32 %v2387, %v2708
    %v2773 = vadd.f32 %v2388, %v2709
    %v2774 = vadd.f32 %v2389, %v2710
    %v2775 = vadd.f32 %v2390, %v2711
    %v2776 = vadd.f32 %v2391, %v2712
    %v2777 = vadd.f32 %v2392, %v2713
    %v2778 = vadd.f32 %v2393, %v2714
    %v2779 = vadd.f32 %v2394, %v2715
    %v2780 = vadd.f32 %v2395, %v2716
    %v2781 = vadd.f32 %v2396, %v2717
    %v2782 = vadd.f32 %v2397, %v2718
    %v2783 = vadd.f32 %v2398, %v2719
    %v2784 = vadd.f32 %v2399, %v2720
    %v2785 = vadd.f32 %v2400, %v2721
    %v2786 = vadd.f32 %v2401, %v2722
    %v2787 = vadd.f32 %v2402, %v2723
    %v2788 = vadd.f32 %v2403, %v2724
    %v2789 = vadd.f32 %v2404, %v2725
    %v2790 = vadd.f32 %v2405, %v2726
    %v2791 = vadd.f32 %v2406, %v2727
    %v2792 = vadd.f32 %v2407, %v2728
    %v2793 = vadd.f32 %v2408, %v2729
    %v2794 = vadd.f32 %v2409, %v2730
    %v2795 = vadd.f32 %v2410, %v2731
    %v2796 = vadd.f32 %v2411, %v2732
    %v2797 = vadd.f32 %v2412, %v2733
    %v2798 = vadd.f32 %v2413, %v2734
    %v2799 = vadd.f32 %v2414, %v2735
    %2800 = vrot.lane.b32.xlu0 %v551, 18
    %v2801 = vpop.permute.xlu0 %2800
    %2802 = vrot.lane.b32.xlu0 %v550, 18
    %v2803 = vpop.permute.xlu0 %2802
    %2804 = vrot.lane.b32.xlu0 %v549, 18
    %v2805 = vpop.permute.xlu0 %2804
    %2806 = vrot.lane.b32.xlu0 %v548, 18
    %v2807 = vpop.permute.xlu0 %2806
    %2808 = vrot.lane.b32.xlu0 %v547, 18
    %v2809 = vpop.permute.xlu0 %2808
    %2810 = vrot.lane.b32.xlu0 %v546, 18
    %v2811 = vpop.permute.xlu0 %2810
    %2812 = vrot.lane.b32.xlu0 %v545, 18
    %v2813 = vpop.permute.xlu0 %2812
    %2814 = vrot.lane.b32.xlu0 %v544, 18
    %v2815 = vpop.permute.xlu0 %2814
    %2816 = vrot.lane.b32.xlu0 %v543, 18
    %v2817 = vpop.permute.xlu0 %2816
    %2818 = vrot.lane.b32.xlu0 %v542, 18
    %v2819 = vpop.permute.xlu0 %2818
    %2820 = vrot.lane.b32.xlu0 %v541, 18
    %v2821 = vpop.permute.xlu0 %2820
    %2822 = vrot.lane.b32.xlu0 %v540, 18
    %v2823 = vpop.permute.xlu0 %2822
    %2824 = vrot.lane.b32.xlu0 %v539, 18
    %v2825 = vpop.permute.xlu0 %2824
    %2826 = vrot.lane.b32.xlu0 %v538, 18
    %v2827 = vpop.permute.xlu0 %2826
    %2828 = vrot.lane.b32.xlu0 %v537, 18
    %v2829 = vpop.permute.xlu0 %2828
    %2830 = vrot.lane.b32.xlu0 %v536, 18
    %v2831 = vpop.permute.xlu0 %2830
    %2832 = vrot.lane.b32.xlu0 %v535, 18
    %v2833 = vpop.permute.xlu0 %2832
    %2834 = vrot.lane.b32.xlu0 %v534, 18
    %v2835 = vpop.permute.xlu0 %2834
    %2836 = vrot.lane.b32.xlu0 %v533, 18
    %v2837 = vpop.permute.xlu0 %2836
    %2838 = vrot.lane.b32.xlu0 %v532, 18
    %v2839 = vpop.permute.xlu0 %2838
    %2840 = vrot.lane.b32.xlu0 %v531, 18
    %v2841 = vpop.permute.xlu0 %2840
    %2842 = vrot.lane.b32.xlu0 %v530, 18
    %v2843 = vpop.permute.xlu0 %2842
    %2844 = vrot.lane.b32.xlu0 %v529, 18
    %v2845 = vpop.permute.xlu0 %2844
    %2846 = vrot.lane.b32.xlu0 %v528, 18
    %v2847 = vpop.permute.xlu0 %2846
    %2848 = vrot.lane.b32.xlu0 %v527, 18
    %v2849 = vpop.permute.xlu0 %2848
    %2850 = vrot.lane.b32.xlu0 %v526, 18
    %v2851 = vpop.permute.xlu0 %2850
    %2852 = vrot.lane.b32.xlu0 %v525, 18
    %v2853 = vpop.permute.xlu0 %2852
    %2854 = vrot.lane.b32.xlu0 %v524, 18
    %v2855 = vpop.permute.xlu0 %2854
    %2856 = vrot.lane.b32.xlu0 %v523, 18
    %v2857 = vpop.permute.xlu0 %2856
    %2858 = vrot.lane.b32.xlu0 %v522, 18
    %v2859 = vpop.permute.xlu0 %2858
    %2860 = vrot.lane.b32.xlu0 %v521, 18
    %v2861 = vpop.permute.xlu0 %2860
    %2862 = vrot.lane.b32.xlu0 %v520, 18
    %v2863 = vpop.permute.xlu0 %2862
    %2864 = vrot.lane.b32.xlu0 %v519, 18
    %v2865 = vpop.permute.xlu0 %2864
    %2866 = vrot.lane.b32.xlu0 %v518, 18
    %v2867 = vpop.permute.xlu0 %2866
    %2868 = vrot.lane.b32.xlu0 %v517, 18
    %v2869 = vpop.permute.xlu0 %2868
    %2870 = vrot.lane.b32.xlu0 %v516, 18
    %v2871 = vpop.permute.xlu0 %2870
    %2872 = vrot.lane.b32.xlu0 %v515, 18
    %v2873 = vpop.permute.xlu0 %2872
    %2874 = vrot.lane.b32.xlu0 %v514, 18
    %v2875 = vpop.permute.xlu0 %2874
    %2876 = vrot.lane.b32.xlu0 %v513, 18
    %v2877 = vpop.permute.xlu0 %2876
    %2878 = vrot.lane.b32.xlu0 %v512, 18
    %v2879 = vpop.permute.xlu0 %2878
    %2880 = vrot.lane.b32.xlu0 %v511, 18
    %v2881 = vpop.permute.xlu0 %2880
    %2882 = vrot.lane.b32.xlu0 %v510, 18
    %v2883 = vpop.permute.xlu0 %2882
    %2884 = vrot.lane.b32.xlu0 %v509, 18
    %v2885 = vpop.permute.xlu0 %2884
    %2886 = vrot.lane.b32.xlu0 %v508, 18
    %v2887 = vpop.permute.xlu0 %2886
    %2888 = vrot.lane.b32.xlu0 %v507, 18
    %v2889 = vpop.permute.xlu0 %2888
    %2890 = vrot.lane.b32.xlu0 %v506, 18
    %v2891 = vpop.permute.xlu0 %2890
    %2892 = vrot.lane.b32.xlu0 %v505, 18
    %v2893 = vpop.permute.xlu0 %2892
    %2894 = vrot.lane.b32.xlu0 %v504, 18
    %v2895 = vpop.permute.xlu0 %2894
    %2896 = vrot.lane.b32.xlu0 %v503, 18
    %v2897 = vpop.permute.xlu0 %2896
    %2898 = vrot.lane.b32.xlu0 %v502, 18
    %v2899 = vpop.permute.xlu0 %2898
    %2900 = vrot.lane.b32.xlu0 %v501, 18
    %v2901 = vpop.permute.xlu0 %2900
    %2902 = vrot.lane.b32.xlu0 %v500, 18
    %v2903 = vpop.permute.xlu0 %2902
    %2904 = vrot.lane.b32.xlu0 %v499, 18
    %v2905 = vpop.permute.xlu0 %2904
    %2906 = vrot.lane.b32.xlu0 %v498, 18
    %v2907 = vpop.permute.xlu0 %2906
    %2908 = vrot.lane.b32.xlu0 %v497, 18
    %v2909 = vpop.permute.xlu0 %2908
    %2910 = vrot.lane.b32.xlu0 %v496, 18
    %v2911 = vpop.permute.xlu0 %2910
    %2912 = vrot.lane.b32.xlu0 %v495, 18
    %v2913 = vpop.permute.xlu0 %2912
    %2914 = vrot.lane.b32.xlu0 %v494, 18
    %v2915 = vpop.permute.xlu0 %2914
    %2916 = vrot.lane.b32.xlu0 %v493, 18
    %v2917 = vpop.permute.xlu0 %2916
    %2918 = vrot.lane.b32.xlu0 %v492, 18
    %v2919 = vpop.permute.xlu0 %2918
    %2920 = vrot.lane.b32.xlu0 %v491, 18
    %v2921 = vpop.permute.xlu0 %2920
    %2922 = vrot.lane.b32.xlu0 %v490, 18
    %v2923 = vpop.permute.xlu0 %2922
    %2924 = vrot.lane.b32.xlu0 %v553, 18
    %v2925 = vpop.permute.xlu0 %2924
    %2926 = vrot.lane.b32.xlu0 %v552, 18
    %v2927 = vpop.permute.xlu0 %2926
    %s2928 = scalar_lea.vmem [#allocation15], 1536
    %v2929 = vld [vmem:[%s2928] sm:$0xf]
    %v2930 = vld [vmem:[%s2928 + $0x4] sm:$0xf]
    %v2931 = vld [vmem:[%s2928 + $0x8] sm:$0xf]
    %v2932 = vld [vmem:[%s2928 + $0xc] sm:$0xf]
    %v2933 = vld [vmem:[%s2928 + $0x10] sm:$0xf]
    %v2934 = vld [vmem:[%s2928 + $0x14] sm:$0xf]
    %v2935 = vld [vmem:[%s2928 + $0x18] sm:$0xf]
    %v2936 = vld [vmem:[%s2928 + $0x1c] sm:$0xf]
    %v2937 = vld [vmem:[%s2928 + $0x20] sm:$0xf]
    %v2938 = vld [vmem:[%s2928 + $0x24] sm:$0xf]
    %v2939 = vld [vmem:[%s2928 + $0x28] sm:$0xf]
    %v2940 = vld [vmem:[%s2928 + $0x2c] sm:$0xf]
    %v2941 = vld [vmem:[%s2928 + $0x30] sm:$0xf]
    %v2942 = vld [vmem:[%s2928 + $0x34] sm:$0xf]
    %v2943 = vld [vmem:[%s2928 + $0x38] sm:$0xf]
    %v2944 = vld [vmem:[%s2928 + $0x3c] sm:$0xf]
    %v2945 = vld [vmem:[%s2928 + $0x40] sm:$0xf]
    %v2946 = vld [vmem:[%s2928 + $0x44] sm:$0xf]
    %v2947 = vld [vmem:[%s2928 + $0x48] sm:$0xf]
    %v2948 = vld [vmem:[%s2928 + $0x4c] sm:$0xf]
    %v2949 = vld [vmem:[%s2928 + $0x50] sm:$0xf]
    %v2950 = vld [vmem:[%s2928 + $0x54] sm:$0xf]
    %v2951 = vld [vmem:[%s2928 + $0x58] sm:$0xf]
    %v2952 = vld [vmem:[%s2928 + $0x5c] sm:$0xf]
    %v2953 = vld [vmem:[%s2928 + $0x60] sm:$0xf]
    %v2954 = vld [vmem:[%s2928 + $0x64] sm:$0xf]
    %v2955 = vld [vmem:[%s2928 + $0x68] sm:$0xf]
    %v2956 = vld [vmem:[%s2928 + $0x6c] sm:$0xf]
    %v2957 = vld [vmem:[%s2928 + $0x70] sm:$0xf]
    %v2958 = vld [vmem:[%s2928 + $0x74] sm:$0xf]
    %v2959 = vld [vmem:[%s2928 + $0x78] sm:$0xf]
    %v2960 = vld [vmem:[%s2928 + $0x7c] sm:$0xf]
    %v2961 = vld [vmem:[%s2928 + $0x80] sm:$0xf]
    %v2962 = vld [vmem:[%s2928 + $0x84] sm:$0xf]
    %v2963 = vld [vmem:[%s2928 + $0x88] sm:$0xf]
    %v2964 = vld [vmem:[%s2928 + $0x8c] sm:$0xf]
    %v2965 = vld [vmem:[%s2928 + $0x90] sm:$0xf]
    %v2966 = vld [vmem:[%s2928 + $0x94] sm:$0xf]
    %v2967 = vld [vmem:[%s2928 + $0x98] sm:$0xf]
    %v2968 = vld [vmem:[%s2928 + $0x9c] sm:$0xf]
    %v2969 = vld [vmem:[%s2928 + $0xa0] sm:$0xf]
    %v2970 = vld [vmem:[%s2928 + $0xa4] sm:$0xf]
    %v2971 = vld [vmem:[%s2928 + $0xa8] sm:$0xf]
    %v2972 = vld [vmem:[%s2928 + $0xac] sm:$0xf]
    %v2973 = vld [vmem:[%s2928 + $0xb0] sm:$0xf]
    %v2974 = vld [vmem:[%s2928 + $0xb4] sm:$0xf]
    %v2975 = vld [vmem:[%s2928 + $0xb8] sm:$0xf]
    %v2976 = vld [vmem:[%s2928 + $0xbc] sm:$0xf]
    %v2977 = vld [vmem:[%s2928 + $0xc0] sm:$0xf]
    %v2978 = vld [vmem:[%s2928 + $0xc4] sm:$0xf]
    %v2979 = vld [vmem:[%s2928 + $0xc8] sm:$0xf]
    %v2980 = vld [vmem:[%s2928 + $0xcc] sm:$0xf]
    %v2981 = vld [vmem:[%s2928 + $0xd0] sm:$0xf]
    %v2982 = vld [vmem:[%s2928 + $0xd4] sm:$0xf]
    %v2983 = vld [vmem:[%s2928 + $0xd8] sm:$0xf]
    %v2984 = vld [vmem:[%s2928 + $0xdc] sm:$0xf]
    %v2985 = vld [vmem:[%s2928 + $0xe0] sm:$0xf]
    %v2986 = vld [vmem:[%s2928 + $0xe4] sm:$0xf]
    %v2987 = vld [vmem:[%s2928 + $0xe8] sm:$0xf]
    %v2988 = vld [vmem:[%s2928 + $0xec] sm:$0xf]
    %v2989 = vld [vmem:[%s2928 + $0xf0] sm:$0xf]
    %v2990 = vld [vmem:[%s2928 + $0xf4] sm:$0xf]
    %v2991 = vld [vmem:[%s2928 + $0xf8] sm:$0xf]
    %v2992 = vld [vmem:[%s2928 + $0xfc] sm:$0xf]
    %v2993 = vunpack.c.l.bf16 %v2929
    %v2994 = vunpack.c.l.bf16 %v2930
    %v2995 = vunpack.c.l.bf16 %v2931
    %v2996 = vunpack.c.l.bf16 %v2932
    %v2997 = vunpack.c.l.bf16 %v2933
    %v2998 = vunpack.c.l.bf16 %v2934
    %v2999 = vunpack.c.l.bf16 %v2935
    %v3000 = vunpack.c.l.bf16 %v2936
    %v3001 = vunpack.c.l.bf16 %v2937
    %v3002 = vunpack.c.l.bf16 %v2938
    %v3003 = vunpack.c.l.bf16 %v2939
    %v3004 = vunpack.c.l.bf16 %v2940
    %v3005 = vunpack.c.l.bf16 %v2941
    %v3006 = vunpack.c.l.bf16 %v2942
    %v3007 = vunpack.c.l.bf16 %v2943
    %v3008 = vunpack.c.l.bf16 %v2944
    %v3009 = vunpack.c.l.bf16 %v2945
    %v3010 = vunpack.c.l.bf16 %v2946
    %v3011 = vunpack.c.l.bf16 %v2947
    %v3012 = vunpack.c.l.bf16 %v2948
    %v3013 = vunpack.c.l.bf16 %v2949
    %v3014 = vunpack.c.l.bf16 %v2950
    %v3015 = vunpack.c.l.bf16 %v2951
    %v3016 = vunpack.c.l.bf16 %v2952
    %v3017 = vunpack.c.l.bf16 %v2953
    %v3018 = vunpack.c.l.bf16 %v2954
    %v3019 = vunpack.c.l.bf16 %v2955
    %v3020 = vunpack.c.l.bf16 %v2956
    %v3021 = vunpack.c.l.bf16 %v2957
    %v3022 = vunpack.c.l.bf16 %v2958
    %v3023 = vunpack.c.l.bf16 %v2959
    %v3024 = vunpack.c.l.bf16 %v2960
    %v3025 = vunpack.c.l.bf16 %v2961
    %v3026 = vunpack.c.l.bf16 %v2962
    %v3027 = vunpack.c.l.bf16 %v2963
    %v3028 = vunpack.c.l.bf16 %v2964
    %v3029 = vunpack.c.l.bf16 %v2965
    %v3030 = vunpack.c.l.bf16 %v2966
    %v3031 = vunpack.c.l.bf16 %v2967
    %v3032 = vunpack.c.l.bf16 %v2968
    %v3033 = vunpack.c.l.bf16 %v2969
    %v3034 = vunpack.c.l.bf16 %v2970
    %v3035 = vunpack.c.l.bf16 %v2971
    %v3036 = vunpack.c.l.bf16 %v2972
    %v3037 = vunpack.c.l.bf16 %v2973
    %v3038 = vunpack.c.l.bf16 %v2974
    %v3039 = vunpack.c.l.bf16 %v2975
    %v3040 = vunpack.c.l.bf16 %v2976
    %v3041 = vunpack.c.l.bf16 %v2977
    %v3042 = vunpack.c.l.bf16 %v2978
    %v3043 = vunpack.c.l.bf16 %v2979
    %v3044 = vunpack.c.l.bf16 %v2980
    %v3045 = vunpack.c.l.bf16 %v2981
    %v3046 = vunpack.c.l.bf16 %v2982
    %v3047 = vunpack.c.l.bf16 %v2983
    %v3048 = vunpack.c.l.bf16 %v2984
    %v3049 = vunpack.c.l.bf16 %v2985
    %v3050 = vunpack.c.l.bf16 %v2986
    %v3051 = vunpack.c.l.bf16 %v2987
    %v3052 = vunpack.c.l.bf16 %v2988
    %v3053 = vunpack.c.l.bf16 %v2989
    %v3054 = vunpack.c.l.bf16 %v2990
    %v3055 = vunpack.c.l.bf16 %v2991
    %v3056 = vunpack.c.l.bf16 %v2992
    %v3057 = vmul.f32 %v2801, %v2993
    %v3058 = vmul.f32 %v2803, %v2994
    %v3059 = vmul.f32 %v2805, %v2995
    %v3060 = vmul.f32 %v2807, %v2996
    %v3061 = vmul.f32 %v2809, %v2997
    %v3062 = vmul.f32 %v2811, %v2998
    %v3063 = vmul.f32 %v2813, %v2999
    %v3064 = vmul.f32 %v2815, %v3000
    %v3065 = vmul.f32 %v2817, %v3001
    %v3066 = vmul.f32 %v2819, %v3002
    %v3067 = vmul.f32 %v2821, %v3003
    %v3068 = vmul.f32 %v2823, %v3004
    %v3069 = vmul.f32 %v2825, %v3005
    %v3070 = vmul.f32 %v2827, %v3006
    %v3071 = vmul.f32 %v2829, %v3007
    %v3072 = vmul.f32 %v2831, %v3008
    %v3073 = vmul.f32 %v2833, %v3009
    %v3074 = vmul.f32 %v2835, %v3010
    %v3075 = vmul.f32 %v2837, %v3011
    %v3076 = vmul.f32 %v2839, %v3012
    %v3077 = vmul.f32 %v2841, %v3013
    %v3078 = vmul.f32 %v2843, %v3014
    %v3079 = vmul.f32 %v2845, %v3015
    %v3080 = vmul.f32 %v2847, %v3016
    %v3081 = vmul.f32 %v2849, %v3017
    %v3082 = vmul.f32 %v2851, %v3018
    %v3083 = vmul.f32 %v2853, %v3019
    %v3084 = vmul.f32 %v2855, %v3020
    %v3085 = vmul.f32 %v2857, %v3021
    %v3086 = vmul.f32 %v2859, %v3022
    %v3087 = vmul.f32 %v2861, %v3023
    %v3088 = vmul.f32 %v2863, %v3024
    %v3089 = vmul.f32 %v2865, %v3025
    %v3090 = vmul.f32 %v2867, %v3026
    %v3091 = vmul.f32 %v2869, %v3027
    %v3092 = vmul.f32 %v2871, %v3028
    %v3093 = vmul.f32 %v2873, %v3029
    %v3094 = vmul.f32 %v2875, %v3030
    %v3095 = vmul.f32 %v2877, %v3031
    %v3096 = vmul.f32 %v2879, %v3032
    %v3097 = vmul.f32 %v2881, %v3033
    %v3098 = vmul.f32 %v2883, %v3034
    %v3099 = vmul.f32 %v2885, %v3035
    %v3100 = vmul.f32 %v2887, %v3036
    %v3101 = vmul.f32 %v2889, %v3037
    %v3102 = vmul.f32 %v2891, %v3038
    %v3103 = vmul.f32 %v2893, %v3039
    %v3104 = vmul.f32 %v2895, %v3040
    %v3105 = vmul.f32 %v2897, %v3041
    %v3106 = vmul.f32 %v2899, %v3042
    %v3107 = vmul.f32 %v2901, %v3043
    %v3108 = vmul.f32 %v2903, %v3044
    %v3109 = vmul.f32 %v2905, %v3045
    %v3110 = vmul.f32 %v2907, %v3046
    %v3111 = vmul.f32 %v2909, %v3047
    %v3112 = vmul.f32 %v2911, %v3048
    %v3113 = vmul.f32 %v2913, %v3049
    %v3114 = vmul.f32 %v2915, %v3050
    %v3115 = vmul.f32 %v2917, %v3051
    %v3116 = vmul.f32 %v2919, %v3052
    %v3117 = vmul.f32 %v2921, %v3053
    %v3118 = vmul.f32 %v2923, %v3054
    %v3119 = vmul.f32 %v2925, %v3055
    %v3120 = vmul.f32 %v2927, %v3056
    %v3121 = vadd.f32 %v2736, %v3057
    %v3122 = vadd.f32 %v2737, %v3058
    %v3123 = vadd.f32 %v2738, %v3059
    %v3124 = vadd.f32 %v2739, %v3060
    %v3125 = vadd.f32 %v2740, %v3061
    %v3126 = vadd.f32 %v2741, %v3062
    %v3127 = vadd.f32 %v2742, %v3063
    %v3128 = vadd.f32 %v2743, %v3064
    %v3129 = vadd.f32 %v2744, %v3065
    %v3130 = vadd.f32 %v2745, %v3066
    %v3131 = vadd.f32 %v2746, %v3067
    %v3132 = vadd.f32 %v2747, %v3068
    %v3133 = vadd.f32 %v2748, %v3069
    %v3134 = vadd.f32 %v2749, %v3070
    %v3135 = vadd.f32 %v2750, %v3071
    %v3136 = vadd.f32 %v2751, %v3072
    %v3137 = vadd.f32 %v2752, %v3073
    %v3138 = vadd.f32 %v2753, %v3074
    %v3139 = vadd.f32 %v2754, %v3075
    %v3140 = vadd.f32 %v2755, %v3076
    %v3141 = vadd.f32 %v2756, %v3077
    %v3142 = vadd.f32 %v2757, %v3078
    %v3143 = vadd.f32 %v2758, %v3079
    %v3144 = vadd.f32 %v2759, %v3080
    %v3145 = vadd.f32 %v2760, %v3081
    %v3146 = vadd.f32 %v2761, %v3082
    %v3147 = vadd.f32 %v2762, %v3083
    %v3148 = vadd.f32 %v2763, %v3084
    %v3149 = vadd.f32 %v2764, %v3085
    %v3150 = vadd.f32 %v2765, %v3086
    %v3151 = vadd.f32 %v2766, %v3087
    %v3152 = vadd.f32 %v2767, %v3088
    %v3153 = vadd.f32 %v2768, %v3089
    %v3154 = vadd.f32 %v2769, %v3090
    %v3155 = vadd.f32 %v2770, %v3091
    %v3156 = vadd.f32 %v2771, %v3092
    %v3157 = vadd.f32 %v2772, %v3093
    %v3158 = vadd.f32 %v2773, %v3094
    %v3159 = vadd.f32 %v2774, %v3095
    %v3160 = vadd.f32 %v2775, %v3096
    %v3161 = vadd.f32 %v2776, %v3097
    %v3162 = vadd.f32 %v2777, %v3098
    %v3163 = vadd.f32 %v2778, %v3099
    %v3164 = vadd.f32 %v2779, %v3100
    %v3165 = vadd.f32 %v2780, %v3101
    %v3166 = vadd.f32 %v2781, %v3102
    %v3167 = vadd.f32 %v2782, %v3103
    %v3168 = vadd.f32 %v2783, %v3104
    %v3169 = vadd.f32 %v2784, %v3105
    %v3170 = vadd.f32 %v2785, %v3106
    %v3171 = vadd.f32 %v2786, %v3107
    %v3172 = vadd.f32 %v2787, %v3108
    %v3173 = vadd.f32 %v2788, %v3109
    %v3174 = vadd.f32 %v2789, %v3110
    %v3175 = vadd.f32 %v2790, %v3111
    %v3176 = vadd.f32 %v2791, %v3112
    %v3177 = vadd.f32 %v2792, %v3113
    %v3178 = vadd.f32 %v2793, %v3114
    %v3179 = vadd.f32 %v2794, %v3115
    %v3180 = vadd.f32 %v2795, %v3116
    %v3181 = vadd.f32 %v2796, %v3117
    %v3182 = vadd.f32 %v2797, %v3118
    %v3183 = vadd.f32 %v2798, %v3119
    %v3184 = vadd.f32 %v2799, %v3120
    %3185 = vrot.lane.b32.xlu0 %v329, 21
    %v3186 = vpop.permute.xlu0 %3185
    %3187 = vrot.lane.b32.xlu0 %v330, 21
    %v3188 = vpop.permute.xlu0 %3187
    %3189 = vrot.lane.b32.xlu0 %v331, 21
    %v3190 = vpop.permute.xlu0 %3189
    %3191 = vrot.lane.b32.xlu0 %v332, 21
    %v3192 = vpop.permute.xlu0 %3191
    %3193 = vrot.lane.b32.xlu0 %v333, 21
    %v3194 = vpop.permute.xlu0 %3193
    %3195 = vrot.lane.b32.xlu0 %v334, 21
    %v3196 = vpop.permute.xlu0 %3195
    %3197 = vrot.lane.b32.xlu0 %v335, 21
    %v3198 = vpop.permute.xlu0 %3197
    %3199 = vrot.lane.b32.xlu0 %v336, 21
    %v3200 = vpop.permute.xlu0 %3199
    %3201 = vrot.lane.b32.xlu0 %v337, 21
    %v3202 = vpop.permute.xlu0 %3201
    %3203 = vrot.lane.b32.xlu0 %v338, 21
    %v3204 = vpop.permute.xlu0 %3203
    %3205 = vrot.lane.b32.xlu0 %v339, 21
    %v3206 = vpop.permute.xlu0 %3205
    %3207 = vrot.lane.b32.xlu0 %v340, 21
    %v3208 = vpop.permute.xlu0 %3207
    %3209 = vrot.lane.b32.xlu0 %v341, 21
    %v3210 = vpop.permute.xlu0 %3209
    %3211 = vrot.lane.b32.xlu0 %v342, 21
    %v3212 = vpop.permute.xlu0 %3211
    %3213 = vrot.lane.b32.xlu0 %v343, 21
    %v3214 = vpop.permute.xlu0 %3213
    %3215 = vrot.lane.b32.xlu0 %v344, 21
    %v3216 = vpop.permute.xlu0 %3215
    %3217 = vrot.lane.b32.xlu0 %v345, 21
    %v3218 = vpop.permute.xlu0 %3217
    %3219 = vrot.lane.b32.xlu0 %v346, 21
    %v3220 = vpop.permute.xlu0 %3219
    %3221 = vrot.lane.b32.xlu0 %v347, 21
    %v3222 = vpop.permute.xlu0 %3221
    %3223 = vrot.lane.b32.xlu0 %v348, 21
    %v3224 = vpop.permute.xlu0 %3223
    %3225 = vrot.lane.b32.xlu0 %v349, 21
    %v3226 = vpop.permute.xlu0 %3225
    %3227 = vrot.lane.b32.xlu0 %v350, 21
    %v3228 = vpop.permute.xlu0 %3227
    %3229 = vrot.lane.b32.xlu0 %v351, 21
    %v3230 = vpop.permute.xlu0 %3229
    %3231 = vrot.lane.b32.xlu0 %v352, 21
    %v3232 = vpop.permute.xlu0 %3231
    %3233 = vrot.lane.b32.xlu0 %v353, 21
    %v3234 = vpop.permute.xlu0 %3233
    %3235 = vrot.lane.b32.xlu0 %v354, 21
    %v3236 = vpop.permute.xlu0 %3235
    %3237 = vrot.lane.b32.xlu0 %v355, 21
    %v3238 = vpop.permute.xlu0 %3237
    %3239 = vrot.lane.b32.xlu0 %v356, 21
    %v3240 = vpop.permute.xlu0 %3239
    %3241 = vrot.lane.b32.xlu0 %v357, 21
    %v3242 = vpop.permute.xlu0 %3241
    %3243 = vrot.lane.b32.xlu0 %v358, 21
    %v3244 = vpop.permute.xlu0 %3243
    %3245 = vrot.lane.b32.xlu0 %v359, 21
    %v3246 = vpop.permute.xlu0 %3245
    %3247 = vrot.lane.b32.xlu0 %v360, 21
    %v3248 = vpop.permute.xlu0 %3247
    %3249 = vrot.lane.b32.xlu0 %v361, 21
    %v3250 = vpop.permute.xlu0 %3249
    %3251 = vrot.lane.b32.xlu0 %v362, 21
    %v3252 = vpop.permute.xlu0 %3251
    %3253 = vrot.lane.b32.xlu0 %v363, 21
    %v3254 = vpop.permute.xlu0 %3253
    %3255 = vrot.lane.b32.xlu0 %v364, 21
    %v3256 = vpop.permute.xlu0 %3255
    %3257 = vrot.lane.b32.xlu0 %v365, 21
    %v3258 = vpop.permute.xlu0 %3257
    %3259 = vrot.lane.b32.xlu0 %v366, 21
    %v3260 = vpop.permute.xlu0 %3259
    %3261 = vrot.lane.b32.xlu0 %v367, 21
    %v3262 = vpop.permute.xlu0 %3261
    %3263 = vrot.lane.b32.xlu0 %v368, 21
    %v3264 = vpop.permute.xlu0 %3263
    %3265 = vrot.lane.b32.xlu0 %v369, 21
    %v3266 = vpop.permute.xlu0 %3265
    %3267 = vrot.lane.b32.xlu0 %v370, 21
    %v3268 = vpop.permute.xlu0 %3267
    %3269 = vrot.lane.b32.xlu0 %v371, 21
    %v3270 = vpop.permute.xlu0 %3269
    %3271 = vrot.lane.b32.xlu0 %v372, 21
    %v3272 = vpop.permute.xlu0 %3271
    %3273 = vrot.lane.b32.xlu0 %v373, 21
    %v3274 = vpop.permute.xlu0 %3273
    %3275 = vrot.lane.b32.xlu0 %v374, 21
    %v3276 = vpop.permute.xlu0 %3275
    %3277 = vrot.lane.b32.xlu0 %v375, 21
    %v3278 = vpop.permute.xlu0 %3277
    %3279 = vrot.lane.b32.xlu0 %v376, 21
    %v3280 = vpop.permute.xlu0 %3279
    %3281 = vrot.lane.b32.xlu0 %v377, 21
    %v3282 = vpop.permute.xlu0 %3281
    %3283 = vrot.lane.b32.xlu0 %v378, 21
    %v3284 = vpop.permute.xlu0 %3283
    %3285 = vrot.lane.b32.xlu0 %v379, 21
    %v3286 = vpop.permute.xlu0 %3285
    %3287 = vrot.lane.b32.xlu0 %v380, 21
    %v3288 = vpop.permute.xlu0 %3287
    %3289 = vrot.lane.b32.xlu0 %v381, 21
    %v3290 = vpop.permute.xlu0 %3289
    %3291 = vrot.lane.b32.xlu0 %v382, 21
    %v3292 = vpop.permute.xlu0 %3291
    %3293 = vrot.lane.b32.xlu0 %v383, 21
    %v3294 = vpop.permute.xlu0 %3293
    %3295 = vrot.lane.b32.xlu0 %v384, 21
    %v3296 = vpop.permute.xlu0 %3295
    %3297 = vrot.lane.b32.xlu0 %v385, 21
    %v3298 = vpop.permute.xlu0 %3297
    %3299 = vrot.lane.b32.xlu0 %v386, 21
    %v3300 = vpop.permute.xlu0 %3299
    %3301 = vrot.lane.b32.xlu0 %v387, 21
    %v3302 = vpop.permute.xlu0 %3301
    %3303 = vrot.lane.b32.xlu0 %v388, 21
    %v3304 = vpop.permute.xlu0 %3303
    %3305 = vrot.lane.b32.xlu0 %v389, 21
    %v3306 = vpop.permute.xlu0 %3305
    %3307 = vrot.lane.b32.xlu0 %v390, 21
    %v3308 = vpop.permute.xlu0 %3307
    %3309 = vrot.lane.b32.xlu0 %v327, 21
    %v3310 = vpop.permute.xlu0 %3309
    %3311 = vrot.lane.b32.xlu0 %v328, 21
    %v3312 = vpop.permute.xlu0 %3311
    %s3313 = scalar_lea.vmem [#allocation15], 1792
    %v3314 = vld [vmem:[%s3313] sm:$0xf]
    %v3315 = vld [vmem:[%s3313 + $0x4] sm:$0xf]
    %v3316 = vld [vmem:[%s3313 + $0x8] sm:$0xf]
    %v3317 = vld [vmem:[%s3313 + $0xc] sm:$0xf]
    %v3318 = vld [vmem:[%s3313 + $0x10] sm:$0xf]
    %v3319 = vld [vmem:[%s3313 + $0x14] sm:$0xf]
    %v3320 = vld [vmem:[%s3313 + $0x18] sm:$0xf]
    %v3321 = vld [vmem:[%s3313 + $0x1c] sm:$0xf]
    %v3322 = vld [vmem:[%s3313 + $0x20] sm:$0xf]
    %v3323 = vld [vmem:[%s3313 + $0x24] sm:$0xf]
    %v3324 = vld [vmem:[%s3313 + $0x28] sm:$0xf]
    %v3325 = vld [vmem:[%s3313 + $0x2c] sm:$0xf]
    %v3326 = vld [vmem:[%s3313 + $0x30] sm:$0xf]
    %v3327 = vld [vmem:[%s3313 + $0x34] sm:$0xf]
    %v3328 = vld [vmem:[%s3313 + $0x38] sm:$0xf]
    %v3329 = vld [vmem:[%s3313 + $0x3c] sm:$0xf]
    %v3330 = vld [vmem:[%s3313 + $0x40] sm:$0xf]
    %v3331 = vld [vmem:[%s3313 + $0x44] sm:$0xf]
    %v3332 = vld [vmem:[%s3313 + $0x48] sm:$0xf]
    %v3333 = vld [vmem:[%s3313 + $0x4c] sm:$0xf]
    %v3334 = vld [vmem:[%s3313 + $0x50] sm:$0xf]
    %v3335 = vld [vmem:[%s3313 + $0x54] sm:$0xf]
    %v3336 = vld [vmem:[%s3313 + $0x58] sm:$0xf]
    %v3337 = vld [vmem:[%s3313 + $0x5c] sm:$0xf]
    %v3338 = vld [vmem:[%s3313 + $0x60] sm:$0xf]
    %v3339 = vld [vmem:[%s3313 + $0x64] sm:$0xf]
    %v3340 = vld [vmem:[%s3313 + $0x68] sm:$0xf]
    %v3341 = vld [vmem:[%s3313 + $0x6c] sm:$0xf]
    %v3342 = vld [vmem:[%s3313 + $0x70] sm:$0xf]
    %v3343 = vld [vmem:[%s3313 + $0x74] sm:$0xf]
    %v3344 = vld [vmem:[%s3313 + $0x78] sm:$0xf]
    %v3345 = vld [vmem:[%s3313 + $0x7c] sm:$0xf]
    %v3346 = vld [vmem:[%s3313 + $0x80] sm:$0xf]
    %v3347 = vld [vmem:[%s3313 + $0x84] sm:$0xf]
    %v3348 = vld [vmem:[%s3313 + $0x88] sm:$0xf]
    %v3349 = vld [vmem:[%s3313 + $0x8c] sm:$0xf]
    %v3350 = vld [vmem:[%s3313 + $0x90] sm:$0xf]
    %v3351 = vld [vmem:[%s3313 + $0x94] sm:$0xf]
    %v3352 = vld [vmem:[%s3313 + $0x98] sm:$0xf]
    %v3353 = vld [vmem:[%s3313 + $0x9c] sm:$0xf]
    %v3354 = vld [vmem:[%s3313 + $0xa0] sm:$0xf]
    %v3355 = vld [vmem:[%s3313 + $0xa4] sm:$0xf]
    %v3356 = vld [vmem:[%s3313 + $0xa8] sm:$0xf]
    %v3357 = vld [vmem:[%s3313 + $0xac] sm:$0xf]
    %v3358 = vld [vmem:[%s3313 + $0xb0] sm:$0xf]
    %v3359 = vld [vmem:[%s3313 + $0xb4] sm:$0xf]
    %v3360 = vld [vmem:[%s3313 + $0xb8] sm:$0xf]
    %v3361 = vld [vmem:[%s3313 + $0xbc] sm:$0xf]
    %v3362 = vld [vmem:[%s3313 + $0xc0] sm:$0xf]
    %v3363 = vld [vmem:[%s3313 + $0xc4] sm:$0xf]
    %v3364 = vld [vmem:[%s3313 + $0xc8] sm:$0xf]
    %v3365 = vld [vmem:[%s3313 + $0xcc] sm:$0xf]
    %v3366 = vld [vmem:[%s3313 + $0xd0] sm:$0xf]
    %v3367 = vld [vmem:[%s3313 + $0xd4] sm:$0xf]
    %v3368 = vld [vmem:[%s3313 + $0xd8] sm:$0xf]
    %v3369 = vld [vmem:[%s3313 + $0xdc] sm:$0xf]
    %v3370 = vld [vmem:[%s3313 + $0xe0] sm:$0xf]
    %v3371 = vld [vmem:[%s3313 + $0xe4] sm:$0xf]
    %v3372 = vld [vmem:[%s3313 + $0xe8] sm:$0xf]
    %v3373 = vld [vmem:[%s3313 + $0xec] sm:$0xf]
    %v3374 = vld [vmem:[%s3313 + $0xf0] sm:$0xf]
    %v3375 = vld [vmem:[%s3313 + $0xf4] sm:$0xf]
    %v3376 = vld [vmem:[%s3313 + $0xf8] sm:$0xf]
    %v3377 = vld [vmem:[%s3313 + $0xfc] sm:$0xf]
    %v3378 = vunpack.c.l.bf16 %v3314
    %v3379 = vunpack.c.l.bf16 %v3315
    %v3380 = vunpack.c.l.bf16 %v3316
    %v3381 = vunpack.c.l.bf16 %v3317
    %v3382 = vunpack.c.l.bf16 %v3318
    %v3383 = vunpack.c.l.bf16 %v3319
    %v3384 = vunpack.c.l.bf16 %v3320
    %v3385 = vunpack.c.l.bf16 %v3321
    %v3386 = vunpack.c.l.bf16 %v3322
    %v3387 = vunpack.c.l.bf16 %v3323
    %v3388 = vunpack.c.l.bf16 %v3324
    %v3389 = vunpack.c.l.bf16 %v3325
    %v3390 = vunpack.c.l.bf16 %v3326
    %v3391 = vunpack.c.l.bf16 %v3327
    %v3392 = vunpack.c.l.bf16 %v3328
    %v3393 = vunpack.c.l.bf16 %v3329
    %v3394 = vunpack.c.l.bf16 %v3330
    %v3395 = vunpack.c.l.bf16 %v3331
    %v3396 = vunpack.c.l.bf16 %v3332
    %v3397 = vunpack.c.l.bf16 %v3333
    %v3398 = vunpack.c.l.bf16 %v3334
    %v3399 = vunpack.c.l.bf16 %v3335
    %v3400 = vunpack.c.l.bf16 %v3336
    %v3401 = vunpack.c.l.bf16 %v3337
    %v3402 = vunpack.c.l.bf16 %v3338
    %v3403 = vunpack.c.l.bf16 %v3339
    %v3404 = vunpack.c.l.bf16 %v3340
    %v3405 = vunpack.c.l.bf16 %v3341
    %v3406 = vunpack.c.l.bf16 %v3342
    %v3407 = vunpack.c.l.bf16 %v3343
    %v3408 = vunpack.c.l.bf16 %v3344
    %v3409 = vunpack.c.l.bf16 %v3345
    %v3410 = vunpack.c.l.bf16 %v3346
    %v3411 = vunpack.c.l.bf16 %v3347
    %v3412 = vunpack.c.l.bf16 %v3348
    %v3413 = vunpack.c.l.bf16 %v3349
    %v3414 = vunpack.c.l.bf16 %v3350
    %v3415 = vunpack.c.l.bf16 %v3351
    %v3416 = vunpack.c.l.bf16 %v3352
    %v3417 = vunpack.c.l.bf16 %v3353
    %v3418 = vunpack.c.l.bf16 %v3354
    %v3419 = vunpack.c.l.bf16 %v3355
    %v3420 = vunpack.c.l.bf16 %v3356
    %v3421 = vunpack.c.l.bf16 %v3357
    %v3422 = vunpack.c.l.bf16 %v3358
    %v3423 = vunpack.c.l.bf16 %v3359
    %v3424 = vunpack.c.l.bf16 %v3360
    %v3425 = vunpack.c.l.bf16 %v3361
    %v3426 = vunpack.c.l.bf16 %v3362
    %v3427 = vunpack.c.l.bf16 %v3363
    %v3428 = vunpack.c.l.bf16 %v3364
    %v3429 = vunpack.c.l.bf16 %v3365
    %v3430 = vunpack.c.l.bf16 %v3366
    %v3431 = vunpack.c.l.bf16 %v3367
    %v3432 = vunpack.c.l.bf16 %v3368
    %v3433 = vunpack.c.l.bf16 %v3369
    %v3434 = vunpack.c.l.bf16 %v3370
    %v3435 = vunpack.c.l.bf16 %v3371
    %v3436 = vunpack.c.l.bf16 %v3372
    %v3437 = vunpack.c.l.bf16 %v3373
    %v3438 = vunpack.c.l.bf16 %v3374
    %v3439 = vunpack.c.l.bf16 %v3375
    %v3440 = vunpack.c.l.bf16 %v3376
    %v3441 = vunpack.c.l.bf16 %v3377
    %v3442 = vmul.f32 %v3186, %v3378
    %v3443 = vmul.f32 %v3188, %v3379
    %v3444 = vmul.f32 %v3190, %v3380
    %v3445 = vmul.f32 %v3192, %v3381
    %v3446 = vmul.f32 %v3194, %v3382
    %v3447 = vmul.f32 %v3196, %v3383
    %v3448 = vmul.f32 %v3198, %v3384
    %v3449 = vmul.f32 %v3200, %v3385
    %v3450 = vmul.f32 %v3202, %v3386
    %v3451 = vmul.f32 %v3204, %v3387
    %v3452 = vmul.f32 %v3206, %v3388
    %v3453 = vmul.f32 %v3208, %v3389
    %v3454 = vmul.f32 %v3210, %v3390
    %v3455 = vmul.f32 %v3212, %v3391
    %v3456 = vmul.f32 %v3214, %v3392
    %v3457 = vmul.f32 %v3216, %v3393
    %v3458 = vmul.f32 %v3218, %v3394
    %v3459 = vmul.f32 %v3220, %v3395
    %v3460 = vmul.f32 %v3222, %v3396
    %v3461 = vmul.f32 %v3224, %v3397
    %v3462 = vmul.f32 %v3226, %v3398
    %v3463 = vmul.f32 %v3228, %v3399
    %v3464 = vmul.f32 %v3230, %v3400
    %v3465 = vmul.f32 %v3232, %v3401
    %v3466 = vmul.f32 %v3234, %v3402
    %v3467 = vmul.f32 %v3236, %v3403
    %v3468 = vmul.f32 %v3238, %v3404
    %v3469 = vmul.f32 %v3240, %v3405
    %v3470 = vmul.f32 %v3242, %v3406
    %v3471 = vmul.f32 %v3244, %v3407
    %v3472 = vmul.f32 %v3246, %v3408
    %v3473 = vmul.f32 %v3248, %v3409
    %v3474 = vmul.f32 %v3250, %v3410
    %v3475 = vmul.f32 %v3252, %v3411
    %v3476 = vmul.f32 %v3254, %v3412
    %v3477 = vmul.f32 %v3256, %v3413
    %v3478 = vmul.f32 %v3258, %v3414
    %v3479 = vmul.f32 %v3260, %v3415
    %v3480 = vmul.f32 %v3262, %v3416
    %v3481 = vmul.f32 %v3264, %v3417
    %v3482 = vmul.f32 %v3266, %v3418
    %v3483 = vmul.f32 %v3268, %v3419
    %v3484 = vmul.f32 %v3270, %v3420
    %v3485 = vmul.f32 %v3272, %v3421
    %v3486 = vmul.f32 %v3274, %v3422
    %v3487 = vmul.f32 %v3276, %v3423
    %v3488 = vmul.f32 %v3278, %v3424
    %v3489 = vmul.f32 %v3280, %v3425
    %v3490 = vmul.f32 %v3282, %v3426
    %v3491 = vmul.f32 %v3284, %v3427
    %v3492 = vmul.f32 %v3286, %v3428
    %v3493 = vmul.f32 %v3288, %v3429
    %v3494 = vmul.f32 %v3290, %v3430
    %v3495 = vmul.f32 %v3292, %v3431
    %v3496 = vmul.f32 %v3294, %v3432
    %v3497 = vmul.f32 %v3296, %v3433
    %v3498 = vmul.f32 %v3298, %v3434
    %v3499 = vmul.f32 %v3300, %v3435
    %v3500 = vmul.f32 %v3302, %v3436
    %v3501 = vmul.f32 %v3304, %v3437
    %v3502 = vmul.f32 %v3306, %v3438
    %v3503 = vmul.f32 %v3308, %v3439
    %v3504 = vmul.f32 %v3310, %v3440
    %v3505 = vmul.f32 %v3312, %v3441
    %v3506 = vadd.f32 %v3121, %v3442
    %v3507 = vadd.f32 %v3122, %v3443
    %v3508 = vadd.f32 %v3123, %v3444
    %v3509 = vadd.f32 %v3124, %v3445
    %v3510 = vadd.f32 %v3125, %v3446
    %v3511 = vadd.f32 %v3126, %v3447
    %v3512 = vadd.f32 %v3127, %v3448
    %v3513 = vadd.f32 %v3128, %v3449
    %v3514 = vadd.f32 %v3129, %v3450
    %v3515 = vadd.f32 %v3130, %v3451
    %v3516 = vadd.f32 %v3131, %v3452
    %v3517 = vadd.f32 %v3132, %v3453
    %v3518 = vadd.f32 %v3133, %v3454
    %v3519 = vadd.f32 %v3134, %v3455
    %v3520 = vadd.f32 %v3135, %v3456
    %v3521 = vadd.f32 %v3136, %v3457
    %v3522 = vadd.f32 %v3137, %v3458
    %v3523 = vadd.f32 %v3138, %v3459
    %v3524 = vadd.f32 %v3139, %v3460
    %v3525 = vadd.f32 %v3140, %v3461
    %v3526 = vadd.f32 %v3141, %v3462
    %v3527 = vadd.f32 %v3142, %v3463
    %v3528 = vadd.f32 %v3143, %v3464
    %v3529 = vadd.f32 %v3144, %v3465
    %v3530 = vadd.f32 %v3145, %v3466
    %v3531 = vadd.f32 %v3146, %v3467
    %v3532 = vadd.f32 %v3147, %v3468
    %v3533 = vadd.f32 %v3148, %v3469
    %v3534 = vadd.f32 %v3149, %v3470
    %v3535 = vadd.f32 %v3150, %v3471
    %v3536 = vadd.f32 %v3151, %v3472
    %v3537 = vadd.f32 %v3152, %v3473
    %v3538 = vadd.f32 %v3153, %v3474
    %v3539 = vadd.f32 %v3154, %v3475
    %v3540 = vadd.f32 %v3155, %v3476
    %v3541 = vadd.f32 %v3156, %v3477
    %v3542 = vadd.f32 %v3157, %v3478
    %v3543 = vadd.f32 %v3158, %v3479
    %v3544 = vadd.f32 %v3159, %v3480
    %v3545 = vadd.f32 %v3160, %v3481
    %v3546 = vadd.f32 %v3161, %v3482
    %v3547 = vadd.f32 %v3162, %v3483
    %v3548 = vadd.f32 %v3163, %v3484
    %v3549 = vadd.f32 %v3164, %v3485
    %v3550 = vadd.f32 %v3165, %v3486
    %v3551 = vadd.f32 %v3166, %v3487
    %v3552 = vadd.f32 %v3167, %v3488
    %v3553 = vadd.f32 %v3168, %v3489
    %v3554 = vadd.f32 %v3169, %v3490
    %v3555 = vadd.f32 %v3170, %v3491
    %v3556 = vadd.f32 %v3171, %v3492
    %v3557 = vadd.f32 %v3172, %v3493
    %v3558 = vadd.f32 %v3173, %v3494
    %v3559 = vadd.f32 %v3174, %v3495
    %v3560 = vadd.f32 %v3175, %v3496
    %v3561 = vadd.f32 %v3176, %v3497
    %v3562 = vadd.f32 %v3177, %v3498
    %v3563 = vadd.f32 %v3178, %v3499
    %v3564 = vadd.f32 %v3179, %v3500
    %v3565 = vadd.f32 %v3180, %v3501
    %v3566 = vadd.f32 %v3181, %v3502
    %v3567 = vadd.f32 %v3182, %v3503
    %v3568 = vadd.f32 %v3183, %v3504
    %v3569 = vadd.f32 %v3184, %v3505
    %3570 = vrot.lane.b32.xlu0 %v679, 24
    %v3571 = vpop.permute.xlu0 %3570
    %3572 = vrot.lane.b32.xlu0 %v678, 24
    %v3573 = vpop.permute.xlu0 %3572
    %3574 = vrot.lane.b32.xlu0 %v677, 24
    %v3575 = vpop.permute.xlu0 %3574
    %3576 = vrot.lane.b32.xlu0 %v676, 24
    %v3577 = vpop.permute.xlu0 %3576
    %3578 = vrot.lane.b32.xlu0 %v675, 24
    %v3579 = vpop.permute.xlu0 %3578
    %3580 = vrot.lane.b32.xlu0 %v674, 24
    %v3581 = vpop.permute.xlu0 %3580
    %3582 = vrot.lane.b32.xlu0 %v673, 24
    %v3583 = vpop.permute.xlu0 %3582
    %3584 = vrot.lane.b32.xlu0 %v672, 24
    %v3585 = vpop.permute.xlu0 %3584
    %3586 = vrot.lane.b32.xlu0 %v671, 24
    %v3587 = vpop.permute.xlu0 %3586
    %3588 = vrot.lane.b32.xlu0 %v670, 24
    %v3589 = vpop.permute.xlu0 %3588
    %3590 = vrot.lane.b32.xlu0 %v669, 24
    %v3591 = vpop.permute.xlu0 %3590
    %3592 = vrot.lane.b32.xlu0 %v668, 24
    %v3593 = vpop.permute.xlu0 %3592
    %3594 = vrot.lane.b32.xlu0 %v667, 24
    %v3595 = vpop.permute.xlu0 %3594
    %3596 = vrot.lane.b32.xlu0 %v666, 24
    %v3597 = vpop.permute.xlu0 %3596
    %3598 = vrot.lane.b32.xlu0 %v665, 24
    %v3599 = vpop.permute.xlu0 %3598
    %3600 = vrot.lane.b32.xlu0 %v664, 24
    %v3601 = vpop.permute.xlu0 %3600
    %3602 = vrot.lane.b32.xlu0 %v663, 24
    %v3603 = vpop.permute.xlu0 %3602
    %3604 = vrot.lane.b32.xlu0 %v662, 24
    %v3605 = vpop.permute.xlu0 %3604
    %3606 = vrot.lane.b32.xlu0 %v661, 24
    %v3607 = vpop.permute.xlu0 %3606
    %3608 = vrot.lane.b32.xlu0 %v660, 24
    %v3609 = vpop.permute.xlu0 %3608
    %3610 = vrot.lane.b32.xlu0 %v659, 24
    %v3611 = vpop.permute.xlu0 %3610
    %3612 = vrot.lane.b32.xlu0 %v658, 24
    %v3613 = vpop.permute.xlu0 %3612
    %3614 = vrot.lane.b32.xlu0 %v657, 24
    %v3615 = vpop.permute.xlu0 %3614
    %3616 = vrot.lane.b32.xlu0 %v656, 24
    %v3617 = vpop.permute.xlu0 %3616
    %3618 = vrot.lane.b32.xlu0 %v655, 24
    %v3619 = vpop.permute.xlu0 %3618
    %3620 = vrot.lane.b32.xlu0 %v654, 24
    %v3621 = vpop.permute.xlu0 %3620
    %3622 = vrot.lane.b32.xlu0 %v653, 24
    %v3623 = vpop.permute.xlu0 %3622
    %3624 = vrot.lane.b32.xlu0 %v652, 24
    %v3625 = vpop.permute.xlu0 %3624
    %3626 = vrot.lane.b32.xlu0 %v651, 24
    %v3627 = vpop.permute.xlu0 %3626
    %3628 = vrot.lane.b32.xlu0 %v650, 24
    %v3629 = vpop.permute.xlu0 %3628
    %3630 = vrot.lane.b32.xlu0 %v649, 24
    %v3631 = vpop.permute.xlu0 %3630
    %3632 = vrot.lane.b32.xlu0 %v648, 24
    %v3633 = vpop.permute.xlu0 %3632
    %3634 = vrot.lane.b32.xlu0 %v647, 24
    %v3635 = vpop.permute.xlu0 %3634
    %3636 = vrot.lane.b32.xlu0 %v646, 24
    %v3637 = vpop.permute.xlu0 %3636
    %3638 = vrot.lane.b32.xlu0 %v645, 24
    %v3639 = vpop.permute.xlu0 %3638
    %3640 = vrot.lane.b32.xlu0 %v644, 24
    %v3641 = vpop.permute.xlu0 %3640
    %3642 = vrot.lane.b32.xlu0 %v643, 24
    %v3643 = vpop.permute.xlu0 %3642
    %3644 = vrot.lane.b32.xlu0 %v642, 24
    %v3645 = vpop.permute.xlu0 %3644
    %3646 = vrot.lane.b32.xlu0 %v641, 24
    %v3647 = vpop.permute.xlu0 %3646
    %3648 = vrot.lane.b32.xlu0 %v640, 24
    %v3649 = vpop.permute.xlu0 %3648
    %3650 = vrot.lane.b32.xlu0 %v639, 24
    %v3651 = vpop.permute.xlu0 %3650
    %3652 = vrot.lane.b32.xlu0 %v638, 24
    %v3653 = vpop.permute.xlu0 %3652
    %3654 = vrot.lane.b32.xlu0 %v637, 24
    %v3655 = vpop.permute.xlu0 %3654
    %3656 = vrot.lane.b32.xlu0 %v636, 24
    %v3657 = vpop.permute.xlu0 %3656
    %3658 = vrot.lane.b32.xlu0 %v635, 24
    %v3659 = vpop.permute.xlu0 %3658
    %3660 = vrot.lane.b32.xlu0 %v634, 24
    %v3661 = vpop.permute.xlu0 %3660
    %3662 = vrot.lane.b32.xlu0 %v633, 24
    %v3663 = vpop.permute.xlu0 %3662
    %3664 = vrot.lane.b32.xlu0 %v632, 24
    %v3665 = vpop.permute.xlu0 %3664
    %3666 = vrot.lane.b32.xlu0 %v631, 24
    %v3667 = vpop.permute.xlu0 %3666
    %3668 = vrot.lane.b32.xlu0 %v630, 24
    %v3669 = vpop.permute.xlu0 %3668
    %3670 = vrot.lane.b32.xlu0 %v629, 24
    %v3671 = vpop.permute.xlu0 %3670
    %3672 = vrot.lane.b32.xlu0 %v628, 24
    %v3673 = vpop.permute.xlu0 %3672
    %3674 = vrot.lane.b32.xlu0 %v627, 24
    %v3675 = vpop.permute.xlu0 %3674
    %3676 = vrot.lane.b32.xlu0 %v626, 24
    %v3677 = vpop.permute.xlu0 %3676
    %3678 = vrot.lane.b32.xlu0 %v625, 24
    %v3679 = vpop.permute.xlu0 %3678
    %3680 = vrot.lane.b32.xlu0 %v624, 24
    %v3681 = vpop.permute.xlu0 %3680
    %3682 = vrot.lane.b32.xlu0 %v623, 24
    %v3683 = vpop.permute.xlu0 %3682
    %3684 = vrot.lane.b32.xlu0 %v622, 24
    %v3685 = vpop.permute.xlu0 %3684
    %3686 = vrot.lane.b32.xlu0 %v621, 24
    %v3687 = vpop.permute.xlu0 %3686
    %3688 = vrot.lane.b32.xlu0 %v620, 24
    %v3689 = vpop.permute.xlu0 %3688
    %3690 = vrot.lane.b32.xlu0 %v619, 24
    %v3691 = vpop.permute.xlu0 %3690
    %3692 = vrot.lane.b32.xlu0 %v682, 24
    %v3693 = vpop.permute.xlu0 %3692
    %3694 = vrot.lane.b32.xlu0 %v681, 24
    %v3695 = vpop.permute.xlu0 %3694
    %3696 = vrot.lane.b32.xlu0 %v680, 24
    %v3697 = vpop.permute.xlu0 %3696
    %s3698 = scalar_lea.vmem [#allocation15], 2048
    %v3699 = vld [vmem:[%s3698] sm:$0xf]
    %v3700 = vld [vmem:[%s3698 + $0x4] sm:$0xf]
    %v3701 = vld [vmem:[%s3698 + $0x8] sm:$0xf]
    %v3702 = vld [vmem:[%s3698 + $0xc] sm:$0xf]
    %v3703 = vld [vmem:[%s3698 + $0x10] sm:$0xf]
    %v3704 = vld [vmem:[%s3698 + $0x14] sm:$0xf]
    %v3705 = vld [vmem:[%s3698 + $0x18] sm:$0xf]
    %v3706 = vld [vmem:[%s3698 + $0x1c] sm:$0xf]
    %v3707 = vld [vmem:[%s3698 + $0x20] sm:$0xf]
    %v3708 = vld [vmem:[%s3698 + $0x24] sm:$0xf]
    %v3709 = vld [vmem:[%s3698 + $0x28] sm:$0xf]
    %v3710 = vld [vmem:[%s3698 + $0x2c] sm:$0xf]
    %v3711 = vld [vmem:[%s3698 + $0x30] sm:$0xf]
    %v3712 = vld [vmem:[%s3698 + $0x34] sm:$0xf]
    %v3713 = vld [vmem:[%s3698 + $0x38] sm:$0xf]
    %v3714 = vld [vmem:[%s3698 + $0x3c] sm:$0xf]
    %v3715 = vld [vmem:[%s3698 + $0x40] sm:$0xf]
    %v3716 = vld [vmem:[%s3698 + $0x44] sm:$0xf]
    %v3717 = vld [vmem:[%s3698 + $0x48] sm:$0xf]
    %v3718 = vld [vmem:[%s3698 + $0x4c] sm:$0xf]
    %v3719 = vld [vmem:[%s3698 + $0x50] sm:$0xf]
    %v3720 = vld [vmem:[%s3698 + $0x54] sm:$0xf]
    %v3721 = vld [vmem:[%s3698 + $0x58] sm:$0xf]
    %v3722 = vld [vmem:[%s3698 + $0x5c] sm:$0xf]
    %v3723 = vld [vmem:[%s3698 + $0x60] sm:$0xf]
    %v3724 = vld [vmem:[%s3698 + $0x64] sm:$0xf]
    %v3725 = vld [vmem:[%s3698 + $0x68] sm:$0xf]
    %v3726 = vld [vmem:[%s3698 + $0x6c] sm:$0xf]
    %v3727 = vld [vmem:[%s3698 + $0x70] sm:$0xf]
    %v3728 = vld [vmem:[%s3698 + $0x74] sm:$0xf]
    %v3729 = vld [vmem:[%s3698 + $0x78] sm:$0xf]
    %v3730 = vld [vmem:[%s3698 + $0x7c] sm:$0xf]
    %v3731 = vld [vmem:[%s3698 + $0x80] sm:$0xf]
    %v3732 = vld [vmem:[%s3698 + $0x84] sm:$0xf]
    %v3733 = vld [vmem:[%s3698 + $0x88] sm:$0xf]
    %v3734 = vld [vmem:[%s3698 + $0x8c] sm:$0xf]
    %v3735 = vld [vmem:[%s3698 + $0x90] sm:$0xf]
    %v3736 = vld [vmem:[%s3698 + $0x94] sm:$0xf]
    %v3737 = vld [vmem:[%s3698 + $0x98] sm:$0xf]
    %v3738 = vld [vmem:[%s3698 + $0x9c] sm:$0xf]
    %v3739 = vld [vmem:[%s3698 + $0xa0] sm:$0xf]
    %v3740 = vld [vmem:[%s3698 + $0xa4] sm:$0xf]
    %v3741 = vld [vmem:[%s3698 + $0xa8] sm:$0xf]
    %v3742 = vld [vmem:[%s3698 + $0xac] sm:$0xf]
    %v3743 = vld [vmem:[%s3698 + $0xb0] sm:$0xf]
    %v3744 = vld [vmem:[%s3698 + $0xb4] sm:$0xf]
    %v3745 = vld [vmem:[%s3698 + $0xb8] sm:$0xf]
    %v3746 = vld [vmem:[%s3698 + $0xbc] sm:$0xf]
    %v3747 = vld [vmem:[%s3698 + $0xc0] sm:$0xf]
    %v3748 = vld [vmem:[%s3698 + $0xc4] sm:$0xf]
    %v3749 = vld [vmem:[%s3698 + $0xc8] sm:$0xf]
    %v3750 = vld [vmem:[%s3698 + $0xcc] sm:$0xf]
    %v3751 = vld [vmem:[%s3698 + $0xd0] sm:$0xf]
    %v3752 = vld [vmem:[%s3698 + $0xd4] sm:$0xf]
    %v3753 = vld [vmem:[%s3698 + $0xd8] sm:$0xf]
    %v3754 = vld [vmem:[%s3698 + $0xdc] sm:$0xf]
    %v3755 = vld [vmem:[%s3698 + $0xe0] sm:$0xf]
    %v3756 = vld [vmem:[%s3698 + $0xe4] sm:$0xf]
    %v3757 = vld [vmem:[%s3698 + $0xe8] sm:$0xf]
    %v3758 = vld [vmem:[%s3698 + $0xec] sm:$0xf]
    %v3759 = vld [vmem:[%s3698 + $0xf0] sm:$0xf]
    %v3760 = vld [vmem:[%s3698 + $0xf4] sm:$0xf]
    %v3761 = vld [vmem:[%s3698 + $0xf8] sm:$0xf]
    %v3762 = vld [vmem:[%s3698 + $0xfc] sm:$0xf]
    %v3763 = vunpack.c.l.bf16 %v3699
    %v3764 = vunpack.c.l.bf16 %v3700
    %v3765 = vunpack.c.l.bf16 %v3701
    %v3766 = vunpack.c.l.bf16 %v3702
    %v3767 = vunpack.c.l.bf16 %v3703
    %v3768 = vunpack.c.l.bf16 %v3704
    %v3769 = vunpack.c.l.bf16 %v3705
    %v3770 = vunpack.c.l.bf16 %v3706
    %v3771 = vunpack.c.l.bf16 %v3707
    %v3772 = vunpack.c.l.bf16 %v3708
    %v3773 = vunpack.c.l.bf16 %v3709
    %v3774 = vunpack.c.l.bf16 %v3710
    %v3775 = vunpack.c.l.bf16 %v3711
    %v3776 = vunpack.c.l.bf16 %v3712
    %v3777 = vunpack.c.l.bf16 %v3713
    %v3778 = vunpack.c.l.bf16 %v3714
    %v3779 = vunpack.c.l.bf16 %v3715
    %v3780 = vunpack.c.l.bf16 %v3716
    %v3781 = vunpack.c.l.bf16 %v3717
    %v3782 = vunpack.c.l.bf16 %v3718
    %v3783 = vunpack.c.l.bf16 %v3719
    %v3784 = vunpack.c.l.bf16 %v3720
    %v3785 = vunpack.c.l.bf16 %v3721
    %v3786 = vunpack.c.l.bf16 %v3722
    %v3787 = vunpack.c.l.bf16 %v3723
    %v3788 = vunpack.c.l.bf16 %v3724
    %v3789 = vunpack.c.l.bf16 %v3725
    %v3790 = vunpack.c.l.bf16 %v3726
    %v3791 = vunpack.c.l.bf16 %v3727
    %v3792 = vunpack.c.l.bf16 %v3728
    %v3793 = vunpack.c.l.bf16 %v3729
    %v3794 = vunpack.c.l.bf16 %v3730
    %v3795 = vunpack.c.l.bf16 %v3731
    %v3796 = vunpack.c.l.bf16 %v3732
    %v3797 = vunpack.c.l.bf16 %v3733
    %v3798 = vunpack.c.l.bf16 %v3734
    %v3799 = vunpack.c.l.bf16 %v3735
    %v3800 = vunpack.c.l.bf16 %v3736
    %v3801 = vunpack.c.l.bf16 %v3737
    %v3802 = vunpack.c.l.bf16 %v3738
    %v3803 = vunpack.c.l.bf16 %v3739
    %v3804 = vunpack.c.l.bf16 %v3740
    %v3805 = vunpack.c.l.bf16 %v3741
    %v3806 = vunpack.c.l.bf16 %v3742
    %v3807 = vunpack.c.l.bf16 %v3743
    %v3808 = vunpack.c.l.bf16 %v3744
    %v3809 = vunpack.c.l.bf16 %v3745
    %v3810 = vunpack.c.l.bf16 %v3746
    %v3811 = vunpack.c.l.bf16 %v3747
    %v3812 = vunpack.c.l.bf16 %v3748
    %v3813 = vunpack.c.l.bf16 %v3749
    %v3814 = vunpack.c.l.bf16 %v3750
    %v3815 = vunpack.c.l.bf16 %v3751
    %v3816 = vunpack.c.l.bf16 %v3752
    %v3817 = vunpack.c.l.bf16 %v3753
    %v3818 = vunpack.c.l.bf16 %v3754
    %v3819 = vunpack.c.l.bf16 %v3755
    %v3820 = vunpack.c.l.bf16 %v3756
    %v3821 = vunpack.c.l.bf16 %v3757
    %v3822 = vunpack.c.l.bf16 %v3758
    %v3823 = vunpack.c.l.bf16 %v3759
    %v3824 = vunpack.c.l.bf16 %v3760
    %v3825 = vunpack.c.l.bf16 %v3761
    %v3826 = vunpack.c.l.bf16 %v3762
    %v3827 = vmul.f32 %v3571, %v3763
    %v3828 = vmul.f32 %v3573, %v3764
    %v3829 = vmul.f32 %v3575, %v3765
    %v3830 = vmul.f32 %v3577, %v3766
    %v3831 = vmul.f32 %v3579, %v3767
    %v3832 = vmul.f32 %v3581, %v3768
    %v3833 = vmul.f32 %v3583, %v3769
    %v3834 = vmul.f32 %v3585, %v3770
    %v3835 = vmul.f32 %v3587, %v3771
    %v3836 = vmul.f32 %v3589, %v3772
    %v3837 = vmul.f32 %v3591, %v3773
    %v3838 = vmul.f32 %v3593, %v3774
    %v3839 = vmul.f32 %v3595, %v3775
    %v3840 = vmul.f32 %v3597, %v3776
    %v3841 = vmul.f32 %v3599, %v3777
    %v3842 = vmul.f32 %v3601, %v3778
    %v3843 = vmul.f32 %v3603, %v3779
    %v3844 = vmul.f32 %v3605, %v3780
    %v3845 = vmul.f32 %v3607, %v3781
    %v3846 = vmul.f32 %v3609, %v3782
    %v3847 = vmul.f32 %v3611, %v3783
    %v3848 = vmul.f32 %v3613, %v3784
    %v3849 = vmul.f32 %v3615, %v3785
    %v3850 = vmul.f32 %v3617, %v3786
    %v3851 = vmul.f32 %v3619, %v3787
    %v3852 = vmul.f32 %v3621, %v3788
    %v3853 = vmul.f32 %v3623, %v3789
    %v3854 = vmul.f32 %v3625, %v3790
    %v3855 = vmul.f32 %v3627, %v3791
    %v3856 = vmul.f32 %v3629, %v3792
    %v3857 = vmul.f32 %v3631, %v3793
    %v3858 = vmul.f32 %v3633, %v3794
    %v3859 = vmul.f32 %v3635, %v3795
    %v3860 = vmul.f32 %v3637, %v3796
    %v3861 = vmul.f32 %v3639, %v3797
    %v3862 = vmul.f32 %v3641, %v3798
    %v3863 = vmul.f32 %v3643, %v3799
    %v3864 = vmul.f32 %v3645, %v3800
    %v3865 = vmul.f32 %v3647, %v3801
    %v3866 = vmul.f32 %v3649, %v3802
    %v3867 = vmul.f32 %v3651, %v3803
    %v3868 = vmul.f32 %v3653, %v3804
    %v3869 = vmul.f32 %v3655, %v3805
    %v3870 = vmul.f32 %v3657, %v3806
    %v3871 = vmul.f32 %v3659, %v3807
    %v3872 = vmul.f32 %v3661, %v3808
    %v3873 = vmul.f32 %v3663, %v3809
    %v3874 = vmul.f32 %v3665, %v3810
    %v3875 = vmul.f32 %v3667, %v3811
    %v3876 = vmul.f32 %v3669, %v3812
    %v3877 = vmul.f32 %v3671, %v3813
    %v3878 = vmul.f32 %v3673, %v3814
    %v3879 = vmul.f32 %v3675, %v3815
    %v3880 = vmul.f32 %v3677, %v3816
    %v3881 = vmul.f32 %v3679, %v3817
    %v3882 = vmul.f32 %v3681, %v3818
    %v3883 = vmul.f32 %v3683, %v3819
    %v3884 = vmul.f32 %v3685, %v3820
    %v3885 = vmul.f32 %v3687, %v3821
    %v3886 = vmul.f32 %v3689, %v3822
    %v3887 = vmul.f32 %v3691, %v3823
    %v3888 = vmul.f32 %v3693, %v3824
    %v3889 = vmul.f32 %v3695, %v3825
    %v3890 = vmul.f32 %v3697, %v3826
    %v3891 = vadd.f32 %v3506, %v3827
    %v3892 = vadd.f32 %v3507, %v3828
    %v3893 = vadd.f32 %v3508, %v3829
    %v3894 = vadd.f32 %v3509, %v3830
    %v3895 = vadd.f32 %v3510, %v3831
    %v3896 = vadd.f32 %v3511, %v3832
    %v3897 = vadd.f32 %v3512, %v3833
    %v3898 = vadd.f32 %v3513, %v3834
    %v3899 = vadd.f32 %v3514, %v3835
    %v3900 = vadd.f32 %v3515, %v3836
    %v3901 = vadd.f32 %v3516, %v3837
    %v3902 = vadd.f32 %v3517, %v3838
    %v3903 = vadd.f32 %v3518, %v3839
    %v3904 = vadd.f32 %v3519, %v3840
    %v3905 = vadd.f32 %v3520, %v3841
    %v3906 = vadd.f32 %v3521, %v3842
    %v3907 = vadd.f32 %v3522, %v3843
    %v3908 = vadd.f32 %v3523, %v3844
    %v3909 = vadd.f32 %v3524, %v3845
    %v3910 = vadd.f32 %v3525, %v3846
    %v3911 = vadd.f32 %v3526, %v3847
    %v3912 = vadd.f32 %v3527, %v3848
    %v3913 = vadd.f32 %v3528, %v3849
    %v3914 = vadd.f32 %v3529, %v3850
    %v3915 = vadd.f32 %v3530, %v3851
    %v3916 = vadd.f32 %v3531, %v3852
    %v3917 = vadd.f32 %v3532, %v3853
    %v3918 = vadd.f32 %v3533, %v3854
    %v3919 = vadd.f32 %v3534, %v3855
    %v3920 = vadd.f32 %v3535, %v3856
    %v3921 = vadd.f32 %v3536, %v3857
    %v3922 = vadd.f32 %v3537, %v3858
    %v3923 = vadd.f32 %v3538, %v3859
    %v3924 = vadd.f32 %v3539, %v3860
    %v3925 = vadd.f32 %v3540, %v3861
    %v3926 = vadd.f32 %v3541, %v3862
    %v3927 = vadd.f32 %v3542, %v3863
    %v3928 = vadd.f32 %v3543, %v3864
    %v3929 = vadd.f32 %v3544, %v3865
    %v3930 = vadd.f32 %v3545, %v3866
    %v3931 = vadd.f32 %v3546, %v3867
    %v3932 = vadd.f32 %v3547, %v3868
    %v3933 = vadd.f32 %v3548, %v3869
    %v3934 = vadd.f32 %v3549, %v3870
    %v3935 = vadd.f32 %v3550, %v3871
    %v3936 = vadd.f32 %v3551, %v3872
    %v3937 = vadd.f32 %v3552, %v3873
    %v3938 = vadd.f32 %v3553, %v3874
    %v3939 = vadd.f32 %v3554, %v3875
    %v3940 = vadd.f32 %v3555, %v3876
    %v3941 = vadd.f32 %v3556, %v3877
    %v3942 = vadd.f32 %v3557, %v3878
    %v3943 = vadd.f32 %v3558, %v3879
    %v3944 = vadd.f32 %v3559, %v3880
    %v3945 = vadd.f32 %v3560, %v3881
    %v3946 = vadd.f32 %v3561, %v3882
    %v3947 = vadd.f32 %v3562, %v3883
    %v3948 = vadd.f32 %v3563, %v3884
    %v3949 = vadd.f32 %v3564, %v3885
    %v3950 = vadd.f32 %v3565, %v3886
    %v3951 = vadd.f32 %v3566, %v3887
    %v3952 = vadd.f32 %v3567, %v3888
    %v3953 = vadd.f32 %v3568, %v3889
    %v3954 = vadd.f32 %v3569, %v3890
    %v3955 = vpack.c.bf16 %v3892, %v3891
    %v3956 = vpack.c.bf16 %v3894, %v3893
    %v3957 = vpack.c.bf16 %v3896, %v3895
    %v3958 = vpack.c.bf16 %v3898, %v3897
    %v3959 = vpack.c.bf16 %v3900, %v3899
    %v3960 = vpack.c.bf16 %v3902, %v3901
    %v3961 = vpack.c.bf16 %v3904, %v3903
    %v3962 = vpack.c.bf16 %v3906, %v3905
    %v3963 = vpack.c.bf16 %v3908, %v3907
    %v3964 = vpack.c.bf16 %v3910, %v3909
    %v3965 = vpack.c.bf16 %v3912, %v3911
    %v3966 = vpack.c.bf16 %v3914, %v3913
    %v3967 = vpack.c.bf16 %v3916, %v3915
    %v3968 = vpack.c.bf16 %v3918, %v3917
    %v3969 = vpack.c.bf16 %v3920, %v3919
    %v3970 = vpack.c.bf16 %v3922, %v3921
    %v3971 = vpack.c.bf16 %v3924, %v3923
    %v3972 = vpack.c.bf16 %v3926, %v3925
    %v3973 = vpack.c.bf16 %v3928, %v3927
    %v3974 = vpack.c.bf16 %v3930, %v3929
    %v3975 = vpack.c.bf16 %v3932, %v3931
    %v3976 = vpack.c.bf16 %v3934, %v3933
    %v3977 = vpack.c.bf16 %v3936, %v3935
    %v3978 = vpack.c.bf16 %v3938, %v3937
    %v3979 = vpack.c.bf16 %v3940, %v3939
    %v3980 = vpack.c.bf16 %v3942, %v3941
    %v3981 = vpack.c.bf16 %v3944, %v3943
    %v3982 = vpack.c.bf16 %v3946, %v3945
    %v3983 = vpack.c.bf16 %v3948, %v3947
    %v3984 = vpack.c.bf16 %v3950, %v3949
    %v3985 = vpack.c.bf16 %v3952, %v3951
    %v3986 = vpack.c.bf16 %v3954, %v3953
    %v4019 = vunpack.c.l.b16 %v391
    %v4020 = vunpack.c.h.b16 %v391
    %v4021 = vunpack.c.l.b16 %v392
    %v4022 = vunpack.c.h.b16 %v392
    %v4023 = vunpack.c.l.b16 %v393
    %v4024 = vunpack.c.h.b16 %v393
    %v4025 = vunpack.c.l.b16 %v394
    %v4026 = vunpack.c.h.b16 %v394
    %v4027 = vunpack.c.l.b16 %v395
    %v4028 = vunpack.c.h.b16 %v395
    %v4029 = vunpack.c.l.b16 %v396
    %v4030 = vunpack.c.h.b16 %v396
    %v4031 = vunpack.c.l.b16 %v397
    %v4032 = vunpack.c.h.b16 %v397
    %v4033 = vunpack.c.l.b16 %v398
    %v4034 = vunpack.c.h.b16 %v398
    %v4035 = vunpack.c.l.b16 %v399
    %v4036 = vunpack.c.h.b16 %v399
    %v4037 = vunpack.c.l.b16 %v400
    %v4038 = vunpack.c.h.b16 %v400
    %v4039 = vunpack.c.l.b16 %v401
    %v4040 = vunpack.c.h.b16 %v401
    %v4041 = vunpack.c.l.b16 %v402
    %v4042 = vunpack.c.h.b16 %v402
    %v4043 = vunpack.c.l.b16 %v403
    %v4044 = vunpack.c.h.b16 %v403
    %v4045 = vunpack.c.l.b16 %v404
    %v4046 = vunpack.c.h.b16 %v404
    %v4047 = vunpack.c.l.b16 %v405
    %v4048 = vunpack.c.h.b16 %v405
    %v4049 = vunpack.c.l.b16 %v406
    %v4050 = vunpack.c.h.b16 %v406
    %v4051 = vunpack.c.l.b16 %v407
    %v4052 = vunpack.c.h.b16 %v407
    %v4053 = vunpack.c.l.b16 %v408
    %v4054 = vunpack.c.h.b16 %v408
    %v4055 = vunpack.c.l.b16 %v409
    %v4056 = vunpack.c.h.b16 %v409
    %v4057 = vunpack.c.l.b16 %v410
    %v4058 = vunpack.c.h.b16 %v410
    %v4059 = vunpack.c.l.b16 %v411
    %v4060 = vunpack.c.h.b16 %v411
    %v4061 = vunpack.c.l.b16 %v412
    %v4062 = vunpack.c.h.b16 %v412
    %v4063 = vunpack.c.l.b16 %v413
    %v4064 = vunpack.c.h.b16 %v413
    %v4065 = vunpack.c.l.b16 %v414
    %v4066 = vunpack.c.h.b16 %v414
    %v4067 = vunpack.c.l.b16 %v415
    %v4068 = vunpack.c.h.b16 %v415
    %v4069 = vunpack.c.l.b16 %v416
    %v4070 = vunpack.c.h.b16 %v416
    %v4071 = vunpack.c.l.b16 %v417
    %v4072 = vunpack.c.h.b16 %v417
    %v4073 = vunpack.c.l.b16 %v418
    %v4074 = vunpack.c.h.b16 %v418
    %v4075 = vunpack.c.l.b16 %v419
    %v4076 = vunpack.c.h.b16 %v419
    %v4077 = vunpack.c.l.b16 %v420
    %v4078 = vunpack.c.h.b16 %v420
    %v4079 = vunpack.c.l.b16 %v421
    %v4080 = vunpack.c.h.b16 %v421
    %v4081 = vunpack.c.l.b16 %v422
    %v4082 = vunpack.c.h.b16 %v422
    %v4083 = vpack.c.b16 %v4023, %v4019
    %v4084 = vpack.c.b16 %v4024, %v4020
    %v4085 = vpack.c.b16 %v4025, %v4021
    %v4086 = vpack.c.b16 %v4026, %v4022
    %v4087 = vpack.c.b16 %v4031, %v4027
    %v4088 = vpack.c.b16 %v4032, %v4028
    %v4089 = vpack.c.b16 %v4033, %v4029
    %v4090 = vpack.c.b16 %v4034, %v4030
    %v4091 = vpack.c.b16 %v4039, %v4035
    %v4092 = vpack.c.b16 %v4040, %v4036
    %v4093 = vpack.c.b16 %v4041, %v4037
    %v4094 = vpack.c.b16 %v4042, %v4038
    %v4095 = vpack.c.b16 %v4047, %v4043
    %v4096 = vpack.c.b16 %v4048, %v4044
    %v4097 = vpack.c.b16 %v4049, %v4045
    %v4098 = vpack.c.b16 %v4050, %v4046
    %v4099 = vpack.c.b16 %v4055, %v4051
    %v4100 = vpack.c.b16 %v4056, %v4052
    %v4101 = vpack.c.b16 %v4057, %v4053
    %v4102 = vpack.c.b16 %v4058, %v4054
    %v4103 = vpack.c.b16 %v4063, %v4059
    %v4104 = vpack.c.b16 %v4064, %v4060
    %v4105 = vpack.c.b16 %v4065, %v4061
    %v4106 = vpack.c.b16 %v4066, %v4062
    %v4107 = vpack.c.b16 %v4071, %v4067
    %v4108 = vpack.c.b16 %v4072, %v4068
    %v4109 = vpack.c.b16 %v4073, %v4069
    %v4110 = vpack.c.b16 %v4074, %v4070
    %v4111 = vpack.c.b16 %v4079, %v4075
    %v4112 = vpack.c.b16 %v4080, %v4076
    %v4113 = vpack.c.b16 %v4081, %v4077
    %v4114 = vpack.c.b16 %v4082, %v4078
    %4147 = vmatprep.subr.bf16.mxu0 0
    %4148 = vmatpush1.bf16.msra.mxu0 %v3962
    %4149 = vmatprep.subr.bf16.mxu0 0
    %4150 = vmatpush1.bf16.msra.mxu0 %v3961
    %4151 = vmatprep.subr.bf16.mxu0 0
    %4152 = vmatpush1.bf16.msra.mxu0 %v3960
    %4153 = vmatprep.subr.bf16.mxu0 0
    %4154 = vmatpush1.bf16.msra.mxu0 %v3959
    %4155 = vmatprep.subr.bf16.mxu0 0
    %4156 = vmatpush1.bf16.msra.mxu0 %v3958
    %4157 = vmatprep.subr.bf16.mxu0 0
    %4158 = vmatpush1.bf16.msra.mxu0 %v3957
    %4159 = vmatprep.subr.bf16.mxu0 0
    %4160 = vmatpush1.bf16.msra.mxu0 %v3956
    %4161 = vmatprep.subr.bf16.mxu0 0
    %4162 = vmatpush1.bf16.msra.mxu0 %v3955
    %4163 = vmatprep.subr.bf16.mxu0 0
    %4164 = vmatpush2.bf16.msra.mxu0 %v3970
    %4165 = vmatprep.subr.bf16.mxu0 0
    %4166 = vmatpush2.bf16.msra.mxu0 %v3969
    %4167 = vmatprep.subr.bf16.mxu0 0
    %4168 = vmatpush2.bf16.msra.mxu0 %v3968
    %4169 = vmatprep.subr.bf16.mxu0 0
    %4170 = vmatpush2.bf16.msra.mxu0 %v3967
    %4171 = vmatprep.subr.bf16.mxu0 0
    %4172 = vmatpush2.bf16.msra.mxu0 %v3966
    %4173 = vmatprep.subr.bf16.mxu0 0
    %4174 = vmatpush2.bf16.msra.mxu0 %v3965
    %4175 = vmatprep.subr.bf16.mxu0 0
    %4176 = vmatpush2.bf16.msra.mxu0 %v3964
    %4177 = vmatprep.subr.bf16.mxu0 0
    %4178 = vmatpush2.bf16.msra.mxu0 %v3963
    %4179 = vmatprep.mubr.bf16.mxu0 %v4084
    %4180 = vmatmul.mubr.bf16.gmra.mxu0 %v4083
    %v4181 = vpop.f32.mrf.mxu0
    %v4182 = vadd.f32 0.0, %v4181
    %v4183 = vpop.f32.mrf.mxu0
    %v4184 = vpop.f32.mrf.mxu0
    %v4185 = vadd.f32 0.0, %v4184
    %v4186 = vpop.f32.mrf.mxu0
    %4187 = vmatprep.mubr.bf16.mxu0 %v4088
    %4188 = vmatmul.mubr.bf16.gmra.mxu0 %v4087
    %v4189 = vpop.f32.mrf.mxu0
    %v4190 = vadd.f32 0.0, %v4189
    %v4191 = vpop.f32.mrf.mxu0
    %v4192 = vpop.f32.mrf.mxu0
    %v4193 = vadd.f32 0.0, %v4192
    %v4194 = vpop.f32.mrf.mxu0
    %4195 = vmatprep.mubr.bf16.mxu0 %v4092
    %4196 = vmatmul.mubr.bf16.gmra.mxu0 %v4091
    %v4197 = vpop.f32.mrf.mxu0
    %v4198 = vadd.f32 0.0, %v4197
    %v4199 = vpop.f32.mrf.mxu0
    %v4200 = vpop.f32.mrf.mxu0
    %v4201 = vadd.f32 0.0, %v4200
    %v4202 = vpop.f32.mrf.mxu0
    %4203 = vmatprep.mubr.bf16.mxu0 %v4096
    %4204 = vmatmul.mubr.bf16.gmra.mxu0 %v4095
    %v4205 = vpop.f32.mrf.mxu0
    %v4206 = vadd.f32 0.0, %v4205
    %v4207 = vpop.f32.mrf.mxu0
    %v4208 = vpop.f32.mrf.mxu0
    %v4209 = vadd.f32 0.0, %v4208
    %v4210 = vpop.f32.mrf.mxu0
    %4211 = vmatprep.mubr.bf16.mxu0 %v4100
    %4212 = vmatmul.mubr.bf16.gmra.mxu0 %v4099
    %v4213 = vpop.f32.mrf.mxu0
    %v4214 = vadd.f32 0.0, %v4213
    %v4215 = vpop.f32.mrf.mxu0
    %v4216 = vpop.f32.mrf.mxu0
    %v4217 = vadd.f32 0.0, %v4216
    %v4218 = vpop.f32.mrf.mxu0
    %4219 = vmatprep.mubr.bf16.mxu0 %v4104
    %4220 = vmatmul.mubr.bf16.gmra.mxu0 %v4103
    %v4221 = vpop.f32.mrf.mxu0
    %v4222 = vadd.f32 0.0, %v4221
    %v4223 = vpop.f32.mrf.mxu0
    %v4224 = vpop.f32.mrf.mxu0
    %v4225 = vadd.f32 0.0, %v4224
    %v4226 = vpop.f32.mrf.mxu0
    %4227 = vmatprep.mubr.bf16.mxu0 %v4108
    %4228 = vmatmul.mubr.bf16.gmra.mxu0 %v4107
    %v4229 = vpop.f32.mrf.mxu0
    %v4230 = vadd.f32 0.0, %v4229
    %v4231 = vpop.f32.mrf.mxu0
    %v4232 = vpop.f32.mrf.mxu0
    %v4233 = vadd.f32 0.0, %v4232
    %v4234 = vpop.f32.mrf.mxu0
    %4235 = vmatprep.mubr.bf16.mxu0 %v4112
    %4236 = vmatmul.mubr.bf16.gmra.mxu0 %v4111
    %v4237 = vpop.f32.mrf.mxu0
    %v4238 = vadd.f32 0.0, %v4237
    %v4239 = vpop.f32.mrf.mxu0
    %v4240 = vpop.f32.mrf.mxu0
    %v4241 = vadd.f32 0.0, %v4240
    %v4242 = vpop.f32.mrf.mxu0
    %4243 = vdwg.mxu0
    %4244 = vmatprep.subr.bf16.mxu0 0
    %4245 = vmatpush1.bf16.msra.mxu0 %v3978
    %4246 = vmatprep.subr.bf16.mxu0 0
    %4247 = vmatpush1.bf16.msra.mxu0 %v3977
    %4248 = vmatprep.subr.bf16.mxu0 0
    %4249 = vmatpush1.bf16.msra.mxu0 %v3976
    %4250 = vmatprep.subr.bf16.mxu0 0
    %4251 = vmatpush1.bf16.msra.mxu0 %v3975
    %4252 = vmatprep.subr.bf16.mxu0 0
    %4253 = vmatpush1.bf16.msra.mxu0 %v3974
    %4254 = vmatprep.subr.bf16.mxu0 0
    %4255 = vmatpush1.bf16.msra.mxu0 %v3973
    %4256 = vmatprep.subr.bf16.mxu0 0
    %4257 = vmatpush1.bf16.msra.mxu0 %v3972
    %4258 = vmatprep.subr.bf16.mxu0 0
    %4259 = vmatpush1.bf16.msra.mxu0 %v3971
    %4260 = vmatprep.subr.bf16.mxu0 0
    %4261 = vmatpush2.bf16.msra.mxu0 %v3986
    %4262 = vmatprep.subr.bf16.mxu0 0
    %4263 = vmatpush2.bf16.msra.mxu0 %v3985
    %4264 = vmatprep.subr.bf16.mxu0 0
    %4265 = vmatpush2.bf16.msra.mxu0 %v3984
    %4266 = vmatprep.subr.bf16.mxu0 0
    %4267 = vmatpush2.bf16.msra.mxu0 %v3983
    %4268 = vmatprep.subr.bf16.mxu0 0
    %4269 = vmatpush2.bf16.msra.mxu0 %v3982
    %4270 = vmatprep.subr.bf16.mxu0 0
    %4271 = vmatpush2.bf16.msra.mxu0 %v3981
    %4272 = vmatprep.subr.bf16.mxu0 0
    %4273 = vmatpush2.bf16.msra.mxu0 %v3980
    %4274 = vmatprep.subr.bf16.mxu0 0
    %4275 = vmatpush2.bf16.msra.mxu0 %v3979
    %4276 = vmatprep.mubr.bf16.mxu0 %v4086
    %4277 = vmatmul.mubr.bf16.gmra.mxu0 %v4085
    %v4278 = vpop.f32.mrf.mxu0
    %v4279 = vadd.f32 %v4182, %v4278
    %v4280 = vpop.f32.mrf.mxu0
    %v4281 = vpop.f32.mrf.mxu0
    %v4282 = vadd.f32 %v4185, %v4281
    %v4283 = vpop.f32.mrf.mxu0
    %4284 = vmatprep.mubr.bf16.mxu0 %v4090
    %4285 = vmatmul.mubr.bf16.gmra.mxu0 %v4089
    %v4286 = vpop.f32.mrf.mxu0
    %v4287 = vadd.f32 %v4190, %v4286
    %v4288 = vpop.f32.mrf.mxu0
    %v4289 = vpop.f32.mrf.mxu0
    %v4290 = vadd.f32 %v4193, %v4289
    %v4291 = vpop.f32.mrf.mxu0
    %4292 = vmatprep.mubr.bf16.mxu0 %v4094
    %4293 = vmatmul.mubr.bf16.gmra.mxu0 %v4093
    %v4294 = vpop.f32.mrf.mxu0
    %v4295 = vadd.f32 %v4198, %v4294
    %v4296 = vpop.f32.mrf.mxu0
    %v4297 = vpop.f32.mrf.mxu0
    %v4298 = vadd.f32 %v4201, %v4297
    %v4299 = vpop.f32.mrf.mxu0
    %4300 = vmatprep.mubr.bf16.mxu0 %v4098
    %4301 = vmatmul.mubr.bf16.gmra.mxu0 %v4097
    %v4302 = vpop.f32.mrf.mxu0
    %v4303 = vadd.f32 %v4206, %v4302
    %v4304 = vpop.f32.mrf.mxu0
    %v4305 = vpop.f32.mrf.mxu0
    %v4306 = vadd.f32 %v4209, %v4305
    %v4307 = vpop.f32.mrf.mxu0
    %4308 = vmatprep.mubr.bf16.mxu0 %v4102
    %4309 = vmatmul.mubr.bf16.gmra.mxu0 %v4101
    %v4310 = vpop.f32.mrf.mxu0
    %v4311 = vadd.f32 %v4214, %v4310
    %v4312 = vpop.f32.mrf.mxu0
    %v4313 = vpop.f32.mrf.mxu0
    %v4314 = vadd.f32 %v4217, %v4313
    %v4315 = vpop.f32.mrf.mxu0
    %4316 = vmatprep.mubr.bf16.mxu0 %v4106
    %4317 = vmatmul.mubr.bf16.gmra.mxu0 %v4105
    %v4318 = vpop.f32.mrf.mxu0
    %v4319 = vadd.f32 %v4222, %v4318
    %v4320 = vpop.f32.mrf.mxu0
    %v4321 = vpop.f32.mrf.mxu0
    %v4322 = vadd.f32 %v4225, %v4321
    %v4323 = vpop.f32.mrf.mxu0
    %4324 = vmatprep.mubr.bf16.mxu0 %v4110
    %4325 = vmatmul.mubr.bf16.gmra.mxu0 %v4109
    %v4326 = vpop.f32.mrf.mxu0
    %v4327 = vadd.f32 %v4230, %v4326
    %v4328 = vpop.f32.mrf.mxu0
    %v4329 = vpop.f32.mrf.mxu0
    %v4330 = vadd.f32 %v4233, %v4329
    %v4331 = vpop.f32.mrf.mxu0
    %4332 = vmatprep.mubr.bf16.mxu0 %v4114
    %4333 = vmatmul.mubr.bf16.gmra.mxu0 %v4113
    %v4334 = vpop.f32.mrf.mxu0
    %v4335 = vadd.f32 %v4238, %v4334
    %v4336 = vpop.f32.mrf.mxu0
    %v4337 = vpop.f32.mrf.mxu0
    %v4338 = vadd.f32 %v4241, %v4337
    %v4339 = vpop.f32.mrf.mxu0
    %4340 = vdwg.mxu0
    %v4341 = vpack.c.bf16 %v4282, %v4279
    %v4342 = vpack.c.bf16 %v4290, %v4287
    %v4343 = vpack.c.bf16 %v4298, %v4295
    %v4344 = vpack.c.bf16 %v4306, %v4303
    %v4345 = vpack.c.bf16 %v4314, %v4311
    %v4346 = vpack.c.bf16 %v4322, %v4319
    %v4347 = vpack.c.bf16 %v4330, %v4327
    %v4348 = vpack.c.bf16 %v4338, %v4335
    %v4349 = vld [vmem:[#allocation2] sm:$0xf]
    %v4350 = vld [vmem:[#allocation2 + $0x4] sm:$0xf]
    %v4351 = vld [vmem:[#allocation2 + $0x8] sm:$0xf]
    %v4352 = vld [vmem:[#allocation2 + $0xc] sm:$0xf]
    %v4353 = vld [vmem:[#allocation2 + $0x10] sm:$0xf]
    %v4354 = vld [vmem:[#allocation2 + $0x14] sm:$0xf]
    %v4355 = vld [vmem:[#allocation2 + $0x18] sm:$0xf]
    %v4356 = vld [vmem:[#allocation2 + $0x1c] sm:$0xf]
    %v4357 = vld [vmem:[#allocation2 + $0x20] sm:$0xf]
    %v4358 = vld [vmem:[#allocation2 + $0x24] sm:$0xf]
    %v4359 = vld [vmem:[#allocation2 + $0x28] sm:$0xf]
    %v4360 = vld [vmem:[#allocation2 + $0x2c] sm:$0xf]
    %v4361 = vld [vmem:[#allocation2 + $0x30] sm:$0xf]
    %v4362 = vld [vmem:[#allocation2 + $0x34] sm:$0xf]
    %v4363 = vld [vmem:[#allocation2 + $0x38] sm:$0xf]
    %v4364 = vld [vmem:[#allocation2 + $0x3c] sm:$0xf]
    %v4381 = vunpack.c.l.b16 %v4349
    %v4382 = vunpack.c.l.b16 %v4350
    %v4383 = vunpack.c.l.b16 %v4351
    %v4384 = vunpack.c.l.b16 %v4352
    %v4385 = vunpack.c.l.b16 %v4353
    %v4386 = vunpack.c.l.b16 %v4354
    %v4387 = vunpack.c.l.b16 %v4355
    %v4388 = vunpack.c.l.b16 %v4356
    %v4389 = vunpack.c.l.b16 %v4357
    %v4390 = vunpack.c.l.b16 %v4358
    %v4391 = vunpack.c.l.b16 %v4359
    %v4392 = vunpack.c.l.b16 %v4360
    %v4393 = vunpack.c.l.b16 %v4361
    %v4394 = vunpack.c.l.b16 %v4362
    %v4395 = vunpack.c.l.b16 %v4363
    %v4396 = vunpack.c.l.b16 %v4364
    %v4397 = vpack.c.b16 %v4382, %v4381
    %v4398 = vpack.c.b16 %v4384, %v4383
    %v4399 = vpack.c.b16 %v4386, %v4385
    %v4400 = vpack.c.b16 %v4388, %v4387
    %v4401 = vpack.c.b16 %v4390, %v4389
    %v4402 = vpack.c.b16 %v4392, %v4391
    %v4403 = vpack.c.b16 %v4394, %v4393
    %v4404 = vpack.c.b16 %v4396, %v4395
    %4413 = vmatprep.subr.bf16.mxu0 0
    %4414 = vmatpush1.bf16.msra.mxu0 %v4404
    %4415 = vmatprep.subr.bf16.mxu0 0
    %4416 = vmatpush1.bf16.msra.mxu0 %v4403
    %4417 = vmatprep.subr.bf16.mxu0 0
    %4418 = vmatpush1.bf16.msra.mxu0 %v4402
    %4419 = vmatprep.subr.bf16.mxu0 0
    %4420 = vmatpush1.bf16.msra.mxu0 %v4401
    %4421 = vmatprep.subr.bf16.mxu0 0
    %4422 = vmatpush1.bf16.msra.mxu0 %v4400
    %4423 = vmatprep.subr.bf16.mxu0 0
    %4424 = vmatpush1.bf16.msra.mxu0 %v4399
    %4425 = vmatprep.subr.bf16.mxu0 0
    %4426 = vmatpush1.bf16.msra.mxu0 %v4398
    %4427 = vmatprep.subr.bf16.mxu0 0
    %4428 = vmatpush1.bf16.msra.mxu0 %v4397
    %4429 = vmatprep.subr.bf16.mxu0 0
    %4430 = vmatpush2.bf16.msra.mxu0 0
    %4431 = vmatprep.subr.bf16.mxu0 0
    %4432 = vmatpush2.bf16.msra.mxu0 0
    %4433 = vmatprep.subr.bf16.mxu0 0
    %4434 = vmatpush2.bf16.msra.mxu0 0
    %4435 = vmatprep.subr.bf16.mxu0 0
    %4436 = vmatpush2.bf16.msra.mxu0 0
    %4437 = vmatprep.subr.bf16.mxu0 0
    %4438 = vmatpush2.bf16.msra.mxu0 0
    %4439 = vmatprep.subr.bf16.mxu0 0
    %4440 = vmatpush2.bf16.msra.mxu0 0
    %4441 = vmatprep.subr.bf16.mxu0 0
    %4442 = vmatpush2.bf16.msra.mxu0 0
    %4443 = vmatprep.subr.bf16.mxu0 0
    %4444 = vmatpush2.bf16.msra.mxu0 0
    %4445 = vmatprep.mubr.bf16.mxu0 0
    %4446 = vmatmul.mubr.bf16.gmra.mxu0 %v4341
    %v4447 = vpop.f32.mrf.mxu0
    %v4448 = vadd.f32 0.0, %v4447
    %v4449 = vpop.f32.mrf.mxu0
    %v4450 = vpop.f32.mrf.mxu0
    %v4451 = vadd.f32 0.0, %v4450
    %v4452 = vpop.f32.mrf.mxu0
    %4453 = vmatprep.mubr.bf16.mxu0 0
    %4454 = vmatmul.mubr.bf16.gmra.mxu0 %v4342
    %v4455 = vpop.f32.mrf.mxu0
    %v4456 = vadd.f32 0.0, %v4455
    %v4457 = vpop.f32.mrf.mxu0
    %v4458 = vpop.f32.mrf.mxu0
    %v4459 = vadd.f32 0.0, %v4458
    %v4460 = vpop.f32.mrf.mxu0
    %4461 = vmatprep.mubr.bf16.mxu0 0
    %4462 = vmatmul.mubr.bf16.gmra.mxu0 %v4343
    %v4463 = vpop.f32.mrf.mxu0
    %v4464 = vadd.f32 0.0, %v4463
    %v4465 = vpop.f32.mrf.mxu0
    %v4466 = vpop.f32.mrf.mxu0
    %v4467 = vadd.f32 0.0, %v4466
    %v4468 = vpop.f32.mrf.mxu0
    %4469 = vmatprep.mubr.bf16.mxu0 0
    %4470 = vmatmul.mubr.bf16.gmra.mxu0 %v4344
    %v4471 = vpop.f32.mrf.mxu0
    %v4472 = vadd.f32 0.0, %v4471
    %v4473 = vpop.f32.mrf.mxu0
    %v4474 = vpop.f32.mrf.mxu0
    %v4475 = vadd.f32 0.0, %v4474
    %v4476 = vpop.f32.mrf.mxu0
    %4477 = vmatprep.mubr.bf16.mxu0 0
    %4478 = vmatmul.mubr.bf16.gmra.mxu0 %v4345
    %v4479 = vpop.f32.mrf.mxu0
    %v4480 = vadd.f32 0.0, %v4479
    %v4481 = vpop.f32.mrf.mxu0
    %v4482 = vpop.f32.mrf.mxu0
    %v4483 = vadd.f32 0.0, %v4482
    %v4484 = vpop.f32.mrf.mxu0
    %4485 = vmatprep.mubr.bf16.mxu0 0
    %4486 = vmatmul.mubr.bf16.gmra.mxu0 %v4346
    %v4487 = vpop.f32.mrf.mxu0
    %v4488 = vadd.f32 0.0, %v4487
    %v4489 = vpop.f32.mrf.mxu0
    %v4490 = vpop.f32.mrf.mxu0
    %v4491 = vadd.f32 0.0, %v4490
    %v4492 = vpop.f32.mrf.mxu0
    %4493 = vmatprep.mubr.bf16.mxu0 0
    %4494 = vmatmul.mubr.bf16.gmra.mxu0 %v4347
    %v4495 = vpop.f32.mrf.mxu0
    %v4496 = vadd.f32 0.0, %v4495
    %v4497 = vpop.f32.mrf.mxu0
    %v4498 = vpop.f32.mrf.mxu0
    %v4499 = vadd.f32 0.0, %v4498
    %v4500 = vpop.f32.mrf.mxu0
    %4501 = vmatprep.mubr.bf16.mxu0 0
    %4502 = vmatmul.mubr.bf16.gmra.mxu0 %v4348
    %v4503 = vpop.f32.mrf.mxu0
    %v4504 = vadd.f32 0.0, %v4503
    %v4505 = vpop.f32.mrf.mxu0
    %v4506 = vpop.f32.mrf.mxu0
    %v4507 = vadd.f32 0.0, %v4506
    %v4508 = vpop.f32.mrf.mxu0
    %4509 = vdwg.mxu0
    %v4510 = vld [vmem:[#allocation7] sm:$0x1]
    %v4511 = vld [vmem:[#allocation7 + $0x1] sm:$0x1]
    %v4512 = vadd.f32 %v4448, %v4451
    %v4513 = vadd.f32 %v4512, %v4456
    %v4514 = vadd.f32 %v4513, %v4459
    %v4515 = vadd.f32 %v4514, %v4464
    %v4516 = vadd.f32 %v4515, %v4467
    %v4517 = vadd.f32 %v4516, %v4472
    %v4518 = vadd.f32 %v4517, %v4475
    %v4519 = vadd.f32 %v4518, %v4480
    %v4520 = vadd.f32 %v4519, %v4483
    %v4521 = vadd.f32 %v4520, %v4488
    %v4522 = vadd.f32 %v4521, %v4491
    %v4523 = vadd.f32 %v4522, %v4496
    %v4524 = vadd.f32 %v4523, %v4499
    %v4525 = vadd.f32 %v4524, %v4504
    %v4526 = vadd.f32 %v4525, %v4507
    %v4527 = vrot.slane %v4526, 4
    %v4528 = vadd.f32 %v4526, %v4527
    %v4529 = vrot.slane %v4528, 2
    %v4530 = vadd.f32 %v4528, %v4529
    %v4531 = vrot.slane %v4530, 1
    %v4532 = vadd.f32 %v4530, %v4531
    %v4533 = vmul.f32 %v4448, %v4448
    %v4534 = vmul.f32 %v4451, %v4451
    %v4535 = vmul.f32 %v4456, %v4456
    %v4536 = vmul.f32 %v4459, %v4459
    %v4537 = vmul.f32 %v4464, %v4464
    %v4538 = vmul.f32 %v4467, %v4467
    %v4539 = vmul.f32 %v4472, %v4472
    %v4540 = vmul.f32 %v4475, %v4475
    %v4541 = vmul.f32 %v4480, %v4480
    %v4542 = vmul.f32 %v4483, %v4483
    %v4543 = vmul.f32 %v4488, %v4488
    %v4544 = vmul.f32 %v4491, %v4491
    %v4545 = vmul.f32 %v4496, %v4496
    %v4546 = vmul.f32 %v4499, %v4499
    %v4547 = vmul.f32 %v4504, %v4504
    %v4548 = vmul.f32 %v4507, %v4507
    %v4549 = vadd.f32 %v4533, %v4534
    %v4550 = vadd.f32 %v4549, %v4535
    %v4551 = vadd.f32 %v4550, %v4536
    %v4552 = vadd.f32 %v4551, %v4537
    %v4553 = vadd.f32 %v4552, %v4538
    %v4554 = vadd.f32 %v4553, %v4539
    %v4555 = vadd.f32 %v4554, %v4540
    %v4556 = vadd.f32 %v4555, %v4541
    %v4557 = vadd.f32 %v4556, %v4542
    %v4558 = vadd.f32 %v4557, %v4543
    %v4559 = vadd.f32 %v4558, %v4544
    %v4560 = vadd.f32 %v4559, %v4545
    %v4561 = vadd.f32 %v4560, %v4546
    %v4562 = vadd.f32 %v4561, %v4547
    %v4563 = vadd.f32 %v4562, %v4548
    %v4564 = vrot.slane %v4563, 4
    %v4565 = vadd.f32 %v4563, %v4564
    %v4566 = vrot.slane %v4565, 2
    %v4567 = vadd.f32 %v4565, %v4566
    %v4568 = vrot.slane %v4567, 1
    %v4569 = vadd.f32 %v4567, %v4568
    %v4570 = vmul.f32 %v4532, 0.0078125
    %v4571 = vmul.f32 %v4569, 0.0078125
    %v4572 = vmul.f32 %v4570, %v4570
    %v4573 = vsub.f32 %v4571, %v4572
    %v4574 = vmax.f32 %v4573, 0.0
    %v4575 = vadd.f32 %v4574, 1e-05
    %v4576 = vrsqrt.pop %v4575
    %v4577 = vmul.f32 %v4576, %v4510
    %v4578 = vsub.f32 %v4448, %v4570
    %v4579 = vsub.f32 %v4451, %v4570
    %v4580 = vsub.f32 %v4456, %v4570
    %v4581 = vsub.f32 %v4459, %v4570
    %v4582 = vsub.f32 %v4464, %v4570
    %v4583 = vsub.f32 %v4467, %v4570
    %v4584 = vsub.f32 %v4472, %v4570
    %v4585 = vsub.f32 %v4475, %v4570
    %v4586 = vsub.f32 %v4480, %v4570
    %v4587 = vsub.f32 %v4483, %v4570
    %v4588 = vsub.f32 %v4488, %v4570
    %v4589 = vsub.f32 %v4491, %v4570
    %v4590 = vsub.f32 %v4496, %v4570
    %v4591 = vsub.f32 %v4499, %v4570
    %v4592 = vsub.f32 %v4504, %v4570
    %v4593 = vsub.f32 %v4507, %v4570
    %v4594 = vlaneseq
    %v4595 = vshrl.u32 %v4594, 7
    %v4596 = vsub.s32 0, %v4595
    %v4597 = vrot.slane %v4577, %v4596
    %v4598 = vmul.f32 %v4578, %v4597
    %v4599 = vmul.f32 %v4579, %v4597
    %v4600 = vmul.f32 %v4580, %v4597
    %v4601 = vmul.f32 %v4581, %v4597
    %v4602 = vmul.f32 %v4582, %v4597
    %v4603 = vmul.f32 %v4583, %v4597
    %v4604 = vmul.f32 %v4584, %v4597
    %v4605 = vmul.f32 %v4585, %v4597
    %v4606 = vmul.f32 %v4586, %v4597
    %v4607 = vmul.f32 %v4587, %v4597
    %v4608 = vmul.f32 %v4588, %v4597
    %v4609 = vmul.f32 %v4589, %v4597
    %v4610 = vmul.f32 %v4590, %v4597
    %v4611 = vmul.f32 %v4591, %v4597
    %v4612 = vmul.f32 %v4592, %v4597
    %v4613 = vmul.f32 %v4593, %v4597
    %v4614 = vlaneseq
    %v4615 = vshrl.u32 %v4614, 7
    %v4616 = vsub.s32 0, %v4615
    %v4617 = vrot.slane %v4511, %v4616
    %v4618 = vadd.f32 %v4598, %v4617
    %v4619 = vadd.f32 %v4599, %v4617
    %v4620 = vadd.f32 %v4600, %v4617
    %v4621 = vadd.f32 %v4601, %v4617
    %v4622 = vadd.f32 %v4602, %v4617
    %v4623 = vadd.f32 %v4603, %v4617
    %v4624 = vadd.f32 %v4604, %v4617
    %v4625 = vadd.f32 %v4605, %v4617
    %v4626 = vadd.f32 %v4606, %v4617
    %v4627 = vadd.f32 %v4607, %v4617
    %v4628 = vadd.f32 %v4608, %v4617
    %v4629 = vadd.f32 %v4609, %v4617
    %v4630 = vadd.f32 %v4610, %v4617
    %v4631 = vadd.f32 %v4611, %v4617
    %v4632 = vadd.f32 %v4612, %v4617
    %v4633 = vadd.f32 %v4613, %v4617
    %v4634 = vmax.f32 %v4618, 0.0
    %v4635 = vmax.f32 %v4619, 0.0
    %v4636 = vmax.f32 %v4620, 0.0
    %v4637 = vmax.f32 %v4621, 0.0
    %v4638 = vmax.f32 %v4622, 0.0
    %v4639 = vmax.f32 %v4623, 0.0
    %v4640 = vmax.f32 %v4624, 0.0
    %v4641 = vmax.f32 %v4625, 0.0
    %v4642 = vmax.f32 %v4626, 0.0
    %v4643 = vmax.f32 %v4627, 0.0
    %v4644 = vmax.f32 %v4628, 0.0
    %v4645 = vmax.f32 %v4629, 0.0
    %v4646 = vmax.f32 %v4630, 0.0
    %v4647 = vmax.f32 %v4631, 0.0
    %v4648 = vmax.f32 %v4632, 0.0
    %v4649 = vmax.f32 %v4633, 0.0
    %v4650 = vrot.slane %v4634, 7
    %v4651 = vrot.slane %v4635, 7
    %v4652 = vrot.slane %v4636, 7
    %v4653 = vrot.slane %v4637, 7
    %v4654 = vrot.slane %v4638, 7
    %v4655 = vrot.slane %v4639, 7
    %v4656 = vrot.slane %v4640, 7
    %v4657 = vrot.slane %v4641, 7
    %v4658 = vrot.slane %v4642, 7
    %v4659 = vrot.slane %v4643, 7
    %v4660 = vrot.slane %v4644, 7
    %v4661 = vrot.slane %v4645, 7
    %v4662 = vrot.slane %v4646, 7
    %v4663 = vrot.slane %v4647, 7
    %v4664 = vrot.slane %v4648, 7
    %v4665 = vrot.slane %v4649, 7
    %v4666 = vsel %vm489, %v4664, %v4665
    %v4667 = vsel %vm489, %v4663, %v4664
    %v4668 = vsel %vm489, %v4662, %v4663
    %v4669 = vsel %vm489, %v4661, %v4662
    %v4670 = vsel %vm489, %v4660, %v4661
    %v4671 = vsel %vm489, %v4659, %v4660
    %v4672 = vsel %vm489, %v4658, %v4659
    %v4673 = vsel %vm489, %v4657, %v4658
    %v4674 = vsel %vm489, %v4656, %v4657
    %v4675 = vsel %vm489, %v4655, %v4656
    %v4676 = vsel %vm489, %v4654, %v4655
    %v4677 = vsel %vm489, %v4653, %v4654
    %v4678 = vsel %vm489, %v4652, %v4653
    %v4679 = vsel %vm489, %v4651, %v4652
    %v4680 = vsel %vm489, %v4650, %v4651
    %v4681 = vsel %vm489, %v4665, %v4650
    %v4682 = vrot.slane %v4634, 1
    %v4683 = vrot.slane %v4635, 1
    %v4684 = vrot.slane %v4636, 1
    %v4685 = vrot.slane %v4637, 1
    %v4686 = vrot.slane %v4638, 1
    %v4687 = vrot.slane %v4639, 1
    %v4688 = vrot.slane %v4640, 1
    %v4689 = vrot.slane %v4641, 1
    %v4690 = vrot.slane %v4642, 1
    %v4691 = vrot.slane %v4643, 1
    %v4692 = vrot.slane %v4644, 1
    %v4693 = vrot.slane %v4645, 1
    %v4694 = vrot.slane %v4646, 1
    %v4695 = vrot.slane %v4647, 1
    %v4696 = vrot.slane %v4648, 1
    %v4697 = vrot.slane %v4649, 1
    %v4698 = vsel %vm618, %v4696, %v4697
    %v4699 = vsel %vm618, %v4695, %v4696
    %v4700 = vsel %vm618, %v4694, %v4695
    %v4701 = vsel %vm618, %v4693, %v4694
    %v4702 = vsel %vm618, %v4692, %v4693
    %v4703 = vsel %vm618, %v4691, %v4692
    %v4704 = vsel %vm618, %v4690, %v4691
    %v4705 = vsel %vm618, %v4689, %v4690
    %v4706 = vsel %vm618, %v4688, %v4689
    %v4707 = vsel %vm618, %v4687, %v4688
    %v4708 = vsel %vm618, %v4686, %v4687
    %v4709 = vsel %vm618, %v4685, %v4686
    %v4710 = vsel %vm618, %v4684, %v4685
    %v4711 = vsel %vm618, %v4683, %v4684
    %v4712 = vsel %vm618, %v4682, %v4683
    %v4713 = vsel %vm618, %v4697, %v4682
    %v4714 = vld [vmem:[#allocation16] sm:$0xf]
    %v4715 = vld [vmem:[#allocation16 + $0x4] sm:$0xf]
    %v4716 = vld [vmem:[#allocation16 + $0x8] sm:$0xf]
    %v4717 = vld [vmem:[#allocation16 + $0xc] sm:$0xf]
    %v4718 = vld [vmem:[#allocation16 + $0x10] sm:$0xf]
    %v4719 = vld [vmem:[#allocation16 + $0x14] sm:$0xf]
    %v4720 = vld [vmem:[#allocation16 + $0x18] sm:$0xf]
    %v4721 = vld [vmem:[#allocation16 + $0x1c] sm:$0xf]
    %v4722 = vld [vmem:[#allocation16 + $0x20] sm:$0xf]
    %v4723 = vld [vmem:[#allocation16 + $0x24] sm:$0xf]
    %v4724 = vld [vmem:[#allocation16 + $0x28] sm:$0xf]
    %v4725 = vld [vmem:[#allocation16 + $0x2c] sm:$0xf]
    %v4726 = vld [vmem:[#allocation16 + $0x30] sm:$0xf]
    %v4727 = vld [vmem:[#allocation16 + $0x34] sm:$0xf]
    %v4728 = vld [vmem:[#allocation16 + $0x38] sm:$0xf]
    %v4729 = vld [vmem:[#allocation16 + $0x3c] sm:$0xf]
    %v4730 = vunpack.c.l.bf16 %v4714
    %v4731 = vunpack.c.l.bf16 %v4715
    %v4732 = vunpack.c.l.bf16 %v4716
    %v4733 = vunpack.c.l.bf16 %v4717
    %v4734 = vunpack.c.l.bf16 %v4718
    %v4735 = vunpack.c.l.bf16 %v4719
    %v4736 = vunpack.c.l.bf16 %v4720
    %v4737 = vunpack.c.l.bf16 %v4721
    %v4738 = vunpack.c.l.bf16 %v4722
    %v4739 = vunpack.c.l.bf16 %v4723
    %v4740 = vunpack.c.l.bf16 %v4724
    %v4741 = vunpack.c.l.bf16 %v4725
    %v4742 = vunpack.c.l.bf16 %v4726
    %v4743 = vunpack.c.l.bf16 %v4727
    %v4744 = vunpack.c.l.bf16 %v4728
    %v4745 = vunpack.c.l.bf16 %v4729
    %v4746 = vmul.f32 %v4666, %v4730
    %v4747 = vmul.f32 %v4681, %v4731
    %v4748 = vmul.f32 %v4680, %v4732
    %v4749 = vmul.f32 %v4679, %v4733
    %v4750 = vmul.f32 %v4678, %v4734
    %v4751 = vmul.f32 %v4677, %v4735
    %v4752 = vmul.f32 %v4676, %v4736
    %v4753 = vmul.f32 %v4675, %v4737
    %v4754 = vmul.f32 %v4674, %v4738
    %v4755 = vmul.f32 %v4673, %v4739
    %v4756 = vmul.f32 %v4672, %v4740
    %v4757 = vmul.f32 %v4671, %v4741
    %v4758 = vmul.f32 %v4670, %v4742
    %v4759 = vmul.f32 %v4669, %v4743
    %v4760 = vmul.f32 %v4668, %v4744
    %v4761 = vmul.f32 %v4667, %v4745
    %4762 = vrot.lane.b32.xlu0 %v4649, 16
    %v4763 = vpop.permute.xlu0 %4762
    %4764 = vrot.lane.b32.xlu0 %v4634, 16
    %v4765 = vpop.permute.xlu0 %4764
    %4766 = vrot.lane.b32.xlu0 %v4635, 16
    %v4767 = vpop.permute.xlu0 %4766
    %4768 = vrot.lane.b32.xlu0 %v4636, 16
    %v4769 = vpop.permute.xlu0 %4768
    %4770 = vrot.lane.b32.xlu0 %v4637, 16
    %v4771 = vpop.permute.xlu0 %4770
    %4772 = vrot.lane.b32.xlu0 %v4638, 16
    %v4773 = vpop.permute.xlu0 %4772
    %4774 = vrot.lane.b32.xlu0 %v4639, 16
    %v4775 = vpop.permute.xlu0 %4774
    %4776 = vrot.lane.b32.xlu0 %v4640, 16
    %v4777 = vpop.permute.xlu0 %4776
    %4778 = vrot.lane.b32.xlu0 %v4641, 16
    %v4779 = vpop.permute.xlu0 %4778
    %4780 = vrot.lane.b32.xlu0 %v4642, 16
    %v4781 = vpop.permute.xlu0 %4780
    %4782 = vrot.lane.b32.xlu0 %v4643, 16
    %v4783 = vpop.permute.xlu0 %4782
    %4784 = vrot.lane.b32.xlu0 %v4644, 16
    %v4785 = vpop.permute.xlu0 %4784
    %4786 = vrot.lane.b32.xlu0 %v4645, 16
    %v4787 = vpop.permute.xlu0 %4786
    %4788 = vrot.lane.b32.xlu0 %v4646, 16
    %v4789 = vpop.permute.xlu0 %4788
    %4790 = vrot.lane.b32.xlu0 %v4647, 16
    %v4791 = vpop.permute.xlu0 %4790
    %4792 = vrot.lane.b32.xlu0 %v4648, 16
    %v4793 = vpop.permute.xlu0 %4792
    %s4794 = scalar_lea.vmem [#allocation16], 64
    %v4795 = vld [vmem:[%s4794] sm:$0xf]
    %v4796 = vld [vmem:[%s4794 + $0x4] sm:$0xf]
    %v4797 = vld [vmem:[%s4794 + $0x8] sm:$0xf]
    %v4798 = vld [vmem:[%s4794 + $0xc] sm:$0xf]
    %v4799 = vld [vmem:[%s4794 + $0x10] sm:$0xf]
    %v4800 = vld [vmem:[%s4794 + $0x14] sm:$0xf]
    %v4801 = vld [vmem:[%s4794 + $0x18] sm:$0xf]
    %v4802 = vld [vmem:[%s4794 + $0x1c] sm:$0xf]
    %v4803 = vld [vmem:[%s4794 + $0x20] sm:$0xf]
    %v4804 = vld [vmem:[%s4794 + $0x24] sm:$0xf]
    %v4805 = vld [vmem:[%s4794 + $0x28] sm:$0xf]
    %v4806 = vld [vmem:[%s4794 + $0x2c] sm:$0xf]
    %v4807 = vld [vmem:[%s4794 + $0x30] sm:$0xf]
    %v4808 = vld [vmem:[%s4794 + $0x34] sm:$0xf]
    %v4809 = vld [vmem:[%s4794 + $0x38] sm:$0xf]
    %v4810 = vld [vmem:[%s4794 + $0x3c] sm:$0xf]
    %v4811 = vunpack.c.l.bf16 %v4795
    %v4812 = vunpack.c.l.bf16 %v4796
    %v4813 = vunpack.c.l.bf16 %v4797
    %v4814 = vunpack.c.l.bf16 %v4798
    %v4815 = vunpack.c.l.bf16 %v4799
    %v4816 = vunpack.c.l.bf16 %v4800
    %v4817 = vunpack.c.l.bf16 %v4801
    %v4818 = vunpack.c.l.bf16 %v4802
    %v4819 = vunpack.c.l.bf16 %v4803
    %v4820 = vunpack.c.l.bf16 %v4804
    %v4821 = vunpack.c.l.bf16 %v4805
    %v4822 = vunpack.c.l.bf16 %v4806
    %v4823 = vunpack.c.l.bf16 %v4807
    %v4824 = vunpack.c.l.bf16 %v4808
    %v4825 = vunpack.c.l.bf16 %v4809
    %v4826 = vunpack.c.l.bf16 %v4810
    %v4827 = vmul.f32 %v4763, %v4811
    %v4828 = vmul.f32 %v4765, %v4812
    %v4829 = vmul.f32 %v4767, %v4813
    %v4830 = vmul.f32 %v4769, %v4814
    %v4831 = vmul.f32 %v4771, %v4815
    %v4832 = vmul.f32 %v4773, %v4816
    %v4833 = vmul.f32 %v4775, %v4817
    %v4834 = vmul.f32 %v4777, %v4818
    %v4835 = vmul.f32 %v4779, %v4819
    %v4836 = vmul.f32 %v4781, %v4820
    %v4837 = vmul.f32 %v4783, %v4821
    %v4838 = vmul.f32 %v4785, %v4822
    %v4839 = vmul.f32 %v4787, %v4823
    %v4840 = vmul.f32 %v4789, %v4824
    %v4841 = vmul.f32 %v4791, %v4825
    %v4842 = vmul.f32 %v4793, %v4826
    %v4843 = vadd.f32 %v4746, %v4827
    %v4844 = vadd.f32 %v4747, %v4828
    %v4845 = vadd.f32 %v4748, %v4829
    %v4846 = vadd.f32 %v4749, %v4830
    %v4847 = vadd.f32 %v4750, %v4831
    %v4848 = vadd.f32 %v4751, %v4832
    %v4849 = vadd.f32 %v4752, %v4833
    %v4850 = vadd.f32 %v4753, %v4834
    %v4851 = vadd.f32 %v4754, %v4835
    %v4852 = vadd.f32 %v4755, %v4836
    %v4853 = vadd.f32 %v4756, %v4837
    %v4854 = vadd.f32 %v4757, %v4838
    %v4855 = vadd.f32 %v4758, %v4839
    %v4856 = vadd.f32 %v4759, %v4840
    %v4857 = vadd.f32 %v4760, %v4841
    %v4858 = vadd.f32 %v4761, %v4842
    %4859 = vrot.lane.b32.xlu0 %v4713, 32
    %v4860 = vpop.permute.xlu0 %4859
    %4861 = vrot.lane.b32.xlu0 %v4712, 32
    %v4862 = vpop.permute.xlu0 %4861
    %4863 = vrot.lane.b32.xlu0 %v4711, 32
    %v4864 = vpop.permute.xlu0 %4863
    %4865 = vrot.lane.b32.xlu0 %v4710, 32
    %v4866 = vpop.permute.xlu0 %4865
    %4867 = vrot.lane.b32.xlu0 %v4709, 32
    %v4868 = vpop.permute.xlu0 %4867
    %4869 = vrot.lane.b32.xlu0 %v4708, 32
    %v4870 = vpop.permute.xlu0 %4869
    %4871 = vrot.lane.b32.xlu0 %v4707, 32
    %v4872 = vpop.permute.xlu0 %4871
    %4873 = vrot.lane.b32.xlu0 %v4706, 32
    %v4874 = vpop.permute.xlu0 %4873
    %4875 = vrot.lane.b32.xlu0 %v4705, 32
    %v4876 = vpop.permute.xlu0 %4875
    %4877 = vrot.lane.b32.xlu0 %v4704, 32
    %v4878 = vpop.permute.xlu0 %4877
    %4879 = vrot.lane.b32.xlu0 %v4703, 32
    %v4880 = vpop.permute.xlu0 %4879
    %4881 = vrot.lane.b32.xlu0 %v4702, 32
    %v4882 = vpop.permute.xlu0 %4881
    %4883 = vrot.lane.b32.xlu0 %v4701, 32
    %v4884 = vpop.permute.xlu0 %4883
    %4885 = vrot.lane.b32.xlu0 %v4700, 32
    %v4886 = vpop.permute.xlu0 %4885
    %4887 = vrot.lane.b32.xlu0 %v4699, 32
    %v4888 = vpop.permute.xlu0 %4887
    %4889 = vrot.lane.b32.xlu0 %v4698, 32
    %v4890 = vpop.permute.xlu0 %4889
    %s4891 = scalar_lea.vmem [#allocation16], 128
    %v4892 = vld [vmem:[%s4891] sm:$0xf]
    %v4893 = vld [vmem:[%s4891 + $0x4] sm:$0xf]
    %v4894 = vld [vmem:[%s4891 + $0x8] sm:$0xf]
    %v4895 = vld [vmem:[%s4891 + $0xc] sm:$0xf]
    %v4896 = vld [vmem:[%s4891 + $0x10] sm:$0xf]
    %v4897 = vld [vmem:[%s4891 + $0x14] sm:$0xf]
    %v4898 = vld [vmem:[%s4891 + $0x18] sm:$0xf]
    %v4899 = vld [vmem:[%s4891 + $0x1c] sm:$0xf]
    %v4900 = vld [vmem:[%s4891 + $0x20] sm:$0xf]
    %v4901 = vld [vmem:[%s4891 + $0x24] sm:$0xf]
    %v4902 = vld [vmem:[%s4891 + $0x28] sm:$0xf]
    %v4903 = vld [vmem:[%s4891 + $0x2c] sm:$0xf]
    %v4904 = vld [vmem:[%s4891 + $0x30] sm:$0xf]
    %v4905 = vld [vmem:[%s4891 + $0x34] sm:$0xf]
    %v4906 = vld [vmem:[%s4891 + $0x38] sm:$0xf]
    %v4907 = vld [vmem:[%s4891 + $0x3c] sm:$0xf]
    %v4908 = vunpack.c.l.bf16 %v4892
    %v4909 = vunpack.c.l.bf16 %v4893
    %v4910 = vunpack.c.l.bf16 %v4894
    %v4911 = vunpack.c.l.bf16 %v4895
    %v4912 = vunpack.c.l.bf16 %v4896
    %v4913 = vunpack.c.l.bf16 %v4897
    %v4914 = vunpack.c.l.bf16 %v4898
    %v4915 = vunpack.c.l.bf16 %v4899
    %v4916 = vunpack.c.l.bf16 %v4900
    %v4917 = vunpack.c.l.bf16 %v4901
    %v4918 = vunpack.c.l.bf16 %v4902
    %v4919 = vunpack.c.l.bf16 %v4903
    %v4920 = vunpack.c.l.bf16 %v4904
    %v4921 = vunpack.c.l.bf16 %v4905
    %v4922 = vunpack.c.l.bf16 %v4906
    %v4923 = vunpack.c.l.bf16 %v4907
    %v4924 = vmul.f32 %v4860, %v4908
    %v4925 = vmul.f32 %v4862, %v4909
    %v4926 = vmul.f32 %v4864, %v4910
    %v4927 = vmul.f32 %v4866, %v4911
    %v4928 = vmul.f32 %v4868, %v4912
    %v4929 = vmul.f32 %v4870, %v4913
    %v4930 = vmul.f32 %v4872, %v4914
    %v4931 = vmul.f32 %v4874, %v4915
    %v4932 = vmul.f32 %v4876, %v4916
    %v4933 = vmul.f32 %v4878, %v4917
    %v4934 = vmul.f32 %v4880, %v4918
    %v4935 = vmul.f32 %v4882, %v4919
    %v4936 = vmul.f32 %v4884, %v4920
    %v4937 = vmul.f32 %v4886, %v4921
    %v4938 = vmul.f32 %v4888, %v4922
    %v4939 = vmul.f32 %v4890, %v4923
    %v4940 = vadd.f32 %v4843, %v4924
    %v4941 = vadd.f32 %v4844, %v4925
    %v4942 = vadd.f32 %v4845, %v4926
    %v4943 = vadd.f32 %v4846, %v4927
    %v4944 = vadd.f32 %v4847, %v4928
    %v4945 = vadd.f32 %v4848, %v4929
    %v4946 = vadd.f32 %v4849, %v4930
    %v4947 = vadd.f32 %v4850, %v4931
    %v4948 = vadd.f32 %v4851, %v4932
    %v4949 = vadd.f32 %v4852, %v4933
    %v4950 = vadd.f32 %v4853, %v4934
    %v4951 = vadd.f32 %v4854, %v4935
    %v4952 = vadd.f32 %v4855, %v4936
    %v4953 = vadd.f32 %v4856, %v4937
    %v4954 = vadd.f32 %v4857, %v4938
    %v4955 = vadd.f32 %v4858, %v4939
    %4956 = vrot.lane.b32.xlu0 %v4681, 48
    %v4957 = vpop.permute.xlu0 %4956
    %4958 = vrot.lane.b32.xlu0 %v4680, 48
    %v4959 = vpop.permute.xlu0 %4958
    %4960 = vrot.lane.b32.xlu0 %v4679, 48
    %v4961 = vpop.permute.xlu0 %4960
    %4962 = vrot.lane.b32.xlu0 %v4678, 48
    %v4963 = vpop.permute.xlu0 %4962
    %4964 = vrot.lane.b32.xlu0 %v4677, 48
    %v4965 = vpop.permute.xlu0 %4964
    %4966 = vrot.lane.b32.xlu0 %v4676, 48
    %v4967 = vpop.permute.xlu0 %4966
    %4968 = vrot.lane.b32.xlu0 %v4675, 48
    %v4969 = vpop.permute.xlu0 %4968
    %4970 = vrot.lane.b32.xlu0 %v4674, 48
    %v4971 = vpop.permute.xlu0 %4970
    %4972 = vrot.lane.b32.xlu0 %v4673, 48
    %v4973 = vpop.permute.xlu0 %4972
    %4974 = vrot.lane.b32.xlu0 %v4672, 48
    %v4975 = vpop.permute.xlu0 %4974
    %4976 = vrot.lane.b32.xlu0 %v4671, 48
    %v4977 = vpop.permute.xlu0 %4976
    %4978 = vrot.lane.b32.xlu0 %v4670, 48
    %v4979 = vpop.permute.xlu0 %4978
    %4980 = vrot.lane.b32.xlu0 %v4669, 48
    %v4981 = vpop.permute.xlu0 %4980
    %4982 = vrot.lane.b32.xlu0 %v4668, 48
    %v4983 = vpop.permute.xlu0 %4982
    %4984 = vrot.lane.b32.xlu0 %v4667, 48
    %v4985 = vpop.permute.xlu0 %4984
    %4986 = vrot.lane.b32.xlu0 %v4666, 48
    %v4987 = vpop.permute.xlu0 %4986
    %s4988 = scalar_lea.vmem [#allocation16], 192
    %v4989 = vld [vmem:[%s4988] sm:$0xf]
    %v4990 = vld [vmem:[%s4988 + $0x4] sm:$0xf]
    %v4991 = vld [vmem:[%s4988 + $0x8] sm:$0xf]
    %v4992 = vld [vmem:[%s4988 + $0xc] sm:$0xf]
    %v4993 = vld [vmem:[%s4988 + $0x10] sm:$0xf]
    %v4994 = vld [vmem:[%s4988 + $0x14] sm:$0xf]
    %v4995 = vld [vmem:[%s4988 + $0x18] sm:$0xf]
    %v4996 = vld [vmem:[%s4988 + $0x1c] sm:$0xf]
    %v4997 = vld [vmem:[%s4988 + $0x20] sm:$0xf]
    %v4998 = vld [vmem:[%s4988 + $0x24] sm:$0xf]
    %v4999 = vld [vmem:[%s4988 + $0x28] sm:$0xf]
    %v5000 = vld [vmem:[%s4988 + $0x2c] sm:$0xf]
    %v5001 = vld [vmem:[%s4988 + $0x30] sm:$0xf]
    %v5002 = vld [vmem:[%s4988 + $0x34] sm:$0xf]
    %v5003 = vld [vmem:[%s4988 + $0x38] sm:$0xf]
    %v5004 = vld [vmem:[%s4988 + $0x3c] sm:$0xf]
    %v5005 = vunpack.c.l.bf16 %v4989
    %v5006 = vunpack.c.l.bf16 %v4990
    %v5007 = vunpack.c.l.bf16 %v4991
    %v5008 = vunpack.c.l.bf16 %v4992
    %v5009 = vunpack.c.l.bf16 %v4993
    %v5010 = vunpack.c.l.bf16 %v4994
    %v5011 = vunpack.c.l.bf16 %v4995
    %v5012 = vunpack.c.l.bf16 %v4996
    %v5013 = vunpack.c.l.bf16 %v4997
    %v5014 = vunpack.c.l.bf16 %v4998
    %v5015 = vunpack.c.l.bf16 %v4999
    %v5016 = vunpack.c.l.bf16 %v5000
    %v5017 = vunpack.c.l.bf16 %v5001
    %v5018 = vunpack.c.l.bf16 %v5002
    %v5019 = vunpack.c.l.bf16 %v5003
    %v5020 = vunpack.c.l.bf16 %v5004
    %v5021 = vmul.f32 %v4957, %v5005
    %v5022 = vmul.f32 %v4959, %v5006
    %v5023 = vmul.f32 %v4961, %v5007
    %v5024 = vmul.f32 %v4963, %v5008
    %v5025 = vmul.f32 %v4965, %v5009
    %v5026 = vmul.f32 %v4967, %v5010
    %v5027 = vmul.f32 %v4969, %v5011
    %v5028 = vmul.f32 %v4971, %v5012
    %v5029 = vmul.f32 %v4973, %v5013
    %v5030 = vmul.f32 %v4975, %v5014
    %v5031 = vmul.f32 %v4977, %v5015
    %v5032 = vmul.f32 %v4979, %v5016
    %v5033 = vmul.f32 %v4981, %v5017
    %v5034 = vmul.f32 %v4983, %v5018
    %v5035 = vmul.f32 %v4985, %v5019
    %v5036 = vmul.f32 %v4987, %v5020
    %v5037 = vadd.f32 %v4940, %v5021
    %v5038 = vadd.f32 %v4941, %v5022
    %v5039 = vadd.f32 %v4942, %v5023
    %v5040 = vadd.f32 %v4943, %v5024
    %v5041 = vadd.f32 %v4944, %v5025
    %v5042 = vadd.f32 %v4945, %v5026
    %v5043 = vadd.f32 %v4946, %v5027
    %v5044 = vadd.f32 %v4947, %v5028
    %v5045 = vadd.f32 %v4948, %v5029
    %v5046 = vadd.f32 %v4949, %v5030
    %v5047 = vadd.f32 %v4950, %v5031
    %v5048 = vadd.f32 %v4951, %v5032
    %v5049 = vadd.f32 %v4952, %v5033
    %v5050 = vadd.f32 %v4953, %v5034
    %v5051 = vadd.f32 %v4954, %v5035
    %v5052 = vadd.f32 %v4955, %v5036
    %5053 = vrot.lane.b32.xlu0 %v4634, 64
    %v5054 = vpop.permute.xlu0 %5053
    %5055 = vrot.lane.b32.xlu0 %v4635, 64
    %v5056 = vpop.permute.xlu0 %5055
    %5057 = vrot.lane.b32.xlu0 %v4636, 64
    %v5058 = vpop.permute.xlu0 %5057
    %5059 = vrot.lane.b32.xlu0 %v4637, 64
    %v5060 = vpop.permute.xlu0 %5059
    %5061 = vrot.lane.b32.xlu0 %v4638, 64
    %v5062 = vpop.permute.xlu0 %5061
    %5063 = vrot.lane.b32.xlu0 %v4639, 64
    %v5064 = vpop.permute.xlu0 %5063
    %5065 = vrot.lane.b32.xlu0 %v4640, 64
    %v5066 = vpop.permute.xlu0 %5065
    %5067 = vrot.lane.b32.xlu0 %v4641, 64
    %v5068 = vpop.permute.xlu0 %5067
    %5069 = vrot.lane.b32.xlu0 %v4642, 64
    %v5070 = vpop.permute.xlu0 %5069
    %5071 = vrot.lane.b32.xlu0 %v4643, 64
    %v5072 = vpop.permute.xlu0 %5071
    %5073 = vrot.lane.b32.xlu0 %v4644, 64
    %v5074 = vpop.permute.xlu0 %5073
    %5075 = vrot.lane.b32.xlu0 %v4645, 64
    %v5076 = vpop.permute.xlu0 %5075
    %5077 = vrot.lane.b32.xlu0 %v4646, 64
    %v5078 = vpop.permute.xlu0 %5077
    %5079 = vrot.lane.b32.xlu0 %v4647, 64
    %v5080 = vpop.permute.xlu0 %5079
    %5081 = vrot.lane.b32.xlu0 %v4648, 64
    %v5082 = vpop.permute.xlu0 %5081
    %5083 = vrot.lane.b32.xlu0 %v4649, 64
    %v5084 = vpop.permute.xlu0 %5083
    %s5085 = scalar_lea.vmem [#allocation16], 256
    %v5086 = vld [vmem:[%s5085] sm:$0xf]
    %v5087 = vld [vmem:[%s5085 + $0x4] sm:$0xf]
    %v5088 = vld [vmem:[%s5085 + $0x8] sm:$0xf]
    %v5089 = vld [vmem:[%s5085 + $0xc] sm:$0xf]
    %v5090 = vld [vmem:[%s5085 + $0x10] sm:$0xf]
    %v5091 = vld [vmem:[%s5085 + $0x14] sm:$0xf]
    %v5092 = vld [vmem:[%s5085 + $0x18] sm:$0xf]
    %v5093 = vld [vmem:[%s5085 + $0x1c] sm:$0xf]
    %v5094 = vld [vmem:[%s5085 + $0x20] sm:$0xf]
    %v5095 = vld [vmem:[%s5085 + $0x24] sm:$0xf]
    %v5096 = vld [vmem:[%s5085 + $0x28] sm:$0xf]
    %v5097 = vld [vmem:[%s5085 + $0x2c] sm:$0xf]
    %v5098 = vld [vmem:[%s5085 + $0x30] sm:$0xf]
    %v5099 = vld [vmem:[%s5085 + $0x34] sm:$0xf]
    %v5100 = vld [vmem:[%s5085 + $0x38] sm:$0xf]
    %v5101 = vld [vmem:[%s5085 + $0x3c] sm:$0xf]
    %v5102 = vunpack.c.l.bf16 %v5086
    %v5103 = vunpack.c.l.bf16 %v5087
    %v5104 = vunpack.c.l.bf16 %v5088
    %v5105 = vunpack.c.l.bf16 %v5089
    %v5106 = vunpack.c.l.bf16 %v5090
    %v5107 = vunpack.c.l.bf16 %v5091
    %v5108 = vunpack.c.l.bf16 %v5092
    %v5109 = vunpack.c.l.bf16 %v5093
    %v5110 = vunpack.c.l.bf16 %v5094
    %v5111 = vunpack.c.l.bf16 %v5095
    %v5112 = vunpack.c.l.bf16 %v5096
    %v5113 = vunpack.c.l.bf16 %v5097
    %v5114 = vunpack.c.l.bf16 %v5098
    %v5115 = vunpack.c.l.bf16 %v5099
    %v5116 = vunpack.c.l.bf16 %v5100
    %v5117 = vunpack.c.l.bf16 %v5101
    %v5118 = vmul.f32 %v5054, %v5102
    %v5119 = vmul.f32 %v5056, %v5103
    %v5120 = vmul.f32 %v5058, %v5104
    %v5121 = vmul.f32 %v5060, %v5105
    %v5122 = vmul.f32 %v5062, %v5106
    %v5123 = vmul.f32 %v5064, %v5107
    %v5124 = vmul.f32 %v5066, %v5108
    %v5125 = vmul.f32 %v5068, %v5109
    %v5126 = vmul.f32 %v5070, %v5110
    %v5127 = vmul.f32 %v5072, %v5111
    %v5128 = vmul.f32 %v5074, %v5112
    %v5129 = vmul.f32 %v5076, %v5113
    %v5130 = vmul.f32 %v5078, %v5114
    %v5131 = vmul.f32 %v5080, %v5115
    %v5132 = vmul.f32 %v5082, %v5116
    %v5133 = vmul.f32 %v5084, %v5117
    %v5134 = vadd.f32 %v5037, %v5118
    %v5135 = vadd.f32 %v5038, %v5119
    %v5136 = vadd.f32 %v5039, %v5120
    %v5137 = vadd.f32 %v5040, %v5121
    %v5138 = vadd.f32 %v5041, %v5122
    %v5139 = vadd.f32 %v5042, %v5123
    %v5140 = vadd.f32 %v5043, %v5124
    %v5141 = vadd.f32 %v5044, %v5125
    %v5142 = vadd.f32 %v5045, %v5126
    %v5143 = vadd.f32 %v5046, %v5127
    %v5144 = vadd.f32 %v5047, %v5128
    %v5145 = vadd.f32 %v5048, %v5129
    %v5146 = vadd.f32 %v5049, %v5130
    %v5147 = vadd.f32 %v5050, %v5131
    %v5148 = vadd.f32 %v5051, %v5132
    %v5149 = vadd.f32 %v5052, %v5133
    %5150 = vrot.lane.b32.xlu0 %v4712, 80
    %v5151 = vpop.permute.xlu0 %5150
    %5152 = vrot.lane.b32.xlu0 %v4711, 80
    %v5153 = vpop.permute.xlu0 %5152
    %5154 = vrot.lane.b32.xlu0 %v4710, 80
    %v5155 = vpop.permute.xlu0 %5154
    %5156 = vrot.lane.b32.xlu0 %v4709, 80
    %v5157 = vpop.permute.xlu0 %5156
    %5158 = vrot.lane.b32.xlu0 %v4708, 80
    %v5159 = vpop.permute.xlu0 %5158
    %5160 = vrot.lane.b32.xlu0 %v4707, 80
    %v5161 = vpop.permute.xlu0 %5160
    %5162 = vrot.lane.b32.xlu0 %v4706, 80
    %v5163 = vpop.permute.xlu0 %5162
    %5164 = vrot.lane.b32.xlu0 %v4705, 80
    %v5165 = vpop.permute.xlu0 %5164
    %5166 = vrot.lane.b32.xlu0 %v4704, 80
    %v5167 = vpop.permute.xlu0 %5166
    %5168 = vrot.lane.b32.xlu0 %v4703, 80
    %v5169 = vpop.permute.xlu0 %5168
    %5170 = vrot.lane.b32.xlu0 %v4702, 80
    %v5171 = vpop.permute.xlu0 %5170
    %5172 = vrot.lane.b32.xlu0 %v4701, 80
    %v5173 = vpop.permute.xlu0 %5172
    %5174 = vrot.lane.b32.xlu0 %v4700, 80
    %v5175 = vpop.permute.xlu0 %5174
    %5176 = vrot.lane.b32.xlu0 %v4699, 80
    %v5177 = vpop.permute.xlu0 %5176
    %5178 = vrot.lane.b32.xlu0 %v4698, 80
    %v5179 = vpop.permute.xlu0 %5178
    %5180 = vrot.lane.b32.xlu0 %v4713, 80
    %v5181 = vpop.permute.xlu0 %5180
    %s5182 = scalar_lea.vmem [#allocation16], 320
    %v5183 = vld [vmem:[%s5182] sm:$0xf]
    %v5184 = vld [vmem:[%s5182 + $0x4] sm:$0xf]
    %v5185 = vld [vmem:[%s5182 + $0x8] sm:$0xf]
    %v5186 = vld [vmem:[%s5182 + $0xc] sm:$0xf]
    %v5187 = vld [vmem:[%s5182 + $0x10] sm:$0xf]
    %v5188 = vld [vmem:[%s5182 + $0x14] sm:$0xf]
    %v5189 = vld [vmem:[%s5182 + $0x18] sm:$0xf]
    %v5190 = vld [vmem:[%s5182 + $0x1c] sm:$0xf]
    %v5191 = vld [vmem:[%s5182 + $0x20] sm:$0xf]
    %v5192 = vld [vmem:[%s5182 + $0x24] sm:$0xf]
    %v5193 = vld [vmem:[%s5182 + $0x28] sm:$0xf]
    %v5194 = vld [vmem:[%s5182 + $0x2c] sm:$0xf]
    %v5195 = vld [vmem:[%s5182 + $0x30] sm:$0xf]
    %v5196 = vld [vmem:[%s5182 + $0x34] sm:$0xf]
    %v5197 = vld [vmem:[%s5182 + $0x38] sm:$0xf]
    %v5198 = vld [vmem:[%s5182 + $0x3c] sm:$0xf]
    %v5199 = vunpack.c.l.bf16 %v5183
    %v5200 = vunpack.c.l.bf16 %v5184
    %v5201 = vunpack.c.l.bf16 %v5185
    %v5202 = vunpack.c.l.bf16 %v5186
    %v5203 = vunpack.c.l.bf16 %v5187
    %v5204 = vunpack.c.l.bf16 %v5188
    %v5205 = vunpack.c.l.bf16 %v5189
    %v5206 = vunpack.c.l.bf16 %v5190
    %v5207 = vunpack.c.l.bf16 %v5191
    %v5208 = vunpack.c.l.bf16 %v5192
    %v5209 = vunpack.c.l.bf16 %v5193
    %v5210 = vunpack.c.l.bf16 %v5194
    %v5211 = vunpack.c.l.bf16 %v5195
    %v5212 = vunpack.c.l.bf16 %v5196
    %v5213 = vunpack.c.l.bf16 %v5197
    %v5214 = vunpack.c.l.bf16 %v5198
    %v5215 = vmul.f32 %v5151, %v5199
    %v5216 = vmul.f32 %v5153, %v5200
    %v5217 = vmul.f32 %v5155, %v5201
    %v5218 = vmul.f32 %v5157, %v5202
    %v5219 = vmul.f32 %v5159, %v5203
    %v5220 = vmul.f32 %v5161, %v5204
    %v5221 = vmul.f32 %v5163, %v5205
    %v5222 = vmul.f32 %v5165, %v5206
    %v5223 = vmul.f32 %v5167, %v5207
    %v5224 = vmul.f32 %v5169, %v5208
    %v5225 = vmul.f32 %v5171, %v5209
    %v5226 = vmul.f32 %v5173, %v5210
    %v5227 = vmul.f32 %v5175, %v5211
    %v5228 = vmul.f32 %v5177, %v5212
    %v5229 = vmul.f32 %v5179, %v5213
    %v5230 = vmul.f32 %v5181, %v5214
    %v5231 = vadd.f32 %v5134, %v5215
    %v5232 = vadd.f32 %v5135, %v5216
    %v5233 = vadd.f32 %v5136, %v5217
    %v5234 = vadd.f32 %v5137, %v5218
    %v5235 = vadd.f32 %v5138, %v5219
    %v5236 = vadd.f32 %v5139, %v5220
    %v5237 = vadd.f32 %v5140, %v5221
    %v5238 = vadd.f32 %v5141, %v5222
    %v5239 = vadd.f32 %v5142, %v5223
    %v5240 = vadd.f32 %v5143, %v5224
    %v5241 = vadd.f32 %v5144, %v5225
    %v5242 = vadd.f32 %v5145, %v5226
    %v5243 = vadd.f32 %v5146, %v5227
    %v5244 = vadd.f32 %v5147, %v5228
    %v5245 = vadd.f32 %v5148, %v5229
    %v5246 = vadd.f32 %v5149, %v5230
    %5247 = vrot.lane.b32.xlu0 %v4680, 96
    %v5248 = vpop.permute.xlu0 %5247
    %5249 = vrot.lane.b32.xlu0 %v4679, 96
    %v5250 = vpop.permute.xlu0 %5249
    %5251 = vrot.lane.b32.xlu0 %v4678, 96
    %v5252 = vpop.permute.xlu0 %5251
    %5253 = vrot.lane.b32.xlu0 %v4677, 96
    %v5254 = vpop.permute.xlu0 %5253
    %5255 = vrot.lane.b32.xlu0 %v4676, 96
    %v5256 = vpop.permute.xlu0 %5255
    %5257 = vrot.lane.b32.xlu0 %v4675, 96
    %v5258 = vpop.permute.xlu0 %5257
    %5259 = vrot.lane.b32.xlu0 %v4674, 96
    %v5260 = vpop.permute.xlu0 %5259
    %5261 = vrot.lane.b32.xlu0 %v4673, 96
    %v5262 = vpop.permute.xlu0 %5261
    %5263 = vrot.lane.b32.xlu0 %v4672, 96
    %v5264 = vpop.permute.xlu0 %5263
    %5265 = vrot.lane.b32.xlu0 %v4671, 96
    %v5266 = vpop.permute.xlu0 %5265
    %5267 = vrot.lane.b32.xlu0 %v4670, 96
    %v5268 = vpop.permute.xlu0 %5267
    %5269 = vrot.lane.b32.xlu0 %v4669, 96
    %v5270 = vpop.permute.xlu0 %5269
    %5271 = vrot.lane.b32.xlu0 %v4668, 96
    %v5272 = vpop.permute.xlu0 %5271
    %5273 = vrot.lane.b32.xlu0 %v4667, 96
    %v5274 = vpop.permute.xlu0 %5273
    %5275 = vrot.lane.b32.xlu0 %v4666, 96
    %v5276 = vpop.permute.xlu0 %5275
    %5277 = vrot.lane.b32.xlu0 %v4681, 96
    %v5278 = vpop.permute.xlu0 %5277
    %s5279 = scalar_lea.vmem [#allocation16], 384
    %v5280 = vld [vmem:[%s5279] sm:$0xf]
    %v5281 = vld [vmem:[%s5279 + $0x4] sm:$0xf]
    %v5282 = vld [vmem:[%s5279 + $0x8] sm:$0xf]
    %v5283 = vld [vmem:[%s5279 + $0xc] sm:$0xf]
    %v5284 = vld [vmem:[%s5279 + $0x10] sm:$0xf]
    %v5285 = vld [vmem:[%s5279 + $0x14] sm:$0xf]
    %v5286 = vld [vmem:[%s5279 + $0x18] sm:$0xf]
    %v5287 = vld [vmem:[%s5279 + $0x1c] sm:$0xf]
    %v5288 = vld [vmem:[%s5279 + $0x20] sm:$0xf]
    %v5289 = vld [vmem:[%s5279 + $0x24] sm:$0xf]
    %v5290 = vld [vmem:[%s5279 + $0x28] sm:$0xf]
    %v5291 = vld [vmem:[%s5279 + $0x2c] sm:$0xf]
    %v5292 = vld [vmem:[%s5279 + $0x30] sm:$0xf]
    %v5293 = vld [vmem:[%s5279 + $0x34] sm:$0xf]
    %v5294 = vld [vmem:[%s5279 + $0x38] sm:$0xf]
    %v5295 = vld [vmem:[%s5279 + $0x3c] sm:$0xf]
    %v5296 = vunpack.c.l.bf16 %v5280
    %v5297 = vunpack.c.l.bf16 %v5281
    %v5298 = vunpack.c.l.bf16 %v5282
    %v5299 = vunpack.c.l.bf16 %v5283
    %v5300 = vunpack.c.l.bf16 %v5284
    %v5301 = vunpack.c.l.bf16 %v5285
    %v5302 = vunpack.c.l.bf16 %v5286
    %v5303 = vunpack.c.l.bf16 %v5287
    %v5304 = vunpack.c.l.bf16 %v5288
    %v5305 = vunpack.c.l.bf16 %v5289
    %v5306 = vunpack.c.l.bf16 %v5290
    %v5307 = vunpack.c.l.bf16 %v5291
    %v5308 = vunpack.c.l.bf16 %v5292
    %v5309 = vunpack.c.l.bf16 %v5293
    %v5310 = vunpack.c.l.bf16 %v5294
    %v5311 = vunpack.c.l.bf16 %v5295
    %v5312 = vmul.f32 %v5248, %v5296
    %v5313 = vmul.f32 %v5250, %v5297
    %v5314 = vmul.f32 %v5252, %v5298
    %v5315 = vmul.f32 %v5254, %v5299
    %v5316 = vmul.f32 %v5256, %v5300
    %v5317 = vmul.f32 %v5258, %v5301
    %v5318 = vmul.f32 %v5260, %v5302
    %v5319 = vmul.f32 %v5262, %v5303
    %v5320 = vmul.f32 %v5264, %v5304
    %v5321 = vmul.f32 %v5266, %v5305
    %v5322 = vmul.f32 %v5268, %v5306
    %v5323 = vmul.f32 %v5270, %v5307
    %v5324 = vmul.f32 %v5272, %v5308
    %v5325 = vmul.f32 %v5274, %v5309
    %v5326 = vmul.f32 %v5276, %v5310
    %v5327 = vmul.f32 %v5278, %v5311
    %v5328 = vadd.f32 %v5231, %v5312
    %v5329 = vadd.f32 %v5232, %v5313
    %v5330 = vadd.f32 %v5233, %v5314
    %v5331 = vadd.f32 %v5234, %v5315
    %v5332 = vadd.f32 %v5235, %v5316
    %v5333 = vadd.f32 %v5236, %v5317
    %v5334 = vadd.f32 %v5237, %v5318
    %v5335 = vadd.f32 %v5238, %v5319
    %v5336 = vadd.f32 %v5239, %v5320
    %v5337 = vadd.f32 %v5240, %v5321
    %v5338 = vadd.f32 %v5241, %v5322
    %v5339 = vadd.f32 %v5242, %v5323
    %v5340 = vadd.f32 %v5243, %v5324
    %v5341 = vadd.f32 %v5244, %v5325
    %v5342 = vadd.f32 %v5245, %v5326
    %v5343 = vadd.f32 %v5246, %v5327
    %5344 = vrot.lane.b32.xlu0 %v4635, 112
    %v5345 = vpop.permute.xlu0 %5344
    %5346 = vrot.lane.b32.xlu0 %v4636, 112
    %v5347 = vpop.permute.xlu0 %5346
    %5348 = vrot.lane.b32.xlu0 %v4637, 112
    %v5349 = vpop.permute.xlu0 %5348
    %5350 = vrot.lane.b32.xlu0 %v4638, 112
    %v5351 = vpop.permute.xlu0 %5350
    %5352 = vrot.lane.b32.xlu0 %v4639, 112
    %v5353 = vpop.permute.xlu0 %5352
    %5354 = vrot.lane.b32.xlu0 %v4640, 112
    %v5355 = vpop.permute.xlu0 %5354
    %5356 = vrot.lane.b32.xlu0 %v4641, 112
    %v5357 = vpop.permute.xlu0 %5356
    %5358 = vrot.lane.b32.xlu0 %v4642, 112
    %v5359 = vpop.permute.xlu0 %5358
    %5360 = vrot.lane.b32.xlu0 %v4643, 112
    %v5361 = vpop.permute.xlu0 %5360
    %5362 = vrot.lane.b32.xlu0 %v4644, 112
    %v5363 = vpop.permute.xlu0 %5362
    %5364 = vrot.lane.b32.xlu0 %v4645, 112
    %v5365 = vpop.permute.xlu0 %5364
    %5366 = vrot.lane.b32.xlu0 %v4646, 112
    %v5367 = vpop.permute.xlu0 %5366
    %5368 = vrot.lane.b32.xlu0 %v4647, 112
    %v5369 = vpop.permute.xlu0 %5368
    %5370 = vrot.lane.b32.xlu0 %v4648, 112
    %v5371 = vpop.permute.xlu0 %5370
    %5372 = vrot.lane.b32.xlu0 %v4649, 112
    %v5373 = vpop.permute.xlu0 %5372
    %5374 = vrot.lane.b32.xlu0 %v4634, 112
    %v5375 = vpop.permute.xlu0 %5374
    %s5376 = scalar_lea.vmem [#allocation16], 448
    %v5377 = vld [vmem:[%s5376] sm:$0xf]
    %v5378 = vld [vmem:[%s5376 + $0x4] sm:$0xf]
    %v5379 = vld [vmem:[%s5376 + $0x8] sm:$0xf]
    %v5380 = vld [vmem:[%s5376 + $0xc] sm:$0xf]
    %v5381 = vld [vmem:[%s5376 + $0x10] sm:$0xf]
    %v5382 = vld [vmem:[%s5376 + $0x14] sm:$0xf]
    %v5383 = vld [vmem:[%s5376 + $0x18] sm:$0xf]
    %v5384 = vld [vmem:[%s5376 + $0x1c] sm:$0xf]
    %v5385 = vld [vmem:[%s5376 + $0x20] sm:$0xf]
    %v5386 = vld [vmem:[%s5376 + $0x24] sm:$0xf]
    %v5387 = vld [vmem:[%s5376 + $0x28] sm:$0xf]
    %v5388 = vld [vmem:[%s5376 + $0x2c] sm:$0xf]
    %v5389 = vld [vmem:[%s5376 + $0x30] sm:$0xf]
    %v5390 = vld [vmem:[%s5376 + $0x34] sm:$0xf]
    %v5391 = vld [vmem:[%s5376 + $0x38] sm:$0xf]
    %v5392 = vld [vmem:[%s5376 + $0x3c] sm:$0xf]
    %v5393 = vunpack.c.l.bf16 %v5377
    %v5394 = vunpack.c.l.bf16 %v5378
    %v5395 = vunpack.c.l.bf16 %v5379
    %v5396 = vunpack.c.l.bf16 %v5380
    %v5397 = vunpack.c.l.bf16 %v5381
    %v5398 = vunpack.c.l.bf16 %v5382
    %v5399 = vunpack.c.l.bf16 %v5383
    %v5400 = vunpack.c.l.bf16 %v5384
    %v5401 = vunpack.c.l.bf16 %v5385
    %v5402 = vunpack.c.l.bf16 %v5386
    %v5403 = vunpack.c.l.bf16 %v5387
    %v5404 = vunpack.c.l.bf16 %v5388
    %v5405 = vunpack.c.l.bf16 %v5389
    %v5406 = vunpack.c.l.bf16 %v5390
    %v5407 = vunpack.c.l.bf16 %v5391
    %v5408 = vunpack.c.l.bf16 %v5392
    %v5409 = vmul.f32 %v5345, %v5393
    %v5410 = vmul.f32 %v5347, %v5394
    %v5411 = vmul.f32 %v5349, %v5395
    %v5412 = vmul.f32 %v5351, %v5396
    %v5413 = vmul.f32 %v5353, %v5397
    %v5414 = vmul.f32 %v5355, %v5398
    %v5415 = vmul.f32 %v5357, %v5399
    %v5416 = vmul.f32 %v5359, %v5400
    %v5417 = vmul.f32 %v5361, %v5401
    %v5418 = vmul.f32 %v5363, %v5402
    %v5419 = vmul.f32 %v5365, %v5403
    %v5420 = vmul.f32 %v5367, %v5404
    %v5421 = vmul.f32 %v5369, %v5405
    %v5422 = vmul.f32 %v5371, %v5406
    %v5423 = vmul.f32 %v5373, %v5407
    %v5424 = vmul.f32 %v5375, %v5408
    %v5425 = vadd.f32 %v5328, %v5409
    %v5426 = vadd.f32 %v5329, %v5410
    %v5427 = vadd.f32 %v5330, %v5411
    %v5428 = vadd.f32 %v5331, %v5412
    %v5429 = vadd.f32 %v5332, %v5413
    %v5430 = vadd.f32 %v5333, %v5414
    %v5431 = vadd.f32 %v5334, %v5415
    %v5432 = vadd.f32 %v5335, %v5416
    %v5433 = vadd.f32 %v5336, %v5417
    %v5434 = vadd.f32 %v5337, %v5418
    %v5435 = vadd.f32 %v5338, %v5419
    %v5436 = vadd.f32 %v5339, %v5420
    %v5437 = vadd.f32 %v5340, %v5421
    %v5438 = vadd.f32 %v5341, %v5422
    %v5439 = vadd.f32 %v5342, %v5423
    %v5440 = vadd.f32 %v5343, %v5424
    %s5441 = scalar_lea.vmem [#allocation16], 512
    %v5442 = vld [vmem:[%s5441] sm:$0xf]
    %v5443 = vld [vmem:[%s5441 + $0x4] sm:$0xf]
    %v5444 = vld [vmem:[%s5441 + $0x8] sm:$0xf]
    %v5445 = vld [vmem:[%s5441 + $0xc] sm:$0xf]
    %v5446 = vld [vmem:[%s5441 + $0x10] sm:$0xf]
    %v5447 = vld [vmem:[%s5441 + $0x14] sm:$0xf]
    %v5448 = vld [vmem:[%s5441 + $0x18] sm:$0xf]
    %v5449 = vld [vmem:[%s5441 + $0x1c] sm:$0xf]
    %v5450 = vld [vmem:[%s5441 + $0x20] sm:$0xf]
    %v5451 = vld [vmem:[%s5441 + $0x24] sm:$0xf]
    %v5452 = vld [vmem:[%s5441 + $0x28] sm:$0xf]
    %v5453 = vld [vmem:[%s5441 + $0x2c] sm:$0xf]
    %v5454 = vld [vmem:[%s5441 + $0x30] sm:$0xf]
    %v5455 = vld [vmem:[%s5441 + $0x34] sm:$0xf]
    %v5456 = vld [vmem:[%s5441 + $0x38] sm:$0xf]
    %v5457 = vld [vmem:[%s5441 + $0x3c] sm:$0xf]
    %v5458 = vunpack.c.l.bf16 %v5442
    %v5459 = vunpack.c.l.bf16 %v5443
    %v5460 = vunpack.c.l.bf16 %v5444
    %v5461 = vunpack.c.l.bf16 %v5445
    %v5462 = vunpack.c.l.bf16 %v5446
    %v5463 = vunpack.c.l.bf16 %v5447
    %v5464 = vunpack.c.l.bf16 %v5448
    %v5465 = vunpack.c.l.bf16 %v5449
    %v5466 = vunpack.c.l.bf16 %v5450
    %v5467 = vunpack.c.l.bf16 %v5451
    %v5468 = vunpack.c.l.bf16 %v5452
    %v5469 = vunpack.c.l.bf16 %v5453
    %v5470 = vunpack.c.l.bf16 %v5454
    %v5471 = vunpack.c.l.bf16 %v5455
    %v5472 = vunpack.c.l.bf16 %v5456
    %v5473 = vunpack.c.l.bf16 %v5457
    %v5474 = vmul.f32 %v4711, %v5458
    %v5475 = vmul.f32 %v4710, %v5459
    %v5476 = vmul.f32 %v4709, %v5460
    %v5477 = vmul.f32 %v4708, %v5461
    %v5478 = vmul.f32 %v4707, %v5462
    %v5479 = vmul.f32 %v4706, %v5463
    %v5480 = vmul.f32 %v4705, %v5464
    %v5481 = vmul.f32 %v4704, %v5465
    %v5482 = vmul.f32 %v4703, %v5466
    %v5483 = vmul.f32 %v4702, %v5467
    %v5484 = vmul.f32 %v4701, %v5468
    %v5485 = vmul.f32 %v4700, %v5469
    %v5486 = vmul.f32 %v4699, %v5470
    %v5487 = vmul.f32 %v4698, %v5471
    %v5488 = vmul.f32 %v4713, %v5472
    %v5489 = vmul.f32 %v4712, %v5473
    %v5490 = vpack.c.bf16 %v5426, %v5425
    %v5491 = vpack.c.bf16 %v5428, %v5427
    %v5492 = vpack.c.bf16 %v5430, %v5429
    %v5493 = vpack.c.bf16 %v5432, %v5431
    %v5494 = vpack.c.bf16 %v5434, %v5433
    %v5495 = vpack.c.bf16 %v5436, %v5435
    %v5496 = vpack.c.bf16 %v5438, %v5437
    %v5497 = vpack.c.bf16 %v5440, %v5439
    %s5498 = scalar_lea.vmem [#allocation2], 64
    %v5499 = vld [vmem:[%s5498] sm:$0xf]
    %v5500 = vld [vmem:[%s5498 + $0x4] sm:$0xf]
    %v5501 = vld [vmem:[%s5498 + $0x8] sm:$0xf]
    %v5502 = vld [vmem:[%s5498 + $0xc] sm:$0xf]
    %v5503 = vld [vmem:[%s5498 + $0x10] sm:$0xf]
    %v5504 = vld [vmem:[%s5498 + $0x14] sm:$0xf]
    %v5505 = vld [vmem:[%s5498 + $0x18] sm:$0xf]
    %v5506 = vld [vmem:[%s5498 + $0x1c] sm:$0xf]
    %v5507 = vld [vmem:[%s5498 + $0x20] sm:$0xf]
    %v5508 = vld [vmem:[%s5498 + $0x24] sm:$0xf]
    %v5509 = vld [vmem:[%s5498 + $0x28] sm:$0xf]
    %v5510 = vld [vmem:[%s5498 + $0x2c] sm:$0xf]
    %v5511 = vld [vmem:[%s5498 + $0x30] sm:$0xf]
    %v5512 = vld [vmem:[%s5498 + $0x34] sm:$0xf]
    %v5513 = vld [vmem:[%s5498 + $0x38] sm:$0xf]
    %v5514 = vld [vmem:[%s5498 + $0x3c] sm:$0xf]
    %v5515 = vpack.c.bf16 %v5475, %v5474
    %v5516 = vpack.c.bf16 %v5477, %v5476
    %v5517 = vpack.c.bf16 %v5479, %v5478
    %v5518 = vpack.c.bf16 %v5481, %v5480
    %v5519 = vpack.c.bf16 %v5483, %v5482
    %v5520 = vpack.c.bf16 %v5485, %v5484
    %v5521 = vpack.c.bf16 %v5487, %v5486
    %v5522 = vpack.c.bf16 %v5489, %v5488
    %s5523 = scalar_lea.vmem [#allocation2], 128
    %v5524 = vld [vmem:[%s5523] sm:$0xf]
    %v5525 = vld [vmem:[%s5523 + $0x4] sm:$0xf]
    %v5526 = vld [vmem:[%s5523 + $0x8] sm:$0xf]
    %v5527 = vld [vmem:[%s5523 + $0xc] sm:$0xf]
    %v5528 = vld [vmem:[%s5523 + $0x10] sm:$0xf]
    %v5529 = vld [vmem:[%s5523 + $0x14] sm:$0xf]
    %v5530 = vld [vmem:[%s5523 + $0x18] sm:$0xf]
    %v5531 = vld [vmem:[%s5523 + $0x1c] sm:$0xf]
    %v5532 = vld [vmem:[%s5523 + $0x20] sm:$0xf]
    %v5533 = vld [vmem:[%s5523 + $0x24] sm:$0xf]
    %v5534 = vld [vmem:[%s5523 + $0x28] sm:$0xf]
    %v5535 = vld [vmem:[%s5523 + $0x2c] sm:$0xf]
    %v5536 = vld [vmem:[%s5523 + $0x30] sm:$0xf]
    %v5537 = vld [vmem:[%s5523 + $0x34] sm:$0xf]
    %v5538 = vld [vmem:[%s5523 + $0x38] sm:$0xf]
    %v5539 = vld [vmem:[%s5523 + $0x3c] sm:$0xf]
    %v5556 = vunpack.c.l.b16 %v5524
    %v5557 = vunpack.c.l.b16 %v5525
    %v5558 = vunpack.c.l.b16 %v5526
    %v5559 = vunpack.c.l.b16 %v5527
    %v5560 = vunpack.c.l.b16 %v5528
    %v5561 = vunpack.c.l.b16 %v5529
    %v5562 = vunpack.c.l.b16 %v5530
    %v5563 = vunpack.c.l.b16 %v5531
    %v5564 = vunpack.c.l.b16 %v5532
    %v5565 = vunpack.c.l.b16 %v5533
    %v5566 = vunpack.c.l.b16 %v5534
    %v5567 = vunpack.c.l.b16 %v5535
    %v5568 = vunpack.c.l.b16 %v5536
    %v5569 = vunpack.c.l.b16 %v5537
    %v5570 = vunpack.c.l.b16 %v5538
    %v5571 = vunpack.c.l.b16 %v5539
    %v5572 = vpack.c.b16 %v5557, %v5556
    %v5573 = vpack.c.b16 %v5559, %v5558
    %v5574 = vpack.c.b16 %v5561, %v5560
    %v5575 = vpack.c.b16 %v5563, %v5562
    %v5576 = vpack.c.b16 %v5565, %v5564
    %v5577 = vpack.c.b16 %v5567, %v5566
    %v5578 = vpack.c.b16 %v5569, %v5568
    %v5579 = vpack.c.b16 %v5571, %v5570
    %5588 = vmatprep.subr.bf16.mxu0 0
    %5589 = vmatpush1.bf16.msra.mxu0 %v5579
    %5590 = vmatprep.subr.bf16.mxu0 0
    %5591 = vmatpush1.bf16.msra.mxu0 %v5578
    %5592 = vmatprep.subr.bf16.mxu0 0
    %5593 = vmatpush1.bf16.msra.mxu0 %v5577
    %5594 = vmatprep.subr.bf16.mxu0 0
    %5595 = vmatpush1.bf16.msra.mxu0 %v5576
    %5596 = vmatprep.subr.bf16.mxu0 0
    %5597 = vmatpush1.bf16.msra.mxu0 %v5575
    %5598 = vmatprep.subr.bf16.mxu0 0
    %5599 = vmatpush1.bf16.msra.mxu0 %v5574
    %5600 = vmatprep.subr.bf16.mxu0 0
    %5601 = vmatpush1.bf16.msra.mxu0 %v5573
    %5602 = vmatprep.subr.bf16.mxu0 0
    %5603 = vmatpush1.bf16.msra.mxu0 %v5572
    %5604 = vmatprep.subr.bf16.mxu0 0
    %5605 = vmatpush2.bf16.msra.mxu0 0
    %5606 = vmatprep.subr.bf16.mxu0 0
    %5607 = vmatpush2.bf16.msra.mxu0 0
    %5608 = vmatprep.subr.bf16.mxu0 0
    %5609 = vmatpush2.bf16.msra.mxu0 0
    %5610 = vmatprep.subr.bf16.mxu0 0
    %5611 = vmatpush2.bf16.msra.mxu0 0
    %5612 = vmatprep.subr.bf16.mxu0 0
    %5613 = vmatpush2.bf16.msra.mxu0 0
    %5614 = vmatprep.subr.bf16.mxu0 0
    %5615 = vmatpush2.bf16.msra.mxu0 0
    %5616 = vmatprep.subr.bf16.mxu0 0
    %5617 = vmatpush2.bf16.msra.mxu0 0
    %5618 = vmatprep.subr.bf16.mxu0 0
    %5619 = vmatpush2.bf16.msra.mxu0 0
    %5620 = vmatprep.mubr.bf16.mxu0 0
    %5621 = vmatmul.mubr.bf16.gmra.mxu0 %v5515
    %v5622 = vpop.f32.mrf.mxu0
    %v5623 = vadd.f32 0.0, %v5622
    %v5624 = vpop.f32.mrf.mxu0
    %v5625 = vpop.f32.mrf.mxu0
    %v5626 = vadd.f32 0.0, %v5625
    %v5627 = vpop.f32.mrf.mxu0
    %5628 = vmatprep.mubr.bf16.mxu0 0
    %5629 = vmatmul.mubr.bf16.gmra.mxu0 %v5516
    %v5630 = vpop.f32.mrf.mxu0
    %v5631 = vadd.f32 0.0, %v5630
    %v5632 = vpop.f32.mrf.mxu0
    %v5633 = vpop.f32.mrf.mxu0
    %v5634 = vadd.f32 0.0, %v5633
    %v5635 = vpop.f32.mrf.mxu0
    %5636 = vmatprep.mubr.bf16.mxu0 0
    %5637 = vmatmul.mubr.bf16.gmra.mxu0 %v5517
    %v5638 = vpop.f32.mrf.mxu0
    %v5639 = vadd.f32 0.0, %v5638
    %v5640 = vpop.f32.mrf.mxu0
    %v5641 = vpop.f32.mrf.mxu0
    %v5642 = vadd.f32 0.0, %v5641
    %v5643 = vpop.f32.mrf.mxu0
    %5644 = vmatprep.mubr.bf16.mxu0 0
    %5645 = vmatmul.mubr.bf16.gmra.mxu0 %v5518
    %v5646 = vpop.f32.mrf.mxu0
    %v5647 = vadd.f32 0.0, %v5646
    %v5648 = vpop.f32.mrf.mxu0
    %v5649 = vpop.f32.mrf.mxu0
    %v5650 = vadd.f32 0.0, %v5649
    %v5651 = vpop.f32.mrf.mxu0
    %5652 = vmatprep.mubr.bf16.mxu0 0
    %5653 = vmatmul.mubr.bf16.gmra.mxu0 %v5519
    %v5654 = vpop.f32.mrf.mxu0
    %v5655 = vadd.f32 0.0, %v5654
    %v5656 = vpop.f32.mrf.mxu0
    %v5657 = vpop.f32.mrf.mxu0
    %v5658 = vadd.f32 0.0, %v5657
    %v5659 = vpop.f32.mrf.mxu0
    %5660 = vmatprep.mubr.bf16.mxu0 0
    %5661 = vmatmul.mubr.bf16.gmra.mxu0 %v5520
    %v5662 = vpop.f32.mrf.mxu0
    %v5663 = vadd.f32 0.0, %v5662
    %v5664 = vpop.f32.mrf.mxu0
    %v5665 = vpop.f32.mrf.mxu0
    %v5666 = vadd.f32 0.0, %v5665
    %v5667 = vpop.f32.mrf.mxu0
    %5668 = vmatprep.mubr.bf16.mxu0 0
    %5669 = vmatmul.mubr.bf16.gmra.mxu0 %v5521
    %v5670 = vpop.f32.mrf.mxu0
    %v5671 = vadd.f32 0.0, %v5670
    %v5672 = vpop.f32.mrf.mxu0
    %v5673 = vpop.f32.mrf.mxu0
    %v5674 = vadd.f32 0.0, %v5673
    %v5675 = vpop.f32.mrf.mxu0
    %5676 = vmatprep.mubr.bf16.mxu0 0
    %5677 = vmatmul.mubr.bf16.gmra.mxu0 %v5522
    %v5678 = vpop.f32.mrf.mxu0
    %v5679 = vadd.f32 0.0, %v5678
    %v5680 = vpop.f32.mrf.mxu0
    %v5681 = vpop.f32.mrf.mxu0
    %v5682 = vadd.f32 0.0, %v5681
    %v5683 = vpop.f32.mrf.mxu0
    %5684 = vdwg.mxu0
    %v5701 = vunpack.c.l.b16 %v5499
    %v5702 = vunpack.c.l.b16 %v5500
    %v5703 = vunpack.c.l.b16 %v5501
    %v5704 = vunpack.c.l.b16 %v5502
    %v5705 = vunpack.c.l.b16 %v5503
    %v5706 = vunpack.c.l.b16 %v5504
    %v5707 = vunpack.c.l.b16 %v5505
    %v5708 = vunpack.c.l.b16 %v5506
    %v5709 = vunpack.c.l.b16 %v5507
    %v5710 = vunpack.c.l.b16 %v5508
    %v5711 = vunpack.c.l.b16 %v5509
    %v5712 = vunpack.c.l.b16 %v5510
    %v5713 = vunpack.c.l.b16 %v5511
    %v5714 = vunpack.c.l.b16 %v5512
    %v5715 = vunpack.c.l.b16 %v5513
    %v5716 = vunpack.c.l.b16 %v5514
    %v5717 = vpack.c.b16 %v5702, %v5701
    %v5718 = vpack.c.b16 %v5704, %v5703
    %v5719 = vpack.c.b16 %v5706, %v5705
    %v5720 = vpack.c.b16 %v5708, %v5707
    %v5721 = vpack.c.b16 %v5710, %v5709
    %v5722 = vpack.c.b16 %v5712, %v5711
    %v5723 = vpack.c.b16 %v5714, %v5713
    %v5724 = vpack.c.b16 %v5716, %v5715
    %5733 = vmatprep.subr.bf16.mxu0 0
    %5734 = vmatpush1.bf16.msra.mxu0 %v5724
    %5735 = vmatprep.subr.bf16.mxu0 0
    %5736 = vmatpush1.bf16.msra.mxu0 %v5723
    %5737 = vmatprep.subr.bf16.mxu0 0
    %5738 = vmatpush1.bf16.msra.mxu0 %v5722
    %5739 = vmatprep.subr.bf16.mxu0 0
    %5740 = vmatpush1.bf16.msra.mxu0 %v5721
    %5741 = vmatprep.subr.bf16.mxu0 0
    %5742 = vmatpush1.bf16.msra.mxu0 %v5720
    %5743 = vmatprep.subr.bf16.mxu0 0
    %5744 = vmatpush1.bf16.msra.mxu0 %v5719
    %5745 = vmatprep.subr.bf16.mxu0 0
    %5746 = vmatpush1.bf16.msra.mxu0 %v5718
    %5747 = vmatprep.subr.bf16.mxu0 0
    %5748 = vmatpush1.bf16.msra.mxu0 %v5717
    %5749 = vmatprep.subr.bf16.mxu0 0
    %5750 = vmatpush2.bf16.msra.mxu0 0
    %5751 = vmatprep.subr.bf16.mxu0 0
    %5752 = vmatpush2.bf16.msra.mxu0 0
    %5753 = vmatprep.subr.bf16.mxu0 0
    %5754 = vmatpush2.bf16.msra.mxu0 0
    %5755 = vmatprep.subr.bf16.mxu0 0
    %5756 = vmatpush2.bf16.msra.mxu0 0
    %5757 = vmatprep.subr.bf16.mxu0 0
    %5758 = vmatpush2.bf16.msra.mxu0 0
    %5759 = vmatprep.subr.bf16.mxu0 0
    %5760 = vmatpush2.bf16.msra.mxu0 0
    %5761 = vmatprep.subr.bf16.mxu0 0
    %5762 = vmatpush2.bf16.msra.mxu0 0
    %5763 = vmatprep.subr.bf16.mxu0 0
    %5764 = vmatpush2.bf16.msra.mxu0 0
    %5765 = vmatprep.mubr.bf16.mxu0 0
    %5766 = vmatmul.mubr.bf16.gmra.mxu0 %v5490
    %v5767 = vpop.f32.mrf.mxu0
    %v5768 = vadd.f32 %v5623, %v5767
    %v5769 = vpop.f32.mrf.mxu0
    %v5770 = vpop.f32.mrf.mxu0
    %v5771 = vadd.f32 %v5626, %v5770
    %v5772 = vpop.f32.mrf.mxu0
    %5773 = vmatprep.mubr.bf16.mxu0 0
    %5774 = vmatmul.mubr.bf16.gmra.mxu0 %v5491
    %v5775 = vpop.f32.mrf.mxu0
    %v5776 = vadd.f32 %v5631, %v5775
    %v5777 = vpop.f32.mrf.mxu0
    %v5778 = vpop.f32.mrf.mxu0
    %v5779 = vadd.f32 %v5634, %v5778
    %v5780 = vpop.f32.mrf.mxu0
    %5781 = vmatprep.mubr.bf16.mxu0 0
    %5782 = vmatmul.mubr.bf16.gmra.mxu0 %v5492
    %v5783 = vpop.f32.mrf.mxu0
    %v5784 = vadd.f32 %v5639, %v5783
    %v5785 = vpop.f32.mrf.mxu0
    %v5786 = vpop.f32.mrf.mxu0
    %v5787 = vadd.f32 %v5642, %v5786
    %v5788 = vpop.f32.mrf.mxu0
    %5789 = vmatprep.mubr.bf16.mxu0 0
    %5790 = vmatmul.mubr.bf16.gmra.mxu0 %v5493
    %v5791 = vpop.f32.mrf.mxu0
    %v5792 = vadd.f32 %v5647, %v5791
    %v5793 = vpop.f32.mrf.mxu0
    %v5794 = vpop.f32.mrf.mxu0
    %v5795 = vadd.f32 %v5650, %v5794
    %v5796 = vpop.f32.mrf.mxu0
    %5797 = vmatprep.mubr.bf16.mxu0 0
    %5798 = vmatmul.mubr.bf16.gmra.mxu0 %v5494
    %v5799 = vpop.f32.mrf.mxu0
    %v5800 = vadd.f32 %v5655, %v5799
    %v5801 = vpop.f32.mrf.mxu0
    %v5802 = vpop.f32.mrf.mxu0
    %v5803 = vadd.f32 %v5658, %v5802
    %v5804 = vpop.f32.mrf.mxu0
    %5805 = vmatprep.mubr.bf16.mxu0 0
    %5806 = vmatmul.mubr.bf16.gmra.mxu0 %v5495
    %v5807 = vpop.f32.mrf.mxu0
    %v5808 = vadd.f32 %v5663, %v5807
    %v5809 = vpop.f32.mrf.mxu0
    %v5810 = vpop.f32.mrf.mxu0
    %v5811 = vadd.f32 %v5666, %v5810
    %v5812 = vpop.f32.mrf.mxu0
    %5813 = vmatprep.mubr.bf16.mxu0 0
    %5814 = vmatmul.mubr.bf16.gmra.mxu0 %v5496
    %v5815 = vpop.f32.mrf.mxu0
    %v5816 = vadd.f32 %v5671, %v5815
    %v5817 = vpop.f32.mrf.mxu0
    %v5818 = vpop.f32.mrf.mxu0
    %v5819 = vadd.f32 %v5674, %v5818
    %v5820 = vpop.f32.mrf.mxu0
    %5821 = vmatprep.mubr.bf16.mxu0 0
    %5822 = vmatmul.mubr.bf16.gmra.mxu0 %v5497
    %v5823 = vpop.f32.mrf.mxu0
    %v5824 = vadd.f32 %v5679, %v5823
    %v5825 = vpop.f32.mrf.mxu0
    %v5826 = vpop.f32.mrf.mxu0
    %v5827 = vadd.f32 %v5682, %v5826
    %v5828 = vpop.f32.mrf.mxu0
    %5829 = vdwg.mxu0
    %v5830 = vld [vmem:[#allocation7 + $0x2] sm:$0x1]
    %v5831 = vld [vmem:[#allocation7 + $0x3] sm:$0x1]
    %v5832 = vadd.f32 %v5768, %v5771
    %v5833 = vadd.f32 %v5832, %v5776
    %v5834 = vadd.f32 %v5833, %v5779
    %v5835 = vadd.f32 %v5834, %v5784
    %v5836 = vadd.f32 %v5835, %v5787
    %v5837 = vadd.f32 %v5836, %v5792
    %v5838 = vadd.f32 %v5837, %v5795
    %v5839 = vadd.f32 %v5838, %v5800
    %v5840 = vadd.f32 %v5839, %v5803
    %v5841 = vadd.f32 %v5840, %v5808
    %v5842 = vadd.f32 %v5841, %v5811
    %v5843 = vadd.f32 %v5842, %v5816
    %v5844 = vadd.f32 %v5843, %v5819
    %v5845 = vadd.f32 %v5844, %v5824
    %v5846 = vadd.f32 %v5845, %v5827
    %v5847 = vrot.slane %v5846, 4
    %v5848 = vadd.f32 %v5846, %v5847
    %v5849 = vrot.slane %v5848, 2
    %v5850 = vadd.f32 %v5848, %v5849
    %v5851 = vrot.slane %v5850, 1
    %v5852 = vadd.f32 %v5850, %v5851
    %v5853 = vmul.f32 %v5768, %v5768
    %v5854 = vmul.f32 %v5771, %v5771
    %v5855 = vmul.f32 %v5776, %v5776
    %v5856 = vmul.f32 %v5779, %v5779
    %v5857 = vmul.f32 %v5784, %v5784
    %v5858 = vmul.f32 %v5787, %v5787
    %v5859 = vmul.f32 %v5792, %v5792
    %v5860 = vmul.f32 %v5795, %v5795
    %v5861 = vmul.f32 %v5800, %v5800
    %v5862 = vmul.f32 %v5803, %v5803
    %v5863 = vmul.f32 %v5808, %v5808
    %v5864 = vmul.f32 %v5811, %v5811
    %v5865 = vmul.f32 %v5816, %v5816
    %v5866 = vmul.f32 %v5819, %v5819
    %v5867 = vmul.f32 %v5824, %v5824
    %v5868 = vmul.f32 %v5827, %v5827
    %v5869 = vadd.f32 %v5853, %v5854
    %v5870 = vadd.f32 %v5869, %v5855
    %v5871 = vadd.f32 %v5870, %v5856
    %v5872 = vadd.f32 %v5871, %v5857
    %v5873 = vadd.f32 %v5872, %v5858
    %v5874 = vadd.f32 %v5873, %v5859
    %v5875 = vadd.f32 %v5874, %v5860
    %v5876 = vadd.f32 %v5875, %v5861
    %v5877 = vadd.f32 %v5876, %v5862
    %v5878 = vadd.f32 %v5877, %v5863
    %v5879 = vadd.f32 %v5878, %v5864
    %v5880 = vadd.f32 %v5879, %v5865
    %v5881 = vadd.f32 %v5880, %v5866
    %v5882 = vadd.f32 %v5881, %v5867
    %v5883 = vadd.f32 %v5882, %v5868
    %v5884 = vrot.slane %v5883, 4
    %v5885 = vadd.f32 %v5883, %v5884
    %v5886 = vrot.slane %v5885, 2
    %v5887 = vadd.f32 %v5885, %v5886
    %v5888 = vrot.slane %v5887, 1
    %v5889 = vadd.f32 %v5887, %v5888
    %v5890 = vmul.f32 %v5852, 0.0078125
    %v5891 = vmul.f32 %v5889, 0.0078125
    %v5892 = vmul.f32 %v5890, %v5890
    %v5893 = vsub.f32 %v5891, %v5892
    %v5894 = vmax.f32 %v5893, 0.0
    %v5895 = vadd.f32 %v5894, 1e-05
    %v5896 = vrsqrt.pop %v5895
    %v5897 = vmul.f32 %v5896, %v5830
    %v5898 = vsub.f32 %v5768, %v5890
    %v5899 = vsub.f32 %v5771, %v5890
    %v5900 = vsub.f32 %v5776, %v5890
    %v5901 = vsub.f32 %v5779, %v5890
    %v5902 = vsub.f32 %v5784, %v5890
    %v5903 = vsub.f32 %v5787, %v5890
    %v5904 = vsub.f32 %v5792, %v5890
    %v5905 = vsub.f32 %v5795, %v5890
    %v5906 = vsub.f32 %v5800, %v5890
    %v5907 = vsub.f32 %v5803, %v5890
    %v5908 = vsub.f32 %v5808, %v5890
    %v5909 = vsub.f32 %v5811, %v5890
    %v5910 = vsub.f32 %v5816, %v5890
    %v5911 = vsub.f32 %v5819, %v5890
    %v5912 = vsub.f32 %v5824, %v5890
    %v5913 = vsub.f32 %v5827, %v5890
    %v5914 = vlaneseq
    %v5915 = vshrl.u32 %v5914, 7
    %v5916 = vsub.s32 0, %v5915
    %v5917 = vrot.slane %v5897, %v5916
    %v5918 = vmul.f32 %v5898, %v5917
    %v5919 = vmul.f32 %v5899, %v5917
    %v5920 = vmul.f32 %v5900, %v5917
    %v5921 = vmul.f32 %v5901, %v5917
    %v5922 = vmul.f32 %v5902, %v5917
    %v5923 = vmul.f32 %v5903, %v5917
    %v5924 = vmul.f32 %v5904, %v5917
    %v5925 = vmul.f32 %v5905, %v5917
    %v5926 = vmul.f32 %v5906, %v5917
    %v5927 = vmul.f32 %v5907, %v5917
    %v5928 = vmul.f32 %v5908, %v5917
    %v5929 = vmul.f32 %v5909, %v5917
    %v5930 = vmul.f32 %v5910, %v5917
    %v5931 = vmul.f32 %v5911, %v5917
    %v5932 = vmul.f32 %v5912, %v5917
    %v5933 = vmul.f32 %v5913, %v5917
    %v5934 = vlaneseq
    %v5935 = vshrl.u32 %v5934, 7
    %v5936 = vsub.s32 0, %v5935
    %v5937 = vrot.slane %v5831, %v5936
    %v5938 = vadd.f32 %v5918, %v5937
    %v5939 = vadd.f32 %v5919, %v5937
    %v5940 = vadd.f32 %v5920, %v5937
    %v5941 = vadd.f32 %v5921, %v5937
    %v5942 = vadd.f32 %v5922, %v5937
    %v5943 = vadd.f32 %v5923, %v5937
    %v5944 = vadd.f32 %v5924, %v5937
    %v5945 = vadd.f32 %v5925, %v5937
    %v5946 = vadd.f32 %v5926, %v5937
    %v5947 = vadd.f32 %v5927, %v5937
    %v5948 = vadd.f32 %v5928, %v5937
    %v5949 = vadd.f32 %v5929, %v5937
    %v5950 = vadd.f32 %v5930, %v5937
    %v5951 = vadd.f32 %v5931, %v5937
    %v5952 = vadd.f32 %v5932, %v5937
    %v5953 = vadd.f32 %v5933, %v5937
    %v5954 = vmax.f32 %v5938, 0.0
    %v5955 = vmax.f32 %v5939, 0.0
    %v5956 = vmax.f32 %v5940, 0.0
    %v5957 = vmax.f32 %v5941, 0.0
    %v5958 = vmax.f32 %v5942, 0.0
    %v5959 = vmax.f32 %v5943, 0.0
    %v5960 = vmax.f32 %v5944, 0.0
    %v5961 = vmax.f32 %v5945, 0.0
    %v5962 = vmax.f32 %v5946, 0.0
    %v5963 = vmax.f32 %v5947, 0.0
    %v5964 = vmax.f32 %v5948, 0.0
    %v5965 = vmax.f32 %v5949, 0.0
    %v5966 = vmax.f32 %v5950, 0.0
    %v5967 = vmax.f32 %v5951, 0.0
    %v5968 = vmax.f32 %v5952, 0.0
    %v5969 = vmax.f32 %v5953, 0.0
    %v5970 = vrot.slane %v5954, 7
    %v5971 = vrot.slane %v5955, 7
    %v5972 = vrot.slane %v5956, 7
    %v5973 = vrot.slane %v5957, 7
    %v5974 = vrot.slane %v5958, 7
    %v5975 = vrot.slane %v5959, 7
    %v5976 = vrot.slane %v5960, 7
    %v5977 = vrot.slane %v5961, 7
    %v5978 = vrot.slane %v5962, 7
    %v5979 = vrot.slane %v5963, 7
    %v5980 = vrot.slane %v5964, 7
    %v5981 = vrot.slane %v5965, 7
    %v5982 = vrot.slane %v5966, 7
    %v5983 = vrot.slane %v5967, 7
    %v5984 = vrot.slane %v5968, 7
    %v5985 = vrot.slane %v5969, 7
    %v5986 = vsel %vm489, %v5984, %v5985
    %v5987 = vsel %vm489, %v5983, %v5984
    %v5988 = vsel %vm489, %v5982, %v5983
    %v5989 = vsel %vm489, %v5981, %v5982
    %v5990 = vsel %vm489, %v5980, %v5981
    %v5991 = vsel %vm489, %v5979, %v5980
    %v5992 = vsel %vm489, %v5978, %v5979
    %v5993 = vsel %vm489, %v5977, %v5978
    %v5994 = vsel %vm489, %v5976, %v5977
    %v5995 = vsel %vm489, %v5975, %v5976
    %v5996 = vsel %vm489, %v5974, %v5975
    %v5997 = vsel %vm489, %v5973, %v5974
    %v5998 = vsel %vm489, %v5972, %v5973
    %v5999 = vsel %vm489, %v5971, %v5972
    %v6000 = vsel %vm489, %v5970, %v5971
    %v6001 = vsel %vm489, %v5985, %v5970
    %v6002 = vrot.slane %v5954, 1
    %v6003 = vrot.slane %v5955, 1
    %v6004 = vrot.slane %v5956, 1
    %v6005 = vrot.slane %v5957, 1
    %v6006 = vrot.slane %v5958, 1
    %v6007 = vrot.slane %v5959, 1
    %v6008 = vrot.slane %v5960, 1
    %v6009 = vrot.slane %v5961, 1
    %v6010 = vrot.slane %v5962, 1
    %v6011 = vrot.slane %v5963, 1
    %v6012 = vrot.slane %v5964, 1
    %v6013 = vrot.slane %v5965, 1
    %v6014 = vrot.slane %v5966, 1
    %v6015 = vrot.slane %v5967, 1
    %v6016 = vrot.slane %v5968, 1
    %v6017 = vrot.slane %v5969, 1
    %v6018 = vsel %vm618, %v6016, %v6017
    %v6019 = vsel %vm618, %v6015, %v6016
    %v6020 = vsel %vm618, %v6014, %v6015
    %v6021 = vsel %vm618, %v6013, %v6014
    %v6022 = vsel %vm618, %v6012, %v6013
    %v6023 = vsel %vm618, %v6011, %v6012
    %v6024 = vsel %vm618, %v6010, %v6011
    %v6025 = vsel %vm618, %v6009, %v6010
    %v6026 = vsel %vm618, %v6008, %v6009
    %v6027 = vsel %vm618, %v6007, %v6008
    %v6028 = vsel %vm618, %v6006, %v6007
    %v6029 = vsel %vm618, %v6005, %v6006
    %v6030 = vsel %vm618, %v6004, %v6005
    %v6031 = vsel %vm618, %v6003, %v6004
    %v6032 = vsel %vm618, %v6002, %v6003
    %v6033 = vsel %vm618, %v6017, %v6002
    %v6034 = vmul.f32 %v5986, %v4730
    %v6035 = vmul.f32 %v6001, %v4731
    %v6036 = vmul.f32 %v6000, %v4732
    %v6037 = vmul.f32 %v5999, %v4733
    %v6038 = vmul.f32 %v5998, %v4734
    %v6039 = vmul.f32 %v5997, %v4735
    %v6040 = vmul.f32 %v5996, %v4736
    %v6041 = vmul.f32 %v5995, %v4737
    %v6042 = vmul.f32 %v5994, %v4738
    %v6043 = vmul.f32 %v5993, %v4739
    %v6044 = vmul.f32 %v5992, %v4740
    %v6045 = vmul.f32 %v5991, %v4741
    %v6046 = vmul.f32 %v5990, %v4742
    %v6047 = vmul.f32 %v5989, %v4743
    %v6048 = vmul.f32 %v5988, %v4744
    %v6049 = vmul.f32 %v5987, %v4745
    %6050 = vrot.lane.b32.xlu0 %v5969, 16
    %v6051 = vpop.permute.xlu0 %6050
    %6052 = vrot.lane.b32.xlu0 %v5954, 16
    %v6053 = vpop.permute.xlu0 %6052
    %6054 = vrot.lane.b32.xlu0 %v5955, 16
    %v6055 = vpop.permute.xlu0 %6054
    %6056 = vrot.lane.b32.xlu0 %v5956, 16
    %v6057 = vpop.permute.xlu0 %6056
    %6058 = vrot.lane.b32.xlu0 %v5957, 16
    %v6059 = vpop.permute.xlu0 %6058
    %6060 = vrot.lane.b32.xlu0 %v5958, 16
    %v6061 = vpop.permute.xlu0 %6060
    %6062 = vrot.lane.b32.xlu0 %v5959, 16
    %v6063 = vpop.permute.xlu0 %6062
    %6064 = vrot.lane.b32.xlu0 %v5960, 16
    %v6065 = vpop.permute.xlu0 %6064
    %6066 = vrot.lane.b32.xlu0 %v5961, 16
    %v6067 = vpop.permute.xlu0 %6066
    %6068 = vrot.lane.b32.xlu0 %v5962, 16
    %v6069 = vpop.permute.xlu0 %6068
    %6070 = vrot.lane.b32.xlu0 %v5963, 16
    %v6071 = vpop.permute.xlu0 %6070
    %6072 = vrot.lane.b32.xlu0 %v5964, 16
    %v6073 = vpop.permute.xlu0 %6072
    %6074 = vrot.lane.b32.xlu0 %v5965, 16
    %v6075 = vpop.permute.xlu0 %6074
    %6076 = vrot.lane.b32.xlu0 %v5966, 16
    %v6077 = vpop.permute.xlu0 %6076
    %6078 = vrot.lane.b32.xlu0 %v5967, 16
    %v6079 = vpop.permute.xlu0 %6078
    %6080 = vrot.lane.b32.xlu0 %v5968, 16
    %v6081 = vpop.permute.xlu0 %6080
    %v6082 = vmul.f32 %v6051, %v4811
    %v6083 = vmul.f32 %v6053, %v4812
    %v6084 = vmul.f32 %v6055, %v4813
    %v6085 = vmul.f32 %v6057, %v4814
    %v6086 = vmul.f32 %v6059, %v4815
    %v6087 = vmul.f32 %v6061, %v4816
    %v6088 = vmul.f32 %v6063, %v4817
    %v6089 = vmul.f32 %v6065, %v4818
    %v6090 = vmul.f32 %v6067, %v4819
    %v6091 = vmul.f32 %v6069, %v4820
    %v6092 = vmul.f32 %v6071, %v4821
    %v6093 = vmul.f32 %v6073, %v4822
    %v6094 = vmul.f32 %v6075, %v4823
    %v6095 = vmul.f32 %v6077, %v4824
    %v6096 = vmul.f32 %v6079, %v4825
    %v6097 = vmul.f32 %v6081, %v4826
    %v6098 = vadd.f32 %v6034, %v6082
    %v6099 = vadd.f32 %v6035, %v6083
    %v6100 = vadd.f32 %v6036, %v6084
    %v6101 = vadd.f32 %v6037, %v6085
    %v6102 = vadd.f32 %v6038, %v6086
    %v6103 = vadd.f32 %v6039, %v6087
    %v6104 = vadd.f32 %v6040, %v6088
    %v6105 = vadd.f32 %v6041, %v6089
    %v6106 = vadd.f32 %v6042, %v6090
    %v6107 = vadd.f32 %v6043, %v6091
    %v6108 = vadd.f32 %v6044, %v6092
    %v6109 = vadd.f32 %v6045, %v6093
    %v6110 = vadd.f32 %v6046, %v6094
    %v6111 = vadd.f32 %v6047, %v6095
    %v6112 = vadd.f32 %v6048, %v6096
    %v6113 = vadd.f32 %v6049, %v6097
    %6114 = vrot.lane.b32.xlu0 %v6033, 32
    %v6115 = vpop.permute.xlu0 %6114
    %6116 = vrot.lane.b32.xlu0 %v6032, 32
    %v6117 = vpop.permute.xlu0 %6116
    %6118 = vrot.lane.b32.xlu0 %v6031, 32
    %v6119 = vpop.permute.xlu0 %6118
    %6120 = vrot.lane.b32.xlu0 %v6030, 32
    %v6121 = vpop.permute.xlu0 %6120
    %6122 = vrot.lane.b32.xlu0 %v6029, 32
    %v6123 = vpop.permute.xlu0 %6122
    %6124 = vrot.lane.b32.xlu0 %v6028, 32
    %v6125 = vpop.permute.xlu0 %6124
    %6126 = vrot.lane.b32.xlu0 %v6027, 32
    %v6127 = vpop.permute.xlu0 %6126
    %6128 = vrot.lane.b32.xlu0 %v6026, 32
    %v6129 = vpop.permute.xlu0 %6128
    %6130 = vrot.lane.b32.xlu0 %v6025, 32
    %v6131 = vpop.permute.xlu0 %6130
    %6132 = vrot.lane.b32.xlu0 %v6024, 32
    %v6133 = vpop.permute.xlu0 %6132
    %6134 = vrot.lane.b32.xlu0 %v6023, 32
    %v6135 = vpop.permute.xlu0 %6134
    %6136 = vrot.lane.b32.xlu0 %v6022, 32
    %v6137 = vpop.permute.xlu0 %6136
    %6138 = vrot.lane.b32.xlu0 %v6021, 32
    %v6139 = vpop.permute.xlu0 %6138
    %6140 = vrot.lane.b32.xlu0 %v6020, 32
    %v6141 = vpop.permute.xlu0 %6140
    %6142 = vrot.lane.b32.xlu0 %v6019, 32
    %v6143 = vpop.permute.xlu0 %6142
    %6144 = vrot.lane.b32.xlu0 %v6018, 32
    %v6145 = vpop.permute.xlu0 %6144
    %v6146 = vmul.f32 %v6115, %v4908
    %v6147 = vmul.f32 %v6117, %v4909
    %v6148 = vmul.f32 %v6119, %v4910
    %v6149 = vmul.f32 %v6121, %v4911
    %v6150 = vmul.f32 %v6123, %v4912
    %v6151 = vmul.f32 %v6125, %v4913
    %v6152 = vmul.f32 %v6127, %v4914
    %v6153 = vmul.f32 %v6129, %v4915
    %v6154 = vmul.f32 %v6131, %v4916
    %v6155 = vmul.f32 %v6133, %v4917
    %v6156 = vmul.f32 %v6135, %v4918
    %v6157 = vmul.f32 %v6137, %v4919
    %v6158 = vmul.f32 %v6139, %v4920
    %v6159 = vmul.f32 %v6141, %v4921
    %v6160 = vmul.f32 %v6143, %v4922
    %v6161 = vmul.f32 %v6145, %v4923
    %v6162 = vadd.f32 %v6098, %v6146
    %v6163 = vadd.f32 %v6099, %v6147
    %v6164 = vadd.f32 %v6100, %v6148
    %v6165 = vadd.f32 %v6101, %v6149
    %v6166 = vadd.f32 %v6102, %v6150
    %v6167 = vadd.f32 %v6103, %v6151
    %v6168 = vadd.f32 %v6104, %v6152
    %v6169 = vadd.f32 %v6105, %v6153
    %v6170 = vadd.f32 %v6106, %v6154
    %v6171 = vadd.f32 %v6107, %v6155
    %v6172 = vadd.f32 %v6108, %v6156
    %v6173 = vadd.f32 %v6109, %v6157
    %v6174 = vadd.f32 %v6110, %v6158
    %v6175 = vadd.f32 %v6111, %v6159
    %v6176 = vadd.f32 %v6112, %v6160
    %v6177 = vadd.f32 %v6113, %v6161
    %6178 = vrot.lane.b32.xlu0 %v6001, 48
    %v6179 = vpop.permute.xlu0 %6178
    %6180 = vrot.lane.b32.xlu0 %v6000, 48
    %v6181 = vpop.permute.xlu0 %6180
    %6182 = vrot.lane.b32.xlu0 %v5999, 48
    %v6183 = vpop.permute.xlu0 %6182
    %6184 = vrot.lane.b32.xlu0 %v5998, 48
    %v6185 = vpop.permute.xlu0 %6184
    %6186 = vrot.lane.b32.xlu0 %v5997, 48
    %v6187 = vpop.permute.xlu0 %6186
    %6188 = vrot.lane.b32.xlu0 %v5996, 48
    %v6189 = vpop.permute.xlu0 %6188
    %6190 = vrot.lane.b32.xlu0 %v5995, 48
    %v6191 = vpop.permute.xlu0 %6190
    %6192 = vrot.lane.b32.xlu0 %v5994, 48
    %v6193 = vpop.permute.xlu0 %6192
    %6194 = vrot.lane.b32.xlu0 %v5993, 48
    %v6195 = vpop.permute.xlu0 %6194
    %6196 = vrot.lane.b32.xlu0 %v5992, 48
    %v6197 = vpop.permute.xlu0 %6196
    %6198 = vrot.lane.b32.xlu0 %v5991, 48
    %v6199 = vpop.permute.xlu0 %6198
    %6200 = vrot.lane.b32.xlu0 %v5990, 48
    %v6201 = vpop.permute.xlu0 %6200
    %6202 = vrot.lane.b32.xlu0 %v5989, 48
    %v6203 = vpop.permute.xlu0 %6202
    %6204 = vrot.lane.b32.xlu0 %v5988, 48
    %v6205 = vpop.permute.xlu0 %6204
    %6206 = vrot.lane.b32.xlu0 %v5987, 48
    %v6207 = vpop.permute.xlu0 %6206
    %6208 = vrot.lane.b32.xlu0 %v5986, 48
    %v6209 = vpop.permute.xlu0 %6208
    %v6210 = vmul.f32 %v6179, %v5005
    %v6211 = vmul.f32 %v6181, %v5006
    %v6212 = vmul.f32 %v6183, %v5007
    %v6213 = vmul.f32 %v6185, %v5008
    %v6214 = vmul.f32 %v6187, %v5009
    %v6215 = vmul.f32 %v6189, %v5010
    %v6216 = vmul.f32 %v6191, %v5011
    %v6217 = vmul.f32 %v6193, %v5012
    %v6218 = vmul.f32 %v6195, %v5013
    %v6219 = vmul.f32 %v6197, %v5014
    %v6220 = vmul.f32 %v6199, %v5015
    %v6221 = vmul.f32 %v6201, %v5016
    %v6222 = vmul.f32 %v6203, %v5017
    %v6223 = vmul.f32 %v6205, %v5018
    %v6224 = vmul.f32 %v6207, %v5019
    %v6225 = vmul.f32 %v6209, %v5020
    %v6226 = vadd.f32 %v6162, %v6210
    %v6227 = vadd.f32 %v6163, %v6211
    %v6228 = vadd.f32 %v6164, %v6212
    %v6229 = vadd.f32 %v6165, %v6213
    %v6230 = vadd.f32 %v6166, %v6214
    %v6231 = vadd.f32 %v6167, %v6215
    %v6232 = vadd.f32 %v6168, %v6216
    %v6233 = vadd.f32 %v6169, %v6217
    %v6234 = vadd.f32 %v6170, %v6218
    %v6235 = vadd.f32 %v6171, %v6219
    %v6236 = vadd.f32 %v6172, %v6220
    %v6237 = vadd.f32 %v6173, %v6221
    %v6238 = vadd.f32 %v6174, %v6222
    %v6239 = vadd.f32 %v6175, %v6223
    %v6240 = vadd.f32 %v6176, %v6224
    %v6241 = vadd.f32 %v6177, %v6225
    %6242 = vrot.lane.b32.xlu0 %v5954, 64
    %v6243 = vpop.permute.xlu0 %6242
    %6244 = vrot.lane.b32.xlu0 %v5955, 64
    %v6245 = vpop.permute.xlu0 %6244
    %6246 = vrot.lane.b32.xlu0 %v5956, 64
    %v6247 = vpop.permute.xlu0 %6246
    %6248 = vrot.lane.b32.xlu0 %v5957, 64
    %v6249 = vpop.permute.xlu0 %6248
    %6250 = vrot.lane.b32.xlu0 %v5958, 64
    %v6251 = vpop.permute.xlu0 %6250
    %6252 = vrot.lane.b32.xlu0 %v5959, 64
    %v6253 = vpop.permute.xlu0 %6252
    %6254 = vrot.lane.b32.xlu0 %v5960, 64
    %v6255 = vpop.permute.xlu0 %6254
    %6256 = vrot.lane.b32.xlu0 %v5961, 64
    %v6257 = vpop.permute.xlu0 %6256
    %6258 = vrot.lane.b32.xlu0 %v5962, 64
    %v6259 = vpop.permute.xlu0 %6258
    %6260 = vrot.lane.b32.xlu0 %v5963, 64
    %v6261 = vpop.permute.xlu0 %6260
    %6262 = vrot.lane.b32.xlu0 %v5964, 64
    %v6263 = vpop.permute.xlu0 %6262
    %6264 = vrot.lane.b32.xlu0 %v5965, 64
    %v6265 = vpop.permute.xlu0 %6264
    %6266 = vrot.lane.b32.xlu0 %v5966, 64
    %v6267 = vpop.permute.xlu0 %6266
    %6268 = vrot.lane.b32.xlu0 %v5967, 64
    %v6269 = vpop.permute.xlu0 %6268
    %6270 = vrot.lane.b32.xlu0 %v5968, 64
    %v6271 = vpop.permute.xlu0 %6270
    %6272 = vrot.lane.b32.xlu0 %v5969, 64
    %v6273 = vpop.permute.xlu0 %6272
    %v6274 = vmul.f32 %v6243, %v5102
    %v6275 = vmul.f32 %v6245, %v5103
    %v6276 = vmul.f32 %v6247, %v5104
    %v6277 = vmul.f32 %v6249, %v5105
    %v6278 = vmul.f32 %v6251, %v5106
    %v6279 = vmul.f32 %v6253, %v5107
    %v6280 = vmul.f32 %v6255, %v5108
    %v6281 = vmul.f32 %v6257, %v5109
    %v6282 = vmul.f32 %v6259, %v5110
    %v6283 = vmul.f32 %v6261, %v5111
    %v6284 = vmul.f32 %v6263, %v5112
    %v6285 = vmul.f32 %v6265, %v5113
    %v6286 = vmul.f32 %v6267, %v5114
    %v6287 = vmul.f32 %v6269, %v5115
    %v6288 = vmul.f32 %v6271, %v5116
    %v6289 = vmul.f32 %v6273, %v5117
    %v6290 = vadd.f32 %v6226, %v6274
    %v6291 = vadd.f32 %v6227, %v6275
    %v6292 = vadd.f32 %v6228, %v6276
    %v6293 = vadd.f32 %v6229, %v6277
    %v6294 = vadd.f32 %v6230, %v6278
    %v6295 = vadd.f32 %v6231, %v6279
    %v6296 = vadd.f32 %v6232, %v6280
    %v6297 = vadd.f32 %v6233, %v6281
    %v6298 = vadd.f32 %v6234, %v6282
    %v6299 = vadd.f32 %v6235, %v6283
    %v6300 = vadd.f32 %v6236, %v6284
    %v6301 = vadd.f32 %v6237, %v6285
    %v6302 = vadd.f32 %v6238, %v6286
    %v6303 = vadd.f32 %v6239, %v6287
    %v6304 = vadd.f32 %v6240, %v6288
    %v6305 = vadd.f32 %v6241, %v6289
    %6306 = vrot.lane.b32.xlu0 %v6032, 80
    %v6307 = vpop.permute.xlu0 %6306
    %6308 = vrot.lane.b32.xlu0 %v6031, 80
    %v6309 = vpop.permute.xlu0 %6308
    %6310 = vrot.lane.b32.xlu0 %v6030, 80
    %v6311 = vpop.permute.xlu0 %6310
    %6312 = vrot.lane.b32.xlu0 %v6029, 80
    %v6313 = vpop.permute.xlu0 %6312
    %6314 = vrot.lane.b32.xlu0 %v6028, 80
    %v6315 = vpop.permute.xlu0 %6314
    %6316 = vrot.lane.b32.xlu0 %v6027, 80
    %v6317 = vpop.permute.xlu0 %6316
    %6318 = vrot.lane.b32.xlu0 %v6026, 80
    %v6319 = vpop.permute.xlu0 %6318
    %6320 = vrot.lane.b32.xlu0 %v6025, 80
    %v6321 = vpop.permute.xlu0 %6320
    %6322 = vrot.lane.b32.xlu0 %v6024, 80
    %v6323 = vpop.permute.xlu0 %6322
    %6324 = vrot.lane.b32.xlu0 %v6023, 80
    %v6325 = vpop.permute.xlu0 %6324
    %6326 = vrot.lane.b32.xlu0 %v6022, 80
    %v6327 = vpop.permute.xlu0 %6326
    %6328 = vrot.lane.b32.xlu0 %v6021, 80
    %v6329 = vpop.permute.xlu0 %6328
    %6330 = vrot.lane.b32.xlu0 %v6020, 80
    %v6331 = vpop.permute.xlu0 %6330
    %6332 = vrot.lane.b32.xlu0 %v6019, 80
    %v6333 = vpop.permute.xlu0 %6332
    %6334 = vrot.lane.b32.xlu0 %v6018, 80
    %v6335 = vpop.permute.xlu0 %6334
    %6336 = vrot.lane.b32.xlu0 %v6033, 80
    %v6337 = vpop.permute.xlu0 %6336
    %v6338 = vmul.f32 %v6307, %v5199
    %v6339 = vmul.f32 %v6309, %v5200
    %v6340 = vmul.f32 %v6311, %v5201
    %v6341 = vmul.f32 %v6313, %v5202
    %v6342 = vmul.f32 %v6315, %v5203
    %v6343 = vmul.f32 %v6317, %v5204
    %v6344 = vmul.f32 %v6319, %v5205
    %v6345 = vmul.f32 %v6321, %v5206
    %v6346 = vmul.f32 %v6323, %v5207
    %v6347 = vmul.f32 %v6325, %v5208
    %v6348 = vmul.f32 %v6327, %v5209
    %v6349 = vmul.f32 %v6329, %v5210
    %v6350 = vmul.f32 %v6331, %v5211
    %v6351 = vmul.f32 %v6333, %v5212
    %v6352 = vmul.f32 %v6335, %v5213
    %v6353 = vmul.f32 %v6337, %v5214
    %v6354 = vadd.f32 %v6290, %v6338
    %v6355 = vadd.f32 %v6291, %v6339
    %v6356 = vadd.f32 %v6292, %v6340
    %v6357 = vadd.f32 %v6293, %v6341
    %v6358 = vadd.f32 %v6294, %v6342
    %v6359 = vadd.f32 %v6295, %v6343
    %v6360 = vadd.f32 %v6296, %v6344
    %v6361 = vadd.f32 %v6297, %v6345
    %v6362 = vadd.f32 %v6298, %v6346
    %v6363 = vadd.f32 %v6299, %v6347
    %v6364 = vadd.f32 %v6300, %v6348
    %v6365 = vadd.f32 %v6301, %v6349
    %v6366 = vadd.f32 %v6302, %v6350
    %v6367 = vadd.f32 %v6303, %v6351
    %v6368 = vadd.f32 %v6304, %v6352
    %v6369 = vadd.f32 %v6305, %v6353
    %6370 = vrot.lane.b32.xlu0 %v6000, 96
    %v6371 = vpop.permute.xlu0 %6370
    %6372 = vrot.lane.b32.xlu0 %v5999, 96
    %v6373 = vpop.permute.xlu0 %6372
    %6374 = vrot.lane.b32.xlu0 %v5998, 96
    %v6375 = vpop.permute.xlu0 %6374
    %6376 = vrot.lane.b32.xlu0 %v5997, 96
    %v6377 = vpop.permute.xlu0 %6376
    %6378 = vrot.lane.b32.xlu0 %v5996, 96
    %v6379 = vpop.permute.xlu0 %6378
    %6380 = vrot.lane.b32.xlu0 %v5995, 96
    %v6381 = vpop.permute.xlu0 %6380
    %6382 = vrot.lane.b32.xlu0 %v5994, 96
    %v6383 = vpop.permute.xlu0 %6382
    %6384 = vrot.lane.b32.xlu0 %v5993, 96
    %v6385 = vpop.permute.xlu0 %6384
    %6386 = vrot.lane.b32.xlu0 %v5992, 96
    %v6387 = vpop.permute.xlu0 %6386
    %6388 = vrot.lane.b32.xlu0 %v5991, 96
    %v6389 = vpop.permute.xlu0 %6388
    %6390 = vrot.lane.b32.xlu0 %v5990, 96
    %v6391 = vpop.permute.xlu0 %6390
    %6392 = vrot.lane.b32.xlu0 %v5989, 96
    %v6393 = vpop.permute.xlu0 %6392
    %6394 = vrot.lane.b32.xlu0 %v5988, 96
    %v6395 = vpop.permute.xlu0 %6394
    %6396 = vrot.lane.b32.xlu0 %v5987, 96
    %v6397 = vpop.permute.xlu0 %6396
    %6398 = vrot.lane.b32.xlu0 %v5986, 96
    %v6399 = vpop.permute.xlu0 %6398
    %6400 = vrot.lane.b32.xlu0 %v6001, 96
    %v6401 = vpop.permute.xlu0 %6400
    %v6402 = vmul.f32 %v6371, %v5296
    %v6403 = vmul.f32 %v6373, %v5297
    %v6404 = vmul.f32 %v6375, %v5298
    %v6405 = vmul.f32 %v6377, %v5299
    %v6406 = vmul.f32 %v6379, %v5300
    %v6407 = vmul.f32 %v6381, %v5301
    %v6408 = vmul.f32 %v6383, %v5302
    %v6409 = vmul.f32 %v6385, %v5303
    %v6410 = vmul.f32 %v6387, %v5304
    %v6411 = vmul.f32 %v6389, %v5305
    %v6412 = vmul.f32 %v6391, %v5306
    %v6413 = vmul.f32 %v6393, %v5307
    %v6414 = vmul.f32 %v6395, %v5308
    %v6415 = vmul.f32 %v6397, %v5309
    %v6416 = vmul.f32 %v6399, %v5310
    %v6417 = vmul.f32 %v6401, %v5311
    %v6418 = vadd.f32 %v6354, %v6402
    %v6419 = vadd.f32 %v6355, %v6403
    %v6420 = vadd.f32 %v6356, %v6404
    %v6421 = vadd.f32 %v6357, %v6405
    %v6422 = vadd.f32 %v6358, %v6406
    %v6423 = vadd.f32 %v6359, %v6407
    %v6424 = vadd.f32 %v6360, %v6408
    %v6425 = vadd.f32 %v6361, %v6409
    %v6426 = vadd.f32 %v6362, %v6410
    %v6427 = vadd.f32 %v6363, %v6411
    %v6428 = vadd.f32 %v6364, %v6412
    %v6429 = vadd.f32 %v6365, %v6413
    %v6430 = vadd.f32 %v6366, %v6414
    %v6431 = vadd.f32 %v6367, %v6415
    %v6432 = vadd.f32 %v6368, %v6416
    %v6433 = vadd.f32 %v6369, %v6417
    %6434 = vrot.lane.b32.xlu0 %v5955, 112
    %v6435 = vpop.permute.xlu0 %6434
    %6436 = vrot.lane.b32.xlu0 %v5956, 112
    %v6437 = vpop.permute.xlu0 %6436
    %6438 = vrot.lane.b32.xlu0 %v5957, 112
    %v6439 = vpop.permute.xlu0 %6438
    %6440 = vrot.lane.b32.xlu0 %v5958, 112
    %v6441 = vpop.permute.xlu0 %6440
    %6442 = vrot.lane.b32.xlu0 %v5959, 112
    %v6443 = vpop.permute.xlu0 %6442
    %6444 = vrot.lane.b32.xlu0 %v5960, 112
    %v6445 = vpop.permute.xlu0 %6444
    %6446 = vrot.lane.b32.xlu0 %v5961, 112
    %v6447 = vpop.permute.xlu0 %6446
    %6448 = vrot.lane.b32.xlu0 %v5962, 112
    %v6449 = vpop.permute.xlu0 %6448
    %6450 = vrot.lane.b32.xlu0 %v5963, 112
    %v6451 = vpop.permute.xlu0 %6450
    %6452 = vrot.lane.b32.xlu0 %v5964, 112
    %v6453 = vpop.permute.xlu0 %6452
    %6454 = vrot.lane.b32.xlu0 %v5965, 112
    %v6455 = vpop.permute.xlu0 %6454
    %6456 = vrot.lane.b32.xlu0 %v5966, 112
    %v6457 = vpop.permute.xlu0 %6456
    %6458 = vrot.lane.b32.xlu0 %v5967, 112
    %v6459 = vpop.permute.xlu0 %6458
    %6460 = vrot.lane.b32.xlu0 %v5968, 112
    %v6461 = vpop.permute.xlu0 %6460
    %6462 = vrot.lane.b32.xlu0 %v5969, 112
    %v6463 = vpop.permute.xlu0 %6462
    %6464 = vrot.lane.b32.xlu0 %v5954, 112
    %v6465 = vpop.permute.xlu0 %6464
    %v6466 = vmul.f32 %v6435, %v5393
    %v6467 = vmul.f32 %v6437, %v5394
    %v6468 = vmul.f32 %v6439, %v5395
    %v6469 = vmul.f32 %v6441, %v5396
    %v6470 = vmul.f32 %v6443, %v5397
    %v6471 = vmul.f32 %v6445, %v5398
    %v6472 = vmul.f32 %v6447, %v5399
    %v6473 = vmul.f32 %v6449, %v5400
    %v6474 = vmul.f32 %v6451, %v5401
    %v6475 = vmul.f32 %v6453, %v5402
    %v6476 = vmul.f32 %v6455, %v5403
    %v6477 = vmul.f32 %v6457, %v5404
    %v6478 = vmul.f32 %v6459, %v5405
    %v6479 = vmul.f32 %v6461, %v5406
    %v6480 = vmul.f32 %v6463, %v5407
    %v6481 = vmul.f32 %v6465, %v5408
    %v6482 = vadd.f32 %v6418, %v6466
    %v6483 = vadd.f32 %v6419, %v6467
    %v6484 = vadd.f32 %v6420, %v6468
    %v6485 = vadd.f32 %v6421, %v6469
    %v6486 = vadd.f32 %v6422, %v6470
    %v6487 = vadd.f32 %v6423, %v6471
    %v6488 = vadd.f32 %v6424, %v6472
    %v6489 = vadd.f32 %v6425, %v6473
    %v6490 = vadd.f32 %v6426, %v6474
    %v6491 = vadd.f32 %v6427, %v6475
    %v6492 = vadd.f32 %v6428, %v6476
    %v6493 = vadd.f32 %v6429, %v6477
    %v6494 = vadd.f32 %v6430, %v6478
    %v6495 = vadd.f32 %v6431, %v6479
    %v6496 = vadd.f32 %v6432, %v6480
    %v6497 = vadd.f32 %v6433, %v6481
    %v6498 = vmul.f32 %v6031, %v5458
    %v6499 = vmul.f32 %v6030, %v5459
    %v6500 = vmul.f32 %v6029, %v5460
    %v6501 = vmul.f32 %v6028, %v5461
    %v6502 = vmul.f32 %v6027, %v5462
    %v6503 = vmul.f32 %v6026, %v5463
    %v6504 = vmul.f32 %v6025, %v5464
    %v6505 = vmul.f32 %v6024, %v5465
    %v6506 = vmul.f32 %v6023, %v5466
    %v6507 = vmul.f32 %v6022, %v5467
    %v6508 = vmul.f32 %v6021, %v5468
    %v6509 = vmul.f32 %v6020, %v5469
    %v6510 = vmul.f32 %v6019, %v5470
    %v6511 = vmul.f32 %v6018, %v5471
    %v6512 = vmul.f32 %v6033, %v5472
    %v6513 = vmul.f32 %v6032, %v5473
    %v6514 = vpack.c.bf16 %v6483, %v6482
    %v6515 = vpack.c.bf16 %v6485, %v6484
    %v6516 = vpack.c.bf16 %v6487, %v6486
    %v6517 = vpack.c.bf16 %v6489, %v6488
    %v6518 = vpack.c.bf16 %v6491, %v6490
    %v6519 = vpack.c.bf16 %v6493, %v6492
    %v6520 = vpack.c.bf16 %v6495, %v6494
    %v6521 = vpack.c.bf16 %v6497, %v6496
    %s6522 = scalar_lea.vmem [#allocation2], 192
    %v6523 = vld [vmem:[%s6522] sm:$0xf]
    %v6524 = vld [vmem:[%s6522 + $0x4] sm:$0xf]
    %v6525 = vld [vmem:[%s6522 + $0x8] sm:$0xf]
    %v6526 = vld [vmem:[%s6522 + $0xc] sm:$0xf]
    %v6527 = vld [vmem:[%s6522 + $0x10] sm:$0xf]
    %v6528 = vld [vmem:[%s6522 + $0x14] sm:$0xf]
    %v6529 = vld [vmem:[%s6522 + $0x18] sm:$0xf]
    %v6530 = vld [vmem:[%s6522 + $0x1c] sm:$0xf]
    %v6531 = vld [vmem:[%s6522 + $0x20] sm:$0xf]
    %v6532 = vld [vmem:[%s6522 + $0x24] sm:$0xf]
    %v6533 = vld [vmem:[%s6522 + $0x28] sm:$0xf]
    %v6534 = vld [vmem:[%s6522 + $0x2c] sm:$0xf]
    %v6535 = vld [vmem:[%s6522 + $0x30] sm:$0xf]
    %v6536 = vld [vmem:[%s6522 + $0x34] sm:$0xf]
    %v6537 = vld [vmem:[%s6522 + $0x38] sm:$0xf]
    %v6538 = vld [vmem:[%s6522 + $0x3c] sm:$0xf]
    %v6539 = vpack.c.bf16 %v6499, %v6498
    %v6540 = vpack.c.bf16 %v6501, %v6500
    %v6541 = vpack.c.bf16 %v6503, %v6502
    %v6542 = vpack.c.bf16 %v6505, %v6504
    %v6543 = vpack.c.bf16 %v6507, %v6506
    %v6544 = vpack.c.bf16 %v6509, %v6508
    %v6545 = vpack.c.bf16 %v6511, %v6510
    %v6546 = vpack.c.bf16 %v6513, %v6512
    %s6547 = scalar_lea.vmem [#allocation2], 256
    %v6548 = vld [vmem:[%s6547] sm:$0xf]
    %v6549 = vld [vmem:[%s6547 + $0x4] sm:$0xf]
    %v6550 = vld [vmem:[%s6547 + $0x8] sm:$0xf]
    %v6551 = vld [vmem:[%s6547 + $0xc] sm:$0xf]
    %v6552 = vld [vmem:[%s6547 + $0x10] sm:$0xf]
    %v6553 = vld [vmem:[%s6547 + $0x14] sm:$0xf]
    %v6554 = vld [vmem:[%s6547 + $0x18] sm:$0xf]
    %v6555 = vld [vmem:[%s6547 + $0x1c] sm:$0xf]
    %v6556 = vld [vmem:[%s6547 + $0x20] sm:$0xf]
    %v6557 = vld [vmem:[%s6547 + $0x24] sm:$0xf]
    %v6558 = vld [vmem:[%s6547 + $0x28] sm:$0xf]
    %v6559 = vld [vmem:[%s6547 + $0x2c] sm:$0xf]
    %v6560 = vld [vmem:[%s6547 + $0x30] sm:$0xf]
    %v6561 = vld [vmem:[%s6547 + $0x34] sm:$0xf]
    %v6562 = vld [vmem:[%s6547 + $0x38] sm:$0xf]
    %v6563 = vld [vmem:[%s6547 + $0x3c] sm:$0xf]
    %v6580 = vunpack.c.l.b16 %v6548
    %v6581 = vunpack.c.l.b16 %v6549
    %v6582 = vunpack.c.l.b16 %v6550
    %v6583 = vunpack.c.l.b16 %v6551
    %v6584 = vunpack.c.l.b16 %v6552
    %v6585 = vunpack.c.l.b16 %v6553
    %v6586 = vunpack.c.l.b16 %v6554
    %v6587 = vunpack.c.l.b16 %v6555
    %v6588 = vunpack.c.l.b16 %v6556
    %v6589 = vunpack.c.l.b16 %v6557
    %v6590 = vunpack.c.l.b16 %v6558
    %v6591 = vunpack.c.l.b16 %v6559
    %v6592 = vunpack.c.l.b16 %v6560
    %v6593 = vunpack.c.l.b16 %v6561
    %v6594 = vunpack.c.l.b16 %v6562
    %v6595 = vunpack.c.l.b16 %v6563
    %v6596 = vpack.c.b16 %v6581, %v6580
    %v6597 = vpack.c.b16 %v6583, %v6582
    %v6598 = vpack.c.b16 %v6585, %v6584
    %v6599 = vpack.c.b16 %v6587, %v6586
    %v6600 = vpack.c.b16 %v6589, %v6588
    %v6601 = vpack.c.b16 %v6591, %v6590
    %v6602 = vpack.c.b16 %v6593, %v6592
    %v6603 = vpack.c.b16 %v6595, %v6594
    %6612 = vmatprep.subr.bf16.mxu0 0
    %6613 = vmatpush1.bf16.msra.mxu0 %v6603
    %6614 = vmatprep.subr.bf16.mxu0 0
    %6615 = vmatpush1.bf16.msra.mxu0 %v6602
    %6616 = vmatprep.subr.bf16.mxu0 0
    %6617 = vmatpush1.bf16.msra.mxu0 %v6601
    %6618 = vmatprep.subr.bf16.mxu0 0
    %6619 = vmatpush1.bf16.msra.mxu0 %v6600
    %6620 = vmatprep.subr.bf16.mxu0 0
    %6621 = vmatpush1.bf16.msra.mxu0 %v6599
    %6622 = vmatprep.subr.bf16.mxu0 0
    %6623 = vmatpush1.bf16.msra.mxu0 %v6598
    %6624 = vmatprep.subr.bf16.mxu0 0
    %6625 = vmatpush1.bf16.msra.mxu0 %v6597
    %6626 = vmatprep.subr.bf16.mxu0 0
    %6627 = vmatpush1.bf16.msra.mxu0 %v6596
    %6628 = vmatprep.subr.bf16.mxu0 0
    %6629 = vmatpush2.bf16.msra.mxu0 0
    %6630 = vmatprep.subr.bf16.mxu0 0
    %6631 = vmatpush2.bf16.msra.mxu0 0
    %6632 = vmatprep.subr.bf16.mxu0 0
    %6633 = vmatpush2.bf16.msra.mxu0 0
    %6634 = vmatprep.subr.bf16.mxu0 0
    %6635 = vmatpush2.bf16.msra.mxu0 0
    %6636 = vmatprep.subr.bf16.mxu0 0
    %6637 = vmatpush2.bf16.msra.mxu0 0
    %6638 = vmatprep.subr.bf16.mxu0 0
    %6639 = vmatpush2.bf16.msra.mxu0 0
    %6640 = vmatprep.subr.bf16.mxu0 0
    %6641 = vmatpush2.bf16.msra.mxu0 0
    %6642 = vmatprep.subr.bf16.mxu0 0
    %6643 = vmatpush2.bf16.msra.mxu0 0
    %6644 = vmatprep.mubr.bf16.mxu0 0
    %6645 = vmatmul.mubr.bf16.gmra.mxu0 %v6539
    %v6646 = vpop.f32.mrf.mxu0
    %v6647 = vadd.f32 0.0, %v6646
    %v6648 = vpop.f32.mrf.mxu0
    %v6649 = vpop.f32.mrf.mxu0
    %v6650 = vadd.f32 0.0, %v6649
    %v6651 = vpop.f32.mrf.mxu0
    %6652 = vmatprep.mubr.bf16.mxu0 0
    %6653 = vmatmul.mubr.bf16.gmra.mxu0 %v6540
    %v6654 = vpop.f32.mrf.mxu0
    %v6655 = vadd.f32 0.0, %v6654
    %v6656 = vpop.f32.mrf.mxu0
    %v6657 = vpop.f32.mrf.mxu0
    %v6658 = vadd.f32 0.0, %v6657
    %v6659 = vpop.f32.mrf.mxu0
    %6660 = vmatprep.mubr.bf16.mxu0 0
    %6661 = vmatmul.mubr.bf16.gmra.mxu0 %v6541
    %v6662 = vpop.f32.mrf.mxu0
    %v6663 = vadd.f32 0.0, %v6662
    %v6664 = vpop.f32.mrf.mxu0
    %v6665 = vpop.f32.mrf.mxu0
    %v6666 = vadd.f32 0.0, %v6665
    %v6667 = vpop.f32.mrf.mxu0
    %6668 = vmatprep.mubr.bf16.mxu0 0
    %6669 = vmatmul.mubr.bf16.gmra.mxu0 %v6542
    %v6670 = vpop.f32.mrf.mxu0
    %v6671 = vadd.f32 0.0, %v6670
    %v6672 = vpop.f32.mrf.mxu0
    %v6673 = vpop.f32.mrf.mxu0
    %v6674 = vadd.f32 0.0, %v6673
    %v6675 = vpop.f32.mrf.mxu0
    %6676 = vmatprep.mubr.bf16.mxu0 0
    %6677 = vmatmul.mubr.bf16.gmra.mxu0 %v6543
    %v6678 = vpop.f32.mrf.mxu0
    %v6679 = vadd.f32 0.0, %v6678
    %v6680 = vpop.f32.mrf.mxu0
    %v6681 = vpop.f32.mrf.mxu0
    %v6682 = vadd.f32 0.0, %v6681
    %v6683 = vpop.f32.mrf.mxu0
    %6684 = vmatprep.mubr.bf16.mxu0 0
    %6685 = vmatmul.mubr.bf16.gmra.mxu0 %v6544
    %v6686 = vpop.f32.mrf.mxu0
    %v6687 = vadd.f32 0.0, %v6686
    %v6688 = vpop.f32.mrf.mxu0
    %v6689 = vpop.f32.mrf.mxu0
    %v6690 = vadd.f32 0.0, %v6689
    %v6691 = vpop.f32.mrf.mxu0
    %6692 = vmatprep.mubr.bf16.mxu0 0
    %6693 = vmatmul.mubr.bf16.gmra.mxu0 %v6545
    %v6694 = vpop.f32.mrf.mxu0
    %v6695 = vadd.f32 0.0, %v6694
    %v6696 = vpop.f32.mrf.mxu0
    %v6697 = vpop.f32.mrf.mxu0
    %v6698 = vadd.f32 0.0, %v6697
    %v6699 = vpop.f32.mrf.mxu0
    %6700 = vmatprep.mubr.bf16.mxu0 0
    %6701 = vmatmul.mubr.bf16.gmra.mxu0 %v6546
    %v6702 = vpop.f32.mrf.mxu0
    %v6703 = vadd.f32 0.0, %v6702
    %v6704 = vpop.f32.mrf.mxu0
    %v6705 = vpop.f32.mrf.mxu0
    %v6706 = vadd.f32 0.0, %v6705
    %v6707 = vpop.f32.mrf.mxu0
    %6708 = vdwg.mxu0
    %v6725 = vunpack.c.l.b16 %v6523
    %v6726 = vunpack.c.l.b16 %v6524
    %v6727 = vunpack.c.l.b16 %v6525
    %v6728 = vunpack.c.l.b16 %v6526
    %v6729 = vunpack.c.l.b16 %v6527
    %v6730 = vunpack.c.l.b16 %v6528
    %v6731 = vunpack.c.l.b16 %v6529
    %v6732 = vunpack.c.l.b16 %v6530
    %v6733 = vunpack.c.l.b16 %v6531
    %v6734 = vunpack.c.l.b16 %v6532
    %v6735 = vunpack.c.l.b16 %v6533
    %v6736 = vunpack.c.l.b16 %v6534
    %v6737 = vunpack.c.l.b16 %v6535
    %v6738 = vunpack.c.l.b16 %v6536
    %v6739 = vunpack.c.l.b16 %v6537
    %v6740 = vunpack.c.l.b16 %v6538
    %v6741 = vpack.c.b16 %v6726, %v6725
    %v6742 = vpack.c.b16 %v6728, %v6727
    %v6743 = vpack.c.b16 %v6730, %v6729
    %v6744 = vpack.c.b16 %v6732, %v6731
    %v6745 = vpack.c.b16 %v6734, %v6733
    %v6746 = vpack.c.b16 %v6736, %v6735
    %v6747 = vpack.c.b16 %v6738, %v6737
    %v6748 = vpack.c.b16 %v6740, %v6739
    %6757 = vmatprep.subr.bf16.mxu0 0
    %6758 = vmatpush1.bf16.msra.mxu0 %v6748
    %6759 = vmatprep.subr.bf16.mxu0 0
    %6760 = vmatpush1.bf16.msra.mxu0 %v6747
    %6761 = vmatprep.subr.bf16.mxu0 0
    %6762 = vmatpush1.bf16.msra.mxu0 %v6746
    %6763 = vmatprep.subr.bf16.mxu0 0
    %6764 = vmatpush1.bf16.msra.mxu0 %v6745
    %6765 = vmatprep.subr.bf16.mxu0 0
    %6766 = vmatpush1.bf16.msra.mxu0 %v6744
    %6767 = vmatprep.subr.bf16.mxu0 0
    %6768 = vmatpush1.bf16.msra.mxu0 %v6743
    %6769 = vmatprep.subr.bf16.mxu0 0
    %6770 = vmatpush1.bf16.msra.mxu0 %v6742
    %6771 = vmatprep.subr.bf16.mxu0 0
    %6772 = vmatpush1.bf16.msra.mxu0 %v6741
    %6773 = vmatprep.subr.bf16.mxu0 0
    %6774 = vmatpush2.bf16.msra.mxu0 0
    %6775 = vmatprep.subr.bf16.mxu0 0
    %6776 = vmatpush2.bf16.msra.mxu0 0
    %6777 = vmatprep.subr.bf16.mxu0 0
    %6778 = vmatpush2.bf16.msra.mxu0 0
    %6779 = vmatprep.subr.bf16.mxu0 0
    %6780 = vmatpush2.bf16.msra.mxu0 0
    %6781 = vmatprep.subr.bf16.mxu0 0
    %6782 = vmatpush2.bf16.msra.mxu0 0
    %6783 = vmatprep.subr.bf16.mxu0 0
    %6784 = vmatpush2.bf16.msra.mxu0 0
    %6785 = vmatprep.subr.bf16.mxu0 0
    %6786 = vmatpush2.bf16.msra.mxu0 0
    %6787 = vmatprep.subr.bf16.mxu0 0
    %6788 = vmatpush2.bf16.msra.mxu0 0
    %6789 = vmatprep.mubr.bf16.mxu0 0
    %6790 = vmatmul.mubr.bf16.gmra.mxu0 %v6514
    %v6791 = vpop.f32.mrf.mxu0
    %v6792 = vadd.f32 %v6647, %v6791
    %v6793 = vpop.f32.mrf.mxu0
    %v6794 = vpop.f32.mrf.mxu0
    %v6795 = vadd.f32 %v6650, %v6794
    %v6796 = vpop.f32.mrf.mxu0
    %6797 = vmatprep.mubr.bf16.mxu0 0
    %6798 = vmatmul.mubr.bf16.gmra.mxu0 %v6515
    %v6799 = vpop.f32.mrf.mxu0
    %v6800 = vadd.f32 %v6655, %v6799
    %v6801 = vpop.f32.mrf.mxu0
    %v6802 = vpop.f32.mrf.mxu0
    %v6803 = vadd.f32 %v6658, %v6802
    %v6804 = vpop.f32.mrf.mxu0
    %6805 = vmatprep.mubr.bf16.mxu0 0
    %6806 = vmatmul.mubr.bf16.gmra.mxu0 %v6516
    %v6807 = vpop.f32.mrf.mxu0
    %v6808 = vadd.f32 %v6663, %v6807
    %v6809 = vpop.f32.mrf.mxu0
    %v6810 = vpop.f32.mrf.mxu0
    %v6811 = vadd.f32 %v6666, %v6810
    %v6812 = vpop.f32.mrf.mxu0
    %6813 = vmatprep.mubr.bf16.mxu0 0
    %6814 = vmatmul.mubr.bf16.gmra.mxu0 %v6517
    %v6815 = vpop.f32.mrf.mxu0
    %v6816 = vadd.f32 %v6671, %v6815
    %v6817 = vpop.f32.mrf.mxu0
    %v6818 = vpop.f32.mrf.mxu0
    %v6819 = vadd.f32 %v6674, %v6818
    %v6820 = vpop.f32.mrf.mxu0
    %6821 = vmatprep.mubr.bf16.mxu0 0
    %6822 = vmatmul.mubr.bf16.gmra.mxu0 %v6518
    %v6823 = vpop.f32.mrf.mxu0
    %v6824 = vadd.f32 %v6679, %v6823
    %v6825 = vpop.f32.mrf.mxu0
    %v6826 = vpop.f32.mrf.mxu0
    %v6827 = vadd.f32 %v6682, %v6826
    %v6828 = vpop.f32.mrf.mxu0
    %6829 = vmatprep.mubr.bf16.mxu0 0
    %6830 = vmatmul.mubr.bf16.gmra.mxu0 %v6519
    %v6831 = vpop.f32.mrf.mxu0
    %v6832 = vadd.f32 %v6687, %v6831
    %v6833 = vpop.f32.mrf.mxu0
    %v6834 = vpop.f32.mrf.mxu0
    %v6835 = vadd.f32 %v6690, %v6834
    %v6836 = vpop.f32.mrf.mxu0
    %6837 = vmatprep.mubr.bf16.mxu0 0
    %6838 = vmatmul.mubr.bf16.gmra.mxu0 %v6520
    %v6839 = vpop.f32.mrf.mxu0
    %v6840 = vadd.f32 %v6695, %v6839
    %v6841 = vpop.f32.mrf.mxu0
    %v6842 = vpop.f32.mrf.mxu0
    %v6843 = vadd.f32 %v6698, %v6842
    %v6844 = vpop.f32.mrf.mxu0
    %6845 = vmatprep.mubr.bf16.mxu0 0
    %6846 = vmatmul.mubr.bf16.gmra.mxu0 %v6521
    %v6847 = vpop.f32.mrf.mxu0
    %v6848 = vadd.f32 %v6703, %v6847
    %v6849 = vpop.f32.mrf.mxu0
    %v6850 = vpop.f32.mrf.mxu0
    %v6851 = vadd.f32 %v6706, %v6850
    %v6852 = vpop.f32.mrf.mxu0
    %6853 = vdwg.mxu0
    %v6854 = vadd.f32 %v6792, %v4448
    %v6855 = vadd.f32 %v6795, %v4451
    %v6856 = vadd.f32 %v6800, %v4456
    %v6857 = vadd.f32 %v6803, %v4459
    %v6858 = vadd.f32 %v6808, %v4464
    %v6859 = vadd.f32 %v6811, %v4467
    %v6860 = vadd.f32 %v6816, %v4472
    %v6861 = vadd.f32 %v6819, %v4475
    %v6862 = vadd.f32 %v6824, %v4480
    %v6863 = vadd.f32 %v6827, %v4483
    %v6864 = vadd.f32 %v6832, %v4488
    %v6865 = vadd.f32 %v6835, %v4491
    %v6866 = vadd.f32 %v6840, %v4496
    %v6867 = vadd.f32 %v6843, %v4499
    %v6868 = vadd.f32 %v6848, %v4504
    %v6869 = vadd.f32 %v6851, %v4507
    %v6870 = vld [vmem:[#allocation7 + $0x4] sm:$0x1]
    %v6871 = vld [vmem:[#allocation7 + $0x5] sm:$0x1]
    %v6872 = vadd.f32 %v6854, %v6855
    %v6873 = vadd.f32 %v6872, %v6856
    %v6874 = vadd.f32 %v6873, %v6857
    %v6875 = vadd.f32 %v6874, %v6858
    %v6876 = vadd.f32 %v6875, %v6859
    %v6877 = vadd.f32 %v6876, %v6860
    %v6878 = vadd.f32 %v6877, %v6861
    %v6879 = vadd.f32 %v6878, %v6862
    %v6880 = vadd.f32 %v6879, %v6863
    %v6881 = vadd.f32 %v6880, %v6864
    %v6882 = vadd.f32 %v6881, %v6865
    %v6883 = vadd.f32 %v6882, %v6866
    %v6884 = vadd.f32 %v6883, %v6867
    %v6885 = vadd.f32 %v6884, %v6868
    %v6886 = vadd.f32 %v6885, %v6869
    %v6887 = vrot.slane %v6886, 4
    %v6888 = vadd.f32 %v6886, %v6887
    %v6889 = vrot.slane %v6888, 2
    %v6890 = vadd.f32 %v6888, %v6889
    %v6891 = vrot.slane %v6890, 1
    %v6892 = vadd.f32 %v6890, %v6891
    %v6893 = vmul.f32 %v6854, %v6854
    %v6894 = vmul.f32 %v6855, %v6855
    %v6895 = vmul.f32 %v6856, %v6856
    %v6896 = vmul.f32 %v6857, %v6857
    %v6897 = vmul.f32 %v6858, %v6858
    %v6898 = vmul.f32 %v6859, %v6859
    %v6899 = vmul.f32 %v6860, %v6860
    %v6900 = vmul.f32 %v6861, %v6861
    %v6901 = vmul.f32 %v6862, %v6862
    %v6902 = vmul.f32 %v6863, %v6863
    %v6903 = vmul.f32 %v6864, %v6864
    %v6904 = vmul.f32 %v6865, %v6865
    %v6905 = vmul.f32 %v6866, %v6866
    %v6906 = vmul.f32 %v6867, %v6867
    %v6907 = vmul.f32 %v6868, %v6868
    %v6908 = vmul.f32 %v6869, %v6869
    %v6909 = vadd.f32 %v6893, %v6894
    %v6910 = vadd.f32 %v6909, %v6895
    %v6911 = vadd.f32 %v6910, %v6896
    %v6912 = vadd.f32 %v6911, %v6897
    %v6913 = vadd.f32 %v6912, %v6898
    %v6914 = vadd.f32 %v6913, %v6899
    %v6915 = vadd.f32 %v6914, %v6900
    %v6916 = vadd.f32 %v6915, %v6901
    %v6917 = vadd.f32 %v6916, %v6902
    %v6918 = vadd.f32 %v6917, %v6903
    %v6919 = vadd.f32 %v6918, %v6904
    %v6920 = vadd.f32 %v6919, %v6905
    %v6921 = vadd.f32 %v6920, %v6906
    %v6922 = vadd.f32 %v6921, %v6907
    %v6923 = vadd.f32 %v6922, %v6908
    %v6924 = vrot.slane %v6923, 4
    %v6925 = vadd.f32 %v6923, %v6924
    %v6926 = vrot.slane %v6925, 2
    %v6927 = vadd.f32 %v6925, %v6926
    %v6928 = vrot.slane %v6927, 1
    %v6929 = vadd.f32 %v6927, %v6928
    %v6930 = vmul.f32 %v6892, 0.0078125
    %v6931 = vmul.f32 %v6929, 0.0078125
    %v6932 = vmul.f32 %v6930, %v6930
    %v6933 = vsub.f32 %v6931, %v6932
    %v6934 = vmax.f32 %v6933, 0.0
    %v6935 = vadd.f32 %v6934, 1e-05
    %v6936 = vrsqrt.pop %v6935
    %v6937 = vmul.f32 %v6936, %v6870
    %v6938 = vsub.f32 %v6854, %v6930
    %v6939 = vsub.f32 %v6855, %v6930
    %v6940 = vsub.f32 %v6856, %v6930
    %v6941 = vsub.f32 %v6857, %v6930
    %v6942 = vsub.f32 %v6858, %v6930
    %v6943 = vsub.f32 %v6859, %v6930
    %v6944 = vsub.f32 %v6860, %v6930
    %v6945 = vsub.f32 %v6861, %v6930
    %v6946 = vsub.f32 %v6862, %v6930
    %v6947 = vsub.f32 %v6863, %v6930
    %v6948 = vsub.f32 %v6864, %v6930
    %v6949 = vsub.f32 %v6865, %v6930
    %v6950 = vsub.f32 %v6866, %v6930
    %v6951 = vsub.f32 %v6867, %v6930
    %v6952 = vsub.f32 %v6868, %v6930
    %v6953 = vsub.f32 %v6869, %v6930
    %v6954 = vlaneseq
    %v6955 = vshrl.u32 %v6954, 7
    %v6956 = vsub.s32 0, %v6955
    %v6957 = vrot.slane %v6937, %v6956
    %v6958 = vmul.f32 %v6938, %v6957
    %v6959 = vmul.f32 %v6939, %v6957
    %v6960 = vmul.f32 %v6940, %v6957
    %v6961 = vmul.f32 %v6941, %v6957
    %v6962 = vmul.f32 %v6942, %v6957
    %v6963 = vmul.f32 %v6943, %v6957
    %v6964 = vmul.f32 %v6944, %v6957
    %v6965 = vmul.f32 %v6945, %v6957
    %v6966 = vmul.f32 %v6946, %v6957
    %v6967 = vmul.f32 %v6947, %v6957
    %v6968 = vmul.f32 %v6948, %v6957
    %v6969 = vmul.f32 %v6949, %v6957
    %v6970 = vmul.f32 %v6950, %v6957
    %v6971 = vmul.f32 %v6951, %v6957
    %v6972 = vmul.f32 %v6952, %v6957
    %v6973 = vmul.f32 %v6953, %v6957
    %v6974 = vlaneseq
    %v6975 = vshrl.u32 %v6974, 7
    %v6976 = vsub.s32 0, %v6975
    %v6977 = vrot.slane %v6871, %v6976
    %v6978 = vadd.f32 %v6958, %v6977
    %v6979 = vadd.f32 %v6959, %v6977
    %v6980 = vadd.f32 %v6960, %v6977
    %v6981 = vadd.f32 %v6961, %v6977
    %v6982 = vadd.f32 %v6962, %v6977
    %v6983 = vadd.f32 %v6963, %v6977
    %v6984 = vadd.f32 %v6964, %v6977
    %v6985 = vadd.f32 %v6965, %v6977
    %v6986 = vadd.f32 %v6966, %v6977
    %v6987 = vadd.f32 %v6967, %v6977
    %v6988 = vadd.f32 %v6968, %v6977
    %v6989 = vadd.f32 %v6969, %v6977
    %v6990 = vadd.f32 %v6970, %v6977
    %v6991 = vadd.f32 %v6971, %v6977
    %v6992 = vadd.f32 %v6972, %v6977
    %v6993 = vadd.f32 %v6973, %v6977
    %v6994 = vmax.f32 %v6978, 0.0
    %v6995 = vmax.f32 %v6979, 0.0
    %v6996 = vmax.f32 %v6980, 0.0
    %v6997 = vmax.f32 %v6981, 0.0
    %v6998 = vmax.f32 %v6982, 0.0
    %v6999 = vmax.f32 %v6983, 0.0
    %v7000 = vmax.f32 %v6984, 0.0
    %v7001 = vmax.f32 %v6985, 0.0
    %v7002 = vmax.f32 %v6986, 0.0
    %v7003 = vmax.f32 %v6987, 0.0
    %v7004 = vmax.f32 %v6988, 0.0
    %v7005 = vmax.f32 %v6989, 0.0
    %v7006 = vmax.f32 %v6990, 0.0
    %v7007 = vmax.f32 %v6991, 0.0
    %v7008 = vmax.f32 %v6992, 0.0
    %v7009 = vmax.f32 %v6993, 0.0
    %v7010 = vld [vmem:[#allocation10] sm:$0xf]
    %v7011 = vld [vmem:[#allocation10 + $0x4] sm:$0xf]
    %v7012 = vld [vmem:[#allocation10 + $0x8] sm:$0xf]
    %v7013 = vld [vmem:[#allocation10 + $0xc] sm:$0xf]
    %v7014 = vrot.slane %v6994, 7
    %v7015 = vrot.slane %v6995, 7
    %v7016 = vrot.slane %v6996, 7
    %v7017 = vrot.slane %v6997, 7
    %v7018 = vrot.slane %v6998, 7
    %v7019 = vrot.slane %v6999, 7
    %v7020 = vrot.slane %v7000, 7
    %v7021 = vrot.slane %v7001, 7
    %v7022 = vrot.slane %v7002, 7
    %v7023 = vrot.slane %v7003, 7
    %v7024 = vrot.slane %v7004, 7
    %v7025 = vrot.slane %v7005, 7
    %v7026 = vrot.slane %v7006, 7
    %v7027 = vrot.slane %v7007, 7
    %v7028 = vrot.slane %v7008, 7
    %v7029 = vrot.slane %v7009, 7
    %v7030 = vsel %vm489, %v7028, %v7029
    %v7031 = vsel %vm489, %v7027, %v7028
    %v7032 = vsel %vm489, %v7026, %v7027
    %v7033 = vsel %vm489, %v7025, %v7026
    %v7034 = vsel %vm489, %v7024, %v7025
    %v7035 = vsel %vm489, %v7023, %v7024
    %v7036 = vsel %vm489, %v7022, %v7023
    %v7037 = vsel %vm489, %v7021, %v7022
    %v7038 = vsel %vm489, %v7020, %v7021
    %v7039 = vsel %vm489, %v7019, %v7020
    %v7040 = vsel %vm489, %v7018, %v7019
    %v7041 = vsel %vm489, %v7017, %v7018
    %v7042 = vsel %vm489, %v7016, %v7017
    %v7043 = vsel %vm489, %v7015, %v7016
    %v7044 = vsel %vm489, %v7014, %v7015
    %v7045 = vsel %vm489, %v7029, %v7014
    %v7046 = vrot.slane %v6994, 1
    %v7047 = vrot.slane %v6995, 1
    %v7048 = vrot.slane %v6996, 1
    %v7049 = vrot.slane %v6997, 1
    %v7050 = vrot.slane %v6998, 1
    %v7051 = vrot.slane %v6999, 1
    %v7052 = vrot.slane %v7000, 1
    %v7053 = vrot.slane %v7001, 1
    %v7054 = vrot.slane %v7002, 1
    %v7055 = vrot.slane %v7003, 1
    %v7056 = vrot.slane %v7004, 1
    %v7057 = vrot.slane %v7005, 1
    %v7058 = vrot.slane %v7006, 1
    %v7059 = vrot.slane %v7007, 1
    %v7060 = vrot.slane %v7008, 1
    %v7061 = vrot.slane %v7009, 1
    %v7062 = vsel %vm618, %v7060, %v7061
    %v7063 = vsel %vm618, %v7059, %v7060
    %v7064 = vsel %vm618, %v7058, %v7059
    %v7065 = vsel %vm618, %v7057, %v7058
    %v7066 = vsel %vm618, %v7056, %v7057
    %v7067 = vsel %vm618, %v7055, %v7056
    %v7068 = vsel %vm618, %v7054, %v7055
    %v7069 = vsel %vm618, %v7053, %v7054
    %v7070 = vsel %vm618, %v7052, %v7053
    %v7071 = vsel %vm618, %v7051, %v7052
    %v7072 = vsel %vm618, %v7050, %v7051
    %v7073 = vsel %vm618, %v7049, %v7050
    %v7074 = vsel %vm618, %v7048, %v7049
    %v7075 = vsel %vm618, %v7047, %v7048
    %v7076 = vsel %vm618, %v7046, %v7047
    %v7077 = vsel %vm618, %v7061, %v7046
    %v7078 = vmul.f32 %v7030, %v4730
    %v7079 = vmul.f32 %v7045, %v4731
    %v7080 = vmul.f32 %v7044, %v4732
    %v7081 = vmul.f32 %v7043, %v4733
    %v7082 = vmul.f32 %v7042, %v4734
    %v7083 = vmul.f32 %v7041, %v4735
    %v7084 = vmul.f32 %v7040, %v4736
    %v7085 = vmul.f32 %v7039, %v4737
    %v7086 = vmul.f32 %v7038, %v4738
    %v7087 = vmul.f32 %v7037, %v4739
    %v7088 = vmul.f32 %v7036, %v4740
    %v7089 = vmul.f32 %v7035, %v4741
    %v7090 = vmul.f32 %v7034, %v4742
    %v7091 = vmul.f32 %v7033, %v4743
    %v7092 = vmul.f32 %v7032, %v4744
    %v7093 = vmul.f32 %v7031, %v4745
    %7094 = vrot.lane.b32.xlu0 %v7009, 16
    %v7095 = vpop.permute.xlu0 %7094
    %7096 = vrot.lane.b32.xlu0 %v6994, 16
    %v7097 = vpop.permute.xlu0 %7096
    %7098 = vrot.lane.b32.xlu0 %v6995, 16
    %v7099 = vpop.permute.xlu0 %7098
    %7100 = vrot.lane.b32.xlu0 %v6996, 16
    %v7101 = vpop.permute.xlu0 %7100
    %7102 = vrot.lane.b32.xlu0 %v6997, 16
    %v7103 = vpop.permute.xlu0 %7102
    %7104 = vrot.lane.b32.xlu0 %v6998, 16
    %v7105 = vpop.permute.xlu0 %7104
    %7106 = vrot.lane.b32.xlu0 %v6999, 16
    %v7107 = vpop.permute.xlu0 %7106
    %7108 = vrot.lane.b32.xlu0 %v7000, 16
    %v7109 = vpop.permute.xlu0 %7108
    %7110 = vrot.lane.b32.xlu0 %v7001, 16
    %v7111 = vpop.permute.xlu0 %7110
    %7112 = vrot.lane.b32.xlu0 %v7002, 16
    %v7113 = vpop.permute.xlu0 %7112
    %7114 = vrot.lane.b32.xlu0 %v7003, 16
    %v7115 = vpop.permute.xlu0 %7114
    %7116 = vrot.lane.b32.xlu0 %v7004, 16
    %v7117 = vpop.permute.xlu0 %7116
    %7118 = vrot.lane.b32.xlu0 %v7005, 16
    %v7119 = vpop.permute.xlu0 %7118
    %7120 = vrot.lane.b32.xlu0 %v7006, 16
    %v7121 = vpop.permute.xlu0 %7120
    %7122 = vrot.lane.b32.xlu0 %v7007, 16
    %v7123 = vpop.permute.xlu0 %7122
    %7124 = vrot.lane.b32.xlu0 %v7008, 16
    %v7125 = vpop.permute.xlu0 %7124
    %v7126 = vmul.f32 %v7095, %v4811
    %v7127 = vmul.f32 %v7097, %v4812
    %v7128 = vmul.f32 %v7099, %v4813
    %v7129 = vmul.f32 %v7101, %v4814
    %v7130 = vmul.f32 %v7103, %v4815
    %v7131 = vmul.f32 %v7105, %v4816
    %v7132 = vmul.f32 %v7107, %v4817
    %v7133 = vmul.f32 %v7109, %v4818
    %v7134 = vmul.f32 %v7111, %v4819
    %v7135 = vmul.f32 %v7113, %v4820
    %v7136 = vmul.f32 %v7115, %v4821
    %v7137 = vmul.f32 %v7117, %v4822
    %v7138 = vmul.f32 %v7119, %v4823
    %v7139 = vmul.f32 %v7121, %v4824
    %v7140 = vmul.f32 %v7123, %v4825
    %v7141 = vmul.f32 %v7125, %v4826
    %v7142 = vadd.f32 %v7078, %v7126
    %v7143 = vadd.f32 %v7079, %v7127
    %v7144 = vadd.f32 %v7080, %v7128
    %v7145 = vadd.f32 %v7081, %v7129
    %v7146 = vadd.f32 %v7082, %v7130
    %v7147 = vadd.f32 %v7083, %v7131
    %v7148 = vadd.f32 %v7084, %v7132
    %v7149 = vadd.f32 %v7085, %v7133
    %v7150 = vadd.f32 %v7086, %v7134
    %v7151 = vadd.f32 %v7087, %v7135
    %v7152 = vadd.f32 %v7088, %v7136
    %v7153 = vadd.f32 %v7089, %v7137
    %v7154 = vadd.f32 %v7090, %v7138
    %v7155 = vadd.f32 %v7091, %v7139
    %v7156 = vadd.f32 %v7092, %v7140
    %v7157 = vadd.f32 %v7093, %v7141
    %7158 = vrot.lane.b32.xlu0 %v7077, 32
    %v7159 = vpop.permute.xlu0 %7158
    %7160 = vrot.lane.b32.xlu0 %v7076, 32
    %v7161 = vpop.permute.xlu0 %7160
    %7162 = vrot.lane.b32.xlu0 %v7075, 32
    %v7163 = vpop.permute.xlu0 %7162
    %7164 = vrot.lane.b32.xlu0 %v7074, 32
    %v7165 = vpop.permute.xlu0 %7164
    %7166 = vrot.lane.b32.xlu0 %v7073, 32
    %v7167 = vpop.permute.xlu0 %7166
    %7168 = vrot.lane.b32.xlu0 %v7072, 32
    %v7169 = vpop.permute.xlu0 %7168
    %7170 = vrot.lane.b32.xlu0 %v7071, 32
    %v7171 = vpop.permute.xlu0 %7170
    %7172 = vrot.lane.b32.xlu0 %v7070, 32
    %v7173 = vpop.permute.xlu0 %7172
    %7174 = vrot.lane.b32.xlu0 %v7069, 32
    %v7175 = vpop.permute.xlu0 %7174
    %7176 = vrot.lane.b32.xlu0 %v7068, 32
    %v7177 = vpop.permute.xlu0 %7176
    %7178 = vrot.lane.b32.xlu0 %v7067, 32
    %v7179 = vpop.permute.xlu0 %7178
    %7180 = vrot.lane.b32.xlu0 %v7066, 32
    %v7181 = vpop.permute.xlu0 %7180
    %7182 = vrot.lane.b32.xlu0 %v7065, 32
    %v7183 = vpop.permute.xlu0 %7182
    %7184 = vrot.lane.b32.xlu0 %v7064, 32
    %v7185 = vpop.permute.xlu0 %7184
    %7186 = vrot.lane.b32.xlu0 %v7063, 32
    %v7187 = vpop.permute.xlu0 %7186
    %7188 = vrot.lane.b32.xlu0 %v7062, 32
    %v7189 = vpop.permute.xlu0 %7188
    %v7190 = vmul.f32 %v7159, %v4908
    %v7191 = vmul.f32 %v7161, %v4909
    %v7192 = vmul.f32 %v7163, %v4910
    %v7193 = vmul.f32 %v7165, %v4911
    %v7194 = vmul.f32 %v7167, %v4912
    %v7195 = vmul.f32 %v7169, %v4913
    %v7196 = vmul.f32 %v7171, %v4914
    %v7197 = vmul.f32 %v7173, %v4915
    %v7198 = vmul.f32 %v7175, %v4916
    %v7199 = vmul.f32 %v7177, %v4917
    %v7200 = vmul.f32 %v7179, %v4918
    %v7201 = vmul.f32 %v7181, %v4919
    %v7202 = vmul.f32 %v7183, %v4920
    %v7203 = vmul.f32 %v7185, %v4921
    %v7204 = vmul.f32 %v7187, %v4922
    %v7205 = vmul.f32 %v7189, %v4923
    %v7206 = vadd.f32 %v7142, %v7190
    %v7207 = vadd.f32 %v7143, %v7191
    %v7208 = vadd.f32 %v7144, %v7192
    %v7209 = vadd.f32 %v7145, %v7193
    %v7210 = vadd.f32 %v7146, %v7194
    %v7211 = vadd.f32 %v7147, %v7195
    %v7212 = vadd.f32 %v7148, %v7196
    %v7213 = vadd.f32 %v7149, %v7197
    %v7214 = vadd.f32 %v7150, %v7198
    %v7215 = vadd.f32 %v7151, %v7199
    %v7216 = vadd.f32 %v7152, %v7200
    %v7217 = vadd.f32 %v7153, %v7201
    %v7218 = vadd.f32 %v7154, %v7202
    %v7219 = vadd.f32 %v7155, %v7203
    %v7220 = vadd.f32 %v7156, %v7204
    %v7221 = vadd.f32 %v7157, %v7205
    %7222 = vrot.lane.b32.xlu0 %v7045, 48
    %v7223 = vpop.permute.xlu0 %7222
    %7224 = vrot.lane.b32.xlu0 %v7044, 48
    %v7225 = vpop.permute.xlu0 %7224
    %7226 = vrot.lane.b32.xlu0 %v7043, 48
    %v7227 = vpop.permute.xlu0 %7226
    %7228 = vrot.lane.b32.xlu0 %v7042, 48
    %v7229 = vpop.permute.xlu0 %7228
    %7230 = vrot.lane.b32.xlu0 %v7041, 48
    %v7231 = vpop.permute.xlu0 %7230
    %7232 = vrot.lane.b32.xlu0 %v7040, 48
    %v7233 = vpop.permute.xlu0 %7232
    %7234 = vrot.lane.b32.xlu0 %v7039, 48
    %v7235 = vpop.permute.xlu0 %7234
    %7236 = vrot.lane.b32.xlu0 %v7038, 48
    %v7237 = vpop.permute.xlu0 %7236
    %7238 = vrot.lane.b32.xlu0 %v7037, 48
    %v7239 = vpop.permute.xlu0 %7238
    %7240 = vrot.lane.b32.xlu0 %v7036, 48
    %v7241 = vpop.permute.xlu0 %7240
    %7242 = vrot.lane.b32.xlu0 %v7035, 48
    %v7243 = vpop.permute.xlu0 %7242
    %7244 = vrot.lane.b32.xlu0 %v7034, 48
    %v7245 = vpop.permute.xlu0 %7244
    %7246 = vrot.lane.b32.xlu0 %v7033, 48
    %v7247 = vpop.permute.xlu0 %7246
    %7248 = vrot.lane.b32.xlu0 %v7032, 48
    %v7249 = vpop.permute.xlu0 %7248
    %7250 = vrot.lane.b32.xlu0 %v7031, 48
    %v7251 = vpop.permute.xlu0 %7250
    %7252 = vrot.lane.b32.xlu0 %v7030, 48
    %v7253 = vpop.permute.xlu0 %7252
    %v7254 = vmul.f32 %v7223, %v5005
    %v7255 = vmul.f32 %v7225, %v5006
    %v7256 = vmul.f32 %v7227, %v5007
    %v7257 = vmul.f32 %v7229, %v5008
    %v7258 = vmul.f32 %v7231, %v5009
    %v7259 = vmul.f32 %v7233, %v5010
    %v7260 = vmul.f32 %v7235, %v5011
    %v7261 = vmul.f32 %v7237, %v5012
    %v7262 = vmul.f32 %v7239, %v5013
    %v7263 = vmul.f32 %v7241, %v5014
    %v7264 = vmul.f32 %v7243, %v5015
    %v7265 = vmul.f32 %v7245, %v5016
    %v7266 = vmul.f32 %v7247, %v5017
    %v7267 = vmul.f32 %v7249, %v5018
    %v7268 = vmul.f32 %v7251, %v5019
    %v7269 = vmul.f32 %v7253, %v5020
    %v7270 = vadd.f32 %v7206, %v7254
    %v7271 = vadd.f32 %v7207, %v7255
    %v7272 = vadd.f32 %v7208, %v7256
    %v7273 = vadd.f32 %v7209, %v7257
    %v7274 = vadd.f32 %v7210, %v7258
    %v7275 = vadd.f32 %v7211, %v7259
    %v7276 = vadd.f32 %v7212, %v7260
    %v7277 = vadd.f32 %v7213, %v7261
    %v7278 = vadd.f32 %v7214, %v7262
    %v7279 = vadd.f32 %v7215, %v7263
    %v7280 = vadd.f32 %v7216, %v7264
    %v7281 = vadd.f32 %v7217, %v7265
    %v7282 = vadd.f32 %v7218, %v7266
    %v7283 = vadd.f32 %v7219, %v7267
    %v7284 = vadd.f32 %v7220, %v7268
    %v7285 = vadd.f32 %v7221, %v7269
    %7286 = vrot.lane.b32.xlu0 %v6994, 64
    %v7287 = vpop.permute.xlu0 %7286
    %7288 = vrot.lane.b32.xlu0 %v6995, 64
    %v7289 = vpop.permute.xlu0 %7288
    %7290 = vrot.lane.b32.xlu0 %v6996, 64
    %v7291 = vpop.permute.xlu0 %7290
    %7292 = vrot.lane.b32.xlu0 %v6997, 64
    %v7293 = vpop.permute.xlu0 %7292
    %7294 = vrot.lane.b32.xlu0 %v6998, 64
    %v7295 = vpop.permute.xlu0 %7294
    %7296 = vrot.lane.b32.xlu0 %v6999, 64
    %v7297 = vpop.permute.xlu0 %7296
    %7298 = vrot.lane.b32.xlu0 %v7000, 64
    %v7299 = vpop.permute.xlu0 %7298
    %7300 = vrot.lane.b32.xlu0 %v7001, 64
    %v7301 = vpop.permute.xlu0 %7300
    %7302 = vrot.lane.b32.xlu0 %v7002, 64
    %v7303 = vpop.permute.xlu0 %7302
    %7304 = vrot.lane.b32.xlu0 %v7003, 64
    %v7305 = vpop.permute.xlu0 %7304
    %7306 = vrot.lane.b32.xlu0 %v7004, 64
    %v7307 = vpop.permute.xlu0 %7306
    %7308 = vrot.lane.b32.xlu0 %v7005, 64
    %v7309 = vpop.permute.xlu0 %7308
    %7310 = vrot.lane.b32.xlu0 %v7006, 64
    %v7311 = vpop.permute.xlu0 %7310
    %7312 = vrot.lane.b32.xlu0 %v7007, 64
    %v7313 = vpop.permute.xlu0 %7312
    %7314 = vrot.lane.b32.xlu0 %v7008, 64
    %v7315 = vpop.permute.xlu0 %7314
    %7316 = vrot.lane.b32.xlu0 %v7009, 64
    %v7317 = vpop.permute.xlu0 %7316
    %v7318 = vmul.f32 %v7287, %v5102
    %v7319 = vmul.f32 %v7289, %v5103
    %v7320 = vmul.f32 %v7291, %v5104
    %v7321 = vmul.f32 %v7293, %v5105
    %v7322 = vmul.f32 %v7295, %v5106
    %v7323 = vmul.f32 %v7297, %v5107
    %v7324 = vmul.f32 %v7299, %v5108
    %v7325 = vmul.f32 %v7301, %v5109
    %v7326 = vmul.f32 %v7303, %v5110
    %v7327 = vmul.f32 %v7305, %v5111
    %v7328 = vmul.f32 %v7307, %v5112
    %v7329 = vmul.f32 %v7309, %v5113
    %v7330 = vmul.f32 %v7311, %v5114
    %v7331 = vmul.f32 %v7313, %v5115
    %v7332 = vmul.f32 %v7315, %v5116
    %v7333 = vmul.f32 %v7317, %v5117
    %v7334 = vadd.f32 %v7270, %v7318
    %v7335 = vadd.f32 %v7271, %v7319
    %v7336 = vadd.f32 %v7272, %v7320
    %v7337 = vadd.f32 %v7273, %v7321
    %v7338 = vadd.f32 %v7274, %v7322
    %v7339 = vadd.f32 %v7275, %v7323
    %v7340 = vadd.f32 %v7276, %v7324
    %v7341 = vadd.f32 %v7277, %v7325
    %v7342 = vadd.f32 %v7278, %v7326
    %v7343 = vadd.f32 %v7279, %v7327
    %v7344 = vadd.f32 %v7280, %v7328
    %v7345 = vadd.f32 %v7281, %v7329
    %v7346 = vadd.f32 %v7282, %v7330
    %v7347 = vadd.f32 %v7283, %v7331
    %v7348 = vadd.f32 %v7284, %v7332
    %v7349 = vadd.f32 %v7285, %v7333
    %7350 = vrot.lane.b32.xlu0 %v7076, 80
    %v7351 = vpop.permute.xlu0 %7350
    %7352 = vrot.lane.b32.xlu0 %v7075, 80
    %v7353 = vpop.permute.xlu0 %7352
    %7354 = vrot.lane.b32.xlu0 %v7074, 80
    %v7355 = vpop.permute.xlu0 %7354
    %7356 = vrot.lane.b32.xlu0 %v7073, 80
    %v7357 = vpop.permute.xlu0 %7356
    %7358 = vrot.lane.b32.xlu0 %v7072, 80
    %v7359 = vpop.permute.xlu0 %7358
    %7360 = vrot.lane.b32.xlu0 %v7071, 80
    %v7361 = vpop.permute.xlu0 %7360
    %7362 = vrot.lane.b32.xlu0 %v7070, 80
    %v7363 = vpop.permute.xlu0 %7362
    %7364 = vrot.lane.b32.xlu0 %v7069, 80
    %v7365 = vpop.permute.xlu0 %7364
    %7366 = vrot.lane.b32.xlu0 %v7068, 80
    %v7367 = vpop.permute.xlu0 %7366
    %7368 = vrot.lane.b32.xlu0 %v7067, 80
    %v7369 = vpop.permute.xlu0 %7368
    %7370 = vrot.lane.b32.xlu0 %v7066, 80
    %v7371 = vpop.permute.xlu0 %7370
    %7372 = vrot.lane.b32.xlu0 %v7065, 80
    %v7373 = vpop.permute.xlu0 %7372
    %7374 = vrot.lane.b32.xlu0 %v7064, 80
    %v7375 = vpop.permute.xlu0 %7374
    %7376 = vrot.lane.b32.xlu0 %v7063, 80
    %v7377 = vpop.permute.xlu0 %7376
    %7378 = vrot.lane.b32.xlu0 %v7062, 80
    %v7379 = vpop.permute.xlu0 %7378
    %7380 = vrot.lane.b32.xlu0 %v7077, 80
    %v7381 = vpop.permute.xlu0 %7380
    %v7382 = vmul.f32 %v7351, %v5199
    %v7383 = vmul.f32 %v7353, %v5200
    %v7384 = vmul.f32 %v7355, %v5201
    %v7385 = vmul.f32 %v7357, %v5202
    %v7386 = vmul.f32 %v7359, %v5203
    %v7387 = vmul.f32 %v7361, %v5204
    %v7388 = vmul.f32 %v7363, %v5205
    %v7389 = vmul.f32 %v7365, %v5206
    %v7390 = vmul.f32 %v7367, %v5207
    %v7391 = vmul.f32 %v7369, %v5208
    %v7392 = vmul.f32 %v7371, %v5209
    %v7393 = vmul.f32 %v7373, %v5210
    %v7394 = vmul.f32 %v7375, %v5211
    %v7395 = vmul.f32 %v7377, %v5212
    %v7396 = vmul.f32 %v7379, %v5213
    %v7397 = vmul.f32 %v7381, %v5214
    %v7398 = vadd.f32 %v7334, %v7382
    %v7399 = vadd.f32 %v7335, %v7383
    %v7400 = vadd.f32 %v7336, %v7384
    %v7401 = vadd.f32 %v7337, %v7385
    %v7402 = vadd.f32 %v7338, %v7386
    %v7403 = vadd.f32 %v7339, %v7387
    %v7404 = vadd.f32 %v7340, %v7388
    %v7405 = vadd.f32 %v7341, %v7389
    %v7406 = vadd.f32 %v7342, %v7390
    %v7407 = vadd.f32 %v7343, %v7391
    %v7408 = vadd.f32 %v7344, %v7392
    %v7409 = vadd.f32 %v7345, %v7393
    %v7410 = vadd.f32 %v7346, %v7394
    %v7411 = vadd.f32 %v7347, %v7395
    %v7412 = vadd.f32 %v7348, %v7396
    %v7413 = vadd.f32 %v7349, %v7397
    %7414 = vrot.lane.b32.xlu0 %v7044, 96
    %v7415 = vpop.permute.xlu0 %7414
    %7416 = vrot.lane.b32.xlu0 %v7043, 96
    %v7417 = vpop.permute.xlu0 %7416
    %7418 = vrot.lane.b32.xlu0 %v7042, 96
    %v7419 = vpop.permute.xlu0 %7418
    %7420 = vrot.lane.b32.xlu0 %v7041, 96
    %v7421 = vpop.permute.xlu0 %7420
    %7422 = vrot.lane.b32.xlu0 %v7040, 96
    %v7423 = vpop.permute.xlu0 %7422
    %7424 = vrot.lane.b32.xlu0 %v7039, 96
    %v7425 = vpop.permute.xlu0 %7424
    %7426 = vrot.lane.b32.xlu0 %v7038, 96
    %v7427 = vpop.permute.xlu0 %7426
    %7428 = vrot.lane.b32.xlu0 %v7037, 96
    %v7429 = vpop.permute.xlu0 %7428
    %7430 = vrot.lane.b32.xlu0 %v7036, 96
    %v7431 = vpop.permute.xlu0 %7430
    %7432 = vrot.lane.b32.xlu0 %v7035, 96
    %v7433 = vpop.permute.xlu0 %7432
    %7434 = vrot.lane.b32.xlu0 %v7034, 96
    %v7435 = vpop.permute.xlu0 %7434
    %7436 = vrot.lane.b32.xlu0 %v7033, 96
    %v7437 = vpop.permute.xlu0 %7436
    %7438 = vrot.lane.b32.xlu0 %v7032, 96
    %v7439 = vpop.permute.xlu0 %7438
    %7440 = vrot.lane.b32.xlu0 %v7031, 96
    %v7441 = vpop.permute.xlu0 %7440
    %7442 = vrot.lane.b32.xlu0 %v7030, 96
    %v7443 = vpop.permute.xlu0 %7442
    %7444 = vrot.lane.b32.xlu0 %v7045, 96
    %v7445 = vpop.permute.xlu0 %7444
    %v7446 = vmul.f32 %v7415, %v5296
    %v7447 = vmul.f32 %v7417, %v5297
    %v7448 = vmul.f32 %v7419, %v5298
    %v7449 = vmul.f32 %v7421, %v5299
    %v7450 = vmul.f32 %v7423, %v5300
    %v7451 = vmul.f32 %v7425, %v5301
    %v7452 = vmul.f32 %v7427, %v5302
    %v7453 = vmul.f32 %v7429, %v5303
    %v7454 = vmul.f32 %v7431, %v5304
    %v7455 = vmul.f32 %v7433, %v5305
    %v7456 = vmul.f32 %v7435, %v5306
    %v7457 = vmul.f32 %v7437, %v5307
    %v7458 = vmul.f32 %v7439, %v5308
    %v7459 = vmul.f32 %v7441, %v5309
    %v7460 = vmul.f32 %v7443, %v5310
    %v7461 = vmul.f32 %v7445, %v5311
    %v7462 = vadd.f32 %v7398, %v7446
    %v7463 = vadd.f32 %v7399, %v7447
    %v7464 = vadd.f32 %v7400, %v7448
    %v7465 = vadd.f32 %v7401, %v7449
    %v7466 = vadd.f32 %v7402, %v7450
    %v7467 = vadd.f32 %v7403, %v7451
    %v7468 = vadd.f32 %v7404, %v7452
    %v7469 = vadd.f32 %v7405, %v7453
    %v7470 = vadd.f32 %v7406, %v7454
    %v7471 = vadd.f32 %v7407, %v7455
    %v7472 = vadd.f32 %v7408, %v7456
    %v7473 = vadd.f32 %v7409, %v7457
    %v7474 = vadd.f32 %v7410, %v7458
    %v7475 = vadd.f32 %v7411, %v7459
    %v7476 = vadd.f32 %v7412, %v7460
    %v7477 = vadd.f32 %v7413, %v7461
    %7478 = vrot.lane.b32.xlu0 %v6995, 112
    %v7479 = vpop.permute.xlu0 %7478
    %7480 = vrot.lane.b32.xlu0 %v6996, 112
    %v7481 = vpop.permute.xlu0 %7480
    %7482 = vrot.lane.b32.xlu0 %v6997, 112
    %v7483 = vpop.permute.xlu0 %7482
    %7484 = vrot.lane.b32.xlu0 %v6998, 112
    %v7485 = vpop.permute.xlu0 %7484
    %7486 = vrot.lane.b32.xlu0 %v6999, 112
    %v7487 = vpop.permute.xlu0 %7486
    %7488 = vrot.lane.b32.xlu0 %v7000, 112
    %v7489 = vpop.permute.xlu0 %7488
    %7490 = vrot.lane.b32.xlu0 %v7001, 112
    %v7491 = vpop.permute.xlu0 %7490
    %7492 = vrot.lane.b32.xlu0 %v7002, 112
    %v7493 = vpop.permute.xlu0 %7492
    %7494 = vrot.lane.b32.xlu0 %v7003, 112
    %v7495 = vpop.permute.xlu0 %7494
    %7496 = vrot.lane.b32.xlu0 %v7004, 112
    %v7497 = vpop.permute.xlu0 %7496
    %7498 = vrot.lane.b32.xlu0 %v7005, 112
    %v7499 = vpop.permute.xlu0 %7498
    %7500 = vrot.lane.b32.xlu0 %v7006, 112
    %v7501 = vpop.permute.xlu0 %7500
    %7502 = vrot.lane.b32.xlu0 %v7007, 112
    %v7503 = vpop.permute.xlu0 %7502
    %7504 = vrot.lane.b32.xlu0 %v7008, 112
    %v7505 = vpop.permute.xlu0 %7504
    %7506 = vrot.lane.b32.xlu0 %v7009, 112
    %v7507 = vpop.permute.xlu0 %7506
    %7508 = vrot.lane.b32.xlu0 %v6994, 112
    %v7509 = vpop.permute.xlu0 %7508
    %v7510 = vmul.f32 %v7479, %v5393
    %v7511 = vmul.f32 %v7481, %v5394
    %v7512 = vmul.f32 %v7483, %v5395
    %v7513 = vmul.f32 %v7485, %v5396
    %v7514 = vmul.f32 %v7487, %v5397
    %v7515 = vmul.f32 %v7489, %v5398
    %v7516 = vmul.f32 %v7491, %v5399
    %v7517 = vmul.f32 %v7493, %v5400
    %v7518 = vmul.f32 %v7495, %v5401
    %v7519 = vmul.f32 %v7497, %v5402
    %v7520 = vmul.f32 %v7499, %v5403
    %v7521 = vmul.f32 %v7501, %v5404
    %v7522 = vmul.f32 %v7503, %v5405
    %v7523 = vmul.f32 %v7505, %v5406
    %v7524 = vmul.f32 %v7507, %v5407
    %v7525 = vmul.f32 %v7509, %v5408
    %v7526 = vadd.f32 %v7462, %v7510
    %v7527 = vadd.f32 %v7463, %v7511
    %v7528 = vadd.f32 %v7464, %v7512
    %v7529 = vadd.f32 %v7465, %v7513
    %v7530 = vadd.f32 %v7466, %v7514
    %v7531 = vadd.f32 %v7467, %v7515
    %v7532 = vadd.f32 %v7468, %v7516
    %v7533 = vadd.f32 %v7469, %v7517
    %v7534 = vadd.f32 %v7470, %v7518
    %v7535 = vadd.f32 %v7471, %v7519
    %v7536 = vadd.f32 %v7472, %v7520
    %v7537 = vadd.f32 %v7473, %v7521
    %v7538 = vadd.f32 %v7474, %v7522
    %v7539 = vadd.f32 %v7475, %v7523
    %v7540 = vadd.f32 %v7476, %v7524
    %v7541 = vadd.f32 %v7477, %v7525
    %v7542 = vmul.f32 %v7075, %v5458
    %v7543 = vmul.f32 %v7074, %v5459
    %v7544 = vmul.f32 %v7073, %v5460
    %v7545 = vmul.f32 %v7072, %v5461
    %v7546 = vmul.f32 %v7071, %v5462
    %v7547 = vmul.f32 %v7070, %v5463
    %v7548 = vmul.f32 %v7069, %v5464
    %v7549 = vmul.f32 %v7068, %v5465
    %v7550 = vmul.f32 %v7067, %v5466
    %v7551 = vmul.f32 %v7066, %v5467
    %v7552 = vmul.f32 %v7065, %v5468
    %v7553 = vmul.f32 %v7064, %v5469
    %v7554 = vmul.f32 %v7063, %v5470
    %v7555 = vmul.f32 %v7062, %v5471
    %v7556 = vmul.f32 %v7077, %v5472
    %v7557 = vmul.f32 %v7076, %v5473
    %v7558 = vpack.c.bf16 %v7527, %v7526
    %v7559 = vpack.c.bf16 %v7529, %v7528
    %v7560 = vpack.c.bf16 %v7531, %v7530
    %v7561 = vpack.c.bf16 %v7533, %v7532
    %v7562 = vpack.c.bf16 %v7535, %v7534
    %v7563 = vpack.c.bf16 %v7537, %v7536
    %v7564 = vpack.c.bf16 %v7539, %v7538
    %v7565 = vpack.c.bf16 %v7541, %v7540
    %v7570 = vunpack.c.l.b16 %v7010
    %v7571 = vunpack.c.l.b16 %v7011
    %v7572 = vunpack.c.l.b16 %v7012
    %v7573 = vunpack.c.l.b16 %v7013
    %v7574 = vpack.c.b16 %v7571, %v7570
    %v7575 = vpack.c.b16 %v7573, %v7572
    %7578 = vmatprep.subr.bf16.mxu0 0
    %7579 = vmatpush1.bf16.msra.mxu0 %v7565
    %7580 = vmatprep.subr.bf16.mxu0 0
    %7581 = vmatpush1.bf16.msra.mxu0 %v7564
    %7582 = vmatprep.subr.bf16.mxu0 0
    %7583 = vmatpush1.bf16.msra.mxu0 %v7563
    %7584 = vmatprep.subr.bf16.mxu0 0
    %7585 = vmatpush1.bf16.msra.mxu0 %v7562
    %7586 = vmatprep.subr.bf16.mxu0 0
    %7587 = vmatpush1.bf16.msra.mxu0 %v7561
    %7588 = vmatprep.subr.bf16.mxu0 0
    %7589 = vmatpush1.bf16.msra.mxu0 %v7560
    %7590 = vmatprep.subr.bf16.mxu0 0
    %7591 = vmatpush1.bf16.msra.mxu0 %v7559
    %7592 = vmatprep.subr.bf16.mxu0 0
    %7593 = vmatpush1.bf16.msra.mxu0 %v7558
    %7594 = vmatprep.subr.bf16.mxu0 0
    %7595 = vmatpush2.bf16.msra.mxu0 0
    %7596 = vmatprep.subr.bf16.mxu0 0
    %7597 = vmatpush2.bf16.msra.mxu0 0
    %7598 = vmatprep.subr.bf16.mxu0 0
    %7599 = vmatpush2.bf16.msra.mxu0 0
    %7600 = vmatprep.subr.bf16.mxu0 0
    %7601 = vmatpush2.bf16.msra.mxu0 0
    %7602 = vmatprep.subr.bf16.mxu0 0
    %7603 = vmatpush2.bf16.msra.mxu0 0
    %7604 = vmatprep.subr.bf16.mxu0 0
    %7605 = vmatpush2.bf16.msra.mxu0 0
    %7606 = vmatprep.subr.bf16.mxu0 0
    %7607 = vmatpush2.bf16.msra.mxu0 0
    %7608 = vmatprep.subr.bf16.mxu0 0
    %7609 = vmatpush2.bf16.msra.mxu0 0
    %7610 = vmatprep.mubr.bf16.mxu0 0
    %7611 = vmatmul.mubr.bf16.gmra.mxu0 %v7574
    %v7612 = vpop.f32.mrf.mxu0
    %v7613 = vadd.f32 0.0, %v7612
    %v7614 = vpop.f32.mrf.mxu0
    %v7615 = vpop.f32.mrf.mxu0
    %v7616 = vadd.f32 0.0, %v7615
    %v7617 = vpop.f32.mrf.mxu0
    %7618 = vmatprep.mubr.bf16.mxu0 0
    %7619 = vmatmul.mubr.bf16.gmra.mxu0 %v7575
    %v7620 = vpop.f32.mrf.mxu0
    %v7621 = vadd.f32 0.0, %v7620
    %v7622 = vpop.f32.mrf.mxu0
    %v7623 = vpop.f32.mrf.mxu0
    %v7624 = vadd.f32 0.0, %v7623
    %v7625 = vpop.f32.mrf.mxu0
    %7626 = vdwg.mxu0
    %v7627 = vpack.c.bf16 %v7616, %v7613
    %v7628 = vpack.c.bf16 %v7624, %v7621
    %s7629 = scalar_lea.vmem [#allocation2], 320
    %v7630 = vld [vmem:[%s7629] sm:$0xf]
    %v7631 = vld [vmem:[%s7629 + $0x4] sm:$0xf]
    %v7632 = vld [vmem:[%s7629 + $0x8] sm:$0xf]
    %v7633 = vld [vmem:[%s7629 + $0xc] sm:$0xf]
    %v7634 = vld [vmem:[%s7629 + $0x10] sm:$0xf]
    %v7635 = vld [vmem:[%s7629 + $0x14] sm:$0xf]
    %v7636 = vld [vmem:[%s7629 + $0x18] sm:$0xf]
    %v7637 = vld [vmem:[%s7629 + $0x1c] sm:$0xf]
    %v7638 = vld [vmem:[%s7629 + $0x20] sm:$0xf]
    %v7639 = vld [vmem:[%s7629 + $0x24] sm:$0xf]
    %v7640 = vld [vmem:[%s7629 + $0x28] sm:$0xf]
    %v7641 = vld [vmem:[%s7629 + $0x2c] sm:$0xf]
    %v7642 = vld [vmem:[%s7629 + $0x30] sm:$0xf]
    %v7643 = vld [vmem:[%s7629 + $0x34] sm:$0xf]
    %v7644 = vld [vmem:[%s7629 + $0x38] sm:$0xf]
    %v7645 = vld [vmem:[%s7629 + $0x3c] sm:$0xf]
    %v7646 = vpack.c.bf16 %v7543, %v7542
    %v7647 = vpack.c.bf16 %v7545, %v7544
    %v7648 = vpack.c.bf16 %v7547, %v7546
    %v7649 = vpack.c.bf16 %v7549, %v7548
    %v7650 = vpack.c.bf16 %v7551, %v7550
    %v7651 = vpack.c.bf16 %v7553, %v7552
    %v7652 = vpack.c.bf16 %v7555, %v7554
    %v7653 = vpack.c.bf16 %v7557, %v7556
    %7654 = vmatprep.subr.bf16.mxu0 0
    %7655 = vmatpush1.bf16.msra.mxu0 %v7653
    %7656 = vmatprep.subr.bf16.mxu0 0
    %7657 = vmatpush1.bf16.msra.mxu0 %v7652
    %7658 = vmatprep.subr.bf16.mxu0 0
    %7659 = vmatpush1.bf16.msra.mxu0 %v7651
    %7660 = vmatprep.subr.bf16.mxu0 0
    %7661 = vmatpush1.bf16.msra.mxu0 %v7650
    %7662 = vmatprep.subr.bf16.mxu0 0
    %7663 = vmatpush1.bf16.msra.mxu0 %v7649
    %7664 = vmatprep.subr.bf16.mxu0 0
    %7665 = vmatpush1.bf16.msra.mxu0 %v7648
    %7666 = vmatprep.subr.bf16.mxu0 0
    %7667 = vmatpush1.bf16.msra.mxu0 %v7647
    %7668 = vmatprep.subr.bf16.mxu0 0
    %7669 = vmatpush1.bf16.msra.mxu0 %v7646
    %7670 = vmatprep.subr.bf16.mxu0 0
    %7671 = vmatpush2.bf16.msra.mxu0 0
    %7672 = vmatprep.subr.bf16.mxu0 0
    %7673 = vmatpush2.bf16.msra.mxu0 0
    %7674 = vmatprep.subr.bf16.mxu0 0
    %7675 = vmatpush2.bf16.msra.mxu0 0
    %7676 = vmatprep.subr.bf16.mxu0 0
    %7677 = vmatpush2.bf16.msra.mxu0 0
    %7678 = vmatprep.subr.bf16.mxu0 0
    %7679 = vmatpush2.bf16.msra.mxu0 0
    %7680 = vmatprep.subr.bf16.mxu0 0
    %7681 = vmatpush2.bf16.msra.mxu0 0
    %7682 = vmatprep.subr.bf16.mxu0 0
    %7683 = vmatpush2.bf16.msra.mxu0 0
    %7684 = vmatprep.subr.bf16.mxu0 0
    %7685 = vmatpush2.bf16.msra.mxu0 0
    %7686 = vmatprep.mubr.bf16.mxu0 0
    %7687 = vmatmul.mubr.bf16.gmra.mxu0 %v7574
    %v7688 = vpop.f32.mrf.mxu0
    %v7689 = vadd.f32 0.0, %v7688
    %v7690 = vpop.f32.mrf.mxu0
    %v7691 = vpop.f32.mrf.mxu0
    %v7692 = vadd.f32 0.0, %v7691
    %v7693 = vpop.f32.mrf.mxu0
    %7694 = vmatprep.mubr.bf16.mxu0 0
    %7695 = vmatmul.mubr.bf16.gmra.mxu0 %v7575
    %v7696 = vpop.f32.mrf.mxu0
    %v7697 = vadd.f32 0.0, %v7696
    %v7698 = vpop.f32.mrf.mxu0
    %v7699 = vpop.f32.mrf.mxu0
    %v7700 = vadd.f32 0.0, %v7699
    %v7701 = vpop.f32.mrf.mxu0
    %7702 = vdwg.mxu0
    %v7703 = vpack.c.bf16 %v7692, %v7689
    %v7704 = vpack.c.bf16 %v7700, %v7697
    %s7705 = scalar_lea.vmem [#allocation2], 384
    %v7706 = vld [vmem:[%s7705] sm:$0xf]
    %v7707 = vld [vmem:[%s7705 + $0x4] sm:$0xf]
    %v7708 = vld [vmem:[%s7705 + $0x8] sm:$0xf]
    %v7709 = vld [vmem:[%s7705 + $0xc] sm:$0xf]
    %v7710 = vld [vmem:[%s7705 + $0x10] sm:$0xf]
    %v7711 = vld [vmem:[%s7705 + $0x14] sm:$0xf]
    %v7712 = vld [vmem:[%s7705 + $0x18] sm:$0xf]
    %v7713 = vld [vmem:[%s7705 + $0x1c] sm:$0xf]
    %v7714 = vld [vmem:[%s7705 + $0x20] sm:$0xf]
    %v7715 = vld [vmem:[%s7705 + $0x24] sm:$0xf]
    %v7716 = vld [vmem:[%s7705 + $0x28] sm:$0xf]
    %v7717 = vld [vmem:[%s7705 + $0x2c] sm:$0xf]
    %v7718 = vld [vmem:[%s7705 + $0x30] sm:$0xf]
    %v7719 = vld [vmem:[%s7705 + $0x34] sm:$0xf]
    %v7720 = vld [vmem:[%s7705 + $0x38] sm:$0xf]
    %v7721 = vld [vmem:[%s7705 + $0x3c] sm:$0xf]
    %v7738 = vunpack.c.l.b16 %v7706
    %v7739 = vunpack.c.l.b16 %v7707
    %v7740 = vunpack.c.l.b16 %v7708
    %v7741 = vunpack.c.l.b16 %v7709
    %v7742 = vunpack.c.l.b16 %v7710
    %v7743 = vunpack.c.l.b16 %v7711
    %v7744 = vunpack.c.l.b16 %v7712
    %v7745 = vunpack.c.l.b16 %v7713
    %v7746 = vunpack.c.l.b16 %v7714
    %v7747 = vunpack.c.l.b16 %v7715
    %v7748 = vunpack.c.l.b16 %v7716
    %v7749 = vunpack.c.l.b16 %v7717
    %v7750 = vunpack.c.l.b16 %v7718
    %v7751 = vunpack.c.l.b16 %v7719
    %v7752 = vunpack.c.l.b16 %v7720
    %v7753 = vunpack.c.l.b16 %v7721
    %v7754 = vpack.c.b16 %v7739, %v7738
    %v7755 = vpack.c.b16 %v7741, %v7740
    %v7756 = vpack.c.b16 %v7743, %v7742
    %v7757 = vpack.c.b16 %v7745, %v7744
    %v7758 = vpack.c.b16 %v7747, %v7746
    %v7759 = vpack.c.b16 %v7749, %v7748
    %v7760 = vpack.c.b16 %v7751, %v7750
    %v7761 = vpack.c.b16 %v7753, %v7752
    %7770 = vmatprep.subr.bf16.mxu0 0
    %7771 = vmatpush1.bf16.msra.mxu0 %v7761
    %7772 = vmatprep.subr.bf16.mxu0 0
    %7773 = vmatpush1.bf16.msra.mxu0 %v7760
    %7774 = vmatprep.subr.bf16.mxu0 0
    %7775 = vmatpush1.bf16.msra.mxu0 %v7759
    %7776 = vmatprep.subr.bf16.mxu0 0
    %7777 = vmatpush1.bf16.msra.mxu0 %v7758
    %7778 = vmatprep.subr.bf16.mxu0 0
    %7779 = vmatpush1.bf16.msra.mxu0 %v7757
    %7780 = vmatprep.subr.bf16.mxu0 0
    %7781 = vmatpush1.bf16.msra.mxu0 %v7756
    %7782 = vmatprep.subr.bf16.mxu0 0
    %7783 = vmatpush1.bf16.msra.mxu0 %v7755
    %7784 = vmatprep.subr.bf16.mxu0 0
    %7785 = vmatpush1.bf16.msra.mxu0 %v7754
    %7786 = vmatprep.subr.bf16.mxu0 0
    %7787 = vmatpush2.bf16.msra.mxu0 0
    %7788 = vmatprep.subr.bf16.mxu0 0
    %7789 = vmatpush2.bf16.msra.mxu0 0
    %7790 = vmatprep.subr.bf16.mxu0 0
    %7791 = vmatpush2.bf16.msra.mxu0 0
    %7792 = vmatprep.subr.bf16.mxu0 0
    %7793 = vmatpush2.bf16.msra.mxu0 0
    %7794 = vmatprep.subr.bf16.mxu0 0
    %7795 = vmatpush2.bf16.msra.mxu0 0
    %7796 = vmatprep.subr.bf16.mxu0 0
    %7797 = vmatpush2.bf16.msra.mxu0 0
    %7798 = vmatprep.subr.bf16.mxu0 0
    %7799 = vmatpush2.bf16.msra.mxu0 0
    %7800 = vmatprep.subr.bf16.mxu0 0
    %7801 = vmatpush2.bf16.msra.mxu0 0
    %7802 = vmatprep.mubr.bf16.mxu0 0
    %7803 = vmatmul.mubr.bf16.gmra.mxu0 %v7703
    %v7804 = vpop.f32.mrf.mxu0
    %v7805 = vadd.f32 0.0, %v7804
    %v7806 = vpop.f32.mrf.mxu0
    %v7807 = vpop.f32.mrf.mxu0
    %v7808 = vadd.f32 0.0, %v7807
    %v7809 = vpop.f32.mrf.mxu0
    %7810 = vmatprep.mubr.bf16.mxu0 0
    %7811 = vmatmul.mubr.bf16.gmra.mxu0 %v7704
    %v7812 = vpop.f32.mrf.mxu0
    %v7813 = vadd.f32 0.0, %v7812
    %v7814 = vpop.f32.mrf.mxu0
    %v7815 = vpop.f32.mrf.mxu0
    %v7816 = vadd.f32 0.0, %v7815
    %v7817 = vpop.f32.mrf.mxu0
    %7818 = vdwg.mxu0
    %v7835 = vunpack.c.l.b16 %v7630
    %v7836 = vunpack.c.l.b16 %v7631
    %v7837 = vunpack.c.l.b16 %v7632
    %v7838 = vunpack.c.l.b16 %v7633
    %v7839 = vunpack.c.l.b16 %v7634
    %v7840 = vunpack.c.l.b16 %v7635
    %v7841 = vunpack.c.l.b16 %v7636
    %v7842 = vunpack.c.l.b16 %v7637
    %v7843 = vunpack.c.l.b16 %v7638
    %v7844 = vunpack.c.l.b16 %v7639
    %v7845 = vunpack.c.l.b16 %v7640
    %v7846 = vunpack.c.l.b16 %v7641
    %v7847 = vunpack.c.l.b16 %v7642
    %v7848 = vunpack.c.l.b16 %v7643
    %v7849 = vunpack.c.l.b16 %v7644
    %v7850 = vunpack.c.l.b16 %v7645
    %v7851 = vpack.c.b16 %v7836, %v7835
    %v7852 = vpack.c.b16 %v7838, %v7837
    %v7853 = vpack.c.b16 %v7840, %v7839
    %v7854 = vpack.c.b16 %v7842, %v7841
    %v7855 = vpack.c.b16 %v7844, %v7843
    %v7856 = vpack.c.b16 %v7846, %v7845
    %v7857 = vpack.c.b16 %v7848, %v7847
    %v7858 = vpack.c.b16 %v7850, %v7849
    %7867 = vmatprep.subr.bf16.mxu0 0
    %7868 = vmatpush1.bf16.msra.mxu0 %v7858
    %7869 = vmatprep.subr.bf16.mxu0 0
    %7870 = vmatpush1.bf16.msra.mxu0 %v7857
    %7871 = vmatprep.subr.bf16.mxu0 0
    %7872 = vmatpush1.bf16.msra.mxu0 %v7856
    %7873 = vmatprep.subr.bf16.mxu0 0
    %7874 = vmatpush1.bf16.msra.mxu0 %v7855
    %7875 = vmatprep.subr.bf16.mxu0 0
    %7876 = vmatpush1.bf16.msra.mxu0 %v7854
    %7877 = vmatprep.subr.bf16.mxu0 0
    %7878 = vmatpush1.bf16.msra.mxu0 %v7853
    %7879 = vmatprep.subr.bf16.mxu0 0
    %7880 = vmatpush1.bf16.msra.mxu0 %v7852
    %7881 = vmatprep.subr.bf16.mxu0 0
    %7882 = vmatpush1.bf16.msra.mxu0 %v7851
    %7883 = vmatprep.subr.bf16.mxu0 0
    %7884 = vmatpush2.bf16.msra.mxu0 0
    %7885 = vmatprep.subr.bf16.mxu0 0
    %7886 = vmatpush2.bf16.msra.mxu0 0
    %7887 = vmatprep.subr.bf16.mxu0 0
    %7888 = vmatpush2.bf16.msra.mxu0 0
    %7889 = vmatprep.subr.bf16.mxu0 0
    %7890 = vmatpush2.bf16.msra.mxu0 0
    %7891 = vmatprep.subr.bf16.mxu0 0
    %7892 = vmatpush2.bf16.msra.mxu0 0
    %7893 = vmatprep.subr.bf16.mxu0 0
    %7894 = vmatpush2.bf16.msra.mxu0 0
    %7895 = vmatprep.subr.bf16.mxu0 0
    %7896 = vmatpush2.bf16.msra.mxu0 0
    %7897 = vmatprep.subr.bf16.mxu0 0
    %7898 = vmatpush2.bf16.msra.mxu0 0
    %7899 = vmatprep.mubr.bf16.mxu0 0
    %7900 = vmatmul.mubr.bf16.gmra.mxu0 %v7627
    %v7901 = vpop.f32.mrf.mxu0
    %v7902 = vadd.f32 %v7805, %v7901
    %v7903 = vpop.f32.mrf.mxu0
    %v7904 = vpop.f32.mrf.mxu0
    %v7905 = vadd.f32 %v7808, %v7904
    %v7906 = vpop.f32.mrf.mxu0
    %7907 = vmatprep.mubr.bf16.mxu0 0
    %7908 = vmatmul.mubr.bf16.gmra.mxu0 %v7628
    %v7909 = vpop.f32.mrf.mxu0
    %v7910 = vadd.f32 %v7813, %v7909
    %v7911 = vpop.f32.mrf.mxu0
    %v7912 = vpop.f32.mrf.mxu0
    %v7913 = vadd.f32 %v7816, %v7912
    %v7914 = vpop.f32.mrf.mxu0
    %7915 = vdwg.mxu0
    %v7916 = vld [vmem:[#allocation7 + $0x6] sm:$0x1]
    %v7917 = vld [vmem:[#allocation7 + $0x7] sm:$0x1]
    %v7918 = vadd.f32 %v7902, %v7905
    %v7919 = vadd.f32 %v7918, %v7910
    %v7920 = vadd.f32 %v7919, %v7913
    %v7921 = vrot.slane %v7920, 4
    %v7922 = vadd.f32 %v7920, %v7921
    %v7923 = vrot.slane %v7922, 2
    %v7924 = vadd.f32 %v7922, %v7923
    %v7925 = vrot.slane %v7924, 1
    %v7926 = vadd.f32 %v7924, %v7925
    %v7927 = vmul.f32 %v7902, %v7902
    %v7928 = vmul.f32 %v7905, %v7905
    %v7929 = vmul.f32 %v7910, %v7910
    %v7930 = vmul.f32 %v7913, %v7913
    %v7931 = vadd.f32 %v7927, %v7928
    %v7932 = vadd.f32 %v7931, %v7929
    %v7933 = vadd.f32 %v7932, %v7930
    %v7934 = vrot.slane %v7933, 4
    %v7935 = vadd.f32 %v7933, %v7934
    %v7936 = vrot.slane %v7935, 2
    %v7937 = vadd.f32 %v7935, %v7936
    %v7938 = vrot.slane %v7937, 1
    %v7939 = vadd.f32 %v7937, %v7938
    %v7940 = vmul.f32 %v7926, 0.03125
    %v7941 = vmul.f32 %v7939, 0.03125
    %v7942 = vmul.f32 %v7940, %v7940
    %v7943 = vsub.f32 %v7941, %v7942
    %v7944 = vmax.f32 %v7943, 0.0
    %v7945 = vadd.f32 %v7944, 1e-05
    %v7946 = vrsqrt.pop %v7945
    %v7947 = vmul.f32 %v7946, %v7916
    %v7948 = vsub.f32 %v7902, %v7940
    %v7949 = vsub.f32 %v7905, %v7940
    %v7950 = vsub.f32 %v7910, %v7940
    %v7951 = vsub.f32 %v7913, %v7940
    %v7952 = vlaneseq
    %v7953 = vshrl.u32 %v7952, 7
    %v7954 = vsub.s32 0, %v7953
    %v7955 = vrot.slane %v7947, %v7954
    %v7956 = vmul.f32 %v7948, %v7955
    %v7957 = vmul.f32 %v7949, %v7955
    %v7958 = vmul.f32 %v7950, %v7955
    %v7959 = vmul.f32 %v7951, %v7955
    %v7960 = vlaneseq
    %v7961 = vshrl.u32 %v7960, 7
    %v7962 = vsub.s32 0, %v7961
    %v7963 = vrot.slane %v7917, %v7962
    %v7964 = vadd.f32 %v7956, %v7963
    %v7965 = vadd.f32 %v7957, %v7963
    %v7966 = vadd.f32 %v7958, %v7963
    %v7967 = vadd.f32 %v7959, %v7963
    %v7968 = vmax.f32 %v7964, 0.0
    %v7969 = vmax.f32 %v7965, 0.0
    %v7970 = vmax.f32 %v7966, 0.0
    %v7971 = vmax.f32 %v7967, 0.0
    %v7972 = vrot.slane %v7968, 7
    %v7973 = vrot.slane %v7969, 7
    %v7974 = vrot.slane %v7970, 7
    %v7975 = vrot.slane %v7971, 7
    %v7976 = vsel %vm489, %v7974, %v7975
    %v7977 = vsel %vm489, %v7973, %v7974
    %v7978 = vsel %vm489, %v7972, %v7973
    %v7979 = vsel %vm489, %v7975, %v7972
    %v7980 = vrot.slane %v7968, 1
    %v7981 = vrot.slane %v7969, 1
    %v7982 = vrot.slane %v7970, 1
    %v7983 = vrot.slane %v7971, 1
    %v7984 = vsel %vm618, %v7982, %v7983
    %v7985 = vsel %vm618, %v7981, %v7982
    %v7986 = vsel %vm618, %v7980, %v7981
    %v7987 = vsel %vm618, %v7983, %v7980
    %v7988 = vrot.slane %v7979, 4
    %v7989 = vrot.slane %v7978, 4
    %v7990 = vrot.slane %v7977, 4
    %v7991 = vrot.slane %v7976, 4
    %vm7992 = vcmp.lt.s32.totalorder %v488, 4
    %v7993 = vsel %vm7992, %v7990, %v7991
    %v7994 = vsel %vm7992, %v7989, %v7990
    %v7995 = vsel %vm7992, %v7988, %v7989
    %v7996 = vsel %vm7992, %v7991, %v7988
    %v7997 = vld [vmem:[#allocation18] sm:$0xf]
    %v7998 = vld [vmem:[#allocation18 + $0x4] sm:$0xf]
    %v7999 = vld [vmem:[#allocation18 + $0x8] sm:$0xf]
    %v8000 = vld [vmem:[#allocation18 + $0xc] sm:$0xf]
    %v8001 = vunpack.c.l.bf16 %v7997
    %v8002 = vunpack.c.l.bf16 %v7998
    %v8003 = vunpack.c.l.bf16 %v7999
    %v8004 = vunpack.c.l.bf16 %v8000
    %v8005 = vmul.f32 %v7996, %v8001
    %v8006 = vmul.f32 %v7995, %v8002
    %v8007 = vmul.f32 %v7994, %v8003
    %v8008 = vmul.f32 %v7993, %v8004
    %v8009 = vrot.slane %v7968, 4
    %v8010 = vrot.slane %v7969, 4
    %v8011 = vrot.slane %v7970, 4
    %v8012 = vrot.slane %v7971, 4
    %v8013 = vsel %vm7992, %v8011, %v8012
    %v8014 = vsel %vm7992, %v8010, %v8011
    %v8015 = vsel %vm7992, %v8009, %v8010
    %v8016 = vsel %vm7992, %v8012, %v8009
    %8017 = vrot.lane.b32.xlu0 %v8016, 32
    %v8018 = vpop.permute.xlu0 %8017
    %8019 = vrot.lane.b32.xlu0 %v8015, 32
    %v8020 = vpop.permute.xlu0 %8019
    %8021 = vrot.lane.b32.xlu0 %v8014, 32
    %v8022 = vpop.permute.xlu0 %8021
    %8023 = vrot.lane.b32.xlu0 %v8013, 32
    %v8024 = vpop.permute.xlu0 %8023
    %s8025 = scalar_lea.vmem [#allocation18], 16
    %v8026 = vld [vmem:[%s8025] sm:$0xf]
    %v8027 = vld [vmem:[%s8025 + $0x4] sm:$0xf]
    %v8028 = vld [vmem:[%s8025 + $0x8] sm:$0xf]
    %v8029 = vld [vmem:[%s8025 + $0xc] sm:$0xf]
    %v8030 = vunpack.c.l.bf16 %v8026
    %v8031 = vunpack.c.l.bf16 %v8027
    %v8032 = vunpack.c.l.bf16 %v8028
    %v8033 = vunpack.c.l.bf16 %v8029
    %v8034 = vmul.f32 %v8018, %v8030
    %v8035 = vmul.f32 %v8020, %v8031
    %v8036 = vmul.f32 %v8022, %v8032
    %v8037 = vmul.f32 %v8024, %v8033
    %v8038 = vadd.f32 %v8005, %v8034
    %v8039 = vadd.f32 %v8006, %v8035
    %v8040 = vadd.f32 %v8007, %v8036
    %v8041 = vadd.f32 %v8008, %v8037
    %v8042 = vrot.slane %v7986, 4
    %v8043 = vrot.slane %v7985, 4
    %v8044 = vrot.slane %v7984, 4
    %v8045 = vrot.slane %v7987, 4
    %v8046 = vsel %vm7992, %v8044, %v8045
    %v8047 = vsel %vm7992, %v8043, %v8044
    %v8048 = vsel %vm7992, %v8042, %v8043
    %v8049 = vsel %vm7992, %v8045, %v8042
    %8050 = vrot.lane.b32.xlu0 %v8049, 64
    %v8051 = vpop.permute.xlu0 %8050
    %8052 = vrot.lane.b32.xlu0 %v8048, 64
    %v8053 = vpop.permute.xlu0 %8052
    %8054 = vrot.lane.b32.xlu0 %v8047, 64
    %v8055 = vpop.permute.xlu0 %8054
    %8056 = vrot.lane.b32.xlu0 %v8046, 64
    %v8057 = vpop.permute.xlu0 %8056
    %s8058 = scalar_lea.vmem [#allocation18], 32
    %v8059 = vld [vmem:[%s8058] sm:$0xf]
    %v8060 = vld [vmem:[%s8058 + $0x4] sm:$0xf]
    %v8061 = vld [vmem:[%s8058 + $0x8] sm:$0xf]
    %v8062 = vld [vmem:[%s8058 + $0xc] sm:$0xf]
    %v8063 = vunpack.c.l.bf16 %v8059
    %v8064 = vunpack.c.l.bf16 %v8060
    %v8065 = vunpack.c.l.bf16 %v8061
    %v8066 = vunpack.c.l.bf16 %v8062
    %v8067 = vmul.f32 %v8051, %v8063
    %v8068 = vmul.f32 %v8053, %v8064
    %v8069 = vmul.f32 %v8055, %v8065
    %v8070 = vmul.f32 %v8057, %v8066
    %v8071 = vadd.f32 %v8038, %v8067
    %v8072 = vadd.f32 %v8039, %v8068
    %v8073 = vadd.f32 %v8040, %v8069
    %v8074 = vadd.f32 %v8041, %v8070
    %8075 = vrot.lane.b32.xlu0 %v7979, 96
    %v8076 = vpop.permute.xlu0 %8075
    %8077 = vrot.lane.b32.xlu0 %v7978, 96
    %v8078 = vpop.permute.xlu0 %8077
    %8079 = vrot.lane.b32.xlu0 %v7977, 96
    %v8080 = vpop.permute.xlu0 %8079
    %8081 = vrot.lane.b32.xlu0 %v7976, 96
    %v8082 = vpop.permute.xlu0 %8081
    %s8083 = scalar_lea.vmem [#allocation18], 48
    %v8084 = vld [vmem:[%s8083] sm:$0xf]
    %v8085 = vld [vmem:[%s8083 + $0x4] sm:$0xf]
    %v8086 = vld [vmem:[%s8083 + $0x8] sm:$0xf]
    %v8087 = vld [vmem:[%s8083 + $0xc] sm:$0xf]
    %v8088 = vunpack.c.l.bf16 %v8084
    %v8089 = vunpack.c.l.bf16 %v8085
    %v8090 = vunpack.c.l.bf16 %v8086
    %v8091 = vunpack.c.l.bf16 %v8087
    %v8092 = vmul.f32 %v8076, %v8088
    %v8093 = vmul.f32 %v8078, %v8089
    %v8094 = vmul.f32 %v8080, %v8090
    %v8095 = vmul.f32 %v8082, %v8091
    %v8096 = vadd.f32 %v8071, %v8092
    %v8097 = vadd.f32 %v8072, %v8093
    %v8098 = vadd.f32 %v8073, %v8094
    %v8099 = vadd.f32 %v8074, %v8095
    %s8100 = scalar_lea.vmem [#allocation18], 64
    %v8101 = vld [vmem:[%s8100] sm:$0xf]
    %v8102 = vld [vmem:[%s8100 + $0x4] sm:$0xf]
    %v8103 = vld [vmem:[%s8100 + $0x8] sm:$0xf]
    %v8104 = vld [vmem:[%s8100 + $0xc] sm:$0xf]
    %v8105 = vunpack.c.l.bf16 %v8101
    %v8106 = vunpack.c.l.bf16 %v8102
    %v8107 = vunpack.c.l.bf16 %v8103
    %v8108 = vunpack.c.l.bf16 %v8104
    %v8109 = vmul.f32 %v7968, %v8105
    %v8110 = vmul.f32 %v7969, %v8106
    %v8111 = vmul.f32 %v7970, %v8107
    %v8112 = vmul.f32 %v7971, %v8108
    %8113 = vrot.lane.b32.xlu0 %v7986, 32
    %v8114 = vpop.permute.xlu0 %8113
    %8115 = vrot.lane.b32.xlu0 %v7985, 32
    %v8116 = vpop.permute.xlu0 %8115
    %8117 = vrot.lane.b32.xlu0 %v7984, 32
    %v8118 = vpop.permute.xlu0 %8117
    %8119 = vrot.lane.b32.xlu0 %v7987, 32
    %v8120 = vpop.permute.xlu0 %8119
    %s8121 = scalar_lea.vmem [#allocation18], 80
    %v8122 = vld [vmem:[%s8121] sm:$0xf]
    %v8123 = vld [vmem:[%s8121 + $0x4] sm:$0xf]
    %v8124 = vld [vmem:[%s8121 + $0x8] sm:$0xf]
    %v8125 = vld [vmem:[%s8121 + $0xc] sm:$0xf]
    %v8126 = vunpack.c.l.bf16 %v8122
    %v8127 = vunpack.c.l.bf16 %v8123
    %v8128 = vunpack.c.l.bf16 %v8124
    %v8129 = vunpack.c.l.bf16 %v8125
    %v8130 = vmul.f32 %v8114, %v8126
    %v8131 = vmul.f32 %v8116, %v8127
    %v8132 = vmul.f32 %v8118, %v8128
    %v8133 = vmul.f32 %v8120, %v8129
    %v8134 = vadd.f32 %v8109, %v8130
    %v8135 = vadd.f32 %v8110, %v8131
    %v8136 = vadd.f32 %v8111, %v8132
    %v8137 = vadd.f32 %v8112, %v8133
    %8138 = vrot.lane.b32.xlu0 %v7995, 64
    %v8139 = vpop.permute.xlu0 %8138
    %8140 = vrot.lane.b32.xlu0 %v7994, 64
    %v8141 = vpop.permute.xlu0 %8140
    %8142 = vrot.lane.b32.xlu0 %v7993, 64
    %v8143 = vpop.permute.xlu0 %8142
    %8144 = vrot.lane.b32.xlu0 %v7996, 64
    %v8145 = vpop.permute.xlu0 %8144
    %s8146 = scalar_lea.vmem [#allocation18], 96
    %v8147 = vld [vmem:[%s8146] sm:$0xf]
    %v8148 = vld [vmem:[%s8146 + $0x4] sm:$0xf]
    %v8149 = vld [vmem:[%s8146 + $0x8] sm:$0xf]
    %v8150 = vld [vmem:[%s8146 + $0xc] sm:$0xf]
    %v8151 = vunpack.c.l.bf16 %v8147
    %v8152 = vunpack.c.l.bf16 %v8148
    %v8153 = vunpack.c.l.bf16 %v8149
    %v8154 = vunpack.c.l.bf16 %v8150
    %v8155 = vmul.f32 %v8139, %v8151
    %v8156 = vmul.f32 %v8141, %v8152
    %v8157 = vmul.f32 %v8143, %v8153
    %v8158 = vmul.f32 %v8145, %v8154
    %v8159 = vadd.f32 %v8134, %v8155
    %v8160 = vadd.f32 %v8135, %v8156
    %v8161 = vadd.f32 %v8136, %v8157
    %v8162 = vadd.f32 %v8137, %v8158
    %8163 = vrot.lane.b32.xlu0 %v8015, 96
    %v8164 = vpop.permute.xlu0 %8163
    %8165 = vrot.lane.b32.xlu0 %v8014, 96
    %v8166 = vpop.permute.xlu0 %8165
    %8167 = vrot.lane.b32.xlu0 %v8013, 96
    %v8168 = vpop.permute.xlu0 %8167
    %8169 = vrot.lane.b32.xlu0 %v8016, 96
    %v8170 = vpop.permute.xlu0 %8169
    %s8171 = scalar_lea.vmem [#allocation18], 112
    %v8172 = vld [vmem:[%s8171] sm:$0xf]
    %v8173 = vld [vmem:[%s8171 + $0x4] sm:$0xf]
    %v8174 = vld [vmem:[%s8171 + $0x8] sm:$0xf]
    %v8175 = vld [vmem:[%s8171 + $0xc] sm:$0xf]
    %v8176 = vunpack.c.l.bf16 %v8172
    %v8177 = vunpack.c.l.bf16 %v8173
    %v8178 = vunpack.c.l.bf16 %v8174
    %v8179 = vunpack.c.l.bf16 %v8175
    %v8180 = vmul.f32 %v8164, %v8176
    %v8181 = vmul.f32 %v8166, %v8177
    %v8182 = vmul.f32 %v8168, %v8178
    %v8183 = vmul.f32 %v8170, %v8179
    %v8184 = vadd.f32 %v8159, %v8180
    %v8185 = vadd.f32 %v8160, %v8181
    %v8186 = vadd.f32 %v8161, %v8182
    %v8187 = vadd.f32 %v8162, %v8183
    %s8188 = scalar_lea.vmem [#allocation18], 128
    %v8189 = vld [vmem:[%s8188] sm:$0xf]
    %v8190 = vld [vmem:[%s8188 + $0x4] sm:$0xf]
    %v8191 = vld [vmem:[%s8188 + $0x8] sm:$0xf]
    %v8192 = vld [vmem:[%s8188 + $0xc] sm:$0xf]
    %v8193 = vunpack.c.l.bf16 %v8189
    %v8194 = vunpack.c.l.bf16 %v8190
    %v8195 = vunpack.c.l.bf16 %v8191
    %v8196 = vunpack.c.l.bf16 %v8192
    %v8197 = vmul.f32 %v8048, %v8193
    %v8198 = vmul.f32 %v8047, %v8194
    %v8199 = vmul.f32 %v8046, %v8195
    %v8200 = vmul.f32 %v8049, %v8196
    %v8201 = vpack.c.bf16 %v8097, %v8096
    %v8202 = vpack.c.bf16 %v8099, %v8098
    %s8203 = scalar_lea.vmem [#allocation2], 448
    %v8204 = vld [vmem:[%s8203] sm:$0xf]
    %v8205 = vld [vmem:[%s8203 + $0x4] sm:$0xf]
    %v8206 = vld [vmem:[%s8203 + $0x8] sm:$0xf]
    %v8207 = vld [vmem:[%s8203 + $0xc] sm:$0xf]
    %v8208 = vld [vmem:[%s8203 + $0x10] sm:$0xf]
    %v8209 = vld [vmem:[%s8203 + $0x14] sm:$0xf]
    %v8210 = vld [vmem:[%s8203 + $0x18] sm:$0xf]
    %v8211 = vld [vmem:[%s8203 + $0x1c] sm:$0xf]
    %v8212 = vld [vmem:[%s8203 + $0x20] sm:$0xf]
    %v8213 = vld [vmem:[%s8203 + $0x24] sm:$0xf]
    %v8214 = vld [vmem:[%s8203 + $0x28] sm:$0xf]
    %v8215 = vld [vmem:[%s8203 + $0x2c] sm:$0xf]
    %v8216 = vld [vmem:[%s8203 + $0x30] sm:$0xf]
    %v8217 = vld [vmem:[%s8203 + $0x34] sm:$0xf]
    %v8218 = vld [vmem:[%s8203 + $0x38] sm:$0xf]
    %v8219 = vld [vmem:[%s8203 + $0x3c] sm:$0xf]
    %v8220 = vpack.c.bf16 %v8185, %v8184
    %v8221 = vpack.c.bf16 %v8187, %v8186
    %s8222 = scalar_lea.vmem [#allocation2], 512
    %v8223 = vld [vmem:[%s8222] sm:$0xf]
    %v8224 = vld [vmem:[%s8222 + $0x4] sm:$0xf]
    %v8225 = vld [vmem:[%s8222 + $0x8] sm:$0xf]
    %v8226 = vld [vmem:[%s8222 + $0xc] sm:$0xf]
    %v8227 = vld [vmem:[%s8222 + $0x10] sm:$0xf]
    %v8228 = vld [vmem:[%s8222 + $0x14] sm:$0xf]
    %v8229 = vld [vmem:[%s8222 + $0x18] sm:$0xf]
    %v8230 = vld [vmem:[%s8222 + $0x1c] sm:$0xf]
    %v8231 = vld [vmem:[%s8222 + $0x20] sm:$0xf]
    %v8232 = vld [vmem:[%s8222 + $0x24] sm:$0xf]
    %v8233 = vld [vmem:[%s8222 + $0x28] sm:$0xf]
    %v8234 = vld [vmem:[%s8222 + $0x2c] sm:$0xf]
    %v8235 = vld [vmem:[%s8222 + $0x30] sm:$0xf]
    %v8236 = vld [vmem:[%s8222 + $0x34] sm:$0xf]
    %v8237 = vld [vmem:[%s8222 + $0x38] sm:$0xf]
    %v8238 = vld [vmem:[%s8222 + $0x3c] sm:$0xf]
    %v8255 = vunpack.c.l.b16 %v8223
    %v8256 = vunpack.c.l.b16 %v8224
    %v8257 = vunpack.c.l.b16 %v8225
    %v8258 = vunpack.c.l.b16 %v8226
    %v8259 = vunpack.c.l.b16 %v8227
    %v8260 = vunpack.c.l.b16 %v8228
    %v8261 = vunpack.c.l.b16 %v8229
    %v8262 = vunpack.c.l.b16 %v8230
    %v8263 = vunpack.c.l.b16 %v8231
    %v8264 = vunpack.c.l.b16 %v8232
    %v8265 = vunpack.c.l.b16 %v8233
    %v8266 = vunpack.c.l.b16 %v8234
    %v8267 = vunpack.c.l.b16 %v8235
    %v8268 = vunpack.c.l.b16 %v8236
    %v8269 = vunpack.c.l.b16 %v8237
    %v8270 = vunpack.c.l.b16 %v8238
    %v8271 = vpack.c.b16 %v8256, %v8255
    %v8272 = vpack.c.b16 %v8258, %v8257
    %v8273 = vpack.c.b16 %v8260, %v8259
    %v8274 = vpack.c.b16 %v8262, %v8261
    %v8275 = vpack.c.b16 %v8264, %v8263
    %v8276 = vpack.c.b16 %v8266, %v8265
    %v8277 = vpack.c.b16 %v8268, %v8267
    %v8278 = vpack.c.b16 %v8270, %v8269
    %8287 = vmatprep.subr.bf16.mxu0 0
    %8288 = vmatpush1.bf16.msra.mxu0 %v8278
    %8289 = vmatprep.subr.bf16.mxu0 0
    %8290 = vmatpush1.bf16.msra.mxu0 %v8277
    %8291 = vmatprep.subr.bf16.mxu0 0
    %8292 = vmatpush1.bf16.msra.mxu0 %v8276
    %8293 = vmatprep.subr.bf16.mxu0 0
    %8294 = vmatpush1.bf16.msra.mxu0 %v8275
    %8295 = vmatprep.subr.bf16.mxu0 0
    %8296 = vmatpush1.bf16.msra.mxu0 %v8274
    %8297 = vmatprep.subr.bf16.mxu0 0
    %8298 = vmatpush1.bf16.msra.mxu0 %v8273
    %8299 = vmatprep.subr.bf16.mxu0 0
    %8300 = vmatpush1.bf16.msra.mxu0 %v8272
    %8301 = vmatprep.subr.bf16.mxu0 0
    %8302 = vmatpush1.bf16.msra.mxu0 %v8271
    %8303 = vmatprep.subr.bf16.mxu0 0
    %8304 = vmatpush2.bf16.msra.mxu0 0
    %8305 = vmatprep.subr.bf16.mxu0 0
    %8306 = vmatpush2.bf16.msra.mxu0 0
    %8307 = vmatprep.subr.bf16.mxu0 0
    %8308 = vmatpush2.bf16.msra.mxu0 0
    %8309 = vmatprep.subr.bf16.mxu0 0
    %8310 = vmatpush2.bf16.msra.mxu0 0
    %8311 = vmatprep.subr.bf16.mxu0 0
    %8312 = vmatpush2.bf16.msra.mxu0 0
    %8313 = vmatprep.subr.bf16.mxu0 0
    %8314 = vmatpush2.bf16.msra.mxu0 0
    %8315 = vmatprep.subr.bf16.mxu0 0
    %8316 = vmatpush2.bf16.msra.mxu0 0
    %8317 = vmatprep.subr.bf16.mxu0 0
    %8318 = vmatpush2.bf16.msra.mxu0 0
    %8319 = vmatprep.mubr.bf16.mxu0 0
    %8320 = vmatmul.mubr.bf16.gmra.mxu0 %v8220
    %v8321 = vpop.f32.mrf.mxu0
    %v8322 = vadd.f32 0.0, %v8321
    %v8323 = vpop.f32.mrf.mxu0
    %v8324 = vpop.f32.mrf.mxu0
    %v8325 = vadd.f32 0.0, %v8324
    %v8326 = vpop.f32.mrf.mxu0
    %8327 = vmatprep.mubr.bf16.mxu0 0
    %8328 = vmatmul.mubr.bf16.gmra.mxu0 %v8221
    %v8329 = vpop.f32.mrf.mxu0
    %v8330 = vadd.f32 0.0, %v8329
    %v8331 = vpop.f32.mrf.mxu0
    %v8332 = vpop.f32.mrf.mxu0
    %v8333 = vadd.f32 0.0, %v8332
    %v8334 = vpop.f32.mrf.mxu0
    %8335 = vdwg.mxu0
    %v8352 = vunpack.c.l.b16 %v8204
    %v8353 = vunpack.c.l.b16 %v8205
    %v8354 = vunpack.c.l.b16 %v8206
    %v8355 = vunpack.c.l.b16 %v8207
    %v8356 = vunpack.c.l.b16 %v8208
    %v8357 = vunpack.c.l.b16 %v8209
    %v8358 = vunpack.c.l.b16 %v8210
    %v8359 = vunpack.c.l.b16 %v8211
    %v8360 = vunpack.c.l.b16 %v8212
    %v8361 = vunpack.c.l.b16 %v8213
    %v8362 = vunpack.c.l.b16 %v8214
    %v8363 = vunpack.c.l.b16 %v8215
    %v8364 = vunpack.c.l.b16 %v8216
    %v8365 = vunpack.c.l.b16 %v8217
    %v8366 = vunpack.c.l.b16 %v8218
    %v8367 = vunpack.c.l.b16 %v8219
    %v8368 = vpack.c.b16 %v8353, %v8352
    %v8369 = vpack.c.b16 %v8355, %v8354
    %v8370 = vpack.c.b16 %v8357, %v8356
    %v8371 = vpack.c.b16 %v8359, %v8358
    %v8372 = vpack.c.b16 %v8361, %v8360
    %v8373 = vpack.c.b16 %v8363, %v8362
    %v8374 = vpack.c.b16 %v8365, %v8364
    %v8375 = vpack.c.b16 %v8367, %v8366
    %8384 = vmatprep.subr.bf16.mxu0 0
    %8385 = vmatpush1.bf16.msra.mxu0 %v8375
    %8386 = vmatprep.subr.bf16.mxu0 0
    %8387 = vmatpush1.bf16.msra.mxu0 %v8374
    %8388 = vmatprep.subr.bf16.mxu0 0
    %8389 = vmatpush1.bf16.msra.mxu0 %v8373
    %8390 = vmatprep.subr.bf16.mxu0 0
    %8391 = vmatpush1.bf16.msra.mxu0 %v8372
    %8392 = vmatprep.subr.bf16.mxu0 0
    %8393 = vmatpush1.bf16.msra.mxu0 %v8371
    %8394 = vmatprep.subr.bf16.mxu0 0
    %8395 = vmatpush1.bf16.msra.mxu0 %v8370
    %8396 = vmatprep.subr.bf16.mxu0 0
    %8397 = vmatpush1.bf16.msra.mxu0 %v8369
    %8398 = vmatprep.subr.bf16.mxu0 0
    %8399 = vmatpush1.bf16.msra.mxu0 %v8368
    %8400 = vmatprep.subr.bf16.mxu0 0
    %8401 = vmatpush2.bf16.msra.mxu0 0
    %8402 = vmatprep.subr.bf16.mxu0 0
    %8403 = vmatpush2.bf16.msra.mxu0 0
    %8404 = vmatprep.subr.bf16.mxu0 0
    %8405 = vmatpush2.bf16.msra.mxu0 0
    %8406 = vmatprep.subr.bf16.mxu0 0
    %8407 = vmatpush2.bf16.msra.mxu0 0
    %8408 = vmatprep.subr.bf16.mxu0 0
    %8409 = vmatpush2.bf16.msra.mxu0 0
    %8410 = vmatprep.subr.bf16.mxu0 0
    %8411 = vmatpush2.bf16.msra.mxu0 0
    %8412 = vmatprep.subr.bf16.mxu0 0
    %8413 = vmatpush2.bf16.msra.mxu0 0
    %8414 = vmatprep.subr.bf16.mxu0 0
    %8415 = vmatpush2.bf16.msra.mxu0 0
    %8416 = vmatprep.mubr.bf16.mxu0 0
    %8417 = vmatmul.mubr.bf16.gmra.mxu0 %v8201
    %v8418 = vpop.f32.mrf.mxu0
    %v8419 = vadd.f32 %v8322, %v8418
    %v8420 = vpop.f32.mrf.mxu0
    %v8421 = vpop.f32.mrf.mxu0
    %v8422 = vadd.f32 %v8325, %v8421
    %v8423 = vpop.f32.mrf.mxu0
    %8424 = vmatprep.mubr.bf16.mxu0 0
    %8425 = vmatmul.mubr.bf16.gmra.mxu0 %v8202
    %v8426 = vpop.f32.mrf.mxu0
    %v8427 = vadd.f32 %v8330, %v8426
    %v8428 = vpop.f32.mrf.mxu0
    %v8429 = vpop.f32.mrf.mxu0
    %v8430 = vadd.f32 %v8333, %v8429
    %v8431 = vpop.f32.mrf.mxu0
    %8432 = vdwg.mxu0
    %v8433 = vpack.c.bf16 %v8198, %v8197
    %v8434 = vpack.c.bf16 %v8200, %v8199
    %s8435 = scalar_lea.vmem [#allocation2], 576
    %v8436 = vld [vmem:[%s8435] sm:$0xf]
    %v8437 = vld [vmem:[%s8435 + $0x4] sm:$0xf]
    %v8438 = vld [vmem:[%s8435 + $0x8] sm:$0xf]
    %v8439 = vld [vmem:[%s8435 + $0xc] sm:$0xf]
    %v8440 = vld [vmem:[%s8435 + $0x10] sm:$0xf]
    %v8441 = vld [vmem:[%s8435 + $0x14] sm:$0xf]
    %v8442 = vld [vmem:[%s8435 + $0x18] sm:$0xf]
    %v8443 = vld [vmem:[%s8435 + $0x1c] sm:$0xf]
    %v8444 = vld [vmem:[%s8435 + $0x20] sm:$0xf]
    %v8445 = vld [vmem:[%s8435 + $0x24] sm:$0xf]
    %v8446 = vld [vmem:[%s8435 + $0x28] sm:$0xf]
    %v8447 = vld [vmem:[%s8435 + $0x2c] sm:$0xf]
    %v8448 = vld [vmem:[%s8435 + $0x30] sm:$0xf]
    %v8449 = vld [vmem:[%s8435 + $0x34] sm:$0xf]
    %v8450 = vld [vmem:[%s8435 + $0x38] sm:$0xf]
    %v8451 = vld [vmem:[%s8435 + $0x3c] sm:$0xf]
    %v8468 = vunpack.c.l.b16 %v8436
    %v8469 = vunpack.c.l.b16 %v8437
    %v8470 = vunpack.c.l.b16 %v8438
    %v8471 = vunpack.c.l.b16 %v8439
    %v8472 = vunpack.c.l.b16 %v8440
    %v8473 = vunpack.c.l.b16 %v8441
    %v8474 = vunpack.c.l.b16 %v8442
    %v8475 = vunpack.c.l.b16 %v8443
    %v8476 = vunpack.c.l.b16 %v8444
    %v8477 = vunpack.c.l.b16 %v8445
    %v8478 = vunpack.c.l.b16 %v8446
    %v8479 = vunpack.c.l.b16 %v8447
    %v8480 = vunpack.c.l.b16 %v8448
    %v8481 = vunpack.c.l.b16 %v8449
    %v8482 = vunpack.c.l.b16 %v8450
    %v8483 = vunpack.c.l.b16 %v8451
    %v8484 = vpack.c.b16 %v8469, %v8468
    %v8485 = vpack.c.b16 %v8471, %v8470
    %v8486 = vpack.c.b16 %v8473, %v8472
    %v8487 = vpack.c.b16 %v8475, %v8474
    %v8488 = vpack.c.b16 %v8477, %v8476
    %v8489 = vpack.c.b16 %v8479, %v8478
    %v8490 = vpack.c.b16 %v8481, %v8480
    %v8491 = vpack.c.b16 %v8483, %v8482
    %8500 = vmatprep.subr.bf16.mxu0 0
    %8501 = vmatpush1.bf16.msra.mxu0 %v8491
    %8502 = vmatprep.subr.bf16.mxu0 0
    %8503 = vmatpush1.bf16.msra.mxu0 %v8490
    %8504 = vmatprep.subr.bf16.mxu0 0
    %8505 = vmatpush1.bf16.msra.mxu0 %v8489
    %8506 = vmatprep.subr.bf16.mxu0 0
    %8507 = vmatpush1.bf16.msra.mxu0 %v8488
    %8508 = vmatprep.subr.bf16.mxu0 0
    %8509 = vmatpush1.bf16.msra.mxu0 %v8487
    %8510 = vmatprep.subr.bf16.mxu0 0
    %8511 = vmatpush1.bf16.msra.mxu0 %v8486
    %8512 = vmatprep.subr.bf16.mxu0 0
    %8513 = vmatpush1.bf16.msra.mxu0 %v8485
    %8514 = vmatprep.subr.bf16.mxu0 0
    %8515 = vmatpush1.bf16.msra.mxu0 %v8484
    %8516 = vmatprep.subr.bf16.mxu0 0
    %8517 = vmatpush2.bf16.msra.mxu0 0
    %8518 = vmatprep.subr.bf16.mxu0 0
    %8519 = vmatpush2.bf16.msra.mxu0 0
    %8520 = vmatprep.subr.bf16.mxu0 0
    %8521 = vmatpush2.bf16.msra.mxu0 0
    %8522 = vmatprep.subr.bf16.mxu0 0
    %8523 = vmatpush2.bf16.msra.mxu0 0
    %8524 = vmatprep.subr.bf16.mxu0 0
    %8525 = vmatpush2.bf16.msra.mxu0 0
    %8526 = vmatprep.subr.bf16.mxu0 0
    %8527 = vmatpush2.bf16.msra.mxu0 0
    %8528 = vmatprep.subr.bf16.mxu0 0
    %8529 = vmatpush2.bf16.msra.mxu0 0
    %8530 = vmatprep.subr.bf16.mxu0 0
    %8531 = vmatpush2.bf16.msra.mxu0 0
    %8532 = vmatprep.mubr.bf16.mxu0 0
    %8533 = vmatmul.mubr.bf16.gmra.mxu0 %v8433
    %v8534 = vpop.f32.mrf.mxu0
    %v8535 = vadd.f32 0.0, %v8534
    %v8536 = vpop.f32.mrf.mxu0
    %v8537 = vpop.f32.mrf.mxu0
    %v8538 = vadd.f32 0.0, %v8537
    %v8539 = vpop.f32.mrf.mxu0
    %8540 = vmatprep.mubr.bf16.mxu0 0
    %8541 = vmatmul.mubr.bf16.gmra.mxu0 %v8434
    %v8542 = vpop.f32.mrf.mxu0
    %v8543 = vadd.f32 0.0, %v8542
    %v8544 = vpop.f32.mrf.mxu0
    %v8545 = vpop.f32.mrf.mxu0
    %v8546 = vadd.f32 0.0, %v8545
    %v8547 = vpop.f32.mrf.mxu0
    %8548 = vdwg.mxu0
    %v8549 = vadd.f32 %v8419, %v8535
    %v8550 = vadd.f32 %v8422, %v8538
    %v8551 = vadd.f32 %v8427, %v8543
    %v8552 = vadd.f32 %v8430, %v8546
    %v8553 = vld [vmem:[#allocation12] sm:$0xf]
    %v8554 = vld [vmem:[#allocation12 + $0x4] sm:$0xf]
    %v8555 = vld [vmem:[#allocation12 + $0x8] sm:$0xf]
    %v8556 = vld [vmem:[#allocation12 + $0xc] sm:$0xf]
    %v8557 = vpack.c.bf16 %v6995, %v6994
    %v8558 = vpack.c.bf16 %v6997, %v6996
    %v8559 = vpack.c.bf16 %v6999, %v6998
    %v8560 = vpack.c.bf16 %v7001, %v7000
    %v8561 = vpack.c.bf16 %v7003, %v7002
    %v8562 = vpack.c.bf16 %v7005, %v7004
    %v8563 = vpack.c.bf16 %v7007, %v7006
    %v8564 = vpack.c.bf16 %v7009, %v7008
    %v8569 = vunpack.c.l.b16 %v8553
    %v8570 = vunpack.c.l.b16 %v8554
    %v8571 = vunpack.c.l.b16 %v8555
    %v8572 = vunpack.c.l.b16 %v8556
    %v8573 = vpack.c.b16 %v8570, %v8569
    %v8574 = vpack.c.b16 %v8572, %v8571
    %8577 = vmatprep.subr.bf16.mxu0 0
    %8578 = vmatpush1.bf16.msra.mxu0 %v8564
    %8579 = vmatprep.subr.bf16.mxu0 0
    %8580 = vmatpush1.bf16.msra.mxu0 %v8563
    %8581 = vmatprep.subr.bf16.mxu0 0
    %8582 = vmatpush1.bf16.msra.mxu0 %v8562
    %8583 = vmatprep.subr.bf16.mxu0 0
    %8584 = vmatpush1.bf16.msra.mxu0 %v8561
    %8585 = vmatprep.subr.bf16.mxu0 0
    %8586 = vmatpush1.bf16.msra.mxu0 %v8560
    %8587 = vmatprep.subr.bf16.mxu0 0
    %8588 = vmatpush1.bf16.msra.mxu0 %v8559
    %8589 = vmatprep.subr.bf16.mxu0 0
    %8590 = vmatpush1.bf16.msra.mxu0 %v8558
    %8591 = vmatprep.subr.bf16.mxu0 0
    %8592 = vmatpush1.bf16.msra.mxu0 %v8557
    %8593 = vmatprep.subr.bf16.mxu0 0
    %8594 = vmatpush2.bf16.msra.mxu0 0
    %8595 = vmatprep.subr.bf16.mxu0 0
    %8596 = vmatpush2.bf16.msra.mxu0 0
    %8597 = vmatprep.subr.bf16.mxu0 0
    %8598 = vmatpush2.bf16.msra.mxu0 0
    %8599 = vmatprep.subr.bf16.mxu0 0
    %8600 = vmatpush2.bf16.msra.mxu0 0
    %8601 = vmatprep.subr.bf16.mxu0 0
    %8602 = vmatpush2.bf16.msra.mxu0 0
    %8603 = vmatprep.subr.bf16.mxu0 0
    %8604 = vmatpush2.bf16.msra.mxu0 0
    %8605 = vmatprep.subr.bf16.mxu0 0
    %8606 = vmatpush2.bf16.msra.mxu0 0
    %8607 = vmatprep.subr.bf16.mxu0 0
    %8608 = vmatpush2.bf16.msra.mxu0 0
    %8609 = vmatprep.mubr.bf16.mxu0 0
    %8610 = vmatmul.mubr.bf16.gmra.mxu0 %v8573
    %v8611 = vpop.f32.mrf.mxu0
    %v8612 = vadd.f32 0.0, %v8611
    %v8613 = vpop.f32.mrf.mxu0
    %v8614 = vpop.f32.mrf.mxu0
    %v8615 = vadd.f32 0.0, %v8614
    %v8616 = vpop.f32.mrf.mxu0
    %8617 = vmatprep.mubr.bf16.mxu0 0
    %8618 = vmatmul.mubr.bf16.gmra.mxu0 %v8574
    %v8619 = vpop.f32.mrf.mxu0
    %v8620 = vadd.f32 0.0, %v8619
    %v8621 = vpop.f32.mrf.mxu0
    %v8622 = vpop.f32.mrf.mxu0
    %v8623 = vadd.f32 0.0, %v8622
    %v8624 = vpop.f32.mrf.mxu0
    %8625 = vdwg.mxu0
    %v8626 = vpack.c.bf16 %v8615, %v8612
    %v8627 = vpack.c.bf16 %v8623, %v8620
    %v8628 = vld [vmem:[#allocation4] sm:$0xf]
    %v8629 = vld [vmem:[#allocation4 + $0x4] sm:$0xf]
    %v8630 = vld [vmem:[#allocation4 + $0x8] sm:$0xf]
    %v8631 = vld [vmem:[#allocation4 + $0xc] sm:$0xf]
    %v8632 = vld [vmem:[#allocation4 + $0x10] sm:$0xf]
    %v8633 = vld [vmem:[#allocation4 + $0x14] sm:$0xf]
    %v8634 = vld [vmem:[#allocation4 + $0x18] sm:$0xf]
    %v8635 = vld [vmem:[#allocation4 + $0x1c] sm:$0xf]
    %v8636 = vld [vmem:[#allocation4 + $0x20] sm:$0xf]
    %v8637 = vld [vmem:[#allocation4 + $0x24] sm:$0xf]
    %v8638 = vld [vmem:[#allocation4 + $0x28] sm:$0xf]
    %v8639 = vld [vmem:[#allocation4 + $0x2c] sm:$0xf]
    %v8640 = vld [vmem:[#allocation4 + $0x30] sm:$0xf]
    %v8641 = vld [vmem:[#allocation4 + $0x34] sm:$0xf]
    %v8642 = vld [vmem:[#allocation4 + $0x38] sm:$0xf]
    %v8643 = vld [vmem:[#allocation4 + $0x3c] sm:$0xf]
    %v8660 = vunpack.c.l.b16 %v8628
    %v8661 = vunpack.c.l.b16 %v8629
    %v8662 = vunpack.c.l.b16 %v8630
    %v8663 = vunpack.c.l.b16 %v8631
    %v8664 = vunpack.c.l.b16 %v8632
    %v8665 = vunpack.c.l.b16 %v8633
    %v8666 = vunpack.c.l.b16 %v8634
    %v8667 = vunpack.c.l.b16 %v8635
    %v8668 = vunpack.c.l.b16 %v8636
    %v8669 = vunpack.c.l.b16 %v8637
    %v8670 = vunpack.c.l.b16 %v8638
    %v8671 = vunpack.c.l.b16 %v8639
    %v8672 = vunpack.c.l.b16 %v8640
    %v8673 = vunpack.c.l.b16 %v8641
    %v8674 = vunpack.c.l.b16 %v8642
    %v8675 = vunpack.c.l.b16 %v8643
    %v8676 = vpack.c.b16 %v8661, %v8660
    %v8677 = vpack.c.b16 %v8663, %v8662
    %v8678 = vpack.c.b16 %v8665, %v8664
    %v8679 = vpack.c.b16 %v8667, %v8666
    %v8680 = vpack.c.b16 %v8669, %v8668
    %v8681 = vpack.c.b16 %v8671, %v8670
    %v8682 = vpack.c.b16 %v8673, %v8672
    %v8683 = vpack.c.b16 %v8675, %v8674
    %8692 = vmatprep.subr.bf16.mxu0 0
    %8693 = vmatpush1.bf16.msra.mxu0 %v8683
    %8694 = vmatprep.subr.bf16.mxu0 0
    %8695 = vmatpush1.bf16.msra.mxu0 %v8682
    %8696 = vmatprep.subr.bf16.mxu0 0
    %8697 = vmatpush1.bf16.msra.mxu0 %v8681
    %8698 = vmatprep.subr.bf16.mxu0 0
    %8699 = vmatpush1.bf16.msra.mxu0 %v8680
    %8700 = vmatprep.subr.bf16.mxu0 0
    %8701 = vmatpush1.bf16.msra.mxu0 %v8679
    %8702 = vmatprep.subr.bf16.mxu0 0
    %8703 = vmatpush1.bf16.msra.mxu0 %v8678
    %8704 = vmatprep.subr.bf16.mxu0 0
    %8705 = vmatpush1.bf16.msra.mxu0 %v8677
    %8706 = vmatprep.subr.bf16.mxu0 0
    %8707 = vmatpush1.bf16.msra.mxu0 %v8676
    %8708 = vmatprep.subr.bf16.mxu0 0
    %8709 = vmatpush2.bf16.msra.mxu0 0
    %8710 = vmatprep.subr.bf16.mxu0 0
    %8711 = vmatpush2.bf16.msra.mxu0 0
    %8712 = vmatprep.subr.bf16.mxu0 0
    %8713 = vmatpush2.bf16.msra.mxu0 0
    %8714 = vmatprep.subr.bf16.mxu0 0
    %8715 = vmatpush2.bf16.msra.mxu0 0
    %8716 = vmatprep.subr.bf16.mxu0 0
    %8717 = vmatpush2.bf16.msra.mxu0 0
    %8718 = vmatprep.subr.bf16.mxu0 0
    %8719 = vmatpush2.bf16.msra.mxu0 0
    %8720 = vmatprep.subr.bf16.mxu0 0
    %8721 = vmatpush2.bf16.msra.mxu0 0
    %8722 = vmatprep.subr.bf16.mxu0 0
    %8723 = vmatpush2.bf16.msra.mxu0 0
    %8724 = vmatprep.mubr.bf16.mxu0 0
    %8725 = vmatmul.mubr.bf16.gmra.mxu0 %v8626
    %v8726 = vpop.f32.mrf.mxu0
    %v8727 = vadd.f32 0.0, %v8726
    %v8728 = vpop.f32.mrf.mxu0
    %v8729 = vpop.f32.mrf.mxu0
    %v8730 = vadd.f32 0.0, %v8729
    %v8731 = vpop.f32.mrf.mxu0
    %8732 = vmatprep.mubr.bf16.mxu0 0
    %8733 = vmatmul.mubr.bf16.gmra.mxu0 %v8627
    %v8734 = vpop.f32.mrf.mxu0
    %v8735 = vadd.f32 0.0, %v8734
    %v8736 = vpop.f32.mrf.mxu0
    %v8737 = vpop.f32.mrf.mxu0
    %v8738 = vadd.f32 0.0, %v8737
    %v8739 = vpop.f32.mrf.mxu0
    %8740 = vdwg.mxu0
    %v8741 = vadd.f32 %v8549, %v8727
    %v8742 = vadd.f32 %v8550, %v8730
    %v8743 = vadd.f32 %v8551, %v8735
    %v8744 = vadd.f32 %v8552, %v8738
    %v8745 = vld [vmem:[#allocation7 + $0x8] sm:$0x1]
    %v8746 = vld [vmem:[#allocation7 + $0x9] sm:$0x1]
    %v8747 = vadd.f32 %v8741, %v8742
    %v8748 = vadd.f32 %v8747, %v8743
    %v8749 = vadd.f32 %v8748, %v8744
    %v8750 = vrot.slane %v8749, 4
    %v8751 = vadd.f32 %v8749, %v8750
    %v8752 = vrot.slane %v8751, 2
    %v8753 = vadd.f32 %v8751, %v8752
    %v8754 = vrot.slane %v8753, 1
    %v8755 = vadd.f32 %v8753, %v8754
    %v8756 = vmul.f32 %v8741, %v8741
    %v8757 = vmul.f32 %v8742, %v8742
    %v8758 = vmul.f32 %v8743, %v8743
    %v8759 = vmul.f32 %v8744, %v8744
    %v8760 = vadd.f32 %v8756, %v8757
    %v8761 = vadd.f32 %v8760, %v8758
    %v8762 = vadd.f32 %v8761, %v8759
    %v8763 = vrot.slane %v8762, 4
    %v8764 = vadd.f32 %v8762, %v8763
    %v8765 = vrot.slane %v8764, 2
    %v8766 = vadd.f32 %v8764, %v8765
    %v8767 = vrot.slane %v8766, 1
    %v8768 = vadd.f32 %v8766, %v8767
    %v8769 = vmul.f32 %v8755, 0.03125
    %v8770 = vmul.f32 %v8768, 0.03125
    %v8771 = vmul.f32 %v8769, %v8769
    %v8772 = vsub.f32 %v8770, %v8771
    %v8773 = vmax.f32 %v8772, 0.0
    %v8774 = vadd.f32 %v8773, 1e-05
    %v8775 = vrsqrt.pop %v8774
    %v8776 = vmul.f32 %v8775, %v8745
    %v8777 = vsub.f32 %v8741, %v8769
    %v8778 = vsub.f32 %v8742, %v8769
    %v8779 = vsub.f32 %v8743, %v8769
    %v8780 = vsub.f32 %v8744, %v8769
    %v8781 = vlaneseq
    %v8782 = vshrl.u32 %v8781, 7
    %v8783 = vsub.s32 0, %v8782
    %v8784 = vrot.slane %v8776, %v8783
    %v8785 = vmul.f32 %v8777, %v8784
    %v8786 = vmul.f32 %v8778, %v8784
    %v8787 = vmul.f32 %v8779, %v8784
    %v8788 = vmul.f32 %v8780, %v8784
    %v8789 = vlaneseq
    %v8790 = vshrl.u32 %v8789, 7
    %v8791 = vsub.s32 0, %v8790
    %v8792 = vrot.slane %v8746, %v8791
    %v8793 = vadd.f32 %v8785, %v8792
    %v8794 = vadd.f32 %v8786, %v8792
    %v8795 = vadd.f32 %v8787, %v8792
    %v8796 = vadd.f32 %v8788, %v8792
    %v8797 = vmax.f32 %v8793, 0.0
    %v8798 = vmax.f32 %v8794, 0.0
    %v8799 = vmax.f32 %v8795, 0.0
    %v8800 = vmax.f32 %v8796, 0.0
    %v8801 = vld [vmem:[#allocation13] sm:$0xf]
    %v8802 = vpack.c.bf16 %v8798, %v8797
    %v8803 = vpack.c.bf16 %v8800, %v8799
    %vm8804 = vcmask 261120
    %v8806 = vsel %vm8804, %v8801, 0
    %8808 = vmatprep.subr.bf16.mxu0 0
    %8809 = vmatpush1.bf16.msra.mxu0 0
    %8810 = vmatprep.subr.bf16.mxu0 0
    %8811 = vmatpush1.bf16.msra.mxu0 0
    %8812 = vmatprep.subr.bf16.mxu0 0
    %8813 = vmatpush1.bf16.msra.mxu0 0
    %8814 = vmatprep.subr.bf16.mxu0 0
    %8815 = vmatpush1.bf16.msra.mxu0 0
    %8816 = vmatprep.subr.bf16.mxu0 0
    %8817 = vmatpush1.bf16.msra.mxu0 0
    %8818 = vmatprep.subr.bf16.mxu0 0
    %8819 = vmatpush1.bf16.msra.mxu0 0
    %8820 = vmatprep.subr.bf16.mxu0 0
    %8821 = vmatpush1.bf16.msra.mxu0 %v8803
    %8822 = vmatprep.subr.bf16.mxu0 0
    %8823 = vmatpush1.bf16.msra.mxu0 %v8802
    %8824 = vmatprep.subr.bf16.mxu0 0
    %8825 = vmatpush2.bf16.msra.mxu0 0
    %8826 = vmatprep.subr.bf16.mxu0 0
    %8827 = vmatpush2.bf16.msra.mxu0 0
    %8828 = vmatprep.subr.bf16.mxu0 0
    %8829 = vmatpush2.bf16.msra.mxu0 0
    %8830 = vmatprep.subr.bf16.mxu0 0
    %8831 = vmatpush2.bf16.msra.mxu0 0
    %8832 = vmatprep.subr.bf16.mxu0 0
    %8833 = vmatpush2.bf16.msra.mxu0 0
    %8834 = vmatprep.subr.bf16.mxu0 0
    %8835 = vmatpush2.bf16.msra.mxu0 0
    %8836 = vmatprep.subr.bf16.mxu0 0
    %8837 = vmatpush2.bf16.msra.mxu0 0
    %8838 = vmatprep.subr.bf16.mxu0 0
    %8839 = vmatpush2.bf16.msra.mxu0 0
    %8840 = vmatprep.mubr.bf16.mxu0 0
    %8841 = vmatmul.mubr.bf16.gmra.mxu0 %v8806
    %v8842 = vpop.f32.mrf.mxu0
    %v8843 = vadd.f32 0.0, %v8842
    %v8844 = vpop.f32.mrf.mxu0
    %v8845 = vpop.f32.mrf.mxu0
    %v8846 = vpop.f32.mrf.mxu0
    %8847 = vdwg.mxu0
    %v8848 = vpack.c.bf16 %v8843, %v8843
    %v8849 = vld [vmem:[#allocation6] sm:$0xf]
    %v8850 = vld [vmem:[#allocation6 + $0x4] sm:$0xf]
    %v8851 = vld [vmem:[#allocation6 + $0x8] sm:$0xf]
    %v8852 = vld [vmem:[#allocation6 + $0xc] sm:$0xf]
    %v8853 = vld [vmem:[#allocation6 + $0x10] sm:$0xf]
    %v8854 = vld [vmem:[#allocation6 + $0x14] sm:$0xf]
    %v8855 = vld [vmem:[#allocation6 + $0x18] sm:$0xf]
    %v8856 = vld [vmem:[#allocation6 + $0x1c] sm:$0xf]
    %v8857 = vld [vmem:[#allocation6 + $0x20] sm:$0xf]
    %v8858 = vld [vmem:[#allocation6 + $0x24] sm:$0xf]
    %v8859 = vld [vmem:[#allocation6 + $0x28] sm:$0xf]
    %v8860 = vld [vmem:[#allocation6 + $0x2c] sm:$0xf]
    %v8861 = vld [vmem:[#allocation6 + $0x30] sm:$0xf]
    %v8862 = vld [vmem:[#allocation6 + $0x34] sm:$0xf]
    %v8863 = vld [vmem:[#allocation6 + $0x38] sm:$0xf]
    %v8864 = vld [vmem:[#allocation6 + $0x3c] sm:$0xf]
    %v8865 = vld [vmem:[#allocation7 + $0xa] sm:$0x1]
    %v8866 = vlaneseq
    %v8867 = vshrl.u32 %v8866, 7
    %v8868 = vsub.s32 0, %v8867
    %v8869 = vrot.slane %v8865, %v8868
    %v8886 = vunpack.c.l.b16 %v8849
    %v8887 = vunpack.c.l.b16 %v8850
    %v8888 = vunpack.c.l.b16 %v8851
    %v8889 = vunpack.c.l.b16 %v8852
    %v8890 = vunpack.c.l.b16 %v8853
    %v8891 = vunpack.c.l.b16 %v8854
    %v8892 = vunpack.c.l.b16 %v8855
    %v8893 = vunpack.c.l.b16 %v8856
    %v8894 = vunpack.c.l.b16 %v8857
    %v8895 = vunpack.c.l.b16 %v8858
    %v8896 = vunpack.c.l.b16 %v8859
    %v8897 = vunpack.c.l.b16 %v8860
    %v8898 = vunpack.c.l.b16 %v8861
    %v8899 = vunpack.c.l.b16 %v8862
    %v8900 = vunpack.c.l.b16 %v8863
    %v8901 = vunpack.c.l.b16 %v8864
    %v8902 = vpack.c.b16 %v8887, %v8886
    %v8903 = vpack.c.b16 %v8889, %v8888
    %v8904 = vpack.c.b16 %v8891, %v8890
    %v8905 = vpack.c.b16 %v8893, %v8892
    %v8906 = vpack.c.b16 %v8895, %v8894
    %v8907 = vpack.c.b16 %v8897, %v8896
    %v8908 = vpack.c.b16 %v8899, %v8898
    %v8909 = vpack.c.b16 %v8901, %v8900
    %8918 = vmatprep.subr.bf16.mxu0 0
    %8919 = vmatpush1.bf16.msra.mxu0 %v8909
    %8920 = vmatprep.subr.bf16.mxu0 0
    %8921 = vmatpush1.bf16.msra.mxu0 %v8908
    %8922 = vmatprep.subr.bf16.mxu0 0
    %8923 = vmatpush1.bf16.msra.mxu0 %v8907
    %8924 = vmatprep.subr.bf16.mxu0 0
    %8925 = vmatpush1.bf16.msra.mxu0 %v8906
    %8926 = vmatprep.subr.bf16.mxu0 0
    %8927 = vmatpush1.bf16.msra.mxu0 %v8905
    %8928 = vmatprep.subr.bf16.mxu0 0
    %8929 = vmatpush1.bf16.msra.mxu0 %v8904
    %8930 = vmatprep.subr.bf16.mxu0 0
    %8931 = vmatpush1.bf16.msra.mxu0 %v8903
    %8932 = vmatprep.subr.bf16.mxu0 0
    %8933 = vmatpush1.bf16.msra.mxu0 %v8902
    %8934 = vmatprep.subr.bf16.mxu0 0
    %8935 = vmatpush2.bf16.msra.mxu0 0
    %8936 = vmatprep.subr.bf16.mxu0 0
    %8937 = vmatpush2.bf16.msra.mxu0 0
    %8938 = vmatprep.subr.bf16.mxu0 0
    %8939 = vmatpush2.bf16.msra.mxu0 0
    %8940 = vmatprep.subr.bf16.mxu0 0
    %8941 = vmatpush2.bf16.msra.mxu0 0
    %8942 = vmatprep.subr.bf16.mxu0 0
    %8943 = vmatpush2.bf16.msra.mxu0 0
    %8944 = vmatprep.subr.bf16.mxu0 0
    %8945 = vmatpush2.bf16.msra.mxu0 0
    %8946 = vmatprep.subr.bf16.mxu0 0
    %8947 = vmatpush2.bf16.msra.mxu0 0
    %8948 = vmatprep.subr.bf16.mxu0 0
    %8949 = vmatpush2.bf16.msra.mxu0 0
    %8950 = vmatprep.mubr.bf16.mxu0 0
    %8951 = vmatmul.mubr.bf16.gmra.mxu0 %v8848
    %v8952 = vpop.f32.mrf.mxu0
    %v8953 = vadd.f32 %v8869, %v8952
    %v8954 = vpop.f32.mrf.mxu0
    %v8955 = vpop.f32.mrf.mxu0
    %v8956 = vpop.f32.mrf.mxu0
    %8957 = vdwg.mxu0
    %8958 = vst [vmem:[%s12] sm:$0xff] %v8953
    // Predicated region
    $region94: #{resnet_v2_forward.1} parent=1 // pred_check
      _
    $region95: #{resnet_v2_forward.1} parent=1 // pred_check_branch
      %8960 = sbr.rel (0) target = $region97
    $region96: #{resnet_v2_forward.1} parent=1 // pred_region
      _
    $region97: #{resnet_v2_forward.1} parent=1 // pred_fallthru
      _
    // Predicated region
    $region98: #{resnet_v2_forward.1} parent=1 // pred_check
      _
    $region99: #{resnet_v2_forward.1} parent=1 // pred_check_branch
      %8962 = sbr.rel (0) target = $region101
    $region100: #{resnet_v2_forward.1} parent=1 // pred_region
      _
    $region101: #{resnet_v2_forward.1} parent=1 // pred_fallthru
      _
    %8963 = vsyncpa [#allocation3], 1
    %8964 = vsyncpa [#allocation5], 1
    %8965 = vsyncpa [#allocation8], 1
    %8966 = vsyncpa [#allocation11], 1
    %8967 = vsyncpa [#allocation14], 1
    %8968 = vsyncpa [#allocation17], 1

</llo_original>
